<compile_context>
chip_gen: v6e
topology: v6e:2x2x1
jax: 0.10.0
libtpu: 0.0.40
codegen_flags: <defaults>
</compile_context>

<pallas_src>
import math

import jax
import jax.numpy as jnp
import numpy as np
from jax import lax
from jax.experimental import pallas as pl
from jax.experimental.pallas import tpu as pltpu

K1, K2, K3 = 255, 127, 63
PMAX = K1 // 2          # 127: centered "same" padding of the merged kernel


def _round_up(x, m):
    return ((x + m - 1) // m) * m


def _tpu_generation():
    try:
        kind = jax.devices()[0].device_kind.lower()
    except Exception:
        return "unknown"
    if "v5 lite" in kind or "v5e" in kind or "v5lite" in kind:
        return "v5e"
    if "v6" in kind:
        return "v6e"
    if "v7" in kind or "7x" in kind:
        return "v7x"
    return "unknown"


def _make_kernel(n_groups, cpg, tpack, sub_pad, depth_g, rt, block_rows, cout_p,
                 static_gather):
    taps_per_group = cpg * tpack

    def gather_group(x_ref, im_ref, col0, tap0):
        # cpg dense (sub_pad, block_rows) copies; each carries `tpack` taps x Cin
        # channels -> full-lane, full-sublane vld/vst (no masked stores).
        for j in range(cpg):
            src = col0 + (tap0 + j * tpack) * rt
            if not isinstance(src, int):
                src = pl.multiple_of(src, 128)     # col0 and tap shifts are 128-aligned
            im_ref[j * sub_pad:(j + 1) * sub_pad, :] = x_ref[:, pl.ds(src, block_rows)]

    def kernel(x_ref, w_ref, b_ref, o_ref, im_ref):
        # x_ref : (sub_pad, Wp*Rt)   r-block slab; sublane s = tp*Cin + c holds channel c
        #                            shifted by tp taps; lane index = w*Rt + r
        # w_ref : (cout_p, n_groups*depth_g)   merged 256-tap weights (packing-matched)
        # b_ref : (cout_p, 1)                  summed bias
        # o_ref : (cout_p, block_rows)         lane-dense output block
        # im_ref: (depth_g, block_rows)        im2col scratch for one tap group
        acc0 = jnp.zeros((cout_p, block_rows), jnp.float32) + b_ref[...]

        if static_gather:
            # Fully-static slicing fallback (single w-block): unrolled group loop.
            acc = acc0
            for g in range(n_groups):
                gather_group(x_ref, im_ref, 0, g * taps_per_group)
                wg = w_ref[:, g * depth_g:(g + 1) * depth_g]
                acc = acc + jnp.dot(wg, im_ref[...],
                                    preferred_element_type=jnp.float32)
            o_ref[...] = acc
        else:
            col0 = pl.multiple_of(pl.program_id(1) * block_rows, 128)

            def group_body(g, acc):
                gather_group(x_ref, im_ref, col0, g * taps_per_group)
                wcol = pl.multiple_of(g * depth_g, 128)
                wg = w_ref[:, pl.ds(wcol, depth_g)]
                return acc + jnp.dot(wg, im_ref[...],
                                     preferred_element_type=jnp.float32)

            acc = lax.fori_loop(0, n_groups, group_body, acc0,
                                unroll=2 if n_groups % 2 == 0 else 1)
            o_ref[...] = acc

    return kernel


def inception_conv2d(x, w1, b1, w2, b2, w3, b3, *, block_w=None):
    """x: (N, Cin, H, W) f32; wX: (Cout, Cin, 1, Kx) PyTorch layout; bX: (Cout,)."""
    N, Cin, H, W = x.shape
    Cout = w1.shape[0]
    R = N * H
    gen = _tpu_generation()

    # ---- tap packing & MXU contraction sizing --------------------------------
    tpack = max(1, 8 // Cin) if Cin <= 8 else 1   # taps packed per 8-sublane copy
    sub = tpack * Cin
    sub_pad = _round_up(sub, 8)                   # sublane height of one gather copy
    depth_target = 128 if gen == "v5e" else 256   # 256-deep contraction on v6e/v7x
    cpg = max(1, depth_target // sub_pad)         # copies per matmul group
    depth_g = cpg * sub_pad                       # contraction depth per matmul
    tg = cpg * tpack                              # taps folded per matmul
    KP = _round_up(K1, tg)                        # merged kernel zero-padded to KP taps
    n_groups = KP // tg

    # ---- r (rows = N*H) tiling: rows live in the lane dim, flat = w*Rt + r ----
    lane_align = 128 // tpack                     # (tap shift)*Rt must be 128-aligned
    Rt = _round_up(min(max(R, 1), 512), lane_align)
    slab_budget = (10 << 20) if gen == "v7x" else (20 << 20)
    while Rt > lane_align and 2 * sub_pad * (W + KP + 256) * Rt * 4 > slab_budget:
        Rt = max(lane_align, _round_up(Rt // 2, lane_align))
    # TODO(synk): if W*N*H is so large that even Rt == lane_align overflows VMEM, the
    # input should move to memory_space=pl.ANY with manual halo double-buffer DMA.
    R_pad = _round_up(R, Rt)
    nb_r = R_pad // Rt

    # ---- w tiling --------------------------------------------------------------
    w_align = 128 // math.gcd(Rt, 128)            # block_w*Rt must be 128-aligned
    if block_w is None:
        rows_target = 1024 if gen == "v7x" else 2048
        rows_target = min(rows_target, max(256, (16 * 1024) // max(Cout, 8)))
        block_w = max(1, rows_target // Rt)
        if block_w >= W and W > 1:                # keep >=2 w-blocks (megacore) if possible
            block_w = -(-W // 2)
    block_w = _round_up(max(1, min(block_w, W)), w_align)
    nb_w = -(-W // block_w)
    W_round = nb_w * block_w
    block_rows = block_w * Rt

    Wp = W_round + KP - 1                         # 127 left pad + right slack
    pad_l = PMAX
    pad_r = Wp - W - pad_l

    # ---- input slab: (nb_r, sub_pad, Wp*Rt), sublane s = tp*Cin + c ------------
    xf = x.astype(jnp.float32)
    xp = jnp.pad(xf, ((0, 0), (0, 0), (0, 0), (pad_l, pad_r)))
    x2 = jnp.transpose(xp, (1, 0, 2, 3)).reshape(Cin, R, Wp)      # rows r = n*H + h
    if R_pad != R:
        x2 = jnp.pad(x2, ((0, 0), (0, R_pad - R), (0, 0)))
    x3 = jnp.transpose(x2.reshape(Cin, nb_r, Rt, Wp), (1, 0, 3, 2))   # (nb_r,Cin,Wp,Rt)
    shifted = [x3 if tp == 0
               else jnp.pad(x3[:, :, tp:, :], ((0, 0), (0, 0), (0, tp), (0, 0)))
               for tp in range(tpack)]
    slab = jnp.stack(shifted, axis=1).reshape(nb_r, tpack * Cin, Wp, Rt)
    if sub_pad != tpack * Cin:
        slab = jnp.pad(slab, ((0, 0), (0, sub_pad - tpack * Cin), (0, 0), (0, 0)))
    slab = slab.reshape(nb_r, sub_pad, Wp * Rt)

    # ---- merged + packing-matched weights: (Cout_p, n_groups*depth_g) ----------
    def prep(w):                                   # (Cout,Cin,1,K) -> (K,Cin,Cout)
        return jnp.transpose(w[:, :, 0, :], (2, 1, 0)).astype(jnp.float32)

    off2 = PMAX - K2 // 2                          # 64
    off3 = PMAX - K3 // 2                          # 96
    Wm = jnp.zeros((KP, Cin, Cout), jnp.float32)
    Wm = Wm.at[0:K1].add(prep(w1))
    Wm = Wm.at[off2:off2 + K2].add(prep(w2))
    Wm = Wm.at[off3:off3 + K3].add(prep(w3))
    Wr = Wm.reshape(n_groups, cpg, tpack * Cin, Cout)
    if sub_pad != tpack * Cin:
        Wr = jnp.pad(Wr, ((0, 0), (0, 0), (0, sub_pad - tpack * Cin), (0, 0)))
    Cout_p = _round_up(Cout, 8)
    w2d = jnp.transpose(Wr.reshape(n_groups * depth_g, Cout))     # (Cout, depth)
    b_tot = (b1 + b2 + b3).astype(jnp.float32).reshape(Cout, 1)
    if Cout_p != Cout:
        w2d = jnp.pad(w2d, ((0, Cout_p - Cout), (0, 0)))
        b_tot = jnp.pad(b_tot, ((0, Cout_p - Cout), (0, 0)))
    total_depth = n_groups * depth_g

    def run(static_gather):
        if static_gather:
            bw, nw = W_round, 1                    # single w-block, fully static slices
        else:
            bw, nw = block_w, nb_w
        brows = bw * Rt
        kernel = _make_kernel(n_groups, cpg, tpack, sub_pad, depth_g, Rt, brows,
                              Cout_p, static_gather)

        flops = 2 * nb_r * nw * brows * total_depth * Cout_p
        bytes_accessed = 4 * (slab.size + w2d.size + b_tot.size
                              + nb_r * Cout_p * W_round * Rt)
        need = 4 * (2 * (slab.size // nb_r) + 2 * w2d.size + 2 * 128 * Cout_p
                    + 2 * Cout_p * brows + depth_g * brows)
        cap = (48 << 20) if gen in ("v7x", "unknown") else (96 << 20)
        vmem_limit = int(min(cap, max(need + (16 << 20), 32 << 20)))

        out = pl.pallas_call(
            kernel,
            out_shape=jax.ShapeDtypeStruct((nb_r, Cout_p, W_round * Rt), jnp.float32),
            grid=(nb_r, nw),
            in_specs=[
                # r-blocked input slab (halo is only along W, so it pipelines over r)
                pl.BlockSpec((None, sub_pad, Wp * Rt), lambda ri, wi: (ri, 0, 0)),
                pl.BlockSpec((Cout_p, total_depth), lambda ri, wi: (0, 0)),
                pl.BlockSpec((Cout_p, 1), lambda ri, wi: (0, 0)),
            ],
            out_specs=pl.BlockSpec((None, Cout_p, brows), lambda ri, wi: (ri, 0, wi)),
            scratch_shapes=[pltpu.VMEM((depth_g, brows), jnp.float32)],
            compiler_params=pltpu.CompilerParams(
                dimension_semantics=("parallel", "parallel"),
                vmem_limit_bytes=vmem_limit),
            cost_estimate=pl.CostEstimate(flops=flops, transcendentals=0,
                                          bytes_accessed=bytes_accessed),
        )(slab, w2d, b_tot)
        return jax.block_until_ready(out)

    try:
        out = run(static_gather=False)
    except Exception:
        # Safety net: if this jax/libtpu build rejects 128-aligned *dynamic* lane-dim
        # slices, re-run with a single w-block and fully static gather offsets.
        out = run(static_gather=True)

    out = out.reshape(nb_r, Cout_p, W_round, Rt)
    out = jnp.transpose(out, (1, 2, 0, 3)).reshape(Cout_p, W_round, R_pad)
    out = out[:Cout, :W, :R].reshape(Cout, W, N, H)
    return jnp.transpose(out, (2, 0, 3, 1))        # back to (N, Cout, H, W)


def _conv_ref(x, w, b, k):
    y = lax.conv_general_dilated(
        x, w, window_strides=(1, 1),
        padding=((0, 0), (k // 2, k // 2)),
        dimension_numbers=("NCHW", "OIHW", "NCHW"),
        precision=lax.Precision.HIGHEST)
    return y + b[None, :, None, None]


# TODO(synk): the module's explain()/LRP relevance backward pass and the v1/v2/v3
# activation caching are stateful XAI bookkeeping, not forward compute; not implemented.

if __name__ == "__main__":
    key = jax.random.PRNGKey(0)
    N, Cin, Cout, H, W = 2, 4, 8, 4, 16
    ks = jax.random.split(key, 7)

    x = jax.random.normal(ks[0], (N, Cin, H, W), jnp.float32)

    def init_w(k, kk):
        scale = 1.0 / np.sqrt(Cin * kk)
        return scale * jax.random.normal(k, (Cout, Cin, 1, kk), jnp.float32)

    w1 = init_w(ks[1], K1); b1 = 0.1 * jax.random.normal(ks[2], (Cout,), jnp.float32)
    w2 = init_w(ks[3], K2); b2 = 0.1 * jax.random.normal(ks[4], (Cout,), jnp.float32)
    w3 = init_w(ks[5], K3); b3 = 0.1 * jax.random.normal(ks[6], (Cout,), jnp.float32)

    # block_w=8 forces a multi-step grid (2 w-blocks x 1 r-block) even at this tiny W.
    out = jax.block_until_ready(
        inception_conv2d(x, w1, b1, w2, b2, w3, b3, block_w=8))

    ref = (_conv_ref(x, w1, b1, K1) + _conv_ref(x, w2, b2, K2) +
           _conv_ref(x, w3, b3, K3))
    # atol sized for the worst case where the MXU evaluates f32 operands as a single
    # bf16 pass (DEFAULT matmul precision) over the ~1.8K-term merged contraction;
    # the Mosaic f32 matmul is normally far more accurate (observed ~1e-6).
    np.testing.assert_allclose(np.asarray(out), np.asarray(ref), rtol=2e-3, atol=2e-2)

    print("KERNEL_OK")
</pallas_src>

<mosaic_0001>
module attributes {stable_mosaic.version = 11 : i64} {
  func.func @kernel(%arg0: i32, %arg1: i32, %arg2: memref<1x8x17344xf32, #tpu.memory_space<vmem>>, %arg3: memref<8x1024xf32, #tpu.memory_space<vmem>>, %arg4: memref<8x1xf32, #tpu.memory_space<vmem>>, %arg5: memref<1x8x1024xf32, #tpu.memory_space<vmem>>, %arg6: memref<256x1024xf32, #tpu.memory_space<vmem>>) attributes {dimension_semantics = [#tpu.dimension_semantics<parallel>, #tpu.dimension_semantics<parallel>], iteration_bounds = array<i64: 1, 1>, scalar_prefetch = 0 : i64, scratch_operands = 1 : i64, tpu.core_type = #tpu.core_type<tc>, window_params = [{transform_indices = @transform_0, window_bounds = array<i64: 1, 8, 17344>}, {pipeline_mode = #tpu.pipeline_mode<synchronous>, transform_indices = @transform_1, window_bounds = array<i64: 8, 1024>}, {pipeline_mode = #tpu.pipeline_mode<synchronous>, transform_indices = @transform_2, window_bounds = array<i64: 8, 1>}, {transform_indices = @transform_3, window_bounds = array<i64: 1, 8, 1024>}]} {
    %cst = arith.constant 0.000000e+00 : f32
    %0 = vector.broadcast %cst : f32 to vector<8x1024xf32>
    %c0 = arith.constant 0 : index
    %c0_0 = arith.constant 0 : index
    %1 = vector.load %arg4[%c0, %c0_0] : memref<8x1xf32, #tpu.memory_space<vmem>>, vector<8x1xf32>
    %2 = vector.broadcast %1 : vector<8x1xf32> to vector<8x1024xf32>
    %3 = arith.addf %0, %2 : vector<8x1024xf32>
    %c0_1 = arith.constant 0 : index
    %c0_2 = arith.constant 0 : index
    %c0_3 = arith.constant 0 : index
    %4 = vector.load %arg2[%c0_1, %c0_2, %c0_3] : memref<1x8x17344xf32, #tpu.memory_space<vmem>>, vector<1x8x1024xf32>
    %5 = vector.shape_cast %4 : vector<1x8x1024xf32> to vector<8x1024xf32>
    %c0_4 = arith.constant 0 : index
    %c0_5 = arith.constant 0 : index
    %6 = vector.load %arg6[%c0_4, %c0_5] : memref<256x1024xf32, #tpu.memory_space<vmem>>, vector<8x1024xf32>
    tpu.vector_store %arg6[%c0_4, %c0_5], %5 {strides = array<i32>} : memref<256x1024xf32, #tpu.memory_space<vmem>>, vector<8x1024xf32>,
    %c0_6 = arith.constant 0 : index
    %c0_7 = arith.constant 0 : index
    %c128 = arith.constant 128 : index
    %7 = vector.load %arg2[%c0_6, %c0_7, %c128] : memref<1x8x17344xf32, #tpu.memory_space<vmem>>, vector<1x8x1024xf32>
    %8 = vector.shape_cast %7 : vector<1x8x1024xf32> to vector<8x1024xf32>
    %c8 = arith.constant 8 : index
    %c0_8 = arith.constant 0 : index
    %9 = vector.load %arg6[%c8, %c0_8] : memref<256x1024xf32, #tpu.memory_space<vmem>>, vector<8x1024xf32>
    tpu.vector_store %arg6[%c8, %c0_8], %8 {strides = array<i32>} : memref<256x1024xf32, #tpu.memory_space<vmem>>, vector<8x1024xf32>,
    %c0_9 = arith.constant 0 : index
    %c0_10 = arith.constant 0 : index
    %c256 = arith.constant 256 : index
    %10 = vector.load %arg2[%c0_9, %c0_10, %c256] : memref<1x8x17344xf32, #tpu.memory_space<vmem>>, vector<1x8x1024xf32>
    %11 = vector.shape_cast %10 : vector<1x8x1024xf32> to vector<8x1024xf32>
    %c16 = arith.constant 16 : index
    %c0_11 = arith.constant 0 : index
    %12 = vector.load %arg6[%c16, %c0_11] : memref<256x1024xf32, #tpu.memory_space<vmem>>, vector<8x1024xf32>
    tpu.vector_store %arg6[%c16, %c0_11], %11 {strides = array<i32>} : memref<256x1024xf32, #tpu.memory_space<vmem>>, vector<8x1024xf32>,
    %c0_12 = arith.constant 0 : index
    %c0_13 = arith.constant 0 : index
    %c384 = arith.constant 384 : index
    %13 = vector.load %arg2[%c0_12, %c0_13, %c384] : memref<1x8x17344xf32, #tpu.memory_space<vmem>>, vector<1x8x1024xf32>
    %14 = vector.shape_cast %13 : vector<1x8x1024xf32> to vector<8x1024xf32>
    %c24 = arith.constant 24 : index
    %c0_14 = arith.constant 0 : index
    %15 = vector.load %arg6[%c24, %c0_14] : memref<256x1024xf32, #tpu.memory_space<vmem>>, vector<8x1024xf32>
    tpu.vector_store %arg6[%c24, %c0_14], %14 {strides = array<i32>} : memref<256x1024xf32, #tpu.memory_space<vmem>>, vector<8x1024xf32>,
    %c0_15 = arith.constant 0 : index
    %c0_16 = arith.constant 0 : index
    %c512 = arith.constant 512 : index
    %16 = vector.load %arg2[%c0_15, %c0_16, %c512] : memref<1x8x17344xf32, #tpu.memory_space<vmem>>, vector<1x8x1024xf32>
    %17 = vector.shape_cast %16 : vector<1x8x1024xf32> to vector<8x1024xf32>
    %c32 = arith.constant 32 : index
    %c0_17 = arith.constant 0 : index
    %18 = vector.load %arg6[%c32, %c0_17] : memref<256x1024xf32, #tpu.memory_space<vmem>>, vector<8x1024xf32>
    tpu.vector_store %arg6[%c32, %c0_17], %17 {strides = array<i32>} : memref<256x1024xf32, #tpu.memory_space<vmem>>, vector<8x1024xf32>,
    %c0_18 = arith.constant 0 : index
    %c0_19 = arith.constant 0 : index
    %c640 = arith.constant 640 : index
    %19 = vector.load %arg2[%c0_18, %c0_19, %c640] : memref<1x8x17344xf32, #tpu.memory_space<vmem>>, vector<1x8x1024xf32>
    %20 = vector.shape_cast %19 : vector<1x8x1024xf32> to vector<8x1024xf32>
    %c40 = arith.constant 40 : index
    %c0_20 = arith.constant 0 : index
    %21 = vector.load %arg6[%c40, %c0_20] : memref<256x1024xf32, #tpu.memory_space<vmem>>, vector<8x1024xf32>
    tpu.vector_store %arg6[%c40, %c0_20], %20 {strides = array<i32>} : memref<256x1024xf32, #tpu.memory_space<vmem>>, vector<8x1024xf32>,
    %c0_21 = arith.constant 0 : index
    %c0_22 = arith.constant 0 : index
    %c768 = arith.constant 768 : index
    %22 = vector.load %arg2[%c0_21, %c0_22, %c768] : memref<1x8x17344xf32, #tpu.memory_space<vmem>>, vector<1x8x1024xf32>
    %23 = vector.shape_cast %22 : vector<1x8x1024xf32> to vector<8x1024xf32>
    %c48 = arith.constant 48 : index
    %c0_23 = arith.constant 0 : index
    %24 = vector.load %arg6[%c48, %c0_23] : memref<256x1024xf32, #tpu.memory_space<vmem>>, vector<8x1024xf32>
    tpu.vector_store %arg6[%c48, %c0_23], %23 {strides = array<i32>} : memref<256x1024xf32, #tpu.memory_space<vmem>>, vector<8x1024xf32>,
    %c0_24 = arith.constant 0 : index
    %c0_25 = arith.constant 0 : index
    %c896 = arith.constant 896 : index
    %25 = vector.load %arg2[%c0_24, %c0_25, %c896] : memref<1x8x17344xf32, #tpu.memory_space<vmem>>, vector<1x8x1024xf32>
    %26 = vector.shape_cast %25 : vector<1x8x1024xf32> to vector<8x1024xf32>
    %c56 = arith.constant 56 : index
    %c0_26 = arith.constant 0 : index
    %27 = vector.load %arg6[%c56, %c0_26] : memref<256x1024xf32, #tpu.memory_space<vmem>>, vector<8x1024xf32>
    tpu.vector_store %arg6[%c56, %c0_26], %26 {strides = array<i32>} : memref<256x1024xf32, #tpu.memory_space<vmem>>, vector<8x1024xf32>,
    %c0_27 = arith.constant 0 : index
    %c0_28 = arith.constant 0 : index
    %c1024 = arith.constant 1024 : index
    %28 = vector.load %arg2[%c0_27, %c0_28, %c1024] : memref<1x8x17344xf32, #tpu.memory_space<vmem>>, vector<1x8x1024xf32>
    %29 = vector.shape_cast %28 : vector<1x8x1024xf32> to vector<8x1024xf32>
    %c64 = arith.constant 64 : index
    %c0_29 = arith.constant 0 : index
    %30 = vector.load %arg6[%c64, %c0_29] : memref<256x1024xf32, #tpu.memory_space<vmem>>, vector<8x1024xf32>
    tpu.vector_store %arg6[%c64, %c0_29], %29 {strides = array<i32>} : memref<256x1024xf32, #tpu.memory_space<vmem>>, vector<8x1024xf32>,
    %c0_30 = arith.constant 0 : index
    %c0_31 = arith.constant 0 : index
    %c1152 = arith.constant 1152 : index
    %31 = vector.load %arg2[%c0_30, %c0_31, %c1152] : memref<1x8x17344xf32, #tpu.memory_space<vmem>>, vector<1x8x1024xf32>
    %32 = vector.shape_cast %31 : vector<1x8x1024xf32> to vector<8x1024xf32>
    %c72 = arith.constant 72 : index
    %c0_32 = arith.constant 0 : index
    %33 = vector.load %arg6[%c72, %c0_32] : memref<256x1024xf32, #tpu.memory_space<vmem>>, vector<8x1024xf32>
    tpu.vector_store %arg6[%c72, %c0_32], %32 {strides = array<i32>} : memref<256x1024xf32, #tpu.memory_space<vmem>>, vector<8x1024xf32>,
    %c0_33 = arith.constant 0 : index
    %c0_34 = arith.constant 0 : index
    %c1280 = arith.constant 1280 : index
    %34 = vector.load %arg2[%c0_33, %c0_34, %c1280] : memref<1x8x17344xf32, #tpu.memory_space<vmem>>, vector<1x8x1024xf32>
    %35 = vector.shape_cast %34 : vector<1x8x1024xf32> to vector<8x1024xf32>
    %c80 = arith.constant 80 : index
    %c0_35 = arith.constant 0 : index
    %36 = vector.load %arg6[%c80, %c0_35] : memref<256x1024xf32, #tpu.memory_space<vmem>>, vector<8x1024xf32>
    tpu.vector_store %arg6[%c80, %c0_35], %35 {strides = array<i32>} : memref<256x1024xf32, #tpu.memory_space<vmem>>, vector<8x1024xf32>,
    %c0_36 = arith.constant 0 : index
    %c0_37 = arith.constant 0 : index
    %c1408 = arith.constant 1408 : index
    %37 = vector.load %arg2[%c0_36, %c0_37, %c1408] : memref<1x8x17344xf32, #tpu.memory_space<vmem>>, vector<1x8x1024xf32>
    %38 = vector.shape_cast %37 : vector<1x8x1024xf32> to vector<8x1024xf32>
    %c88 = arith.constant 88 : index
    %c0_38 = arith.constant 0 : index
    %39 = vector.load %arg6[%c88, %c0_38] : memref<256x1024xf32, #tpu.memory_space<vmem>>, vector<8x1024xf32>
    tpu.vector_store %arg6[%c88, %c0_38], %38 {strides = array<i32>} : memref<256x1024xf32, #tpu.memory_space<vmem>>, vector<8x1024xf32>,
    %c0_39 = arith.constant 0 : index
    %c0_40 = arith.constant 0 : index
    %c1536 = arith.constant 1536 : index
    %40 = vector.load %arg2[%c0_39, %c0_40, %c1536] : memref<1x8x17344xf32, #tpu.memory_space<vmem>>, vector<1x8x1024xf32>
    %41 = vector.shape_cast %40 : vector<1x8x1024xf32> to vector<8x1024xf32>
    %c96 = arith.constant 96 : index
    %c0_41 = arith.constant 0 : index
    %42 = vector.load %arg6[%c96, %c0_41] : memref<256x1024xf32, #tpu.memory_space<vmem>>, vector<8x1024xf32>
    tpu.vector_store %arg6[%c96, %c0_41], %41 {strides = array<i32>} : memref<256x1024xf32, #tpu.memory_space<vmem>>, vector<8x1024xf32>,
    %c0_42 = arith.constant 0 : index
    %c0_43 = arith.constant 0 : index
    %c1664 = arith.constant 1664 : index
    %43 = vector.load %arg2[%c0_42, %c0_43, %c1664] : memref<1x8x17344xf32, #tpu.memory_space<vmem>>, vector<1x8x1024xf32>
    %44 = vector.shape_cast %43 : vector<1x8x1024xf32> to vector<8x1024xf32>
    %c104 = arith.constant 104 : index
    %c0_44 = arith.constant 0 : index
    %45 = vector.load %arg6[%c104, %c0_44] : memref<256x1024xf32, #tpu.memory_space<vmem>>, vector<8x1024xf32>
    tpu.vector_store %arg6[%c104, %c0_44], %44 {strides = array<i32>} : memref<256x1024xf32, #tpu.memory_space<vmem>>, vector<8x1024xf32>,
    %c0_45 = arith.constant 0 : index
    %c0_46 = arith.constant 0 : index
    %c1792 = arith.constant 1792 : index
    %46 = vector.load %arg2[%c0_45, %c0_46, %c1792] : memref<1x8x17344xf32, #tpu.memory_space<vmem>>, vector<1x8x1024xf32>
    %47 = vector.shape_cast %46 : vector<1x8x1024xf32> to vector<8x1024xf32>
    %c112 = arith.constant 112 : index
    %c0_47 = arith.constant 0 : index
    %48 = vector.load %arg6[%c112, %c0_47] : memref<256x1024xf32, #tpu.memory_space<vmem>>, vector<8x1024xf32>
    tpu.vector_store %arg6[%c112, %c0_47], %47 {strides = array<i32>} : memref<256x1024xf32, #tpu.memory_space<vmem>>, vector<8x1024xf32>,
    %c0_48 = arith.constant 0 : index
    %c0_49 = arith.constant 0 : index
    %c1920 = arith.constant 1920 : index
    %49 = vector.load %arg2[%c0_48, %c0_49, %c1920] : memref<1x8x17344xf32, #tpu.memory_space<vmem>>, vector<1x8x1024xf32>
    %50 = vector.shape_cast %49 : vector<1x8x1024xf32> to vector<8x1024xf32>
    %c120 = arith.constant 120 : index
    %c0_50 = arith.constant 0 : index
    %51 = vector.load %arg6[%c120, %c0_50] : memref<256x1024xf32, #tpu.memory_space<vmem>>, vector<8x1024xf32>
    tpu.vector_store %arg6[%c120, %c0_50], %50 {strides = array<i32>} : memref<256x1024xf32, #tpu.memory_space<vmem>>, vector<8x1024xf32>,
    %c0_51 = arith.constant 0 : index
    %c0_52 = arith.constant 0 : index
    %c2048 = arith.constant 2048 : index
    %52 = vector.load %arg2[%c0_51, %c0_52, %c2048] : memref<1x8x17344xf32, #tpu.memory_space<vmem>>, vector<1x8x1024xf32>
    %53 = vector.shape_cast %52 : vector<1x8x1024xf32> to vector<8x1024xf32>
    %c128_53 = arith.constant 128 : index
    %c0_54 = arith.constant 0 : index
    %54 = vector.load %arg6[%c128_53, %c0_54] : memref<256x1024xf32, #tpu.memory_space<vmem>>, vector<8x1024xf32>
    tpu.vector_store %arg6[%c128_53, %c0_54], %53 {strides = array<i32>} : memref<256x1024xf32, #tpu.memory_space<vmem>>, vector<8x1024xf32>,
    %c0_55 = arith.constant 0 : index
    %c0_56 = arith.constant 0 : index
    %c2176 = arith.constant 2176 : index
    %55 = vector.load %arg2[%c0_55, %c0_56, %c2176] : memref<1x8x17344xf32, #tpu.memory_space<vmem>>, vector<1x8x1024xf32>
    %56 = vector.shape_cast %55 : vector<1x8x1024xf32> to vector<8x1024xf32>
    %c136 = arith.constant 136 : index
    %c0_57 = arith.constant 0 : index
    %57 = vector.load %arg6[%c136, %c0_57] : memref<256x1024xf32, #tpu.memory_space<vmem>>, vector<8x1024xf32>
    tpu.vector_store %arg6[%c136, %c0_57], %56 {strides = array<i32>} : memref<256x1024xf32, #tpu.memory_space<vmem>>, vector<8x1024xf32>,
    %c0_58 = arith.constant 0 : index
    %c0_59 = arith.constant 0 : index
    %c2304 = arith.constant 2304 : index
    %58 = vector.load %arg2[%c0_58, %c0_59, %c2304] : memref<1x8x17344xf32, #tpu.memory_space<vmem>>, vector<1x8x1024xf32>
    %59 = vector.shape_cast %58 : vector<1x8x1024xf32> to vector<8x1024xf32>
    %c144 = arith.constant 144 : index
    %c0_60 = arith.constant 0 : index
    %60 = vector.load %arg6[%c144, %c0_60] : memref<256x1024xf32, #tpu.memory_space<vmem>>, vector<8x1024xf32>
    tpu.vector_store %arg6[%c144, %c0_60], %59 {strides = array<i32>} : memref<256x1024xf32, #tpu.memory_space<vmem>>, vector<8x1024xf32>,
    %c0_61 = arith.constant 0 : index
    %c0_62 = arith.constant 0 : index
    %c2432 = arith.constant 2432 : index
    %61 = vector.load %arg2[%c0_61, %c0_62, %c2432] : memref<1x8x17344xf32, #tpu.memory_space<vmem>>, vector<1x8x1024xf32>
    %62 = vector.shape_cast %61 : vector<1x8x1024xf32> to vector<8x1024xf32>
    %c152 = arith.constant 152 : index
    %c0_63 = arith.constant 0 : index
    %63 = vector.load %arg6[%c152, %c0_63] : memref<256x1024xf32, #tpu.memory_space<vmem>>, vector<8x1024xf32>
    tpu.vector_store %arg6[%c152, %c0_63], %62 {strides = array<i32>} : memref<256x1024xf32, #tpu.memory_space<vmem>>, vector<8x1024xf32>,
    %c0_64 = arith.constant 0 : index
    %c0_65 = arith.constant 0 : index
    %c2560 = arith.constant 2560 : index
    %64 = vector.load %arg2[%c0_64, %c0_65, %c2560] : memref<1x8x17344xf32, #tpu.memory_space<vmem>>, vector<1x8x1024xf32>
    %65 = vector.shape_cast %64 : vector<1x8x1024xf32> to vector<8x1024xf32>
    %c160 = arith.constant 160 : index
    %c0_66 = arith.constant 0 : index
    %66 = vector.load %arg6[%c160, %c0_66] : memref<256x1024xf32, #tpu.memory_space<vmem>>, vector<8x1024xf32>
    tpu.vector_store %arg6[%c160, %c0_66], %65 {strides = array<i32>} : memref<256x1024xf32, #tpu.memory_space<vmem>>, vector<8x1024xf32>,
    %c0_67 = arith.constant 0 : index
    %c0_68 = arith.constant 0 : index
    %c2688 = arith.constant 2688 : index
    %67 = vector.load %arg2[%c0_67, %c0_68, %c2688] : memref<1x8x17344xf32, #tpu.memory_space<vmem>>, vector<1x8x1024xf32>
    %68 = vector.shape_cast %67 : vector<1x8x1024xf32> to vector<8x1024xf32>
    %c168 = arith.constant 168 : index
    %c0_69 = arith.constant 0 : index
    %69 = vector.load %arg6[%c168, %c0_69] : memref<256x1024xf32, #tpu.memory_space<vmem>>, vector<8x1024xf32>
    tpu.vector_store %arg6[%c168, %c0_69], %68 {strides = array<i32>} : memref<256x1024xf32, #tpu.memory_space<vmem>>, vector<8x1024xf32>,
    %c0_70 = arith.constant 0 : index
    %c0_71 = arith.constant 0 : index
    %c2816 = arith.constant 2816 : index
    %70 = vector.load %arg2[%c0_70, %c0_71, %c2816] : memref<1x8x17344xf32, #tpu.memory_space<vmem>>, vector<1x8x1024xf32>
    %71 = vector.shape_cast %70 : vector<1x8x1024xf32> to vector<8x1024xf32>
    %c176 = arith.constant 176 : index
    %c0_72 = arith.constant 0 : index
    %72 = vector.load %arg6[%c176, %c0_72] : memref<256x1024xf32, #tpu.memory_space<vmem>>, vector<8x1024xf32>
    tpu.vector_store %arg6[%c176, %c0_72], %71 {strides = array<i32>} : memref<256x1024xf32, #tpu.memory_space<vmem>>, vector<8x1024xf32>,
    %c0_73 = arith.constant 0 : index
    %c0_74 = arith.constant 0 : index
    %c2944 = arith.constant 2944 : index
    %73 = vector.load %arg2[%c0_73, %c0_74, %c2944] : memref<1x8x17344xf32, #tpu.memory_space<vmem>>, vector<1x8x1024xf32>
    %74 = vector.shape_cast %73 : vector<1x8x1024xf32> to vector<8x1024xf32>
    %c184 = arith.constant 184 : index
    %c0_75 = arith.constant 0 : index
    %75 = vector.load %arg6[%c184, %c0_75] : memref<256x1024xf32, #tpu.memory_space<vmem>>, vector<8x1024xf32>
    tpu.vector_store %arg6[%c184, %c0_75], %74 {strides = array<i32>} : memref<256x1024xf32, #tpu.memory_space<vmem>>, vector<8x1024xf32>,
    %c0_76 = arith.constant 0 : index
    %c0_77 = arith.constant 0 : index
    %c3072 = arith.constant 3072 : index
    %76 = vector.load %arg2[%c0_76, %c0_77, %c3072] : memref<1x8x17344xf32, #tpu.memory_space<vmem>>, vector<1x8x1024xf32>
    %77 = vector.shape_cast %76 : vector<1x8x1024xf32> to vector<8x1024xf32>
    %c192 = arith.constant 192 : index
    %c0_78 = arith.constant 0 : index
    %78 = vector.load %arg6[%c192, %c0_78] : memref<256x1024xf32, #tpu.memory_space<vmem>>, vector<8x1024xf32>
    tpu.vector_store %arg6[%c192, %c0_78], %77 {strides = array<i32>} : memref<256x1024xf32, #tpu.memory_space<vmem>>, vector<8x1024xf32>,
    %c0_79 = arith.constant 0 : index
    %c0_80 = arith.constant 0 : index
    %c3200 = arith.constant 3200 : index
    %79 = vector.load %arg2[%c0_79, %c0_80, %c3200] : memref<1x8x17344xf32, #tpu.memory_space<vmem>>, vector<1x8x1024xf32>
    %80 = vector.shape_cast %79 : vector<1x8x1024xf32> to vector<8x1024xf32>
    %c200 = arith.constant 200 : index
    %c0_81 = arith.constant 0 : index
    %81 = vector.load %arg6[%c200, %c0_81] : memref<256x1024xf32, #tpu.memory_space<vmem>>, vector<8x1024xf32>
    tpu.vector_store %arg6[%c200, %c0_81], %80 {strides = array<i32>} : memref<256x1024xf32, #tpu.memory_space<vmem>>, vector<8x1024xf32>,
    %c0_82 = arith.constant 0 : index
    %c0_83 = arith.constant 0 : index
    %c3328 = arith.constant 3328 : index
    %82 = vector.load %arg2[%c0_82, %c0_83, %c3328] : memref<1x8x17344xf32, #tpu.memory_space<vmem>>, vector<1x8x1024xf32>
    %83 = vector.shape_cast %82 : vector<1x8x1024xf32> to vector<8x1024xf32>
    %c208 = arith.constant 208 : index
    %c0_84 = arith.constant 0 : index
    %84 = vector.load %arg6[%c208, %c0_84] : memref<256x1024xf32, #tpu.memory_space<vmem>>, vector<8x1024xf32>
    tpu.vector_store %arg6[%c208, %c0_84], %83 {strides = array<i32>} : memref<256x1024xf32, #tpu.memory_space<vmem>>, vector<8x1024xf32>,
    %c0_85 = arith.constant 0 : index
    %c0_86 = arith.constant 0 : index
    %c3456 = arith.constant 3456 : index
    %85 = vector.load %arg2[%c0_85, %c0_86, %c3456] : memref<1x8x17344xf32, #tpu.memory_space<vmem>>, vector<1x8x1024xf32>
    %86 = vector.shape_cast %85 : vector<1x8x1024xf32> to vector<8x1024xf32>
    %c216 = arith.constant 216 : index
    %c0_87 = arith.constant 0 : index
    %87 = vector.load %arg6[%c216, %c0_87] : memref<256x1024xf32, #tpu.memory_space<vmem>>, vector<8x1024xf32>
    tpu.vector_store %arg6[%c216, %c0_87], %86 {strides = array<i32>} : memref<256x1024xf32, #tpu.memory_space<vmem>>, vector<8x1024xf32>,
    %c0_88 = arith.constant 0 : index
    %c0_89 = arith.constant 0 : index
    %c3584 = arith.constant 3584 : index
    %88 = vector.load %arg2[%c0_88, %c0_89, %c3584] : memref<1x8x17344xf32, #tpu.memory_space<vmem>>, vector<1x8x1024xf32>
    %89 = vector.shape_cast %88 : vector<1x8x1024xf32> to vector<8x1024xf32>
    %c224 = arith.constant 224 : index
    %c0_90 = arith.constant 0 : index
    %90 = vector.load %arg6[%c224, %c0_90] : memref<256x1024xf32, #tpu.memory_space<vmem>>, vector<8x1024xf32>
    tpu.vector_store %arg6[%c224, %c0_90], %89 {strides = array<i32>} : memref<256x1024xf32, #tpu.memory_space<vmem>>, vector<8x1024xf32>,
    %c0_91 = arith.constant 0 : index
    %c0_92 = arith.constant 0 : index
    %c3712 = arith.constant 3712 : index
    %91 = vector.load %arg2[%c0_91, %c0_92, %c3712] : memref<1x8x17344xf32, #tpu.memory_space<vmem>>, vector<1x8x1024xf32>
    %92 = vector.shape_cast %91 : vector<1x8x1024xf32> to vector<8x1024xf32>
    %c232 = arith.constant 232 : index
    %c0_93 = arith.constant 0 : index
    %93 = vector.load %arg6[%c232, %c0_93] : memref<256x1024xf32, #tpu.memory_space<vmem>>, vector<8x1024xf32>
    tpu.vector_store %arg6[%c232, %c0_93], %92 {strides = array<i32>} : memref<256x1024xf32, #tpu.memory_space<vmem>>, vector<8x1024xf32>,
    %c0_94 = arith.constant 0 : index
    %c0_95 = arith.constant 0 : index
    %c3840 = arith.constant 3840 : index
    %94 = vector.load %arg2[%c0_94, %c0_95, %c3840] : memref<1x8x17344xf32, #tpu.memory_space<vmem>>, vector<1x8x1024xf32>
    %95 = vector.shape_cast %94 : vector<1x8x1024xf32> to vector<8x1024xf32>
    %c240 = arith.constant 240 : index
    %c0_96 = arith.constant 0 : index
    %96 = vector.load %arg6[%c240, %c0_96] : memref<256x1024xf32, #tpu.memory_space<vmem>>, vector<8x1024xf32>
    tpu.vector_store %arg6[%c240, %c0_96], %95 {strides = array<i32>} : memref<256x1024xf32, #tpu.memory_space<vmem>>, vector<8x1024xf32>,
    %c0_97 = arith.constant 0 : index
    %c0_98 = arith.constant 0 : index
    %c3968 = arith.constant 3968 : index
    %97 = vector.load %arg2[%c0_97, %c0_98, %c3968] : memref<1x8x17344xf32, #tpu.memory_space<vmem>>, vector<1x8x1024xf32>
    %98 = vector.shape_cast %97 : vector<1x8x1024xf32> to vector<8x1024xf32>
    %c248 = arith.constant 248 : index
    %c0_99 = arith.constant 0 : index
    %99 = vector.load %arg6[%c248, %c0_99] : memref<256x1024xf32, #tpu.memory_space<vmem>>, vector<8x1024xf32>
    tpu.vector_store %arg6[%c248, %c0_99], %98 {strides = array<i32>} : memref<256x1024xf32, #tpu.memory_space<vmem>>, vector<8x1024xf32>,
    %c0_100 = arith.constant 0 : index
    %c0_101 = arith.constant 0 : index
    %100 = vector.load %arg3[%c0_100, %c0_101] : memref<8x1024xf32, #tpu.memory_space<vmem>>, vector<8x256xf32>
    %c0_102 = arith.constant 0 : index
    %c0_103 = arith.constant 0 : index
    %101 = vector.load %arg6[%c0_102, %c0_103] : memref<256x1024xf32, #tpu.memory_space<vmem>>, vector<256x1024xf32>
    %cst_104 = arith.constant dense<0.000000e+00> : vector<8x1024xf32>
    %102 = tpu.matmul %100, %101, %cst_104 {dimension_numbers = #tpu.dot_dimension_numbers<[1], [0], [0], [1], [0, 0, 1, 1], [], []>} : vector<8x256xf32>, vector<256x1024xf32>, vector<8x1024xf32> -> vector<8x1024xf32>
    %103 = arith.addf %3, %102 : vector<8x1024xf32>
    %c0_105 = arith.constant 0 : index
    %c0_106 = arith.constant 0 : index
    %c4096 = arith.constant 4096 : index
    %104 = vector.load %arg2[%c0_105, %c0_106, %c4096] : memref<1x8x17344xf32, #tpu.memory_space<vmem>>, vector<1x8x1024xf32>
    %105 = vector.shape_cast %104 : vector<1x8x1024xf32> to vector<8x1024xf32>
    %c0_107 = arith.constant 0 : index
    %c0_108 = arith.constant 0 : index
    %106 = vector.load %arg6[%c0_107, %c0_108] : memref<256x1024xf32, #tpu.memory_space<vmem>>, vector<8x1024xf32>
    tpu.vector_store %arg6[%c0_107, %c0_108], %105 {strides = array<i32>} : memref<256x1024xf32, #tpu.memory_space<vmem>>, vector<8x1024xf32>,
    %c0_109 = arith.constant 0 : index
    %c0_110 = arith.constant 0 : index
    %c4224 = arith.constant 4224 : index
    %107 = vector.load %arg2[%c0_109, %c0_110, %c4224] : memref<1x8x17344xf32, #tpu.memory_space<vmem>>, vector<1x8x1024xf32>
    %108 = vector.shape_cast %107 : vector<1x8x1024xf32> to vector<8x1024xf32>
    %c8_111 = arith.constant 8 : index
    %c0_112 = arith.constant 0 : index
    %109 = vector.load %arg6[%c8_111, %c0_112] : memref<256x1024xf32, #tpu.memory_space<vmem>>, vector<8x1024xf32>
    tpu.vector_store %arg6[%c8_111, %c0_112], %108 {strides = array<i32>} : memref<256x1024xf32, #tpu.memory_space<vmem>>, vector<8x1024xf32>,
    %c0_113 = arith.constant 0 : index
    %c0_114 = arith.constant 0 : index
    %c4352 = arith.constant 4352 : index
    %110 = vector.load %arg2[%c0_113, %c0_114, %c4352] : memref<1x8x17344xf32, #tpu.memory_space<vmem>>, vector<1x8x1024xf32>
    %111 = vector.shape_cast %110 : vector<1x8x1024xf32> to vector<8x1024xf32>
    %c16_115 = arith.constant 16 : index
    %c0_116 = arith.constant 0 : index
    %112 = vector.load %arg6[%c16_115, %c0_116] : memref<256x1024xf32, #tpu.memory_space<vmem>>, vector<8x1024xf32>
    tpu.vector_store %arg6[%c16_115, %c0_116], %111 {strides = array<i32>} : memref<256x1024xf32, #tpu.memory_space<vmem>>, vector<8x1024xf32>,
    %c0_117 = arith.constant 0 : index
    %c0_118 = arith.constant 0 : index
    %c4480 = arith.constant 4480 : index
    %113 = vector.load %arg2[%c0_117, %c0_118, %c4480] : memref<1x8x17344xf32, #tpu.memory_space<vmem>>, vector<1x8x1024xf32>
    %114 = vector.shape_cast %113 : vector<1x8x1024xf32> to vector<8x1024xf32>
    %c24_119 = arith.constant 24 : index
    %c0_120 = arith.constant 0 : index
    %115 = vector.load %arg6[%c24_119, %c0_120] : memref<256x1024xf32, #tpu.memory_space<vmem>>, vector<8x1024xf32>
    tpu.vector_store %arg6[%c24_119, %c0_120], %114 {strides = array<i32>} : memref<256x1024xf32, #tpu.memory_space<vmem>>, vector<8x1024xf32>,
    %c0_121 = arith.constant 0 : index
    %c0_122 = arith.constant 0 : index
    %c4608 = arith.constant 4608 : index
    %116 = vector.load %arg2[%c0_121, %c0_122, %c4608] : memref<1x8x17344xf32, #tpu.memory_space<vmem>>, vector<1x8x1024xf32>
    %117 = vector.shape_cast %116 : vector<1x8x1024xf32> to vector<8x1024xf32>
    %c32_123 = arith.constant 32 : index
    %c0_124 = arith.constant 0 : index
    %118 = vector.load %arg6[%c32_123, %c0_124] : memref<256x1024xf32, #tpu.memory_space<vmem>>, vector<8x1024xf32>
    tpu.vector_store %arg6[%c32_123, %c0_124], %117 {strides = array<i32>} : memref<256x1024xf32, #tpu.memory_space<vmem>>, vector<8x1024xf32>,
    %c0_125 = arith.constant 0 : index
    %c0_126 = arith.constant 0 : index
    %c4736 = arith.constant 4736 : index
    %119 = vector.load %arg2[%c0_125, %c0_126, %c4736] : memref<1x8x17344xf32, #tpu.memory_space<vmem>>, vector<1x8x1024xf32>
    %120 = vector.shape_cast %119 : vector<1x8x1024xf32> to vector<8x1024xf32>
    %c40_127 = arith.constant 40 : index
    %c0_128 = arith.constant 0 : index
    %121 = vector.load %arg6[%c40_127, %c0_128] : memref<256x1024xf32, #tpu.memory_space<vmem>>, vector<8x1024xf32>
    tpu.vector_store %arg6[%c40_127, %c0_128], %120 {strides = array<i32>} : memref<256x1024xf32, #tpu.memory_space<vmem>>, vector<8x1024xf32>,
    %c0_129 = arith.constant 0 : index
    %c0_130 = arith.constant 0 : index
    %c4864 = arith.constant 4864 : index
    %122 = vector.load %arg2[%c0_129, %c0_130, %c4864] : memref<1x8x17344xf32, #tpu.memory_space<vmem>>, vector<1x8x1024xf32>
    %123 = vector.shape_cast %122 : vector<1x8x1024xf32> to vector<8x1024xf32>
    %c48_131 = arith.constant 48 : index
    %c0_132 = arith.constant 0 : index
    %124 = vector.load %arg6[%c48_131, %c0_132] : memref<256x1024xf32, #tpu.memory_space<vmem>>, vector<8x1024xf32>
    tpu.vector_store %arg6[%c48_131, %c0_132], %123 {strides = array<i32>} : memref<256x1024xf32, #tpu.memory_space<vmem>>, vector<8x1024xf32>,
    %c0_133 = arith.constant 0 : index
    %c0_134 = arith.constant 0 : index
    %c4992 = arith.constant 4992 : index
    %125 = vector.load %arg2[%c0_133, %c0_134, %c4992] : memref<1x8x17344xf32, #tpu.memory_space<vmem>>, vector<1x8x1024xf32>
    %126 = vector.shape_cast %125 : vector<1x8x1024xf32> to vector<8x1024xf32>
    %c56_135 = arith.constant 56 : index
    %c0_136 = arith.constant 0 : index
    %127 = vector.load %arg6[%c56_135, %c0_136] : memref<256x1024xf32, #tpu.memory_space<vmem>>, vector<8x1024xf32>
    tpu.vector_store %arg6[%c56_135, %c0_136], %126 {strides = array<i32>} : memref<256x1024xf32, #tpu.memory_space<vmem>>, vector<8x1024xf32>,
    %c0_137 = arith.constant 0 : index
    %c0_138 = arith.constant 0 : index
    %c5120 = arith.constant 5120 : index
    %128 = vector.load %arg2[%c0_137, %c0_138, %c5120] : memref<1x8x17344xf32, #tpu.memory_space<vmem>>, vector<1x8x1024xf32>
    %129 = vector.shape_cast %128 : vector<1x8x1024xf32> to vector<8x1024xf32>
    %c64_139 = arith.constant 64 : index
    %c0_140 = arith.constant 0 : index
    %130 = vector.load %arg6[%c64_139, %c0_140] : memref<256x1024xf32, #tpu.memory_space<vmem>>, vector<8x1024xf32>
    tpu.vector_store %arg6[%c64_139, %c0_140], %129 {strides = array<i32>} : memref<256x1024xf32, #tpu.memory_space<vmem>>, vector<8x1024xf32>,
    %c0_141 = arith.constant 0 : index
    %c0_142 = arith.constant 0 : index
    %c5248 = arith.constant 5248 : index
    %131 = vector.load %arg2[%c0_141, %c0_142, %c5248] : memref<1x8x17344xf32, #tpu.memory_space<vmem>>, vector<1x8x1024xf32>
    %132 = vector.shape_cast %131 : vector<1x8x1024xf32> to vector<8x1024xf32>
    %c72_143 = arith.constant 72 : index
    %c0_144 = arith.constant 0 : index
    %133 = vector.load %arg6[%c72_143, %c0_144] : memref<256x1024xf32, #tpu.memory_space<vmem>>, vector<8x1024xf32>
    tpu.vector_store %arg6[%c72_143, %c0_144], %132 {strides = array<i32>} : memref<256x1024xf32, #tpu.memory_space<vmem>>, vector<8x1024xf32>,
    %c0_145 = arith.constant 0 : index
    %c0_146 = arith.constant 0 : index
    %c5376 = arith.constant 5376 : index
    %134 = vector.load %arg2[%c0_145, %c0_146, %c5376] : memref<1x8x17344xf32, #tpu.memory_space<vmem>>, vector<1x8x1024xf32>
    %135 = vector.shape_cast %134 : vector<1x8x1024xf32> to vector<8x1024xf32>
    %c80_147 = arith.constant 80 : index
    %c0_148 = arith.constant 0 : index
    %136 = vector.load %arg6[%c80_147, %c0_148] : memref<256x1024xf32, #tpu.memory_space<vmem>>, vector<8x1024xf32>
    tpu.vector_store %arg6[%c80_147, %c0_148], %135 {strides = array<i32>} : memref<256x1024xf32, #tpu.memory_space<vmem>>, vector<8x1024xf32>,
    %c0_149 = arith.constant 0 : index
    %c0_150 = arith.constant 0 : index
    %c5504 = arith.constant 5504 : index
    %137 = vector.load %arg2[%c0_149, %c0_150, %c5504] : memref<1x8x17344xf32, #tpu.memory_space<vmem>>, vector<1x8x1024xf32>
    %138 = vector.shape_cast %137 : vector<1x8x1024xf32> to vector<8x1024xf32>
    %c88_151 = arith.constant 88 : index
    %c0_152 = arith.constant 0 : index
    %139 = vector.load %arg6[%c88_151, %c0_152] : memref<256x1024xf32, #tpu.memory_space<vmem>>, vector<8x1024xf32>
    tpu.vector_store %arg6[%c88_151, %c0_152], %138 {strides = array<i32>} : memref<256x1024xf32, #tpu.memory_space<vmem>>, vector<8x1024xf32>,
    %c0_153 = arith.constant 0 : index
    %c0_154 = arith.constant 0 : index
    %c5632 = arith.constant 5632 : index
    %140 = vector.load %arg2[%c0_153, %c0_154, %c5632] : memref<1x8x17344xf32, #tpu.memory_space<vmem>>, vector<1x8x1024xf32>
    %141 = vector.shape_cast %140 : vector<1x8x1024xf32> to vector<8x1024xf32>
    %c96_155 = arith.constant 96 : index
    %c0_156 = arith.constant 0 : index
    %142 = vector.load %arg6[%c96_155, %c0_156] : memref<256x1024xf32, #tpu.memory_space<vmem>>, vector<8x1024xf32>
    tpu.vector_store %arg6[%c96_155, %c0_156], %141 {strides = array<i32>} : memref<256x1024xf32, #tpu.memory_space<vmem>>, vector<8x1024xf32>,
    %c0_157 = arith.constant 0 : index
    %c0_158 = arith.constant 0 : index
    %c5760 = arith.constant 5760 : index
    %143 = vector.load %arg2[%c0_157, %c0_158, %c5760] : memref<1x8x17344xf32, #tpu.memory_space<vmem>>, vector<1x8x1024xf32>
    %144 = vector.shape_cast %143 : vector<1x8x1024xf32> to vector<8x1024xf32>
    %c104_159 = arith.constant 104 : index
    %c0_160 = arith.constant 0 : index
    %145 = vector.load %arg6[%c104_159, %c0_160] : memref<256x1024xf32, #tpu.memory_space<vmem>>, vector<8x1024xf32>
    tpu.vector_store %arg6[%c104_159, %c0_160], %144 {strides = array<i32>} : memref<256x1024xf32, #tpu.memory_space<vmem>>, vector<8x1024xf32>,
    %c0_161 = arith.constant 0 : index
    %c0_162 = arith.constant 0 : index
    %c5888 = arith.constant 5888 : index
    %146 = vector.load %arg2[%c0_161, %c0_162, %c5888] : memref<1x8x17344xf32, #tpu.memory_space<vmem>>, vector<1x8x1024xf32>
    %147 = vector.shape_cast %146 : vector<1x8x1024xf32> to vector<8x1024xf32>
    %c112_163 = arith.constant 112 : index
    %c0_164 = arith.constant 0 : index
    %148 = vector.load %arg6[%c112_163, %c0_164] : memref<256x1024xf32, #tpu.memory_space<vmem>>, vector<8x1024xf32>
    tpu.vector_store %arg6[%c112_163, %c0_164], %147 {strides = array<i32>} : memref<256x1024xf32, #tpu.memory_space<vmem>>, vector<8x1024xf32>,
    %c0_165 = arith.constant 0 : index
    %c0_166 = arith.constant 0 : index
    %c6016 = arith.constant 6016 : index
    %149 = vector.load %arg2[%c0_165, %c0_166, %c6016] : memref<1x8x17344xf32, #tpu.memory_space<vmem>>, vector<1x8x1024xf32>
    %150 = vector.shape_cast %149 : vector<1x8x1024xf32> to vector<8x1024xf32>
    %c120_167 = arith.constant 120 : index
    %c0_168 = arith.constant 0 : index
    %151 = vector.load %arg6[%c120_167, %c0_168] : memref<256x1024xf32, #tpu.memory_space<vmem>>, vector<8x1024xf32>
    tpu.vector_store %arg6[%c120_167, %c0_168], %150 {strides = array<i32>} : memref<256x1024xf32, #tpu.memory_space<vmem>>, vector<8x1024xf32>,
    %c0_169 = arith.constant 0 : index
    %c0_170 = arith.constant 0 : index
    %c6144 = arith.constant 6144 : index
    %152 = vector.load %arg2[%c0_169, %c0_170, %c6144] : memref<1x8x17344xf32, #tpu.memory_space<vmem>>, vector<1x8x1024xf32>
    %153 = vector.shape_cast %152 : vector<1x8x1024xf32> to vector<8x1024xf32>
    %c128_171 = arith.constant 128 : index
    %c0_172 = arith.constant 0 : index
    %154 = vector.load %arg6[%c128_171, %c0_172] : memref<256x1024xf32, #tpu.memory_space<vmem>>, vector<8x1024xf32>
    tpu.vector_store %arg6[%c128_171, %c0_172], %153 {strides = array<i32>} : memref<256x1024xf32, #tpu.memory_space<vmem>>, vector<8x1024xf32>,
    %c0_173 = arith.constant 0 : index
    %c0_174 = arith.constant 0 : index
    %c6272 = arith.constant 6272 : index
    %155 = vector.load %arg2[%c0_173, %c0_174, %c6272] : memref<1x8x17344xf32, #tpu.memory_space<vmem>>, vector<1x8x1024xf32>
    %156 = vector.shape_cast %155 : vector<1x8x1024xf32> to vector<8x1024xf32>
    %c136_175 = arith.constant 136 : index
    %c0_176 = arith.constant 0 : index
    %157 = vector.load %arg6[%c136_175, %c0_176] : memref<256x1024xf32, #tpu.memory_space<vmem>>, vector<8x1024xf32>
    tpu.vector_store %arg6[%c136_175, %c0_176], %156 {strides = array<i32>} : memref<256x1024xf32, #tpu.memory_space<vmem>>, vector<8x1024xf32>,
    %c0_177 = arith.constant 0 : index
    %c0_178 = arith.constant 0 : index
    %c6400 = arith.constant 6400 : index
    %158 = vector.load %arg2[%c0_177, %c0_178, %c6400] : memref<1x8x17344xf32, #tpu.memory_space<vmem>>, vector<1x8x1024xf32>
    %159 = vector.shape_cast %158 : vector<1x8x1024xf32> to vector<8x1024xf32>
    %c144_179 = arith.constant 144 : index
    %c0_180 = arith.constant 0 : index
    %160 = vector.load %arg6[%c144_179, %c0_180] : memref<256x1024xf32, #tpu.memory_space<vmem>>, vector<8x1024xf32>
    tpu.vector_store %arg6[%c144_179, %c0_180], %159 {strides = array<i32>} : memref<256x1024xf32, #tpu.memory_space<vmem>>, vector<8x1024xf32>,
    %c0_181 = arith.constant 0 : index
    %c0_182 = arith.constant 0 : index
    %c6528 = arith.constant 6528 : index
    %161 = vector.load %arg2[%c0_181, %c0_182, %c6528] : memref<1x8x17344xf32, #tpu.memory_space<vmem>>, vector<1x8x1024xf32>
    %162 = vector.shape_cast %161 : vector<1x8x1024xf32> to vector<8x1024xf32>
    %c152_183 = arith.constant 152 : index
    %c0_184 = arith.constant 0 : index
    %163 = vector.load %arg6[%c152_183, %c0_184] : memref<256x1024xf32, #tpu.memory_space<vmem>>, vector<8x1024xf32>
    tpu.vector_store %arg6[%c152_183, %c0_184], %162 {strides = array<i32>} : memref<256x1024xf32, #tpu.memory_space<vmem>>, vector<8x1024xf32>,
    %c0_185 = arith.constant 0 : index
    %c0_186 = arith.constant 0 : index
    %c6656 = arith.constant 6656 : index
    %164 = vector.load %arg2[%c0_185, %c0_186, %c6656] : memref<1x8x17344xf32, #tpu.memory_space<vmem>>, vector<1x8x1024xf32>
    %165 = vector.shape_cast %164 : vector<1x8x1024xf32> to vector<8x1024xf32>
    %c160_187 = arith.constant 160 : index
    %c0_188 = arith.constant 0 : index
    %166 = vector.load %arg6[%c160_187, %c0_188] : memref<256x1024xf32, #tpu.memory_space<vmem>>, vector<8x1024xf32>
    tpu.vector_store %arg6[%c160_187, %c0_188], %165 {strides = array<i32>} : memref<256x1024xf32, #tpu.memory_space<vmem>>, vector<8x1024xf32>,
    %c0_189 = arith.constant 0 : index
    %c0_190 = arith.constant 0 : index
    %c6784 = arith.constant 6784 : index
    %167 = vector.load %arg2[%c0_189, %c0_190, %c6784] : memref<1x8x17344xf32, #tpu.memory_space<vmem>>, vector<1x8x1024xf32>
    %168 = vector.shape_cast %167 : vector<1x8x1024xf32> to vector<8x1024xf32>
    %c168_191 = arith.constant 168 : index
    %c0_192 = arith.constant 0 : index
    %169 = vector.load %arg6[%c168_191, %c0_192] : memref<256x1024xf32, #tpu.memory_space<vmem>>, vector<8x1024xf32>
    tpu.vector_store %arg6[%c168_191, %c0_192], %168 {strides = array<i32>} : memref<256x1024xf32, #tpu.memory_space<vmem>>, vector<8x1024xf32>,
    %c0_193 = arith.constant 0 : index
    %c0_194 = arith.constant 0 : index
    %c6912 = arith.constant 6912 : index
    %170 = vector.load %arg2[%c0_193, %c0_194, %c6912] : memref<1x8x17344xf32, #tpu.memory_space<vmem>>, vector<1x8x1024xf32>
    %171 = vector.shape_cast %170 : vector<1x8x1024xf32> to vector<8x1024xf32>
    %c176_195 = arith.constant 176 : index
    %c0_196 = arith.constant 0 : index
    %172 = vector.load %arg6[%c176_195, %c0_196] : memref<256x1024xf32, #tpu.memory_space<vmem>>, vector<8x1024xf32>
    tpu.vector_store %arg6[%c176_195, %c0_196], %171 {strides = array<i32>} : memref<256x1024xf32, #tpu.memory_space<vmem>>, vector<8x1024xf32>,
    %c0_197 = arith.constant 0 : index
    %c0_198 = arith.constant 0 : index
    %c7040 = arith.constant 7040 : index
    %173 = vector.load %arg2[%c0_197, %c0_198, %c7040] : memref<1x8x17344xf32, #tpu.memory_space<vmem>>, vector<1x8x1024xf32>
    %174 = vector.shape_cast %173 : vector<1x8x1024xf32> to vector<8x1024xf32>
    %c184_199 = arith.constant 184 : index
    %c0_200 = arith.constant 0 : index
    %175 = vector.load %arg6[%c184_199, %c0_200] : memref<256x1024xf32, #tpu.memory_space<vmem>>, vector<8x1024xf32>
    tpu.vector_store %arg6[%c184_199, %c0_200], %174 {strides = array<i32>} : memref<256x1024xf32, #tpu.memory_space<vmem>>, vector<8x1024xf32>,
    %c0_201 = arith.constant 0 : index
    %c0_202 = arith.constant 0 : index
    %c7168 = arith.constant 7168 : index
    %176 = vector.load %arg2[%c0_201, %c0_202, %c7168] : memref<1x8x17344xf32, #tpu.memory_space<vmem>>, vector<1x8x1024xf32>
    %177 = vector.shape_cast %176 : vector<1x8x1024xf32> to vector<8x1024xf32>
    %c192_203 = arith.constant 192 : index
    %c0_204 = arith.constant 0 : index
    %178 = vector.load %arg6[%c192_203, %c0_204] : memref<256x1024xf32, #tpu.memory_space<vmem>>, vector<8x1024xf32>
    tpu.vector_store %arg6[%c192_203, %c0_204], %177 {strides = array<i32>} : memref<256x1024xf32, #tpu.memory_space<vmem>>, vector<8x1024xf32>,
    %c0_205 = arith.constant 0 : index
    %c0_206 = arith.constant 0 : index
    %c7296 = arith.constant 7296 : index
    %179 = vector.load %arg2[%c0_205, %c0_206, %c7296] : memref<1x8x17344xf32, #tpu.memory_space<vmem>>, vector<1x8x1024xf32>
    %180 = vector.shape_cast %179 : vector<1x8x1024xf32> to vector<8x1024xf32>
    %c200_207 = arith.constant 200 : index
    %c0_208 = arith.constant 0 : index
    %181 = vector.load %arg6[%c200_207, %c0_208] : memref<256x1024xf32, #tpu.memory_space<vmem>>, vector<8x1024xf32>
    tpu.vector_store %arg6[%c200_207, %c0_208], %180 {strides = array<i32>} : memref<256x1024xf32, #tpu.memory_space<vmem>>, vector<8x1024xf32>,
    %c0_209 = arith.constant 0 : index
    %c0_210 = arith.constant 0 : index
    %c7424 = arith.constant 7424 : index
    %182 = vector.load %arg2[%c0_209, %c0_210, %c7424] : memref<1x8x17344xf32, #tpu.memory_space<vmem>>, vector<1x8x1024xf32>
    %183 = vector.shape_cast %182 : vector<1x8x1024xf32> to vector<8x1024xf32>
    %c208_211 = arith.constant 208 : index
    %c0_212 = arith.constant 0 : index
    %184 = vector.load %arg6[%c208_211, %c0_212] : memref<256x1024xf32, #tpu.memory_space<vmem>>, vector<8x1024xf32>
    tpu.vector_store %arg6[%c208_211, %c0_212], %183 {strides = array<i32>} : memref<256x1024xf32, #tpu.memory_space<vmem>>, vector<8x1024xf32>,
    %c0_213 = arith.constant 0 : index
    %c0_214 = arith.constant 0 : index
    %c7552 = arith.constant 7552 : index
    %185 = vector.load %arg2[%c0_213, %c0_214, %c7552] : memref<1x8x17344xf32, #tpu.memory_space<vmem>>, vector<1x8x1024xf32>
    %186 = vector.shape_cast %185 : vector<1x8x1024xf32> to vector<8x1024xf32>
    %c216_215 = arith.constant 216 : index
    %c0_216 = arith.constant 0 : index
    %187 = vector.load %arg6[%c216_215, %c0_216] : memref<256x1024xf32, #tpu.memory_space<vmem>>, vector<8x1024xf32>
    tpu.vector_store %arg6[%c216_215, %c0_216], %186 {strides = array<i32>} : memref<256x1024xf32, #tpu.memory_space<vmem>>, vector<8x1024xf32>,
    %c0_217 = arith.constant 0 : index
    %c0_218 = arith.constant 0 : index
    %c7680 = arith.constant 7680 : index
    %188 = vector.load %arg2[%c0_217, %c0_218, %c7680] : memref<1x8x17344xf32, #tpu.memory_space<vmem>>, vector<1x8x1024xf32>
    %189 = vector.shape_cast %188 : vector<1x8x1024xf32> to vector<8x1024xf32>
    %c224_219 = arith.constant 224 : index
    %c0_220 = arith.constant 0 : index
    %190 = vector.load %arg6[%c224_219, %c0_220] : memref<256x1024xf32, #tpu.memory_space<vmem>>, vector<8x1024xf32>
    tpu.vector_store %arg6[%c224_219, %c0_220], %189 {strides = array<i32>} : memref<256x1024xf32, #tpu.memory_space<vmem>>, vector<8x1024xf32>,
    %c0_221 = arith.constant 0 : index
    %c0_222 = arith.constant 0 : index
    %c7808 = arith.constant 7808 : index
    %191 = vector.load %arg2[%c0_221, %c0_222, %c7808] : memref<1x8x17344xf32, #tpu.memory_space<vmem>>, vector<1x8x1024xf32>
    %192 = vector.shape_cast %191 : vector<1x8x1024xf32> to vector<8x1024xf32>
    %c232_223 = arith.constant 232 : index
    %c0_224 = arith.constant 0 : index
    %193 = vector.load %arg6[%c232_223, %c0_224] : memref<256x1024xf32, #tpu.memory_space<vmem>>, vector<8x1024xf32>
    tpu.vector_store %arg6[%c232_223, %c0_224], %192 {strides = array<i32>} : memref<256x1024xf32, #tpu.memory_space<vmem>>, vector<8x1024xf32>,
    %c0_225 = arith.constant 0 : index
    %c0_226 = arith.constant 0 : index
    %c7936 = arith.constant 7936 : index
    %194 = vector.load %arg2[%c0_225, %c0_226, %c7936] : memref<1x8x17344xf32, #tpu.memory_space<vmem>>, vector<1x8x1024xf32>
    %195 = vector.shape_cast %194 : vector<1x8x1024xf32> to vector<8x1024xf32>
    %c240_227 = arith.constant 240 : index
    %c0_228 = arith.constant 0 : index
    %196 = vector.load %arg6[%c240_227, %c0_228] : memref<256x1024xf32, #tpu.memory_space<vmem>>, vector<8x1024xf32>
    tpu.vector_store %arg6[%c240_227, %c0_228], %195 {strides = array<i32>} : memref<256x1024xf32, #tpu.memory_space<vmem>>, vector<8x1024xf32>,
    %c0_229 = arith.constant 0 : index
    %c0_230 = arith.constant 0 : index
    %c8064 = arith.constant 8064 : index
    %197 = vector.load %arg2[%c0_229, %c0_230, %c8064] : memref<1x8x17344xf32, #tpu.memory_space<vmem>>, vector<1x8x1024xf32>
    %198 = vector.shape_cast %197 : vector<1x8x1024xf32> to vector<8x1024xf32>
    %c248_231 = arith.constant 248 : index
    %c0_232 = arith.constant 0 : index
    %199 = vector.load %arg6[%c248_231, %c0_232] : memref<256x1024xf32, #tpu.memory_space<vmem>>, vector<8x1024xf32>
    tpu.vector_store %arg6[%c248_231, %c0_232], %198 {strides = array<i32>} : memref<256x1024xf32, #tpu.memory_space<vmem>>, vector<8x1024xf32>,
    %c0_233 = arith.constant 0 : index
    %c256_234 = arith.constant 256 : index
    %200 = vector.load %arg3[%c0_233, %c256_234] : memref<8x1024xf32, #tpu.memory_space<vmem>>, vector<8x256xf32>
    %c0_235 = arith.constant 0 : index
    %c0_236 = arith.constant 0 : index
    %201 = vector.load %arg6[%c0_235, %c0_236] : memref<256x1024xf32, #tpu.memory_space<vmem>>, vector<256x1024xf32>
    %cst_237 = arith.constant dense<0.000000e+00> : vector<8x1024xf32>
    %202 = tpu.matmul %200, %201, %cst_237 {dimension_numbers = #tpu.dot_dimension_numbers<[1], [0], [0], [1], [0, 0, 1, 1], [], []>} : vector<8x256xf32>, vector<256x1024xf32>, vector<8x1024xf32> -> vector<8x1024xf32>
    %203 = arith.addf %103, %202 : vector<8x1024xf32>
    %c0_238 = arith.constant 0 : index
    %c0_239 = arith.constant 0 : index
    %c8192 = arith.constant 8192 : index
    %204 = vector.load %arg2[%c0_238, %c0_239, %c8192] : memref<1x8x17344xf32, #tpu.memory_space<vmem>>, vector<1x8x1024xf32>
    %205 = vector.shape_cast %204 : vector<1x8x1024xf32> to vector<8x1024xf32>
    %c0_240 = arith.constant 0 : index
    %c0_241 = arith.constant 0 : index
    %206 = vector.load %arg6[%c0_240, %c0_241] : memref<256x1024xf32, #tpu.memory_space<vmem>>, vector<8x1024xf32>
    tpu.vector_store %arg6[%c0_240, %c0_241], %205 {strides = array<i32>} : memref<256x1024xf32, #tpu.memory_space<vmem>>, vector<8x1024xf32>,
    %c0_242 = arith.constant 0 : index
    %c0_243 = arith.constant 0 : index
    %c8320 = arith.constant 8320 : index
    %207 = vector.load %arg2[%c0_242, %c0_243, %c8320] : memref<1x8x17344xf32, #tpu.memory_space<vmem>>, vector<1x8x1024xf32>
    %208 = vector.shape_cast %207 : vector<1x8x1024xf32> to vector<8x1024xf32>
    %c8_244 = arith.constant 8 : index
    %c0_245 = arith.constant 0 : index
    %209 = vector.load %arg6[%c8_244, %c0_245] : memref<256x1024xf32, #tpu.memory_space<vmem>>, vector<8x1024xf32>
    tpu.vector_store %arg6[%c8_244, %c0_245], %208 {strides = array<i32>} : memref<256x1024xf32, #tpu.memory_space<vmem>>, vector<8x1024xf32>,
    %c0_246 = arith.constant 0 : index
    %c0_247 = arith.constant 0 : index
    %c8448 = arith.constant 8448 : index
    %210 = vector.load %arg2[%c0_246, %c0_247, %c8448] : memref<1x8x17344xf32, #tpu.memory_space<vmem>>, vector<1x8x1024xf32>
    %211 = vector.shape_cast %210 : vector<1x8x1024xf32> to vector<8x1024xf32>
    %c16_248 = arith.constant 16 : index
    %c0_249 = arith.constant 0 : index
    %212 = vector.load %arg6[%c16_248, %c0_249] : memref<256x1024xf32, #tpu.memory_space<vmem>>, vector<8x1024xf32>
    tpu.vector_store %arg6[%c16_248, %c0_249], %211 {strides = array<i32>} : memref<256x1024xf32, #tpu.memory_space<vmem>>, vector<8x1024xf32>,
    %c0_250 = arith.constant 0 : index
    %c0_251 = arith.constant 0 : index
    %c8576 = arith.constant 8576 : index
    %213 = vector.load %arg2[%c0_250, %c0_251, %c8576] : memref<1x8x17344xf32, #tpu.memory_space<vmem>>, vector<1x8x1024xf32>
    %214 = vector.shape_cast %213 : vector<1x8x1024xf32> to vector<8x1024xf32>
    %c24_252 = arith.constant 24 : index
    %c0_253 = arith.constant 0 : index
    %215 = vector.load %arg6[%c24_252, %c0_253] : memref<256x1024xf32, #tpu.memory_space<vmem>>, vector<8x1024xf32>
    tpu.vector_store %arg6[%c24_252, %c0_253], %214 {strides = array<i32>} : memref<256x1024xf32, #tpu.memory_space<vmem>>, vector<8x1024xf32>,
    %c0_254 = arith.constant 0 : index
    %c0_255 = arith.constant 0 : index
    %c8704 = arith.constant 8704 : index
    %216 = vector.load %arg2[%c0_254, %c0_255, %c8704] : memref<1x8x17344xf32, #tpu.memory_space<vmem>>, vector<1x8x1024xf32>
    %217 = vector.shape_cast %216 : vector<1x8x1024xf32> to vector<8x1024xf32>
    %c32_256 = arith.constant 32 : index
    %c0_257 = arith.constant 0 : index
    %218 = vector.load %arg6[%c32_256, %c0_257] : memref<256x1024xf32, #tpu.memory_space<vmem>>, vector<8x1024xf32>
    tpu.vector_store %arg6[%c32_256, %c0_257], %217 {strides = array<i32>} : memref<256x1024xf32, #tpu.memory_space<vmem>>, vector<8x1024xf32>,
    %c0_258 = arith.constant 0 : index
    %c0_259 = arith.constant 0 : index
    %c8832 = arith.constant 8832 : index
    %219 = vector.load %arg2[%c0_258, %c0_259, %c8832] : memref<1x8x17344xf32, #tpu.memory_space<vmem>>, vector<1x8x1024xf32>
    %220 = vector.shape_cast %219 : vector<1x8x1024xf32> to vector<8x1024xf32>
    %c40_260 = arith.constant 40 : index
    %c0_261 = arith.constant 0 : index
    %221 = vector.load %arg6[%c40_260, %c0_261] : memref<256x1024xf32, #tpu.memory_space<vmem>>, vector<8x1024xf32>
    tpu.vector_store %arg6[%c40_260, %c0_261], %220 {strides = array<i32>} : memref<256x1024xf32, #tpu.memory_space<vmem>>, vector<8x1024xf32>,
    %c0_262 = arith.constant 0 : index
    %c0_263 = arith.constant 0 : index
    %c8960 = arith.constant 8960 : index
    %222 = vector.load %arg2[%c0_262, %c0_263, %c8960] : memref<1x8x17344xf32, #tpu.memory_space<vmem>>, vector<1x8x1024xf32>
    %223 = vector.shape_cast %222 : vector<1x8x1024xf32> to vector<8x1024xf32>
    %c48_264 = arith.constant 48 : index
    %c0_265 = arith.constant 0 : index
    %224 = vector.load %arg6[%c48_264, %c0_265] : memref<256x1024xf32, #tpu.memory_space<vmem>>, vector<8x1024xf32>
    tpu.vector_store %arg6[%c48_264, %c0_265], %223 {strides = array<i32>} : memref<256x1024xf32, #tpu.memory_space<vmem>>, vector<8x1024xf32>,
    %c0_266 = arith.constant 0 : index
    %c0_267 = arith.constant 0 : index
    %c9088 = arith.constant 9088 : index
    %225 = vector.load %arg2[%c0_266, %c0_267, %c9088] : memref<1x8x17344xf32, #tpu.memory_space<vmem>>, vector<1x8x1024xf32>
    %226 = vector.shape_cast %225 : vector<1x8x1024xf32> to vector<8x1024xf32>
    %c56_268 = arith.constant 56 : index
    %c0_269 = arith.constant 0 : index
    %227 = vector.load %arg6[%c56_268, %c0_269] : memref<256x1024xf32, #tpu.memory_space<vmem>>, vector<8x1024xf32>
    tpu.vector_store %arg6[%c56_268, %c0_269], %226 {strides = array<i32>} : memref<256x1024xf32, #tpu.memory_space<vmem>>, vector<8x1024xf32>,
    %c0_270 = arith.constant 0 : index
    %c0_271 = arith.constant 0 : index
    %c9216 = arith.constant 9216 : index
    %228 = vector.load %arg2[%c0_270, %c0_271, %c9216] : memref<1x8x17344xf32, #tpu.memory_space<vmem>>, vector<1x8x1024xf32>
    %229 = vector.shape_cast %228 : vector<1x8x1024xf32> to vector<8x1024xf32>
    %c64_272 = arith.constant 64 : index
    %c0_273 = arith.constant 0 : index
    %230 = vector.load %arg6[%c64_272, %c0_273] : memref<256x1024xf32, #tpu.memory_space<vmem>>, vector<8x1024xf32>
    tpu.vector_store %arg6[%c64_272, %c0_273], %229 {strides = array<i32>} : memref<256x1024xf32, #tpu.memory_space<vmem>>, vector<8x1024xf32>,
    %c0_274 = arith.constant 0 : index
    %c0_275 = arith.constant 0 : index
    %c9344 = arith.constant 9344 : index
    %231 = vector.load %arg2[%c0_274, %c0_275, %c9344] : memref<1x8x17344xf32, #tpu.memory_space<vmem>>, vector<1x8x1024xf32>
    %232 = vector.shape_cast %231 : vector<1x8x1024xf32> to vector<8x1024xf32>
    %c72_276 = arith.constant 72 : index
    %c0_277 = arith.constant 0 : index
    %233 = vector.load %arg6[%c72_276, %c0_277] : memref<256x1024xf32, #tpu.memory_space<vmem>>, vector<8x1024xf32>
    tpu.vector_store %arg6[%c72_276, %c0_277], %232 {strides = array<i32>} : memref<256x1024xf32, #tpu.memory_space<vmem>>, vector<8x1024xf32>,
    %c0_278 = arith.constant 0 : index
    %c0_279 = arith.constant 0 : index
    %c9472 = arith.constant 9472 : index
    %234 = vector.load %arg2[%c0_278, %c0_279, %c9472] : memref<1x8x17344xf32, #tpu.memory_space<vmem>>, vector<1x8x1024xf32>
    %235 = vector.shape_cast %234 : vector<1x8x1024xf32> to vector<8x1024xf32>
    %c80_280 = arith.constant 80 : index
    %c0_281 = arith.constant 0 : index
    %236 = vector.load %arg6[%c80_280, %c0_281] : memref<256x1024xf32, #tpu.memory_space<vmem>>, vector<8x1024xf32>
    tpu.vector_store %arg6[%c80_280, %c0_281], %235 {strides = array<i32>} : memref<256x1024xf32, #tpu.memory_space<vmem>>, vector<8x1024xf32>,
    %c0_282 = arith.constant 0 : index
    %c0_283 = arith.constant 0 : index
    %c9600 = arith.constant 9600 : index
    %237 = vector.load %arg2[%c0_282, %c0_283, %c9600] : memref<1x8x17344xf32, #tpu.memory_space<vmem>>, vector<1x8x1024xf32>
    %238 = vector.shape_cast %237 : vector<1x8x1024xf32> to vector<8x1024xf32>
    %c88_284 = arith.constant 88 : index
    %c0_285 = arith.constant 0 : index
    %239 = vector.load %arg6[%c88_284, %c0_285] : memref<256x1024xf32, #tpu.memory_space<vmem>>, vector<8x1024xf32>
    tpu.vector_store %arg6[%c88_284, %c0_285], %238 {strides = array<i32>} : memref<256x1024xf32, #tpu.memory_space<vmem>>, vector<8x1024xf32>,
    %c0_286 = arith.constant 0 : index
    %c0_287 = arith.constant 0 : index
    %c9728 = arith.constant 9728 : index
    %240 = vector.load %arg2[%c0_286, %c0_287, %c9728] : memref<1x8x17344xf32, #tpu.memory_space<vmem>>, vector<1x8x1024xf32>
    %241 = vector.shape_cast %240 : vector<1x8x1024xf32> to vector<8x1024xf32>
    %c96_288 = arith.constant 96 : index
    %c0_289 = arith.constant 0 : index
    %242 = vector.load %arg6[%c96_288, %c0_289] : memref<256x1024xf32, #tpu.memory_space<vmem>>, vector<8x1024xf32>
    tpu.vector_store %arg6[%c96_288, %c0_289], %241 {strides = array<i32>} : memref<256x1024xf32, #tpu.memory_space<vmem>>, vector<8x1024xf32>,
    %c0_290 = arith.constant 0 : index
    %c0_291 = arith.constant 0 : index
    %c9856 = arith.constant 9856 : index
    %243 = vector.load %arg2[%c0_290, %c0_291, %c9856] : memref<1x8x17344xf32, #tpu.memory_space<vmem>>, vector<1x8x1024xf32>
    %244 = vector.shape_cast %243 : vector<1x8x1024xf32> to vector<8x1024xf32>
    %c104_292 = arith.constant 104 : index
    %c0_293 = arith.constant 0 : index
    %245 = vector.load %arg6[%c104_292, %c0_293] : memref<256x1024xf32, #tpu.memory_space<vmem>>, vector<8x1024xf32>
    tpu.vector_store %arg6[%c104_292, %c0_293], %244 {strides = array<i32>} : memref<256x1024xf32, #tpu.memory_space<vmem>>, vector<8x1024xf32>,
    %c0_294 = arith.constant 0 : index
    %c0_295 = arith.constant 0 : index
    %c9984 = arith.constant 9984 : index
    %246 = vector.load %arg2[%c0_294, %c0_295, %c9984] : memref<1x8x17344xf32, #tpu.memory_space<vmem>>, vector<1x8x1024xf32>
    %247 = vector.shape_cast %246 : vector<1x8x1024xf32> to vector<8x1024xf32>
    %c112_296 = arith.constant 112 : index
    %c0_297 = arith.constant 0 : index
    %248 = vector.load %arg6[%c112_296, %c0_297] : memref<256x1024xf32, #tpu.memory_space<vmem>>, vector<8x1024xf32>
    tpu.vector_store %arg6[%c112_296, %c0_297], %247 {strides = array<i32>} : memref<256x1024xf32, #tpu.memory_space<vmem>>, vector<8x1024xf32>,
    %c0_298 = arith.constant 0 : index
    %c0_299 = arith.constant 0 : index
    %c10112 = arith.constant 10112 : index
    %249 = vector.load %arg2[%c0_298, %c0_299, %c10112] : memref<1x8x17344xf32, #tpu.memory_space<vmem>>, vector<1x8x1024xf32>
    %250 = vector.shape_cast %249 : vector<1x8x1024xf32> to vector<8x1024xf32>
    %c120_300 = arith.constant 120 : index
    %c0_301 = arith.constant 0 : index
    %251 = vector.load %arg6[%c120_300, %c0_301] : memref<256x1024xf32, #tpu.memory_space<vmem>>, vector<8x1024xf32>
    tpu.vector_store %arg6[%c120_300, %c0_301], %250 {strides = array<i32>} : memref<256x1024xf32, #tpu.memory_space<vmem>>, vector<8x1024xf32>,
    %c0_302 = arith.constant 0 : index
    %c0_303 = arith.constant 0 : index
    %c10240 = arith.constant 10240 : index
    %252 = vector.load %arg2[%c0_302, %c0_303, %c10240] : memref<1x8x17344xf32, #tpu.memory_space<vmem>>, vector<1x8x1024xf32>
    %253 = vector.shape_cast %252 : vector<1x8x1024xf32> to vector<8x1024xf32>
    %c128_304 = arith.constant 128 : index
    %c0_305 = arith.constant 0 : index
    %254 = vector.load %arg6[%c128_304, %c0_305] : memref<256x1024xf32, #tpu.memory_space<vmem>>, vector<8x1024xf32>
    tpu.vector_store %arg6[%c128_304, %c0_305], %253 {strides = array<i32>} : memref<256x1024xf32, #tpu.memory_space<vmem>>, vector<8x1024xf32>,
    %c0_306 = arith.constant 0 : index
    %c0_307 = arith.constant 0 : index
    %c10368 = arith.constant 10368 : index
    %255 = vector.load %arg2[%c0_306, %c0_307, %c10368] : memref<1x8x17344xf32, #tpu.memory_space<vmem>>, vector<1x8x1024xf32>
    %256 = vector.shape_cast %255 : vector<1x8x1024xf32> to vector<8x1024xf32>
    %c136_308 = arith.constant 136 : index
    %c0_309 = arith.constant 0 : index
    %257 = vector.load %arg6[%c136_308, %c0_309] : memref<256x1024xf32, #tpu.memory_space<vmem>>, vector<8x1024xf32>
    tpu.vector_store %arg6[%c136_308, %c0_309], %256 {strides = array<i32>} : memref<256x1024xf32, #tpu.memory_space<vmem>>, vector<8x1024xf32>,
    %c0_310 = arith.constant 0 : index
    %c0_311 = arith.constant 0 : index
    %c10496 = arith.constant 10496 : index
    %258 = vector.load %arg2[%c0_310, %c0_311, %c10496] : memref<1x8x17344xf32, #tpu.memory_space<vmem>>, vector<1x8x1024xf32>
    %259 = vector.shape_cast %258 : vector<1x8x1024xf32> to vector<8x1024xf32>
    %c144_312 = arith.constant 144 : index
    %c0_313 = arith.constant 0 : index
    %260 = vector.load %arg6[%c144_312, %c0_313] : memref<256x1024xf32, #tpu.memory_space<vmem>>, vector<8x1024xf32>
    tpu.vector_store %arg6[%c144_312, %c0_313], %259 {strides = array<i32>} : memref<256x1024xf32, #tpu.memory_space<vmem>>, vector<8x1024xf32>,
    %c0_314 = arith.constant 0 : index
    %c0_315 = arith.constant 0 : index
    %c10624 = arith.constant 10624 : index
    %261 = vector.load %arg2[%c0_314, %c0_315, %c10624] : memref<1x8x17344xf32, #tpu.memory_space<vmem>>, vector<1x8x1024xf32>
    %262 = vector.shape_cast %261 : vector<1x8x1024xf32> to vector<8x1024xf32>
    %c152_316 = arith.constant 152 : index
    %c0_317 = arith.constant 0 : index
    %263 = vector.load %arg6[%c152_316, %c0_317] : memref<256x1024xf32, #tpu.memory_space<vmem>>, vector<8x1024xf32>
    tpu.vector_store %arg6[%c152_316, %c0_317], %262 {strides = array<i32>} : memref<256x1024xf32, #tpu.memory_space<vmem>>, vector<8x1024xf32>,
    %c0_318 = arith.constant 0 : index
    %c0_319 = arith.constant 0 : index
    %c10752 = arith.constant 10752 : index
    %264 = vector.load %arg2[%c0_318, %c0_319, %c10752] : memref<1x8x17344xf32, #tpu.memory_space<vmem>>, vector<1x8x1024xf32>
    %265 = vector.shape_cast %264 : vector<1x8x1024xf32> to vector<8x1024xf32>
    %c160_320 = arith.constant 160 : index
    %c0_321 = arith.constant 0 : index
    %266 = vector.load %arg6[%c160_320, %c0_321] : memref<256x1024xf32, #tpu.memory_space<vmem>>, vector<8x1024xf32>
    tpu.vector_store %arg6[%c160_320, %c0_321], %265 {strides = array<i32>} : memref<256x1024xf32, #tpu.memory_space<vmem>>, vector<8x1024xf32>,
    %c0_322 = arith.constant 0 : index
    %c0_323 = arith.constant 0 : index
    %c10880 = arith.constant 10880 : index
    %267 = vector.load %arg2[%c0_322, %c0_323, %c10880] : memref<1x8x17344xf32, #tpu.memory_space<vmem>>, vector<1x8x1024xf32>
    %268 = vector.shape_cast %267 : vector<1x8x1024xf32> to vector<8x1024xf32>
    %c168_324 = arith.constant 168 : index
    %c0_325 = arith.constant 0 : index
    %269 = vector.load %arg6[%c168_324, %c0_325] : memref<256x1024xf32, #tpu.memory_space<vmem>>, vector<8x1024xf32>
    tpu.vector_store %arg6[%c168_324, %c0_325], %268 {strides = array<i32>} : memref<256x1024xf32, #tpu.memory_space<vmem>>, vector<8x1024xf32>,
    %c0_326 = arith.constant 0 : index
    %c0_327 = arith.constant 0 : index
    %c11008 = arith.constant 11008 : index
    %270 = vector.load %arg2[%c0_326, %c0_327, %c11008] : memref<1x8x17344xf32, #tpu.memory_space<vmem>>, vector<1x8x1024xf32>
    %271 = vector.shape_cast %270 : vector<1x8x1024xf32> to vector<8x1024xf32>
    %c176_328 = arith.constant 176 : index
    %c0_329 = arith.constant 0 : index
    %272 = vector.load %arg6[%c176_328, %c0_329] : memref<256x1024xf32, #tpu.memory_space<vmem>>, vector<8x1024xf32>
    tpu.vector_store %arg6[%c176_328, %c0_329], %271 {strides = array<i32>} : memref<256x1024xf32, #tpu.memory_space<vmem>>, vector<8x1024xf32>,
    %c0_330 = arith.constant 0 : index
    %c0_331 = arith.constant 0 : index
    %c11136 = arith.constant 11136 : index
    %273 = vector.load %arg2[%c0_330, %c0_331, %c11136] : memref<1x8x17344xf32, #tpu.memory_space<vmem>>, vector<1x8x1024xf32>
    %274 = vector.shape_cast %273 : vector<1x8x1024xf32> to vector<8x1024xf32>
    %c184_332 = arith.constant 184 : index
    %c0_333 = arith.constant 0 : index
    %275 = vector.load %arg6[%c184_332, %c0_333] : memref<256x1024xf32, #tpu.memory_space<vmem>>, vector<8x1024xf32>
    tpu.vector_store %arg6[%c184_332, %c0_333], %274 {strides = array<i32>} : memref<256x1024xf32, #tpu.memory_space<vmem>>, vector<8x1024xf32>,
    %c0_334 = arith.constant 0 : index
    %c0_335 = arith.constant 0 : index
    %c11264 = arith.constant 11264 : index
    %276 = vector.load %arg2[%c0_334, %c0_335, %c11264] : memref<1x8x17344xf32, #tpu.memory_space<vmem>>, vector<1x8x1024xf32>
    %277 = vector.shape_cast %276 : vector<1x8x1024xf32> to vector<8x1024xf32>
    %c192_336 = arith.constant 192 : index
    %c0_337 = arith.constant 0 : index
    %278 = vector.load %arg6[%c192_336, %c0_337] : memref<256x1024xf32, #tpu.memory_space<vmem>>, vector<8x1024xf32>
    tpu.vector_store %arg6[%c192_336, %c0_337], %277 {strides = array<i32>} : memref<256x1024xf32, #tpu.memory_space<vmem>>, vector<8x1024xf32>,
    %c0_338 = arith.constant 0 : index
    %c0_339 = arith.constant 0 : index
    %c11392 = arith.constant 11392 : index
    %279 = vector.load %arg2[%c0_338, %c0_339, %c11392] : memref<1x8x17344xf32, #tpu.memory_space<vmem>>, vector<1x8x1024xf32>
    %280 = vector.shape_cast %279 : vector<1x8x1024xf32> to vector<8x1024xf32>
    %c200_340 = arith.constant 200 : index
    %c0_341 = arith.constant 0 : index
    %281 = vector.load %arg6[%c200_340, %c0_341] : memref<256x1024xf32, #tpu.memory_space<vmem>>, vector<8x1024xf32>
    tpu.vector_store %arg6[%c200_340, %c0_341], %280 {strides = array<i32>} : memref<256x1024xf32, #tpu.memory_space<vmem>>, vector<8x1024xf32>,
    %c0_342 = arith.constant 0 : index
    %c0_343 = arith.constant 0 : index
    %c11520 = arith.constant 11520 : index
    %282 = vector.load %arg2[%c0_342, %c0_343, %c11520] : memref<1x8x17344xf32, #tpu.memory_space<vmem>>, vector<1x8x1024xf32>
    %283 = vector.shape_cast %282 : vector<1x8x1024xf32> to vector<8x1024xf32>
    %c208_344 = arith.constant 208 : index
    %c0_345 = arith.constant 0 : index
    %284 = vector.load %arg6[%c208_344, %c0_345] : memref<256x1024xf32, #tpu.memory_space<vmem>>, vector<8x1024xf32>
    tpu.vector_store %arg6[%c208_344, %c0_345], %283 {strides = array<i32>} : memref<256x1024xf32, #tpu.memory_space<vmem>>, vector<8x1024xf32>,
    %c0_346 = arith.constant 0 : index
    %c0_347 = arith.constant 0 : index
    %c11648 = arith.constant 11648 : index
    %285 = vector.load %arg2[%c0_346, %c0_347, %c11648] : memref<1x8x17344xf32, #tpu.memory_space<vmem>>, vector<1x8x1024xf32>
    %286 = vector.shape_cast %285 : vector<1x8x1024xf32> to vector<8x1024xf32>
    %c216_348 = arith.constant 216 : index
    %c0_349 = arith.constant 0 : index
    %287 = vector.load %arg6[%c216_348, %c0_349] : memref<256x1024xf32, #tpu.memory_space<vmem>>, vector<8x1024xf32>
    tpu.vector_store %arg6[%c216_348, %c0_349], %286 {strides = array<i32>} : memref<256x1024xf32, #tpu.memory_space<vmem>>, vector<8x1024xf32>,
    %c0_350 = arith.constant 0 : index
    %c0_351 = arith.constant 0 : index
    %c11776 = arith.constant 11776 : index
    %288 = vector.load %arg2[%c0_350, %c0_351, %c11776] : memref<1x8x17344xf32, #tpu.memory_space<vmem>>, vector<1x8x1024xf32>
    %289 = vector.shape_cast %288 : vector<1x8x1024xf32> to vector<8x1024xf32>
    %c224_352 = arith.constant 224 : index
    %c0_353 = arith.constant 0 : index
    %290 = vector.load %arg6[%c224_352, %c0_353] : memref<256x1024xf32, #tpu.memory_space<vmem>>, vector<8x1024xf32>
    tpu.vector_store %arg6[%c224_352, %c0_353], %289 {strides = array<i32>} : memref<256x1024xf32, #tpu.memory_space<vmem>>, vector<8x1024xf32>,
    %c0_354 = arith.constant 0 : index
    %c0_355 = arith.constant 0 : index
    %c11904 = arith.constant 11904 : index
    %291 = vector.load %arg2[%c0_354, %c0_355, %c11904] : memref<1x8x17344xf32, #tpu.memory_space<vmem>>, vector<1x8x1024xf32>
    %292 = vector.shape_cast %291 : vector<1x8x1024xf32> to vector<8x1024xf32>
    %c232_356 = arith.constant 232 : index
    %c0_357 = arith.constant 0 : index
    %293 = vector.load %arg6[%c232_356, %c0_357] : memref<256x1024xf32, #tpu.memory_space<vmem>>, vector<8x1024xf32>
    tpu.vector_store %arg6[%c232_356, %c0_357], %292 {strides = array<i32>} : memref<256x1024xf32, #tpu.memory_space<vmem>>, vector<8x1024xf32>,
    %c0_358 = arith.constant 0 : index
    %c0_359 = arith.constant 0 : index
    %c12032 = arith.constant 12032 : index
    %294 = vector.load %arg2[%c0_358, %c0_359, %c12032] : memref<1x8x17344xf32, #tpu.memory_space<vmem>>, vector<1x8x1024xf32>
    %295 = vector.shape_cast %294 : vector<1x8x1024xf32> to vector<8x1024xf32>
    %c240_360 = arith.constant 240 : index
    %c0_361 = arith.constant 0 : index
    %296 = vector.load %arg6[%c240_360, %c0_361] : memref<256x1024xf32, #tpu.memory_space<vmem>>, vector<8x1024xf32>
    tpu.vector_store %arg6[%c240_360, %c0_361], %295 {strides = array<i32>} : memref<256x1024xf32, #tpu.memory_space<vmem>>, vector<8x1024xf32>,
    %c0_362 = arith.constant 0 : index
    %c0_363 = arith.constant 0 : index
    %c12160 = arith.constant 12160 : index
    %297 = vector.load %arg2[%c0_362, %c0_363, %c12160] : memref<1x8x17344xf32, #tpu.memory_space<vmem>>, vector<1x8x1024xf32>
    %298 = vector.shape_cast %297 : vector<1x8x1024xf32> to vector<8x1024xf32>
    %c248_364 = arith.constant 248 : index
    %c0_365 = arith.constant 0 : index
    %299 = vector.load %arg6[%c248_364, %c0_365] : memref<256x1024xf32, #tpu.memory_space<vmem>>, vector<8x1024xf32>
    tpu.vector_store %arg6[%c248_364, %c0_365], %298 {strides = array<i32>} : memref<256x1024xf32, #tpu.memory_space<vmem>>, vector<8x1024xf32>,
    %c0_366 = arith.constant 0 : index
    %c512_367 = arith.constant 512 : index
    %300 = vector.load %arg3[%c0_366, %c512_367] : memref<8x1024xf32, #tpu.memory_space<vmem>>, vector<8x256xf32>
    %c0_368 = arith.constant 0 : index
    %c0_369 = arith.constant 0 : index
    %301 = vector.load %arg6[%c0_368, %c0_369] : memref<256x1024xf32, #tpu.memory_space<vmem>>, vector<256x1024xf32>
    %cst_370 = arith.constant dense<0.000000e+00> : vector<8x1024xf32>
    %302 = tpu.matmul %300, %301, %cst_370 {dimension_numbers = #tpu.dot_dimension_numbers<[1], [0], [0], [1], [0, 0, 1, 1], [], []>} : vector<8x256xf32>, vector<256x1024xf32>, vector<8x1024xf32> -> vector<8x1024xf32>
    %303 = arith.addf %203, %302 : vector<8x1024xf32>
    %c0_371 = arith.constant 0 : index
    %c0_372 = arith.constant 0 : index
    %c12288 = arith.constant 12288 : index
    %304 = vector.load %arg2[%c0_371, %c0_372, %c12288] : memref<1x8x17344xf32, #tpu.memory_space<vmem>>, vector<1x8x1024xf32>
    %305 = vector.shape_cast %304 : vector<1x8x1024xf32> to vector<8x1024xf32>
    %c0_373 = arith.constant 0 : index
    %c0_374 = arith.constant 0 : index
    %306 = vector.load %arg6[%c0_373, %c0_374] : memref<256x1024xf32, #tpu.memory_space<vmem>>, vector<8x1024xf32>
    tpu.vector_store %arg6[%c0_373, %c0_374], %305 {strides = array<i32>} : memref<256x1024xf32, #tpu.memory_space<vmem>>, vector<8x1024xf32>,
    %c0_375 = arith.constant 0 : index
    %c0_376 = arith.constant 0 : index
    %c12416 = arith.constant 12416 : index
    %307 = vector.load %arg2[%c0_375, %c0_376, %c12416] : memref<1x8x17344xf32, #tpu.memory_space<vmem>>, vector<1x8x1024xf32>
    %308 = vector.shape_cast %307 : vector<1x8x1024xf32> to vector<8x1024xf32>
    %c8_377 = arith.constant 8 : index
    %c0_378 = arith.constant 0 : index
    %309 = vector.load %arg6[%c8_377, %c0_378] : memref<256x1024xf32, #tpu.memory_space<vmem>>, vector<8x1024xf32>
    tpu.vector_store %arg6[%c8_377, %c0_378], %308 {strides = array<i32>} : memref<256x1024xf32, #tpu.memory_space<vmem>>, vector<8x1024xf32>,
    %c0_379 = arith.constant 0 : index
    %c0_380 = arith.constant 0 : index
    %c12544 = arith.constant 12544 : index
    %310 = vector.load %arg2[%c0_379, %c0_380, %c12544] : memref<1x8x17344xf32, #tpu.memory_space<vmem>>, vector<1x8x1024xf32>
    %311 = vector.shape_cast %310 : vector<1x8x1024xf32> to vector<8x1024xf32>
    %c16_381 = arith.constant 16 : index
    %c0_382 = arith.constant 0 : index
    %312 = vector.load %arg6[%c16_381, %c0_382] : memref<256x1024xf32, #tpu.memory_space<vmem>>, vector<8x1024xf32>
    tpu.vector_store %arg6[%c16_381, %c0_382], %311 {strides = array<i32>} : memref<256x1024xf32, #tpu.memory_space<vmem>>, vector<8x1024xf32>,
    %c0_383 = arith.constant 0 : index
    %c0_384 = arith.constant 0 : index
    %c12672 = arith.constant 12672 : index
    %313 = vector.load %arg2[%c0_383, %c0_384, %c12672] : memref<1x8x17344xf32, #tpu.memory_space<vmem>>, vector<1x8x1024xf32>
    %314 = vector.shape_cast %313 : vector<1x8x1024xf32> to vector<8x1024xf32>
    %c24_385 = arith.constant 24 : index
    %c0_386 = arith.constant 0 : index
    %315 = vector.load %arg6[%c24_385, %c0_386] : memref<256x1024xf32, #tpu.memory_space<vmem>>, vector<8x1024xf32>
    tpu.vector_store %arg6[%c24_385, %c0_386], %314 {strides = array<i32>} : memref<256x1024xf32, #tpu.memory_space<vmem>>, vector<8x1024xf32>,
    %c0_387 = arith.constant 0 : index
    %c0_388 = arith.constant 0 : index
    %c12800 = arith.constant 12800 : index
    %316 = vector.load %arg2[%c0_387, %c0_388, %c12800] : memref<1x8x17344xf32, #tpu.memory_space<vmem>>, vector<1x8x1024xf32>
    %317 = vector.shape_cast %316 : vector<1x8x1024xf32> to vector<8x1024xf32>
    %c32_389 = arith.constant 32 : index
    %c0_390 = arith.constant 0 : index
    %318 = vector.load %arg6[%c32_389, %c0_390] : memref<256x1024xf32, #tpu.memory_space<vmem>>, vector<8x1024xf32>
    tpu.vector_store %arg6[%c32_389, %c0_390], %317 {strides = array<i32>} : memref<256x1024xf32, #tpu.memory_space<vmem>>, vector<8x1024xf32>,
    %c0_391 = arith.constant 0 : index
    %c0_392 = arith.constant 0 : index
    %c12928 = arith.constant 12928 : index
    %319 = vector.load %arg2[%c0_391, %c0_392, %c12928] : memref<1x8x17344xf32, #tpu.memory_space<vmem>>, vector<1x8x1024xf32>
    %320 = vector.shape_cast %319 : vector<1x8x1024xf32> to vector<8x1024xf32>
    %c40_393 = arith.constant 40 : index
    %c0_394 = arith.constant 0 : index
    %321 = vector.load %arg6[%c40_393, %c0_394] : memref<256x1024xf32, #tpu.memory_space<vmem>>, vector<8x1024xf32>
    tpu.vector_store %arg6[%c40_393, %c0_394], %320 {strides = array<i32>} : memref<256x1024xf32, #tpu.memory_space<vmem>>, vector<8x1024xf32>,
    %c0_395 = arith.constant 0 : index
    %c0_396 = arith.constant 0 : index
    %c13056 = arith.constant 13056 : index
    %322 = vector.load %arg2[%c0_395, %c0_396, %c13056] : memref<1x8x17344xf32, #tpu.memory_space<vmem>>, vector<1x8x1024xf32>
    %323 = vector.shape_cast %322 : vector<1x8x1024xf32> to vector<8x1024xf32>
    %c48_397 = arith.constant 48 : index
    %c0_398 = arith.constant 0 : index
    %324 = vector.load %arg6[%c48_397, %c0_398] : memref<256x1024xf32, #tpu.memory_space<vmem>>, vector<8x1024xf32>
    tpu.vector_store %arg6[%c48_397, %c0_398], %323 {strides = array<i32>} : memref<256x1024xf32, #tpu.memory_space<vmem>>, vector<8x1024xf32>,
    %c0_399 = arith.constant 0 : index
    %c0_400 = arith.constant 0 : index
    %c13184 = arith.constant 13184 : index
    %325 = vector.load %arg2[%c0_399, %c0_400, %c13184] : memref<1x8x17344xf32, #tpu.memory_space<vmem>>, vector<1x8x1024xf32>
    %326 = vector.shape_cast %325 : vector<1x8x1024xf32> to vector<8x1024xf32>
    %c56_401 = arith.constant 56 : index
    %c0_402 = arith.constant 0 : index
    %327 = vector.load %arg6[%c56_401, %c0_402] : memref<256x1024xf32, #tpu.memory_space<vmem>>, vector<8x1024xf32>
    tpu.vector_store %arg6[%c56_401, %c0_402], %326 {strides = array<i32>} : memref<256x1024xf32, #tpu.memory_space<vmem>>, vector<8x1024xf32>,
    %c0_403 = arith.constant 0 : index
    %c0_404 = arith.constant 0 : index
    %c13312 = arith.constant 13312 : index
    %328 = vector.load %arg2[%c0_403, %c0_404, %c13312] : memref<1x8x17344xf32, #tpu.memory_space<vmem>>, vector<1x8x1024xf32>
    %329 = vector.shape_cast %328 : vector<1x8x1024xf32> to vector<8x1024xf32>
    %c64_405 = arith.constant 64 : index
    %c0_406 = arith.constant 0 : index
    %330 = vector.load %arg6[%c64_405, %c0_406] : memref<256x1024xf32, #tpu.memory_space<vmem>>, vector<8x1024xf32>
    tpu.vector_store %arg6[%c64_405, %c0_406], %329 {strides = array<i32>} : memref<256x1024xf32, #tpu.memory_space<vmem>>, vector<8x1024xf32>,
    %c0_407 = arith.constant 0 : index
    %c0_408 = arith.constant 0 : index
    %c13440 = arith.constant 13440 : index
    %331 = vector.load %arg2[%c0_407, %c0_408, %c13440] : memref<1x8x17344xf32, #tpu.memory_space<vmem>>, vector<1x8x1024xf32>
    %332 = vector.shape_cast %331 : vector<1x8x1024xf32> to vector<8x1024xf32>
    %c72_409 = arith.constant 72 : index
    %c0_410 = arith.constant 0 : index
    %333 = vector.load %arg6[%c72_409, %c0_410] : memref<256x1024xf32, #tpu.memory_space<vmem>>, vector<8x1024xf32>
    tpu.vector_store %arg6[%c72_409, %c0_410], %332 {strides = array<i32>} : memref<256x1024xf32, #tpu.memory_space<vmem>>, vector<8x1024xf32>,
    %c0_411 = arith.constant 0 : index
    %c0_412 = arith.constant 0 : index
    %c13568 = arith.constant 13568 : index
    %334 = vector.load %arg2[%c0_411, %c0_412, %c13568] : memref<1x8x17344xf32, #tpu.memory_space<vmem>>, vector<1x8x1024xf32>
    %335 = vector.shape_cast %334 : vector<1x8x1024xf32> to vector<8x1024xf32>
    %c80_413 = arith.constant 80 : index
    %c0_414 = arith.constant 0 : index
    %336 = vector.load %arg6[%c80_413, %c0_414] : memref<256x1024xf32, #tpu.memory_space<vmem>>, vector<8x1024xf32>
    tpu.vector_store %arg6[%c80_413, %c0_414], %335 {strides = array<i32>} : memref<256x1024xf32, #tpu.memory_space<vmem>>, vector<8x1024xf32>,
    %c0_415 = arith.constant 0 : index
    %c0_416 = arith.constant 0 : index
    %c13696 = arith.constant 13696 : index
    %337 = vector.load %arg2[%c0_415, %c0_416, %c13696] : memref<1x8x17344xf32, #tpu.memory_space<vmem>>, vector<1x8x1024xf32>
    %338 = vector.shape_cast %337 : vector<1x8x1024xf32> to vector<8x1024xf32>
    %c88_417 = arith.constant 88 : index
    %c0_418 = arith.constant 0 : index
    %339 = vector.load %arg6[%c88_417, %c0_418] : memref<256x1024xf32, #tpu.memory_space<vmem>>, vector<8x1024xf32>
    tpu.vector_store %arg6[%c88_417, %c0_418], %338 {strides = array<i32>} : memref<256x1024xf32, #tpu.memory_space<vmem>>, vector<8x1024xf32>,
    %c0_419 = arith.constant 0 : index
    %c0_420 = arith.constant 0 : index
    %c13824 = arith.constant 13824 : index
    %340 = vector.load %arg2[%c0_419, %c0_420, %c13824] : memref<1x8x17344xf32, #tpu.memory_space<vmem>>, vector<1x8x1024xf32>
    %341 = vector.shape_cast %340 : vector<1x8x1024xf32> to vector<8x1024xf32>
    %c96_421 = arith.constant 96 : index
    %c0_422 = arith.constant 0 : index
    %342 = vector.load %arg6[%c96_421, %c0_422] : memref<256x1024xf32, #tpu.memory_space<vmem>>, vector<8x1024xf32>
    tpu.vector_store %arg6[%c96_421, %c0_422], %341 {strides = array<i32>} : memref<256x1024xf32, #tpu.memory_space<vmem>>, vector<8x1024xf32>,
    %c0_423 = arith.constant 0 : index
    %c0_424 = arith.constant 0 : index
    %c13952 = arith.constant 13952 : index
    %343 = vector.load %arg2[%c0_423, %c0_424, %c13952] : memref<1x8x17344xf32, #tpu.memory_space<vmem>>, vector<1x8x1024xf32>
    %344 = vector.shape_cast %343 : vector<1x8x1024xf32> to vector<8x1024xf32>
    %c104_425 = arith.constant 104 : index
    %c0_426 = arith.constant 0 : index
    %345 = vector.load %arg6[%c104_425, %c0_426] : memref<256x1024xf32, #tpu.memory_space<vmem>>, vector<8x1024xf32>
    tpu.vector_store %arg6[%c104_425, %c0_426], %344 {strides = array<i32>} : memref<256x1024xf32, #tpu.memory_space<vmem>>, vector<8x1024xf32>,
    %c0_427 = arith.constant 0 : index
    %c0_428 = arith.constant 0 : index
    %c14080 = arith.constant 14080 : index
    %346 = vector.load %arg2[%c0_427, %c0_428, %c14080] : memref<1x8x17344xf32, #tpu.memory_space<vmem>>, vector<1x8x1024xf32>
    %347 = vector.shape_cast %346 : vector<1x8x1024xf32> to vector<8x1024xf32>
    %c112_429 = arith.constant 112 : index
    %c0_430 = arith.constant 0 : index
    %348 = vector.load %arg6[%c112_429, %c0_430] : memref<256x1024xf32, #tpu.memory_space<vmem>>, vector<8x1024xf32>
    tpu.vector_store %arg6[%c112_429, %c0_430], %347 {strides = array<i32>} : memref<256x1024xf32, #tpu.memory_space<vmem>>, vector<8x1024xf32>,
    %c0_431 = arith.constant 0 : index
    %c0_432 = arith.constant 0 : index
    %c14208 = arith.constant 14208 : index
    %349 = vector.load %arg2[%c0_431, %c0_432, %c14208] : memref<1x8x17344xf32, #tpu.memory_space<vmem>>, vector<1x8x1024xf32>
    %350 = vector.shape_cast %349 : vector<1x8x1024xf32> to vector<8x1024xf32>
    %c120_433 = arith.constant 120 : index
    %c0_434 = arith.constant 0 : index
    %351 = vector.load %arg6[%c120_433, %c0_434] : memref<256x1024xf32, #tpu.memory_space<vmem>>, vector<8x1024xf32>
    tpu.vector_store %arg6[%c120_433, %c0_434], %350 {strides = array<i32>} : memref<256x1024xf32, #tpu.memory_space<vmem>>, vector<8x1024xf32>,
    %c0_435 = arith.constant 0 : index
    %c0_436 = arith.constant 0 : index
    %c14336 = arith.constant 14336 : index
    %352 = vector.load %arg2[%c0_435, %c0_436, %c14336] : memref<1x8x17344xf32, #tpu.memory_space<vmem>>, vector<1x8x1024xf32>
    %353 = vector.shape_cast %352 : vector<1x8x1024xf32> to vector<8x1024xf32>
    %c128_437 = arith.constant 128 : index
    %c0_438 = arith.constant 0 : index
    %354 = vector.load %arg6[%c128_437, %c0_438] : memref<256x1024xf32, #tpu.memory_space<vmem>>, vector<8x1024xf32>
    tpu.vector_store %arg6[%c128_437, %c0_438], %353 {strides = array<i32>} : memref<256x1024xf32, #tpu.memory_space<vmem>>, vector<8x1024xf32>,
    %c0_439 = arith.constant 0 : index
    %c0_440 = arith.constant 0 : index
    %c14464 = arith.constant 14464 : index
    %355 = vector.load %arg2[%c0_439, %c0_440, %c14464] : memref<1x8x17344xf32, #tpu.memory_space<vmem>>, vector<1x8x1024xf32>
    %356 = vector.shape_cast %355 : vector<1x8x1024xf32> to vector<8x1024xf32>
    %c136_441 = arith.constant 136 : index
    %c0_442 = arith.constant 0 : index
    %357 = vector.load %arg6[%c136_441, %c0_442] : memref<256x1024xf32, #tpu.memory_space<vmem>>, vector<8x1024xf32>
    tpu.vector_store %arg6[%c136_441, %c0_442], %356 {strides = array<i32>} : memref<256x1024xf32, #tpu.memory_space<vmem>>, vector<8x1024xf32>,
    %c0_443 = arith.constant 0 : index
    %c0_444 = arith.constant 0 : index
    %c14592 = arith.constant 14592 : index
    %358 = vector.load %arg2[%c0_443, %c0_444, %c14592] : memref<1x8x17344xf32, #tpu.memory_space<vmem>>, vector<1x8x1024xf32>
    %359 = vector.shape_cast %358 : vector<1x8x1024xf32> to vector<8x1024xf32>
    %c144_445 = arith.constant 144 : index
    %c0_446 = arith.constant 0 : index
    %360 = vector.load %arg6[%c144_445, %c0_446] : memref<256x1024xf32, #tpu.memory_space<vmem>>, vector<8x1024xf32>
    tpu.vector_store %arg6[%c144_445, %c0_446], %359 {strides = array<i32>} : memref<256x1024xf32, #tpu.memory_space<vmem>>, vector<8x1024xf32>,
    %c0_447 = arith.constant 0 : index
    %c0_448 = arith.constant 0 : index
    %c14720 = arith.constant 14720 : index
    %361 = vector.load %arg2[%c0_447, %c0_448, %c14720] : memref<1x8x17344xf32, #tpu.memory_space<vmem>>, vector<1x8x1024xf32>
    %362 = vector.shape_cast %361 : vector<1x8x1024xf32> to vector<8x1024xf32>
    %c152_449 = arith.constant 152 : index
    %c0_450 = arith.constant 0 : index
    %363 = vector.load %arg6[%c152_449, %c0_450] : memref<256x1024xf32, #tpu.memory_space<vmem>>, vector<8x1024xf32>
    tpu.vector_store %arg6[%c152_449, %c0_450], %362 {strides = array<i32>} : memref<256x1024xf32, #tpu.memory_space<vmem>>, vector<8x1024xf32>,
    %c0_451 = arith.constant 0 : index
    %c0_452 = arith.constant 0 : index
    %c14848 = arith.constant 14848 : index
    %364 = vector.load %arg2[%c0_451, %c0_452, %c14848] : memref<1x8x17344xf32, #tpu.memory_space<vmem>>, vector<1x8x1024xf32>
    %365 = vector.shape_cast %364 : vector<1x8x1024xf32> to vector<8x1024xf32>
    %c160_453 = arith.constant 160 : index
    %c0_454 = arith.constant 0 : index
    %366 = vector.load %arg6[%c160_453, %c0_454] : memref<256x1024xf32, #tpu.memory_space<vmem>>, vector<8x1024xf32>
    tpu.vector_store %arg6[%c160_453, %c0_454], %365 {strides = array<i32>} : memref<256x1024xf32, #tpu.memory_space<vmem>>, vector<8x1024xf32>,
    %c0_455 = arith.constant 0 : index
    %c0_456 = arith.constant 0 : index
    %c14976 = arith.constant 14976 : index
    %367 = vector.load %arg2[%c0_455, %c0_456, %c14976] : memref<1x8x17344xf32, #tpu.memory_space<vmem>>, vector<1x8x1024xf32>
    %368 = vector.shape_cast %367 : vector<1x8x1024xf32> to vector<8x1024xf32>
    %c168_457 = arith.constant 168 : index
    %c0_458 = arith.constant 0 : index
    %369 = vector.load %arg6[%c168_457, %c0_458] : memref<256x1024xf32, #tpu.memory_space<vmem>>, vector<8x1024xf32>
    tpu.vector_store %arg6[%c168_457, %c0_458], %368 {strides = array<i32>} : memref<256x1024xf32, #tpu.memory_space<vmem>>, vector<8x1024xf32>,
    %c0_459 = arith.constant 0 : index
    %c0_460 = arith.constant 0 : index
    %c15104 = arith.constant 15104 : index
    %370 = vector.load %arg2[%c0_459, %c0_460, %c15104] : memref<1x8x17344xf32, #tpu.memory_space<vmem>>, vector<1x8x1024xf32>
    %371 = vector.shape_cast %370 : vector<1x8x1024xf32> to vector<8x1024xf32>
    %c176_461 = arith.constant 176 : index
    %c0_462 = arith.constant 0 : index
    %372 = vector.load %arg6[%c176_461, %c0_462] : memref<256x1024xf32, #tpu.memory_space<vmem>>, vector<8x1024xf32>
    tpu.vector_store %arg6[%c176_461, %c0_462], %371 {strides = array<i32>} : memref<256x1024xf32, #tpu.memory_space<vmem>>, vector<8x1024xf32>,
    %c0_463 = arith.constant 0 : index
    %c0_464 = arith.constant 0 : index
    %c15232 = arith.constant 15232 : index
    %373 = vector.load %arg2[%c0_463, %c0_464, %c15232] : memref<1x8x17344xf32, #tpu.memory_space<vmem>>, vector<1x8x1024xf32>
    %374 = vector.shape_cast %373 : vector<1x8x1024xf32> to vector<8x1024xf32>
    %c184_465 = arith.constant 184 : index
    %c0_466 = arith.constant 0 : index
    %375 = vector.load %arg6[%c184_465, %c0_466] : memref<256x1024xf32, #tpu.memory_space<vmem>>, vector<8x1024xf32>
    tpu.vector_store %arg6[%c184_465, %c0_466], %374 {strides = array<i32>} : memref<256x1024xf32, #tpu.memory_space<vmem>>, vector<8x1024xf32>,
    %c0_467 = arith.constant 0 : index
    %c0_468 = arith.constant 0 : index
    %c15360 = arith.constant 15360 : index
    %376 = vector.load %arg2[%c0_467, %c0_468, %c15360] : memref<1x8x17344xf32, #tpu.memory_space<vmem>>, vector<1x8x1024xf32>
    %377 = vector.shape_cast %376 : vector<1x8x1024xf32> to vector<8x1024xf32>
    %c192_469 = arith.constant 192 : index
    %c0_470 = arith.constant 0 : index
    %378 = vector.load %arg6[%c192_469, %c0_470] : memref<256x1024xf32, #tpu.memory_space<vmem>>, vector<8x1024xf32>
    tpu.vector_store %arg6[%c192_469, %c0_470], %377 {strides = array<i32>} : memref<256x1024xf32, #tpu.memory_space<vmem>>, vector<8x1024xf32>,
    %c0_471 = arith.constant 0 : index
    %c0_472 = arith.constant 0 : index
    %c15488 = arith.constant 15488 : index
    %379 = vector.load %arg2[%c0_471, %c0_472, %c15488] : memref<1x8x17344xf32, #tpu.memory_space<vmem>>, vector<1x8x1024xf32>
    %380 = vector.shape_cast %379 : vector<1x8x1024xf32> to vector<8x1024xf32>
    %c200_473 = arith.constant 200 : index
    %c0_474 = arith.constant 0 : index
    %381 = vector.load %arg6[%c200_473, %c0_474] : memref<256x1024xf32, #tpu.memory_space<vmem>>, vector<8x1024xf32>
    tpu.vector_store %arg6[%c200_473, %c0_474], %380 {strides = array<i32>} : memref<256x1024xf32, #tpu.memory_space<vmem>>, vector<8x1024xf32>,
    %c0_475 = arith.constant 0 : index
    %c0_476 = arith.constant 0 : index
    %c15616 = arith.constant 15616 : index
    %382 = vector.load %arg2[%c0_475, %c0_476, %c15616] : memref<1x8x17344xf32, #tpu.memory_space<vmem>>, vector<1x8x1024xf32>
    %383 = vector.shape_cast %382 : vector<1x8x1024xf32> to vector<8x1024xf32>
    %c208_477 = arith.constant 208 : index
    %c0_478 = arith.constant 0 : index
    %384 = vector.load %arg6[%c208_477, %c0_478] : memref<256x1024xf32, #tpu.memory_space<vmem>>, vector<8x1024xf32>
    tpu.vector_store %arg6[%c208_477, %c0_478], %383 {strides = array<i32>} : memref<256x1024xf32, #tpu.memory_space<vmem>>, vector<8x1024xf32>,
    %c0_479 = arith.constant 0 : index
    %c0_480 = arith.constant 0 : index
    %c15744 = arith.constant 15744 : index
    %385 = vector.load %arg2[%c0_479, %c0_480, %c15744] : memref<1x8x17344xf32, #tpu.memory_space<vmem>>, vector<1x8x1024xf32>
    %386 = vector.shape_cast %385 : vector<1x8x1024xf32> to vector<8x1024xf32>
    %c216_481 = arith.constant 216 : index
    %c0_482 = arith.constant 0 : index
    %387 = vector.load %arg6[%c216_481, %c0_482] : memref<256x1024xf32, #tpu.memory_space<vmem>>, vector<8x1024xf32>
    tpu.vector_store %arg6[%c216_481, %c0_482], %386 {strides = array<i32>} : memref<256x1024xf32, #tpu.memory_space<vmem>>, vector<8x1024xf32>,
    %c0_483 = arith.constant 0 : index
    %c0_484 = arith.constant 0 : index
    %c15872 = arith.constant 15872 : index
    %388 = vector.load %arg2[%c0_483, %c0_484, %c15872] : memref<1x8x17344xf32, #tpu.memory_space<vmem>>, vector<1x8x1024xf32>
    %389 = vector.shape_cast %388 : vector<1x8x1024xf32> to vector<8x1024xf32>
    %c224_485 = arith.constant 224 : index
    %c0_486 = arith.constant 0 : index
    %390 = vector.load %arg6[%c224_485, %c0_486] : memref<256x1024xf32, #tpu.memory_space<vmem>>, vector<8x1024xf32>
    tpu.vector_store %arg6[%c224_485, %c0_486], %389 {strides = array<i32>} : memref<256x1024xf32, #tpu.memory_space<vmem>>, vector<8x1024xf32>,
    %c0_487 = arith.constant 0 : index
    %c0_488 = arith.constant 0 : index
    %c16000 = arith.constant 16000 : index
    %391 = vector.load %arg2[%c0_487, %c0_488, %c16000] : memref<1x8x17344xf32, #tpu.memory_space<vmem>>, vector<1x8x1024xf32>
    %392 = vector.shape_cast %391 : vector<1x8x1024xf32> to vector<8x1024xf32>
    %c232_489 = arith.constant 232 : index
    %c0_490 = arith.constant 0 : index
    %393 = vector.load %arg6[%c232_489, %c0_490] : memref<256x1024xf32, #tpu.memory_space<vmem>>, vector<8x1024xf32>
    tpu.vector_store %arg6[%c232_489, %c0_490], %392 {strides = array<i32>} : memref<256x1024xf32, #tpu.memory_space<vmem>>, vector<8x1024xf32>,
    %c0_491 = arith.constant 0 : index
    %c0_492 = arith.constant 0 : index
    %c16128 = arith.constant 16128 : index
    %394 = vector.load %arg2[%c0_491, %c0_492, %c16128] : memref<1x8x17344xf32, #tpu.memory_space<vmem>>, vector<1x8x1024xf32>
    %395 = vector.shape_cast %394 : vector<1x8x1024xf32> to vector<8x1024xf32>
    %c240_493 = arith.constant 240 : index
    %c0_494 = arith.constant 0 : index
    %396 = vector.load %arg6[%c240_493, %c0_494] : memref<256x1024xf32, #tpu.memory_space<vmem>>, vector<8x1024xf32>
    tpu.vector_store %arg6[%c240_493, %c0_494], %395 {strides = array<i32>} : memref<256x1024xf32, #tpu.memory_space<vmem>>, vector<8x1024xf32>,
    %c0_495 = arith.constant 0 : index
    %c0_496 = arith.constant 0 : index
    %c16256 = arith.constant 16256 : index
    %397 = vector.load %arg2[%c0_495, %c0_496, %c16256] : memref<1x8x17344xf32, #tpu.memory_space<vmem>>, vector<1x8x1024xf32>
    %398 = vector.shape_cast %397 : vector<1x8x1024xf32> to vector<8x1024xf32>
    %c248_497 = arith.constant 248 : index
    %c0_498 = arith.constant 0 : index
    %399 = vector.load %arg6[%c248_497, %c0_498] : memref<256x1024xf32, #tpu.memory_space<vmem>>, vector<8x1024xf32>
    tpu.vector_store %arg6[%c248_497, %c0_498], %398 {strides = array<i32>} : memref<256x1024xf32, #tpu.memory_space<vmem>>, vector<8x1024xf32>,
    %c0_499 = arith.constant 0 : index
    %c768_500 = arith.constant 768 : index
    %400 = vector.load %arg3[%c0_499, %c768_500] : memref<8x1024xf32, #tpu.memory_space<vmem>>, vector<8x256xf32>
    %c0_501 = arith.constant 0 : index
    %c0_502 = arith.constant 0 : index
    %401 = vector.load %arg6[%c0_501, %c0_502] : memref<256x1024xf32, #tpu.memory_space<vmem>>, vector<256x1024xf32>
    %cst_503 = arith.constant dense<0.000000e+00> : vector<8x1024xf32>
    %402 = tpu.matmul %400, %401, %cst_503 {dimension_numbers = #tpu.dot_dimension_numbers<[1], [0], [0], [1], [0, 0, 1, 1], [], []>} : vector<8x256xf32>, vector<256x1024xf32>, vector<8x1024xf32> -> vector<8x1024xf32>
    %403 = arith.addf %303, %402 : vector<8x1024xf32>
    %c0_504 = arith.constant 0 : index
    %c0_505 = arith.constant 0 : index
    %c0_506 = arith.constant 0 : index
    %404 = vector.load %arg5[%c0_504, %c0_505, %c0_506] : memref<1x8x1024xf32, #tpu.memory_space<vmem>>, vector<1x8x1024xf32>
    %405 = vector.shape_cast %404 : vector<1x8x1024xf32> to vector<8x1024xf32>
    %406 = vector.shape_cast %403 : vector<8x1024xf32> to vector<1x8x1024xf32>
    tpu.vector_store %arg5[%c0_504, %c0_505, %c0_506], %406 {strides = array<i32>} : memref<1x8x1024xf32, #tpu.memory_space<vmem>>, vector<1x8x1024xf32>,
    return
  }
  func.func @transform_0(%arg0: i32, %arg1: i32) -> (i32, i32, i32) {
    %c0_i32 = arith.constant 0 : i32
    %c0_i32_0 = arith.constant 0 : i32
    %c0_i32_1 = arith.constant 0 : i32
    return %arg0, %c0_i32, %c0_i32_0 : i32, i32, i32
  }
  func.func @transform_1(%arg0: i32, %arg1: i32) -> (i32, i32) {
    %c0_i32 = arith.constant 0 : i32
    %c0_i32_0 = arith.constant 0 : i32
    %c0_i32_1 = arith.constant 0 : i32
    return %c0_i32, %c0_i32_0 : i32, i32
  }
  func.func @transform_2(%arg0: i32, %arg1: i32) -> (i32, i32) {
    %c0_i32 = arith.constant 0 : i32
    %c0_i32_0 = arith.constant 0 : i32
    %c0_i32_1 = arith.constant 0 : i32
    return %c0_i32, %c0_i32_0 : i32, i32
  }
  func.func @transform_3(%arg0: i32, %arg1: i32) -> (i32, i32, i32) {
    %c0_i32 = arith.constant 0 : i32
    %c0_i32_0 = arith.constant 0 : i32
    return %arg0, %c0_i32, %arg1 : i32, i32, i32
  }
}

</mosaic_0001>

<llo_original>
// kernel: tpu_custom_call.1
$region0: #{tpu_custom_call.1}
  #allocation0 [shape = 'u32[]', space=smem, size = 0x4, offset = 0x4, fixed_abs, tag = 'smem constant byte address 0x4 - core index']
  #allocation1 [shape = 'u32[144,128]{1,0:T(1,128)}', space=vmem, size = 0x12000, scoped, tag = 'internal scratch']
  #allocation2 [shape = 'f32[256,1024]{1,0:T(8,128)}', space=vmem, size = 0x100000, scoped, tag = 'scratch operand']
  %s0 = inlined_call_operand.hbm [shape: f32[1,8,17344], index: 0, kind: input, shape index: {}]
  %s1 = inlined_call_operand.hbm [shape: f32[8,1024], index: 1, kind: input, shape index: {}]
  %s2 = inlined_call_operand.vmem [shape: f32[8,1], index: 2, kind: input, shape index: {}]
  %s3 = inlined_call_operand.hbm [shape: f32[1,8,1024], index: 3, kind: output, shape index: {}]
  %s4 = sld [smem:[#allocation0]]
  $region30: #{tpu_custom_call.1} parent=0
    _
  %s6 = ssub.s32 1, %s4
  %s7 = scalar_select 0, %s6, %s4
  $region1: #{tpu_custom_call.1} parent=0
    #allocation3 [shape = 'u8[557056]{0}', space=vmem, size = 0x88000, scoped, tag = 'input window, operand 0, single buffered']
    #allocation4 [shape = 's32[1]{0}', space=sflag, size = 0x4, scoped, tag = 'scoped memory for tpu_custom_call.1']
    #allocation5 [shape = 's32[1]{0}', space=sflag, size = 0x4, scoped, tag = 'scoped memory for tpu_custom_call.1']
    #allocation6 [shape = 'u8[32768]{0}', space=vmem, size = 0x8000, scoped, tag = 'input window, operand 1, single buffered']
    #allocation7 [shape = 's32[1]{0}', space=sflag, size = 0x4, scoped, tag = 'scoped memory for tpu_custom_call.1']
    #allocation8 [shape = 'u8[32768]{0}', space=vmem, size = 0x8000, scoped, tag = 'output window, operand 0, single buffered']
    %8 = vsyncpa [#allocation4], 0
    %9 = vsyncpa [#allocation7], 0
    %10 = vsyncpa [#allocation5], 0
    // Predicated region
    $region2: #{tpu_custom_call.1} parent=1 // pred_check
      _
    $region3: #{tpu_custom_call.1} parent=1 // pred_check_branch
      %12 = sbr.rel (0) target = $region5
    $region4: #{tpu_custom_call.1} parent=1 // pred_region
      %s14 = ssub.s32 17408, 17408
      %15 = vsyncadd [#allocation4], %s14
      %s17 = sshll.u32 [#allocation3], 4
      %s18 = int_to_ptr.vmem [resolvable:$true] %s17
      %20 = dma.hbm_to_vmem [thread:$0]  %s0, 17408, %s18, [#allocation4]
    $region5: #{tpu_custom_call.1} parent=1 // pred_fallthru
      _
    // Predicated region
    $region6: #{tpu_custom_call.1} parent=1 // pred_check
      _
    $region7: #{tpu_custom_call.1} parent=1 // pred_check_branch
      %22 = sbr.rel (0) target = $region9
    $region8: #{tpu_custom_call.1} parent=1 // pred_region
      %s24 = ssub.s32 1024, 1024
      %25 = vsyncadd [#allocation7], %s24
      %s27 = sshll.u32 [#allocation6], 4
      %s28 = int_to_ptr.vmem [resolvable:$true] %s27
      %30 = dma.hbm_to_vmem [thread:$0]  %s1, 1024, %s28, [#allocation7]
    $region9: #{tpu_custom_call.1} parent=1 // pred_fallthru
      _
    // Predicated region
    $region10: #{tpu_custom_call.1} parent=1 // pred_check
      _
    $region11: #{tpu_custom_call.1} parent=1 // pred_check_branch
      %32 = sbr.rel (0) target = $region13
    $region12: #{tpu_custom_call.1} parent=1 // pred_region
      _
    $region13: #{tpu_custom_call.1} parent=1 // pred_fallthru
      _
    // Predicated region
    $region14: #{tpu_custom_call.1} parent=1 // pred_check
      _
    $region15: #{tpu_custom_call.1} parent=1 // pred_check_branch
      %34 = sbr.rel (0) target = $region17
    $region16: #{tpu_custom_call.1} parent=1 // pred_region
      %35 = dma.done [#allocation4], 17408
    $region17: #{tpu_custom_call.1} parent=1 // pred_fallthru
      _
    // Predicated region
    $region18: #{tpu_custom_call.1} parent=1 // pred_check
      _
    $region19: #{tpu_custom_call.1} parent=1 // pred_check_branch
      %37 = sbr.rel (0) target = $region21
    $region20: #{tpu_custom_call.1} parent=1 // pred_region
      %38 = dma.done [#allocation7], 1024
    $region21: #{tpu_custom_call.1} parent=1 // pred_fallthru
      _
    %v39 = vld [vmem:[%s2] sm:$0xff]
    %41 = vset.pattern.permute.xlu0 0
    %42 = vperm.xlu0 %41, %v39
    %v43 = vpop.permute.xlu0 %42
    %v45 = vadd.f32 %v43, 0.0
    %v46 = vld [vmem:[#allocation3] sm:$0xff]
    %v47 = vld [vmem:[#allocation3 + $0x8] sm:$0xff]
    %v48 = vld [vmem:[#allocation3 + $0x10] sm:$0xff]
    %v49 = vld [vmem:[#allocation3 + $0x18] sm:$0xff]
    %v50 = vld [vmem:[#allocation3 + $0x20] sm:$0xff]
    %v51 = vld [vmem:[#allocation3 + $0x28] sm:$0xff]
    %v52 = vld [vmem:[#allocation3 + $0x30] sm:$0xff]
    %v53 = vld [vmem:[#allocation3 + $0x38] sm:$0xff]
    %54 = vst [vmem:[#allocation2] sm:$0xff] %v46
    %55 = vst [vmem:[#allocation2 + $0x8] sm:$0xff] %v47
    %56 = vst [vmem:[#allocation2 + $0x10] sm:$0xff] %v48
    %57 = vst [vmem:[#allocation2 + $0x18] sm:$0xff] %v49
    %58 = vst [vmem:[#allocation2 + $0x20] sm:$0xff] %v50
    %59 = vst [vmem:[#allocation2 + $0x28] sm:$0xff] %v51
    %60 = vst [vmem:[#allocation2 + $0x30] sm:$0xff] %v52
    %61 = vst [vmem:[#allocation2 + $0x38] sm:$0xff] %v53
    %v62 = vld [vmem:[#allocation3 + $0x8] sm:$0xff]
    %v63 = vld [vmem:[#allocation3 + $0x10] sm:$0xff]
    %v64 = vld [vmem:[#allocation3 + $0x18] sm:$0xff]
    %v65 = vld [vmem:[#allocation3 + $0x20] sm:$0xff]
    %v66 = vld [vmem:[#allocation3 + $0x28] sm:$0xff]
    %v67 = vld [vmem:[#allocation3 + $0x30] sm:$0xff]
    %v68 = vld [vmem:[#allocation3 + $0x38] sm:$0xff]
    %v69 = vld [vmem:[#allocation3 + $0x40] sm:$0xff]
    %70 = vst [vmem:[#allocation2 + $0x40] sm:$0xff] %v62
    %71 = vst [vmem:[#allocation2 + $0x48] sm:$0xff] %v63
    %72 = vst [vmem:[#allocation2 + $0x50] sm:$0xff] %v64
    %73 = vst [vmem:[#allocation2 + $0x58] sm:$0xff] %v65
    %74 = vst [vmem:[#allocation2 + $0x60] sm:$0xff] %v66
    %75 = vst [vmem:[#allocation2 + $0x68] sm:$0xff] %v67
    %76 = vst [vmem:[#allocation2 + $0x70] sm:$0xff] %v68
    %77 = vst [vmem:[#allocation2 + $0x78] sm:$0xff] %v69
    %v78 = vld [vmem:[#allocation3 + $0x10] sm:$0xff]
    %v79 = vld [vmem:[#allocation3 + $0x18] sm:$0xff]
    %v80 = vld [vmem:[#allocation3 + $0x20] sm:$0xff]
    %v81 = vld [vmem:[#allocation3 + $0x28] sm:$0xff]
    %v82 = vld [vmem:[#allocation3 + $0x30] sm:$0xff]
    %v83 = vld [vmem:[#allocation3 + $0x38] sm:$0xff]
    %v84 = vld [vmem:[#allocation3 + $0x40] sm:$0xff]
    %v85 = vld [vmem:[#allocation3 + $0x48] sm:$0xff]
    %86 = vst [vmem:[#allocation2 + $0x80] sm:$0xff] %v78
    %87 = vst [vmem:[#allocation2 + $0x88] sm:$0xff] %v79
    %88 = vst [vmem:[#allocation2 + $0x90] sm:$0xff] %v80
    %89 = vst [vmem:[#allocation2 + $0x98] sm:$0xff] %v81
    %90 = vst [vmem:[#allocation2 + $0xa0] sm:$0xff] %v82
    %91 = vst [vmem:[#allocation2 + $0xa8] sm:$0xff] %v83
    %92 = vst [vmem:[#allocation2 + $0xb0] sm:$0xff] %v84
    %93 = vst [vmem:[#allocation2 + $0xb8] sm:$0xff] %v85
    %v94 = vld [vmem:[#allocation3 + $0x18] sm:$0xff]
    %v95 = vld [vmem:[#allocation3 + $0x20] sm:$0xff]
    %v96 = vld [vmem:[#allocation3 + $0x28] sm:$0xff]
    %v97 = vld [vmem:[#allocation3 + $0x30] sm:$0xff]
    %v98 = vld [vmem:[#allocation3 + $0x38] sm:$0xff]
    %v99 = vld [vmem:[#allocation3 + $0x40] sm:$0xff]
    %v100 = vld [vmem:[#allocation3 + $0x48] sm:$0xff]
    %v101 = vld [vmem:[#allocation3 + $0x50] sm:$0xff]
    %102 = vst [vmem:[#allocation2 + $0xc0] sm:$0xff] %v94
    %103 = vst [vmem:[#allocation2 + $0xc8] sm:$0xff] %v95
    %104 = vst [vmem:[#allocation2 + $0xd0] sm:$0xff] %v96
    %105 = vst [vmem:[#allocation2 + $0xd8] sm:$0xff] %v97
    %106 = vst [vmem:[#allocation2 + $0xe0] sm:$0xff] %v98
    %107 = vst [vmem:[#allocation2 + $0xe8] sm:$0xff] %v99
    %108 = vst [vmem:[#allocation2 + $0xf0] sm:$0xff] %v100
    %109 = vst [vmem:[#allocation2 + $0xf8] sm:$0xff] %v101
    %v110 = vld [vmem:[#allocation3 + $0x20] sm:$0xff]
    %v111 = vld [vmem:[#allocation3 + $0x28] sm:$0xff]
    %v112 = vld [vmem:[#allocation3 + $0x30] sm:$0xff]
    %v113 = vld [vmem:[#allocation3 + $0x38] sm:$0xff]
    %v114 = vld [vmem:[#allocation3 + $0x40] sm:$0xff]
    %v115 = vld [vmem:[#allocation3 + $0x48] sm:$0xff]
    %v116 = vld [vmem:[#allocation3 + $0x50] sm:$0xff]
    %v117 = vld [vmem:[#allocation3 + $0x58] sm:$0xff]
    %118 = vst [vmem:[#allocation2 + $0x100] sm:$0xff] %v110
    %119 = vst [vmem:[#allocation2 + $0x108] sm:$0xff] %v111
    %120 = vst [vmem:[#allocation2 + $0x110] sm:$0xff] %v112
    %121 = vst [vmem:[#allocation2 + $0x118] sm:$0xff] %v113
    %122 = vst [vmem:[#allocation2 + $0x120] sm:$0xff] %v114
    %123 = vst [vmem:[#allocation2 + $0x128] sm:$0xff] %v115
    %124 = vst [vmem:[#allocation2 + $0x130] sm:$0xff] %v116
    %125 = vst [vmem:[#allocation2 + $0x138] sm:$0xff] %v117
    %v126 = vld [vmem:[#allocation3 + $0x28] sm:$0xff]
    %v127 = vld [vmem:[#allocation3 + $0x30] sm:$0xff]
    %v128 = vld [vmem:[#allocation3 + $0x38] sm:$0xff]
    %v129 = vld [vmem:[#allocation3 + $0x40] sm:$0xff]
    %v130 = vld [vmem:[#allocation3 + $0x48] sm:$0xff]
    %v131 = vld [vmem:[#allocation3 + $0x50] sm:$0xff]
    %v132 = vld [vmem:[#allocation3 + $0x58] sm:$0xff]
    %v133 = vld [vmem:[#allocation3 + $0x60] sm:$0xff]
    %134 = vst [vmem:[#allocation2 + $0x140] sm:$0xff] %v126
    %135 = vst [vmem:[#allocation2 + $0x148] sm:$0xff] %v127
    %136 = vst [vmem:[#allocation2 + $0x150] sm:$0xff] %v128
    %137 = vst [vmem:[#allocation2 + $0x158] sm:$0xff] %v129
    %138 = vst [vmem:[#allocation2 + $0x160] sm:$0xff] %v130
    %139 = vst [vmem:[#allocation2 + $0x168] sm:$0xff] %v131
    %140 = vst [vmem:[#allocation2 + $0x170] sm:$0xff] %v132
    %141 = vst [vmem:[#allocation2 + $0x178] sm:$0xff] %v133
    %v142 = vld [vmem:[#allocation3 + $0x30] sm:$0xff]
    %v143 = vld [vmem:[#allocation3 + $0x38] sm:$0xff]
    %v144 = vld [vmem:[#allocation3 + $0x40] sm:$0xff]
    %v145 = vld [vmem:[#allocation3 + $0x48] sm:$0xff]
    %v146 = vld [vmem:[#allocation3 + $0x50] sm:$0xff]
    %v147 = vld [vmem:[#allocation3 + $0x58] sm:$0xff]
    %v148 = vld [vmem:[#allocation3 + $0x60] sm:$0xff]
    %v149 = vld [vmem:[#allocation3 + $0x68] sm:$0xff]
    %150 = vst [vmem:[#allocation2 + $0x180] sm:$0xff] %v142
    %151 = vst [vmem:[#allocation2 + $0x188] sm:$0xff] %v143
    %152 = vst [vmem:[#allocation2 + $0x190] sm:$0xff] %v144
    %153 = vst [vmem:[#allocation2 + $0x198] sm:$0xff] %v145
    %154 = vst [vmem:[#allocation2 + $0x1a0] sm:$0xff] %v146
    %155 = vst [vmem:[#allocation2 + $0x1a8] sm:$0xff] %v147
    %156 = vst [vmem:[#allocation2 + $0x1b0] sm:$0xff] %v148
    %157 = vst [vmem:[#allocation2 + $0x1b8] sm:$0xff] %v149
    %v158 = vld [vmem:[#allocation3 + $0x38] sm:$0xff]
    %v159 = vld [vmem:[#allocation3 + $0x40] sm:$0xff]
    %v160 = vld [vmem:[#allocation3 + $0x48] sm:$0xff]
    %v161 = vld [vmem:[#allocation3 + $0x50] sm:$0xff]
    %v162 = vld [vmem:[#allocation3 + $0x58] sm:$0xff]
    %v163 = vld [vmem:[#allocation3 + $0x60] sm:$0xff]
    %v164 = vld [vmem:[#allocation3 + $0x68] sm:$0xff]
    %v165 = vld [vmem:[#allocation3 + $0x70] sm:$0xff]
    %166 = vst [vmem:[#allocation2 + $0x1c0] sm:$0xff] %v158
    %167 = vst [vmem:[#allocation2 + $0x1c8] sm:$0xff] %v159
    %168 = vst [vmem:[#allocation2 + $0x1d0] sm:$0xff] %v160
    %169 = vst [vmem:[#allocation2 + $0x1d8] sm:$0xff] %v161
    %170 = vst [vmem:[#allocation2 + $0x1e0] sm:$0xff] %v162
    %171 = vst [vmem:[#allocation2 + $0x1e8] sm:$0xff] %v163
    %172 = vst [vmem:[#allocation2 + $0x1f0] sm:$0xff] %v164
    %173 = vst [vmem:[#allocation2 + $0x1f8] sm:$0xff] %v165
    %v174 = vld [vmem:[#allocation3 + $0x40] sm:$0xff]
    %v175 = vld [vmem:[#allocation3 + $0x48] sm:$0xff]
    %v176 = vld [vmem:[#allocation3 + $0x50] sm:$0xff]
    %v177 = vld [vmem:[#allocation3 + $0x58] sm:$0xff]
    %v178 = vld [vmem:[#allocation3 + $0x60] sm:$0xff]
    %v179 = vld [vmem:[#allocation3 + $0x68] sm:$0xff]
    %v180 = vld [vmem:[#allocation3 + $0x70] sm:$0xff]
    %v181 = vld [vmem:[#allocation3 + $0x78] sm:$0xff]
    %182 = vst [vmem:[#allocation2 + $0x200] sm:$0xff] %v174
    %183 = vst [vmem:[#allocation2 + $0x208] sm:$0xff] %v175
    %184 = vst [vmem:[#allocation2 + $0x210] sm:$0xff] %v176
    %185 = vst [vmem:[#allocation2 + $0x218] sm:$0xff] %v177
    %186 = vst [vmem:[#allocation2 + $0x220] sm:$0xff] %v178
    %187 = vst [vmem:[#allocation2 + $0x228] sm:$0xff] %v179
    %188 = vst [vmem:[#allocation2 + $0x230] sm:$0xff] %v180
    %189 = vst [vmem:[#allocation2 + $0x238] sm:$0xff] %v181
    %v190 = vld [vmem:[#allocation3 + $0x48] sm:$0xff]
    %v191 = vld [vmem:[#allocation3 + $0x50] sm:$0xff]
    %v192 = vld [vmem:[#allocation3 + $0x58] sm:$0xff]
    %v193 = vld [vmem:[#allocation3 + $0x60] sm:$0xff]
    %v194 = vld [vmem:[#allocation3 + $0x68] sm:$0xff]
    %v195 = vld [vmem:[#allocation3 + $0x70] sm:$0xff]
    %v196 = vld [vmem:[#allocation3 + $0x78] sm:$0xff]
    %v197 = vld [vmem:[#allocation3 + $0x80] sm:$0xff]
    %198 = vst [vmem:[#allocation2 + $0x240] sm:$0xff] %v190
    %199 = vst [vmem:[#allocation2 + $0x248] sm:$0xff] %v191
    %200 = vst [vmem:[#allocation2 + $0x250] sm:$0xff] %v192
    %201 = vst [vmem:[#allocation2 + $0x258] sm:$0xff] %v193
    %202 = vst [vmem:[#allocation2 + $0x260] sm:$0xff] %v194
    %203 = vst [vmem:[#allocation2 + $0x268] sm:$0xff] %v195
    %204 = vst [vmem:[#allocation2 + $0x270] sm:$0xff] %v196
    %205 = vst [vmem:[#allocation2 + $0x278] sm:$0xff] %v197
    %v206 = vld [vmem:[#allocation3 + $0x50] sm:$0xff]
    %v207 = vld [vmem:[#allocation3 + $0x58] sm:$0xff]
    %v208 = vld [vmem:[#allocation3 + $0x60] sm:$0xff]
    %v209 = vld [vmem:[#allocation3 + $0x68] sm:$0xff]
    %v210 = vld [vmem:[#allocation3 + $0x70] sm:$0xff]
    %v211 = vld [vmem:[#allocation3 + $0x78] sm:$0xff]
    %v212 = vld [vmem:[#allocation3 + $0x80] sm:$0xff]
    %v213 = vld [vmem:[#allocation3 + $0x88] sm:$0xff]
    %214 = vst [vmem:[#allocation2 + $0x280] sm:$0xff] %v206
    %215 = vst [vmem:[#allocation2 + $0x288] sm:$0xff] %v207
    %216 = vst [vmem:[#allocation2 + $0x290] sm:$0xff] %v208
    %217 = vst [vmem:[#allocation2 + $0x298] sm:$0xff] %v209
    %218 = vst [vmem:[#allocation2 + $0x2a0] sm:$0xff] %v210
    %219 = vst [vmem:[#allocation2 + $0x2a8] sm:$0xff] %v211
    %220 = vst [vmem:[#allocation2 + $0x2b0] sm:$0xff] %v212
    %221 = vst [vmem:[#allocation2 + $0x2b8] sm:$0xff] %v213
    %v222 = vld [vmem:[#allocation3 + $0x58] sm:$0xff]
    %v223 = vld [vmem:[#allocation3 + $0x60] sm:$0xff]
    %v224 = vld [vmem:[#allocation3 + $0x68] sm:$0xff]
    %v225 = vld [vmem:[#allocation3 + $0x70] sm:$0xff]
    %v226 = vld [vmem:[#allocation3 + $0x78] sm:$0xff]
    %v227 = vld [vmem:[#allocation3 + $0x80] sm:$0xff]
    %v228 = vld [vmem:[#allocation3 + $0x88] sm:$0xff]
    %v229 = vld [vmem:[#allocation3 + $0x90] sm:$0xff]
    %230 = vst [vmem:[#allocation2 + $0x2c0] sm:$0xff] %v222
    %231 = vst [vmem:[#allocation2 + $0x2c8] sm:$0xff] %v223
    %232 = vst [vmem:[#allocation2 + $0x2d0] sm:$0xff] %v224
    %233 = vst [vmem:[#allocation2 + $0x2d8] sm:$0xff] %v225
    %234 = vst [vmem:[#allocation2 + $0x2e0] sm:$0xff] %v226
    %235 = vst [vmem:[#allocation2 + $0x2e8] sm:$0xff] %v227
    %236 = vst [vmem:[#allocation2 + $0x2f0] sm:$0xff] %v228
    %237 = vst [vmem:[#allocation2 + $0x2f8] sm:$0xff] %v229
    %v238 = vld [vmem:[#allocation3 + $0x60] sm:$0xff]
    %v239 = vld [vmem:[#allocation3 + $0x68] sm:$0xff]
    %v240 = vld [vmem:[#allocation3 + $0x70] sm:$0xff]
    %v241 = vld [vmem:[#allocation3 + $0x78] sm:$0xff]
    %v242 = vld [vmem:[#allocation3 + $0x80] sm:$0xff]
    %v243 = vld [vmem:[#allocation3 + $0x88] sm:$0xff]
    %v244 = vld [vmem:[#allocation3 + $0x90] sm:$0xff]
    %v245 = vld [vmem:[#allocation3 + $0x98] sm:$0xff]
    %246 = vst [vmem:[#allocation2 + $0x300] sm:$0xff] %v238
    %247 = vst [vmem:[#allocation2 + $0x308] sm:$0xff] %v239
    %248 = vst [vmem:[#allocation2 + $0x310] sm:$0xff] %v240
    %249 = vst [vmem:[#allocation2 + $0x318] sm:$0xff] %v241
    %250 = vst [vmem:[#allocation2 + $0x320] sm:$0xff] %v242
    %251 = vst [vmem:[#allocation2 + $0x328] sm:$0xff] %v243
    %252 = vst [vmem:[#allocation2 + $0x330] sm:$0xff] %v244
    %253 = vst [vmem:[#allocation2 + $0x338] sm:$0xff] %v245
    %v254 = vld [vmem:[#allocation3 + $0x68] sm:$0xff]
    %v255 = vld [vmem:[#allocation3 + $0x70] sm:$0xff]
    %v256 = vld [vmem:[#allocation3 + $0x78] sm:$0xff]
    %v257 = vld [vmem:[#allocation3 + $0x80] sm:$0xff]
    %v258 = vld [vmem:[#allocation3 + $0x88] sm:$0xff]
    %v259 = vld [vmem:[#allocation3 + $0x90] sm:$0xff]
    %v260 = vld [vmem:[#allocation3 + $0x98] sm:$0xff]
    %v261 = vld [vmem:[#allocation3 + $0xa0] sm:$0xff]
    %262 = vst [vmem:[#allocation2 + $0x340] sm:$0xff] %v254
    %263 = vst [vmem:[#allocation2 + $0x348] sm:$0xff] %v255
    %264 = vst [vmem:[#allocation2 + $0x350] sm:$0xff] %v256
    %265 = vst [vmem:[#allocation2 + $0x358] sm:$0xff] %v257
    %266 = vst [vmem:[#allocation2 + $0x360] sm:$0xff] %v258
    %267 = vst [vmem:[#allocation2 + $0x368] sm:$0xff] %v259
    %268 = vst [vmem:[#allocation2 + $0x370] sm:$0xff] %v260
    %269 = vst [vmem:[#allocation2 + $0x378] sm:$0xff] %v261
    %v270 = vld [vmem:[#allocation3 + $0x70] sm:$0xff]
    %v271 = vld [vmem:[#allocation3 + $0x78] sm:$0xff]
    %v272 = vld [vmem:[#allocation3 + $0x80] sm:$0xff]
    %v273 = vld [vmem:[#allocation3 + $0x88] sm:$0xff]
    %v274 = vld [vmem:[#allocation3 + $0x90] sm:$0xff]
    %v275 = vld [vmem:[#allocation3 + $0x98] sm:$0xff]
    %v276 = vld [vmem:[#allocation3 + $0xa0] sm:$0xff]
    %v277 = vld [vmem:[#allocation3 + $0xa8] sm:$0xff]
    %278 = vst [vmem:[#allocation2 + $0x380] sm:$0xff] %v270
    %279 = vst [vmem:[#allocation2 + $0x388] sm:$0xff] %v271
    %280 = vst [vmem:[#allocation2 + $0x390] sm:$0xff] %v272
    %281 = vst [vmem:[#allocation2 + $0x398] sm:$0xff] %v273
    %282 = vst [vmem:[#allocation2 + $0x3a0] sm:$0xff] %v274
    %283 = vst [vmem:[#allocation2 + $0x3a8] sm:$0xff] %v275
    %284 = vst [vmem:[#allocation2 + $0x3b0] sm:$0xff] %v276
    %285 = vst [vmem:[#allocation2 + $0x3b8] sm:$0xff] %v277
    %v286 = vld [vmem:[#allocation3 + $0x78] sm:$0xff]
    %v287 = vld [vmem:[#allocation3 + $0x80] sm:$0xff]
    %v288 = vld [vmem:[#allocation3 + $0x88] sm:$0xff]
    %v289 = vld [vmem:[#allocation3 + $0x90] sm:$0xff]
    %v290 = vld [vmem:[#allocation3 + $0x98] sm:$0xff]
    %v291 = vld [vmem:[#allocation3 + $0xa0] sm:$0xff]
    %v292 = vld [vmem:[#allocation3 + $0xa8] sm:$0xff]
    %v293 = vld [vmem:[#allocation3 + $0xb0] sm:$0xff]
    %294 = vst [vmem:[#allocation2 + $0x3c0] sm:$0xff] %v286
    %295 = vst [vmem:[#allocation2 + $0x3c8] sm:$0xff] %v287
    %296 = vst [vmem:[#allocation2 + $0x3d0] sm:$0xff] %v288
    %297 = vst [vmem:[#allocation2 + $0x3d8] sm:$0xff] %v289
    %298 = vst [vmem:[#allocation2 + $0x3e0] sm:$0xff] %v290
    %299 = vst [vmem:[#allocation2 + $0x3e8] sm:$0xff] %v291
    %300 = vst [vmem:[#allocation2 + $0x3f0] sm:$0xff] %v292
    %301 = vst [vmem:[#allocation2 + $0x3f8] sm:$0xff] %v293
    %v302 = vld [vmem:[#allocation3 + $0x80] sm:$0xff]
    %v303 = vld [vmem:[#allocation3 + $0x88] sm:$0xff]
    %v304 = vld [vmem:[#allocation3 + $0x90] sm:$0xff]
    %v305 = vld [vmem:[#allocation3 + $0x98] sm:$0xff]
    %v306 = vld [vmem:[#allocation3 + $0xa0] sm:$0xff]
    %v307 = vld [vmem:[#allocation3 + $0xa8] sm:$0xff]
    %v308 = vld [vmem:[#allocation3 + $0xb0] sm:$0xff]
    %v309 = vld [vmem:[#allocation3 + $0xb8] sm:$0xff]
    %310 = vst [vmem:[#allocation2 + $0x400] sm:$0xff] %v302
    %311 = vst [vmem:[#allocation2 + $0x408] sm:$0xff] %v303
    %312 = vst [vmem:[#allocation2 + $0x410] sm:$0xff] %v304
    %313 = vst [vmem:[#allocation2 + $0x418] sm:$0xff] %v305
    %314 = vst [vmem:[#allocation2 + $0x420] sm:$0xff] %v306
    %315 = vst [vmem:[#allocation2 + $0x428] sm:$0xff] %v307
    %316 = vst [vmem:[#allocation2 + $0x430] sm:$0xff] %v308
    %317 = vst [vmem:[#allocation2 + $0x438] sm:$0xff] %v309
    %v318 = vld [vmem:[#allocation3 + $0x88] sm:$0xff]
    %v319 = vld [vmem:[#allocation3 + $0x90] sm:$0xff]
    %v320 = vld [vmem:[#allocation3 + $0x98] sm:$0xff]
    %v321 = vld [vmem:[#allocation3 + $0xa0] sm:$0xff]
    %v322 = vld [vmem:[#allocation3 + $0xa8] sm:$0xff]
    %v323 = vld [vmem:[#allocation3 + $0xb0] sm:$0xff]
    %v324 = vld [vmem:[#allocation3 + $0xb8] sm:$0xff]
    %v325 = vld [vmem:[#allocation3 + $0xc0] sm:$0xff]
    %326 = vst [vmem:[#allocation2 + $0x440] sm:$0xff] %v318
    %327 = vst [vmem:[#allocation2 + $0x448] sm:$0xff] %v319
    %328 = vst [vmem:[#allocation2 + $0x450] sm:$0xff] %v320
    %329 = vst [vmem:[#allocation2 + $0x458] sm:$0xff] %v321
    %330 = vst [vmem:[#allocation2 + $0x460] sm:$0xff] %v322
    %331 = vst [vmem:[#allocation2 + $0x468] sm:$0xff] %v323
    %332 = vst [vmem:[#allocation2 + $0x470] sm:$0xff] %v324
    %333 = vst [vmem:[#allocation2 + $0x478] sm:$0xff] %v325
    %v334 = vld [vmem:[#allocation3 + $0x90] sm:$0xff]
    %v335 = vld [vmem:[#allocation3 + $0x98] sm:$0xff]
    %v336 = vld [vmem:[#allocation3 + $0xa0] sm:$0xff]
    %v337 = vld [vmem:[#allocation3 + $0xa8] sm:$0xff]
    %v338 = vld [vmem:[#allocation3 + $0xb0] sm:$0xff]
    %v339 = vld [vmem:[#allocation3 + $0xb8] sm:$0xff]
    %v340 = vld [vmem:[#allocation3 + $0xc0] sm:$0xff]
    %v341 = vld [vmem:[#allocation3 + $0xc8] sm:$0xff]
    %342 = vst [vmem:[#allocation2 + $0x480] sm:$0xff] %v334
    %343 = vst [vmem:[#allocation2 + $0x488] sm:$0xff] %v335
    %344 = vst [vmem:[#allocation2 + $0x490] sm:$0xff] %v336
    %345 = vst [vmem:[#allocation2 + $0x498] sm:$0xff] %v337
    %346 = vst [vmem:[#allocation2 + $0x4a0] sm:$0xff] %v338
    %347 = vst [vmem:[#allocation2 + $0x4a8] sm:$0xff] %v339
    %348 = vst [vmem:[#allocation2 + $0x4b0] sm:$0xff] %v340
    %349 = vst [vmem:[#allocation2 + $0x4b8] sm:$0xff] %v341
    %v350 = vld [vmem:[#allocation3 + $0x98] sm:$0xff]
    %v351 = vld [vmem:[#allocation3 + $0xa0] sm:$0xff]
    %v352 = vld [vmem:[#allocation3 + $0xa8] sm:$0xff]
    %v353 = vld [vmem:[#allocation3 + $0xb0] sm:$0xff]
    %v354 = vld [vmem:[#allocation3 + $0xb8] sm:$0xff]
    %v355 = vld [vmem:[#allocation3 + $0xc0] sm:$0xff]
    %v356 = vld [vmem:[#allocation3 + $0xc8] sm:$0xff]
    %v357 = vld [vmem:[#allocation3 + $0xd0] sm:$0xff]
    %358 = vst [vmem:[#allocation2 + $0x4c0] sm:$0xff] %v350
    %359 = vst [vmem:[#allocation2 + $0x4c8] sm:$0xff] %v351
    %360 = vst [vmem:[#allocation2 + $0x4d0] sm:$0xff] %v352
    %361 = vst [vmem:[#allocation2 + $0x4d8] sm:$0xff] %v353
    %362 = vst [vmem:[#allocation2 + $0x4e0] sm:$0xff] %v354
    %363 = vst [vmem:[#allocation2 + $0x4e8] sm:$0xff] %v355
    %364 = vst [vmem:[#allocation2 + $0x4f0] sm:$0xff] %v356
    %365 = vst [vmem:[#allocation2 + $0x4f8] sm:$0xff] %v357
    %v366 = vld [vmem:[#allocation3 + $0xa0] sm:$0xff]
    %v367 = vld [vmem:[#allocation3 + $0xa8] sm:$0xff]
    %v368 = vld [vmem:[#allocation3 + $0xb0] sm:$0xff]
    %v369 = vld [vmem:[#allocation3 + $0xb8] sm:$0xff]
    %v370 = vld [vmem:[#allocation3 + $0xc0] sm:$0xff]
    %v371 = vld [vmem:[#allocation3 + $0xc8] sm:$0xff]
    %v372 = vld [vmem:[#allocation3 + $0xd0] sm:$0xff]
    %v373 = vld [vmem:[#allocation3 + $0xd8] sm:$0xff]
    %374 = vst [vmem:[#allocation2 + $0x500] sm:$0xff] %v366
    %375 = vst [vmem:[#allocation2 + $0x508] sm:$0xff] %v367
    %376 = vst [vmem:[#allocation2 + $0x510] sm:$0xff] %v368
    %377 = vst [vmem:[#allocation2 + $0x518] sm:$0xff] %v369
    %378 = vst [vmem:[#allocation2 + $0x520] sm:$0xff] %v370
    %379 = vst [vmem:[#allocation2 + $0x528] sm:$0xff] %v371
    %380 = vst [vmem:[#allocation2 + $0x530] sm:$0xff] %v372
    %381 = vst [vmem:[#allocation2 + $0x538] sm:$0xff] %v373
    %v382 = vld [vmem:[#allocation3 + $0xa8] sm:$0xff]
    %v383 = vld [vmem:[#allocation3 + $0xb0] sm:$0xff]
    %v384 = vld [vmem:[#allocation3 + $0xb8] sm:$0xff]
    %v385 = vld [vmem:[#allocation3 + $0xc0] sm:$0xff]
    %v386 = vld [vmem:[#allocation3 + $0xc8] sm:$0xff]
    %v387 = vld [vmem:[#allocation3 + $0xd0] sm:$0xff]
    %v388 = vld [vmem:[#allocation3 + $0xd8] sm:$0xff]
    %v389 = vld [vmem:[#allocation3 + $0xe0] sm:$0xff]
    %390 = vst [vmem:[#allocation2 + $0x540] sm:$0xff] %v382
    %391 = vst [vmem:[#allocation2 + $0x548] sm:$0xff] %v383
    %392 = vst [vmem:[#allocation2 + $0x550] sm:$0xff] %v384
    %393 = vst [vmem:[#allocation2 + $0x558] sm:$0xff] %v385
    %394 = vst [vmem:[#allocation2 + $0x560] sm:$0xff] %v386
    %395 = vst [vmem:[#allocation2 + $0x568] sm:$0xff] %v387
    %396 = vst [vmem:[#allocation2 + $0x570] sm:$0xff] %v388
    %397 = vst [vmem:[#allocation2 + $0x578] sm:$0xff] %v389
    %v398 = vld [vmem:[#allocation3 + $0xb0] sm:$0xff]
    %v399 = vld [vmem:[#allocation3 + $0xb8] sm:$0xff]
    %v400 = vld [vmem:[#allocation3 + $0xc0] sm:$0xff]
    %v401 = vld [vmem:[#allocation3 + $0xc8] sm:$0xff]
    %v402 = vld [vmem:[#allocation3 + $0xd0] sm:$0xff]
    %v403 = vld [vmem:[#allocation3 + $0xd8] sm:$0xff]
    %v404 = vld [vmem:[#allocation3 + $0xe0] sm:$0xff]
    %v405 = vld [vmem:[#allocation3 + $0xe8] sm:$0xff]
    %406 = vst [vmem:[#allocation2 + $0x580] sm:$0xff] %v398
    %407 = vst [vmem:[#allocation2 + $0x588] sm:$0xff] %v399
    %408 = vst [vmem:[#allocation2 + $0x590] sm:$0xff] %v400
    %409 = vst [vmem:[#allocation2 + $0x598] sm:$0xff] %v401
    %410 = vst [vmem:[#allocation2 + $0x5a0] sm:$0xff] %v402
    %411 = vst [vmem:[#allocation2 + $0x5a8] sm:$0xff] %v403
    %412 = vst [vmem:[#allocation2 + $0x5b0] sm:$0xff] %v404
    %413 = vst [vmem:[#allocation2 + $0x5b8] sm:$0xff] %v405
    %v414 = vld [vmem:[#allocation3 + $0xb8] sm:$0xff]
    %v415 = vld [vmem:[#allocation3 + $0xc0] sm:$0xff]
    %v416 = vld [vmem:[#allocation3 + $0xc8] sm:$0xff]
    %v417 = vld [vmem:[#allocation3 + $0xd0] sm:$0xff]
    %v418 = vld [vmem:[#allocation3 + $0xd8] sm:$0xff]
    %v419 = vld [vmem:[#allocation3 + $0xe0] sm:$0xff]
    %v420 = vld [vmem:[#allocation3 + $0xe8] sm:$0xff]
    %v421 = vld [vmem:[#allocation3 + $0xf0] sm:$0xff]
    %422 = vst [vmem:[#allocation2 + $0x5c0] sm:$0xff] %v414
    %423 = vst [vmem:[#allocation2 + $0x5c8] sm:$0xff] %v415
    %424 = vst [vmem:[#allocation2 + $0x5d0] sm:$0xff] %v416
    %425 = vst [vmem:[#allocation2 + $0x5d8] sm:$0xff] %v417
    %426 = vst [vmem:[#allocation2 + $0x5e0] sm:$0xff] %v418
    %427 = vst [vmem:[#allocation2 + $0x5e8] sm:$0xff] %v419
    %428 = vst [vmem:[#allocation2 + $0x5f0] sm:$0xff] %v420
    %429 = vst [vmem:[#allocation2 + $0x5f8] sm:$0xff] %v421
    %v430 = vld [vmem:[#allocation3 + $0xc0] sm:$0xff]
    %v431 = vld [vmem:[#allocation3 + $0xc8] sm:$0xff]
    %v432 = vld [vmem:[#allocation3 + $0xd0] sm:$0xff]
    %v433 = vld [vmem:[#allocation3 + $0xd8] sm:$0xff]
    %v434 = vld [vmem:[#allocation3 + $0xe0] sm:$0xff]
    %v435 = vld [vmem:[#allocation3 + $0xe8] sm:$0xff]
    %v436 = vld [vmem:[#allocation3 + $0xf0] sm:$0xff]
    %v437 = vld [vmem:[#allocation3 + $0xf8] sm:$0xff]
    %438 = vst [vmem:[#allocation2 + $0x600] sm:$0xff] %v430
    %439 = vst [vmem:[#allocation2 + $0x608] sm:$0xff] %v431
    %440 = vst [vmem:[#allocation2 + $0x610] sm:$0xff] %v432
    %441 = vst [vmem:[#allocation2 + $0x618] sm:$0xff] %v433
    %442 = vst [vmem:[#allocation2 + $0x620] sm:$0xff] %v434
    %443 = vst [vmem:[#allocation2 + $0x628] sm:$0xff] %v435
    %444 = vst [vmem:[#allocation2 + $0x630] sm:$0xff] %v436
    %445 = vst [vmem:[#allocation2 + $0x638] sm:$0xff] %v437
    %v446 = vld [vmem:[#allocation3 + $0xc8] sm:$0xff]
    %v447 = vld [vmem:[#allocation3 + $0xd0] sm:$0xff]
    %v448 = vld [vmem:[#allocation3 + $0xd8] sm:$0xff]
    %v449 = vld [vmem:[#allocation3 + $0xe0] sm:$0xff]
    %v450 = vld [vmem:[#allocation3 + $0xe8] sm:$0xff]
    %v451 = vld [vmem:[#allocation3 + $0xf0] sm:$0xff]
    %v452 = vld [vmem:[#allocation3 + $0xf8] sm:$0xff]
    %v453 = vld [vmem:[#allocation3 + $0x100] sm:$0xff]
    %454 = vst [vmem:[#allocation2 + $0x640] sm:$0xff] %v446
    %455 = vst [vmem:[#allocation2 + $0x648] sm:$0xff] %v447
    %456 = vst [vmem:[#allocation2 + $0x650] sm:$0xff] %v448
    %457 = vst [vmem:[#allocation2 + $0x658] sm:$0xff] %v449
    %458 = vst [vmem:[#allocation2 + $0x660] sm:$0xff] %v450
    %459 = vst [vmem:[#allocation2 + $0x668] sm:$0xff] %v451
    %460 = vst [vmem:[#allocation2 + $0x670] sm:$0xff] %v452
    %461 = vst [vmem:[#allocation2 + $0x678] sm:$0xff] %v453
    %v462 = vld [vmem:[#allocation3 + $0xd0] sm:$0xff]
    %v463 = vld [vmem:[#allocation3 + $0xd8] sm:$0xff]
    %v464 = vld [vmem:[#allocation3 + $0xe0] sm:$0xff]
    %v465 = vld [vmem:[#allocation3 + $0xe8] sm:$0xff]
    %v466 = vld [vmem:[#allocation3 + $0xf0] sm:$0xff]
    %v467 = vld [vmem:[#allocation3 + $0xf8] sm:$0xff]
    %v468 = vld [vmem:[#allocation3 + $0x100] sm:$0xff]
    %v469 = vld [vmem:[#allocation3 + $0x108] sm:$0xff]
    %470 = vst [vmem:[#allocation2 + $0x680] sm:$0xff] %v462
    %471 = vst [vmem:[#allocation2 + $0x688] sm:$0xff] %v463
    %472 = vst [vmem:[#allocation2 + $0x690] sm:$0xff] %v464
    %473 = vst [vmem:[#allocation2 + $0x698] sm:$0xff] %v465
    %474 = vst [vmem:[#allocation2 + $0x6a0] sm:$0xff] %v466
    %475 = vst [vmem:[#allocation2 + $0x6a8] sm:$0xff] %v467
    %476 = vst [vmem:[#allocation2 + $0x6b0] sm:$0xff] %v468
    %477 = vst [vmem:[#allocation2 + $0x6b8] sm:$0xff] %v469
    %v478 = vld [vmem:[#allocation3 + $0xd8] sm:$0xff]
    %v479 = vld [vmem:[#allocation3 + $0xe0] sm:$0xff]
    %v480 = vld [vmem:[#allocation3 + $0xe8] sm:$0xff]
    %v481 = vld [vmem:[#allocation3 + $0xf0] sm:$0xff]
    %v482 = vld [vmem:[#allocation3 + $0xf8] sm:$0xff]
    %v483 = vld [vmem:[#allocation3 + $0x100] sm:$0xff]
    %v484 = vld [vmem:[#allocation3 + $0x108] sm:$0xff]
    %v485 = vld [vmem:[#allocation3 + $0x110] sm:$0xff]
    %486 = vst [vmem:[#allocation2 + $0x6c0] sm:$0xff] %v478
    %487 = vst [vmem:[#allocation2 + $0x6c8] sm:$0xff] %v479
    %488 = vst [vmem:[#allocation2 + $0x6d0] sm:$0xff] %v480
    %489 = vst [vmem:[#allocation2 + $0x6d8] sm:$0xff] %v481
    %490 = vst [vmem:[#allocation2 + $0x6e0] sm:$0xff] %v482
    %491 = vst [vmem:[#allocation2 + $0x6e8] sm:$0xff] %v483
    %492 = vst [vmem:[#allocation2 + $0x6f0] sm:$0xff] %v484
    %493 = vst [vmem:[#allocation2 + $0x6f8] sm:$0xff] %v485
    %v494 = vld [vmem:[#allocation3 + $0xe0] sm:$0xff]
    %v495 = vld [vmem:[#allocation3 + $0xe8] sm:$0xff]
    %v496 = vld [vmem:[#allocation3 + $0xf0] sm:$0xff]
    %v497 = vld [vmem:[#allocation3 + $0xf8] sm:$0xff]
    %v498 = vld [vmem:[#allocation3 + $0x100] sm:$0xff]
    %v499 = vld [vmem:[#allocation3 + $0x108] sm:$0xff]
    %v500 = vld [vmem:[#allocation3 + $0x110] sm:$0xff]
    %v501 = vld [vmem:[#allocation3 + $0x118] sm:$0xff]
    %502 = vst [vmem:[#allocation2 + $0x700] sm:$0xff] %v494
    %503 = vst [vmem:[#allocation2 + $0x708] sm:$0xff] %v495
    %504 = vst [vmem:[#allocation2 + $0x710] sm:$0xff] %v496
    %505 = vst [vmem:[#allocation2 + $0x718] sm:$0xff] %v497
    %506 = vst [vmem:[#allocation2 + $0x720] sm:$0xff] %v498
    %507 = vst [vmem:[#allocation2 + $0x728] sm:$0xff] %v499
    %508 = vst [vmem:[#allocation2 + $0x730] sm:$0xff] %v500
    %509 = vst [vmem:[#allocation2 + $0x738] sm:$0xff] %v501
    %v510 = vld [vmem:[#allocation3 + $0xe8] sm:$0xff]
    %v511 = vld [vmem:[#allocation3 + $0xf0] sm:$0xff]
    %v512 = vld [vmem:[#allocation3 + $0xf8] sm:$0xff]
    %v513 = vld [vmem:[#allocation3 + $0x100] sm:$0xff]
    %v514 = vld [vmem:[#allocation3 + $0x108] sm:$0xff]
    %v515 = vld [vmem:[#allocation3 + $0x110] sm:$0xff]
    %v516 = vld [vmem:[#allocation3 + $0x118] sm:$0xff]
    %v517 = vld [vmem:[#allocation3 + $0x120] sm:$0xff]
    %518 = vst [vmem:[#allocation2 + $0x740] sm:$0xff] %v510
    %519 = vst [vmem:[#allocation2 + $0x748] sm:$0xff] %v511
    %520 = vst [vmem:[#allocation2 + $0x750] sm:$0xff] %v512
    %521 = vst [vmem:[#allocation2 + $0x758] sm:$0xff] %v513
    %522 = vst [vmem:[#allocation2 + $0x760] sm:$0xff] %v514
    %523 = vst [vmem:[#allocation2 + $0x768] sm:$0xff] %v515
    %524 = vst [vmem:[#allocation2 + $0x770] sm:$0xff] %v516
    %525 = vst [vmem:[#allocation2 + $0x778] sm:$0xff] %v517
    %v526 = vld [vmem:[#allocation3 + $0xf0] sm:$0xff]
    %v527 = vld [vmem:[#allocation3 + $0xf8] sm:$0xff]
    %v528 = vld [vmem:[#allocation3 + $0x100] sm:$0xff]
    %v529 = vld [vmem:[#allocation3 + $0x108] sm:$0xff]
    %v530 = vld [vmem:[#allocation3 + $0x110] sm:$0xff]
    %v531 = vld [vmem:[#allocation3 + $0x118] sm:$0xff]
    %v532 = vld [vmem:[#allocation3 + $0x120] sm:$0xff]
    %v533 = vld [vmem:[#allocation3 + $0x128] sm:$0xff]
    %534 = vst [vmem:[#allocation2 + $0x780] sm:$0xff] %v526
    %535 = vst [vmem:[#allocation2 + $0x788] sm:$0xff] %v527
    %536 = vst [vmem:[#allocation2 + $0x790] sm:$0xff] %v528
    %537 = vst [vmem:[#allocation2 + $0x798] sm:$0xff] %v529
    %538 = vst [vmem:[#allocation2 + $0x7a0] sm:$0xff] %v530
    %539 = vst [vmem:[#allocation2 + $0x7a8] sm:$0xff] %v531
    %540 = vst [vmem:[#allocation2 + $0x7b0] sm:$0xff] %v532
    %541 = vst [vmem:[#allocation2 + $0x7b8] sm:$0xff] %v533
    %v542 = vld [vmem:[#allocation3 + $0xf8] sm:$0xff]
    %v543 = vld [vmem:[#allocation3 + $0x100] sm:$0xff]
    %v544 = vld [vmem:[#allocation3 + $0x108] sm:$0xff]
    %v545 = vld [vmem:[#allocation3 + $0x110] sm:$0xff]
    %v546 = vld [vmem:[#allocation3 + $0x118] sm:$0xff]
    %v547 = vld [vmem:[#allocation3 + $0x120] sm:$0xff]
    %v548 = vld [vmem:[#allocation3 + $0x128] sm:$0xff]
    %v549 = vld [vmem:[#allocation3 + $0x130] sm:$0xff]
    %550 = vst [vmem:[#allocation2 + $0x7c0] sm:$0xff] %v542
    %551 = vst [vmem:[#allocation2 + $0x7c8] sm:$0xff] %v543
    %552 = vst [vmem:[#allocation2 + $0x7d0] sm:$0xff] %v544
    %553 = vst [vmem:[#allocation2 + $0x7d8] sm:$0xff] %v545
    %554 = vst [vmem:[#allocation2 + $0x7e0] sm:$0xff] %v546
    %555 = vst [vmem:[#allocation2 + $0x7e8] sm:$0xff] %v547
    %556 = vst [vmem:[#allocation2 + $0x7f0] sm:$0xff] %v548
    %557 = vst [vmem:[#allocation2 + $0x7f8] sm:$0xff] %v549
    %v558 = vld [vmem:[#allocation6] sm:$0xff]
    %v559 = vld [vmem:[#allocation6 + $0x8] sm:$0xff]
    %v560 = vld [vmem:[#allocation2] sm:$0xff]
    %v561 = vld [vmem:[#allocation2 + $0x8] sm:$0xff]
    %v562 = vld [vmem:[#allocation2 + $0x10] sm:$0xff]
    %v563 = vld [vmem:[#allocation2 + $0x18] sm:$0xff]
    %v564 = vld [vmem:[#allocation2 + $0x20] sm:$0xff]
    %v565 = vld [vmem:[#allocation2 + $0x28] sm:$0xff]
    %v566 = vld [vmem:[#allocation2 + $0x30] sm:$0xff]
    %v567 = vld [vmem:[#allocation2 + $0x38] sm:$0xff]
    %v568 = vld [vmem:[#allocation2 + $0x40] sm:$0xff]
    %v569 = vld [vmem:[#allocation2 + $0x48] sm:$0xff]
    %v570 = vld [vmem:[#allocation2 + $0x50] sm:$0xff]
    %v571 = vld [vmem:[#allocation2 + $0x58] sm:$0xff]
    %v572 = vld [vmem:[#allocation2 + $0x60] sm:$0xff]
    %v573 = vld [vmem:[#allocation2 + $0x68] sm:$0xff]
    %v574 = vld [vmem:[#allocation2 + $0x70] sm:$0xff]
    %v575 = vld [vmem:[#allocation2 + $0x78] sm:$0xff]
    %v576 = vld [vmem:[#allocation2 + $0x80] sm:$0xff]
    %v577 = vld [vmem:[#allocation2 + $0x88] sm:$0xff]
    %v578 = vld [vmem:[#allocation2 + $0x90] sm:$0xff]
    %v579 = vld [vmem:[#allocation2 + $0x98] sm:$0xff]
    %v580 = vld [vmem:[#allocation2 + $0xa0] sm:$0xff]
    %v581 = vld [vmem:[#allocation2 + $0xa8] sm:$0xff]
    %v582 = vld [vmem:[#allocation2 + $0xb0] sm:$0xff]
    %v583 = vld [vmem:[#allocation2 + $0xb8] sm:$0xff]
    %v584 = vld [vmem:[#allocation2 + $0xc0] sm:$0xff]
    %v585 = vld [vmem:[#allocation2 + $0xc8] sm:$0xff]
    %v586 = vld [vmem:[#allocation2 + $0xd0] sm:$0xff]
    %v587 = vld [vmem:[#allocation2 + $0xd8] sm:$0xff]
    %v588 = vld [vmem:[#allocation2 + $0xe0] sm:$0xff]
    %v589 = vld [vmem:[#allocation2 + $0xe8] sm:$0xff]
    %v590 = vld [vmem:[#allocation2 + $0xf0] sm:$0xff]
    %v591 = vld [vmem:[#allocation2 + $0xf8] sm:$0xff]
    %v592 = vld [vmem:[#allocation2 + $0x100] sm:$0xff]
    %v593 = vld [vmem:[#allocation2 + $0x108] sm:$0xff]
    %v594 = vld [vmem:[#allocation2 + $0x110] sm:$0xff]
    %v595 = vld [vmem:[#allocation2 + $0x118] sm:$0xff]
    %v596 = vld [vmem:[#allocation2 + $0x120] sm:$0xff]
    %v597 = vld [vmem:[#allocation2 + $0x128] sm:$0xff]
    %v598 = vld [vmem:[#allocation2 + $0x130] sm:$0xff]
    %v599 = vld [vmem:[#allocation2 + $0x138] sm:$0xff]
    %v600 = vld [vmem:[#allocation2 + $0x140] sm:$0xff]
    %v601 = vld [vmem:[#allocation2 + $0x148] sm:$0xff]
    %v602 = vld [vmem:[#allocation2 + $0x150] sm:$0xff]
    %v603 = vld [vmem:[#allocation2 + $0x158] sm:$0xff]
    %v604 = vld [vmem:[#allocation2 + $0x160] sm:$0xff]
    %v605 = vld [vmem:[#allocation2 + $0x168] sm:$0xff]
    %v606 = vld [vmem:[#allocation2 + $0x170] sm:$0xff]
    %v607 = vld [vmem:[#allocation2 + $0x178] sm:$0xff]
    %v608 = vld [vmem:[#allocation2 + $0x180] sm:$0xff]
    %v609 = vld [vmem:[#allocation2 + $0x188] sm:$0xff]
    %v610 = vld [vmem:[#allocation2 + $0x190] sm:$0xff]
    %v611 = vld [vmem:[#allocation2 + $0x198] sm:$0xff]
    %v612 = vld [vmem:[#allocation2 + $0x1a0] sm:$0xff]
    %v613 = vld [vmem:[#allocation2 + $0x1a8] sm:$0xff]
    %v614 = vld [vmem:[#allocation2 + $0x1b0] sm:$0xff]
    %v615 = vld [vmem:[#allocation2 + $0x1b8] sm:$0xff]
    %v616 = vld [vmem:[#allocation2 + $0x1c0] sm:$0xff]
    %v617 = vld [vmem:[#allocation2 + $0x1c8] sm:$0xff]
    %v618 = vld [vmem:[#allocation2 + $0x1d0] sm:$0xff]
    %v619 = vld [vmem:[#allocation2 + $0x1d8] sm:$0xff]
    %v620 = vld [vmem:[#allocation2 + $0x1e0] sm:$0xff]
    %v621 = vld [vmem:[#allocation2 + $0x1e8] sm:$0xff]
    %v622 = vld [vmem:[#allocation2 + $0x1f0] sm:$0xff]
    %v623 = vld [vmem:[#allocation2 + $0x1f8] sm:$0xff]
    %v624 = vld [vmem:[#allocation2 + $0x200] sm:$0xff]
    %v625 = vld [vmem:[#allocation2 + $0x208] sm:$0xff]
    %v626 = vld [vmem:[#allocation2 + $0x210] sm:$0xff]
    %v627 = vld [vmem:[#allocation2 + $0x218] sm:$0xff]
    %v628 = vld [vmem:[#allocation2 + $0x220] sm:$0xff]
    %v629 = vld [vmem:[#allocation2 + $0x228] sm:$0xff]
    %v630 = vld [vmem:[#allocation2 + $0x230] sm:$0xff]
    %v631 = vld [vmem:[#allocation2 + $0x238] sm:$0xff]
    %v632 = vld [vmem:[#allocation2 + $0x240] sm:$0xff]
    %v633 = vld [vmem:[#allocation2 + $0x248] sm:$0xff]
    %v634 = vld [vmem:[#allocation2 + $0x250] sm:$0xff]
    %v635 = vld [vmem:[#allocation2 + $0x258] sm:$0xff]
    %v636 = vld [vmem:[#allocation2 + $0x260] sm:$0xff]
    %v637 = vld [vmem:[#allocation2 + $0x268] sm:$0xff]
    %v638 = vld [vmem:[#allocation2 + $0x270] sm:$0xff]
    %v639 = vld [vmem:[#allocation2 + $0x278] sm:$0xff]
    %v640 = vld [vmem:[#allocation2 + $0x280] sm:$0xff]
    %v641 = vld [vmem:[#allocation2 + $0x288] sm:$0xff]
    %v642 = vld [vmem:[#allocation2 + $0x290] sm:$0xff]
    %v643 = vld [vmem:[#allocation2 + $0x298] sm:$0xff]
    %v644 = vld [vmem:[#allocation2 + $0x2a0] sm:$0xff]
    %v645 = vld [vmem:[#allocation2 + $0x2a8] sm:$0xff]
    %v646 = vld [vmem:[#allocation2 + $0x2b0] sm:$0xff]
    %v647 = vld [vmem:[#allocation2 + $0x2b8] sm:$0xff]
    %v648 = vld [vmem:[#allocation2 + $0x2c0] sm:$0xff]
    %v649 = vld [vmem:[#allocation2 + $0x2c8] sm:$0xff]
    %v650 = vld [vmem:[#allocation2 + $0x2d0] sm:$0xff]
    %v651 = vld [vmem:[#allocation2 + $0x2d8] sm:$0xff]
    %v652 = vld [vmem:[#allocation2 + $0x2e0] sm:$0xff]
    %v653 = vld [vmem:[#allocation2 + $0x2e8] sm:$0xff]
    %v654 = vld [vmem:[#allocation2 + $0x2f0] sm:$0xff]
    %v655 = vld [vmem:[#allocation2 + $0x2f8] sm:$0xff]
    %v656 = vld [vmem:[#allocation2 + $0x300] sm:$0xff]
    %v657 = vld [vmem:[#allocation2 + $0x308] sm:$0xff]
    %v658 = vld [vmem:[#allocation2 + $0x310] sm:$0xff]
    %v659 = vld [vmem:[#allocation2 + $0x318] sm:$0xff]
    %v660 = vld [vmem:[#allocation2 + $0x320] sm:$0xff]
    %v661 = vld [vmem:[#allocation2 + $0x328] sm:$0xff]
    %v662 = vld [vmem:[#allocation2 + $0x330] sm:$0xff]
    %v663 = vld [vmem:[#allocation2 + $0x338] sm:$0xff]
    %v664 = vld [vmem:[#allocation2 + $0x340] sm:$0xff]
    %v665 = vld [vmem:[#allocation2 + $0x348] sm:$0xff]
    %v666 = vld [vmem:[#allocation2 + $0x350] sm:$0xff]
    %v667 = vld [vmem:[#allocation2 + $0x358] sm:$0xff]
    %v668 = vld [vmem:[#allocation2 + $0x360] sm:$0xff]
    %v669 = vld [vmem:[#allocation2 + $0x368] sm:$0xff]
    %v670 = vld [vmem:[#allocation2 + $0x370] sm:$0xff]
    %v671 = vld [vmem:[#allocation2 + $0x378] sm:$0xff]
    %v672 = vld [vmem:[#allocation2 + $0x380] sm:$0xff]
    %v673 = vld [vmem:[#allocation2 + $0x388] sm:$0xff]
    %v674 = vld [vmem:[#allocation2 + $0x390] sm:$0xff]
    %v675 = vld [vmem:[#allocation2 + $0x398] sm:$0xff]
    %v676 = vld [vmem:[#allocation2 + $0x3a0] sm:$0xff]
    %v677 = vld [vmem:[#allocation2 + $0x3a8] sm:$0xff]
    %v678 = vld [vmem:[#allocation2 + $0x3b0] sm:$0xff]
    %v679 = vld [vmem:[#allocation2 + $0x3b8] sm:$0xff]
    %v680 = vld [vmem:[#allocation2 + $0x3c0] sm:$0xff]
    %v681 = vld [vmem:[#allocation2 + $0x3c8] sm:$0xff]
    %v682 = vld [vmem:[#allocation2 + $0x3d0] sm:$0xff]
    %v683 = vld [vmem:[#allocation2 + $0x3d8] sm:$0xff]
    %v684 = vld [vmem:[#allocation2 + $0x3e0] sm:$0xff]
    %v685 = vld [vmem:[#allocation2 + $0x3e8] sm:$0xff]
    %v686 = vld [vmem:[#allocation2 + $0x3f0] sm:$0xff]
    %v687 = vld [vmem:[#allocation2 + $0x3f8] sm:$0xff]
    %v688 = vld [vmem:[#allocation2 + $0x400] sm:$0xff]
    %v689 = vld [vmem:[#allocation2 + $0x408] sm:$0xff]
    %v690 = vld [vmem:[#allocation2 + $0x410] sm:$0xff]
    %v691 = vld [vmem:[#allocation2 + $0x418] sm:$0xff]
    %v692 = vld [vmem:[#allocation2 + $0x420] sm:$0xff]
    %v693 = vld [vmem:[#allocation2 + $0x428] sm:$0xff]
    %v694 = vld [vmem:[#allocation2 + $0x430] sm:$0xff]
    %v695 = vld [vmem:[#allocation2 + $0x438] sm:$0xff]
    %v696 = vld [vmem:[#allocation2 + $0x440] sm:$0xff]
    %v697 = vld [vmem:[#allocation2 + $0x448] sm:$0xff]
    %v698 = vld [vmem:[#allocation2 + $0x450] sm:$0xff]
    %v699 = vld [vmem:[#allocation2 + $0x458] sm:$0xff]
    %v700 = vld [vmem:[#allocation2 + $0x460] sm:$0xff]
    %v701 = vld [vmem:[#allocation2 + $0x468] sm:$0xff]
    %v702 = vld [vmem:[#allocation2 + $0x470] sm:$0xff]
    %v703 = vld [vmem:[#allocation2 + $0x478] sm:$0xff]
    %v704 = vld [vmem:[#allocation2 + $0x480] sm:$0xff]
    %v705 = vld [vmem:[#allocation2 + $0x488] sm:$0xff]
    %v706 = vld [vmem:[#allocation2 + $0x490] sm:$0xff]
    %v707 = vld [vmem:[#allocation2 + $0x498] sm:$0xff]
    %v708 = vld [vmem:[#allocation2 + $0x4a0] sm:$0xff]
    %v709 = vld [vmem:[#allocation2 + $0x4a8] sm:$0xff]
    %v710 = vld [vmem:[#allocation2 + $0x4b0] sm:$0xff]
    %v711 = vld [vmem:[#allocation2 + $0x4b8] sm:$0xff]
    %v712 = vld [vmem:[#allocation2 + $0x4c0] sm:$0xff]
    %v713 = vld [vmem:[#allocation2 + $0x4c8] sm:$0xff]
    %v714 = vld [vmem:[#allocation2 + $0x4d0] sm:$0xff]
    %v715 = vld [vmem:[#allocation2 + $0x4d8] sm:$0xff]
    %v716 = vld [vmem:[#allocation2 + $0x4e0] sm:$0xff]
    %v717 = vld [vmem:[#allocation2 + $0x4e8] sm:$0xff]
    %v718 = vld [vmem:[#allocation2 + $0x4f0] sm:$0xff]
    %v719 = vld [vmem:[#allocation2 + $0x4f8] sm:$0xff]
    %v720 = vld [vmem:[#allocation2 + $0x500] sm:$0xff]
    %v721 = vld [vmem:[#allocation2 + $0x508] sm:$0xff]
    %v722 = vld [vmem:[#allocation2 + $0x510] sm:$0xff]
    %v723 = vld [vmem:[#allocation2 + $0x518] sm:$0xff]
    %v724 = vld [vmem:[#allocation2 + $0x520] sm:$0xff]
    %v725 = vld [vmem:[#allocation2 + $0x528] sm:$0xff]
    %v726 = vld [vmem:[#allocation2 + $0x530] sm:$0xff]
    %v727 = vld [vmem:[#allocation2 + $0x538] sm:$0xff]
    %v728 = vld [vmem:[#allocation2 + $0x540] sm:$0xff]
    %v729 = vld [vmem:[#allocation2 + $0x548] sm:$0xff]
    %v730 = vld [vmem:[#allocation2 + $0x550] sm:$0xff]
    %v731 = vld [vmem:[#allocation2 + $0x558] sm:$0xff]
    %v732 = vld [vmem:[#allocation2 + $0x560] sm:$0xff]
    %v733 = vld [vmem:[#allocation2 + $0x568] sm:$0xff]
    %v734 = vld [vmem:[#allocation2 + $0x570] sm:$0xff]
    %v735 = vld [vmem:[#allocation2 + $0x578] sm:$0xff]
    %v736 = vld [vmem:[#allocation2 + $0x580] sm:$0xff]
    %v737 = vld [vmem:[#allocation2 + $0x588] sm:$0xff]
    %v738 = vld [vmem:[#allocation2 + $0x590] sm:$0xff]
    %v739 = vld [vmem:[#allocation2 + $0x598] sm:$0xff]
    %v740 = vld [vmem:[#allocation2 + $0x5a0] sm:$0xff]
    %v741 = vld [vmem:[#allocation2 + $0x5a8] sm:$0xff]
    %v742 = vld [vmem:[#allocation2 + $0x5b0] sm:$0xff]
    %v743 = vld [vmem:[#allocation2 + $0x5b8] sm:$0xff]
    %v744 = vld [vmem:[#allocation2 + $0x5c0] sm:$0xff]
    %v745 = vld [vmem:[#allocation2 + $0x5c8] sm:$0xff]
    %v746 = vld [vmem:[#allocation2 + $0x5d0] sm:$0xff]
    %v747 = vld [vmem:[#allocation2 + $0x5d8] sm:$0xff]
    %v748 = vld [vmem:[#allocation2 + $0x5e0] sm:$0xff]
    %v749 = vld [vmem:[#allocation2 + $0x5e8] sm:$0xff]
    %v750 = vld [vmem:[#allocation2 + $0x5f0] sm:$0xff]
    %v751 = vld [vmem:[#allocation2 + $0x5f8] sm:$0xff]
    %v752 = vld [vmem:[#allocation2 + $0x600] sm:$0xff]
    %v753 = vld [vmem:[#allocation2 + $0x608] sm:$0xff]
    %v754 = vld [vmem:[#allocation2 + $0x610] sm:$0xff]
    %v755 = vld [vmem:[#allocation2 + $0x618] sm:$0xff]
    %v756 = vld [vmem:[#allocation2 + $0x620] sm:$0xff]
    %v757 = vld [vmem:[#allocation2 + $0x628] sm:$0xff]
    %v758 = vld [vmem:[#allocation2 + $0x630] sm:$0xff]
    %v759 = vld [vmem:[#allocation2 + $0x638] sm:$0xff]
    %v760 = vld [vmem:[#allocation2 + $0x640] sm:$0xff]
    %v761 = vld [vmem:[#allocation2 + $0x648] sm:$0xff]
    %v762 = vld [vmem:[#allocation2 + $0x650] sm:$0xff]
    %v763 = vld [vmem:[#allocation2 + $0x658] sm:$0xff]
    %v764 = vld [vmem:[#allocation2 + $0x660] sm:$0xff]
    %v765 = vld [vmem:[#allocation2 + $0x668] sm:$0xff]
    %v766 = vld [vmem:[#allocation2 + $0x670] sm:$0xff]
    %v767 = vld [vmem:[#allocation2 + $0x678] sm:$0xff]
    %v768 = vld [vmem:[#allocation2 + $0x680] sm:$0xff]
    %v769 = vld [vmem:[#allocation2 + $0x688] sm:$0xff]
    %v770 = vld [vmem:[#allocation2 + $0x690] sm:$0xff]
    %v771 = vld [vmem:[#allocation2 + $0x698] sm:$0xff]
    %v772 = vld [vmem:[#allocation2 + $0x6a0] sm:$0xff]
    %v773 = vld [vmem:[#allocation2 + $0x6a8] sm:$0xff]
    %v774 = vld [vmem:[#allocation2 + $0x6b0] sm:$0xff]
    %v775 = vld [vmem:[#allocation2 + $0x6b8] sm:$0xff]
    %v776 = vld [vmem:[#allocation2 + $0x6c0] sm:$0xff]
    %v777 = vld [vmem:[#allocation2 + $0x6c8] sm:$0xff]
    %v778 = vld [vmem:[#allocation2 + $0x6d0] sm:$0xff]
    %v779 = vld [vmem:[#allocation2 + $0x6d8] sm:$0xff]
    %v780 = vld [vmem:[#allocation2 + $0x6e0] sm:$0xff]
    %v781 = vld [vmem:[#allocation2 + $0x6e8] sm:$0xff]
    %v782 = vld [vmem:[#allocation2 + $0x6f0] sm:$0xff]
    %v783 = vld [vmem:[#allocation2 + $0x6f8] sm:$0xff]
    %v784 = vld [vmem:[#allocation2 + $0x700] sm:$0xff]
    %v785 = vld [vmem:[#allocation2 + $0x708] sm:$0xff]
    %v786 = vld [vmem:[#allocation2 + $0x710] sm:$0xff]
    %v787 = vld [vmem:[#allocation2 + $0x718] sm:$0xff]
    %v788 = vld [vmem:[#allocation2 + $0x720] sm:$0xff]
    %v789 = vld [vmem:[#allocation2 + $0x728] sm:$0xff]
    %v790 = vld [vmem:[#allocation2 + $0x730] sm:$0xff]
    %v791 = vld [vmem:[#allocation2 + $0x738] sm:$0xff]
    %v792 = vld [vmem:[#allocation2 + $0x740] sm:$0xff]
    %v793 = vld [vmem:[#allocation2 + $0x748] sm:$0xff]
    %v794 = vld [vmem:[#allocation2 + $0x750] sm:$0xff]
    %v795 = vld [vmem:[#allocation2 + $0x758] sm:$0xff]
    %v796 = vld [vmem:[#allocation2 + $0x760] sm:$0xff]
    %v797 = vld [vmem:[#allocation2 + $0x768] sm:$0xff]
    %v798 = vld [vmem:[#allocation2 + $0x770] sm:$0xff]
    %v799 = vld [vmem:[#allocation2 + $0x778] sm:$0xff]
    %v800 = vld [vmem:[#allocation2 + $0x780] sm:$0xff]
    %v801 = vld [vmem:[#allocation2 + $0x788] sm:$0xff]
    %v802 = vld [vmem:[#allocation2 + $0x790] sm:$0xff]
    %v803 = vld [vmem:[#allocation2 + $0x798] sm:$0xff]
    %v804 = vld [vmem:[#allocation2 + $0x7a0] sm:$0xff]
    %v805 = vld [vmem:[#allocation2 + $0x7a8] sm:$0xff]
    %v806 = vld [vmem:[#allocation2 + $0x7b0] sm:$0xff]
    %v807 = vld [vmem:[#allocation2 + $0x7b8] sm:$0xff]
    %v808 = vld [vmem:[#allocation2 + $0x7c0] sm:$0xff]
    %v809 = vld [vmem:[#allocation2 + $0x7c8] sm:$0xff]
    %v810 = vld [vmem:[#allocation2 + $0x7d0] sm:$0xff]
    %v811 = vld [vmem:[#allocation2 + $0x7d8] sm:$0xff]
    %v812 = vld [vmem:[#allocation2 + $0x7e0] sm:$0xff]
    %v813 = vld [vmem:[#allocation2 + $0x7e8] sm:$0xff]
    %v814 = vld [vmem:[#allocation2 + $0x7f0] sm:$0xff]
    %v815 = vld [vmem:[#allocation2 + $0x7f8] sm:$0xff]
    %816 = vmatprep.subr.mxu0 %v681
    %817 = vmatpush1.msra.mxu0 %v680
    %818 = vmatprep.subr.mxu0 %v673
    %819 = vmatpush1.msra.mxu0 %v672
    %820 = vmatprep.subr.mxu0 %v665
    %821 = vmatpush1.msra.mxu0 %v664
    %822 = vmatprep.subr.mxu0 %v657
    %823 = vmatpush1.msra.mxu0 %v656
    %824 = vmatprep.subr.mxu0 %v649
    %825 = vmatpush1.msra.mxu0 %v648
    %826 = vmatprep.subr.mxu0 %v641
    %827 = vmatpush1.msra.mxu0 %v640
    %828 = vmatprep.subr.mxu0 %v633
    %829 = vmatpush1.msra.mxu0 %v632
    %830 = vmatprep.subr.mxu0 %v625
    %831 = vmatpush1.msra.mxu0 %v624
    %832 = vmatprep.subr.mxu0 %v617
    %833 = vmatpush1.msra.mxu0 %v616
    %834 = vmatprep.subr.mxu0 %v609
    %835 = vmatpush1.msra.mxu0 %v608
    %836 = vmatprep.subr.mxu0 %v601
    %837 = vmatpush1.msra.mxu0 %v600
    %838 = vmatprep.subr.mxu0 %v593
    %839 = vmatpush1.msra.mxu0 %v592
    %840 = vmatprep.subr.mxu0 %v585
    %841 = vmatpush1.msra.mxu0 %v584
    %842 = vmatprep.subr.mxu0 %v577
    %843 = vmatpush1.msra.mxu0 %v576
    %844 = vmatprep.subr.mxu0 %v569
    %845 = vmatpush1.msra.mxu0 %v568
    %846 = vmatprep.subr.mxu0 %v561
    %847 = vmatpush1.msra.mxu0 %v560
    %848 = vmatprep.subr.mxu0 %v809
    %849 = vmatpush2.msra.mxu0 %v808
    %850 = vmatprep.subr.mxu0 %v801
    %851 = vmatpush2.msra.mxu0 %v800
    %852 = vmatprep.subr.mxu0 %v793
    %853 = vmatpush2.msra.mxu0 %v792
    %854 = vmatprep.subr.mxu0 %v785
    %855 = vmatpush2.msra.mxu0 %v784
    %856 = vmatprep.subr.mxu0 %v777
    %857 = vmatpush2.msra.mxu0 %v776
    %858 = vmatprep.subr.mxu0 %v769
    %859 = vmatpush2.msra.mxu0 %v768
    %860 = vmatprep.subr.mxu0 %v761
    %861 = vmatpush2.msra.mxu0 %v760
    %862 = vmatprep.subr.mxu0 %v753
    %863 = vmatpush2.msra.mxu0 %v752
    %864 = vmatprep.subr.mxu0 %v745
    %865 = vmatpush2.msra.mxu0 %v744
    %866 = vmatprep.subr.mxu0 %v737
    %867 = vmatpush2.msra.mxu0 %v736
    %868 = vmatprep.subr.mxu0 %v729
    %869 = vmatpush2.msra.mxu0 %v728
    %870 = vmatprep.subr.mxu0 %v721
    %871 = vmatpush2.msra.mxu0 %v720
    %872 = vmatprep.subr.mxu0 %v713
    %873 = vmatpush2.msra.mxu0 %v712
    %874 = vmatprep.subr.mxu0 %v705
    %875 = vmatpush2.msra.mxu0 %v704
    %876 = vmatprep.subr.mxu0 %v697
    %877 = vmatpush2.msra.mxu0 %v696
    %878 = vmatprep.subr.mxu0 %v689
    %879 = vmatpush2.msra.mxu0 %v688
    %880 = vmatprep.mubr.f32.mxu0 %v559
    %881 = vmatmul.mubr.f32.gmra.mxu0 %v558
    %v882 = vpop.f32.mrf.mxu0
    %v883 = vadd.f32 0.0, %v882
    %v884 = vpop.f32.mrf.mxu0
    %v885 = vadd.f32 0.0, %v884
    %886 = vdwg.mxu0
    %887 = vmatprep.subr.mxu0 %v683
    %888 = vmatpush1.msra.mxu0 %v682
    %889 = vmatprep.subr.mxu0 %v675
    %890 = vmatpush1.msra.mxu0 %v674
    %891 = vmatprep.subr.mxu0 %v667
    %892 = vmatpush1.msra.mxu0 %v666
    %893 = vmatprep.subr.mxu0 %v659
    %894 = vmatpush1.msra.mxu0 %v658
    %895 = vmatprep.subr.mxu0 %v651
    %896 = vmatpush1.msra.mxu0 %v650
    %897 = vmatprep.subr.mxu0 %v643
    %898 = vmatpush1.msra.mxu0 %v642
    %899 = vmatprep.subr.mxu0 %v635
    %900 = vmatpush1.msra.mxu0 %v634
    %901 = vmatprep.subr.mxu0 %v627
    %902 = vmatpush1.msra.mxu0 %v626
    %903 = vmatprep.subr.mxu0 %v619
    %904 = vmatpush1.msra.mxu0 %v618
    %905 = vmatprep.subr.mxu0 %v611
    %906 = vmatpush1.msra.mxu0 %v610
    %907 = vmatprep.subr.mxu0 %v603
    %908 = vmatpush1.msra.mxu0 %v602
    %909 = vmatprep.subr.mxu0 %v595
    %910 = vmatpush1.msra.mxu0 %v594
    %911 = vmatprep.subr.mxu0 %v587
    %912 = vmatpush1.msra.mxu0 %v586
    %913 = vmatprep.subr.mxu0 %v579
    %914 = vmatpush1.msra.mxu0 %v578
    %915 = vmatprep.subr.mxu0 %v571
    %916 = vmatpush1.msra.mxu0 %v570
    %917 = vmatprep.subr.mxu0 %v563
    %918 = vmatpush1.msra.mxu0 %v562
    %919 = vmatprep.subr.mxu0 %v811
    %920 = vmatpush2.msra.mxu0 %v810
    %921 = vmatprep.subr.mxu0 %v803
    %922 = vmatpush2.msra.mxu0 %v802
    %923 = vmatprep.subr.mxu0 %v795
    %924 = vmatpush2.msra.mxu0 %v794
    %925 = vmatprep.subr.mxu0 %v787
    %926 = vmatpush2.msra.mxu0 %v786
    %927 = vmatprep.subr.mxu0 %v779
    %928 = vmatpush2.msra.mxu0 %v778
    %929 = vmatprep.subr.mxu0 %v771
    %930 = vmatpush2.msra.mxu0 %v770
    %931 = vmatprep.subr.mxu0 %v763
    %932 = vmatpush2.msra.mxu0 %v762
    %933 = vmatprep.subr.mxu0 %v755
    %934 = vmatpush2.msra.mxu0 %v754
    %935 = vmatprep.subr.mxu0 %v747
    %936 = vmatpush2.msra.mxu0 %v746
    %937 = vmatprep.subr.mxu0 %v739
    %938 = vmatpush2.msra.mxu0 %v738
    %939 = vmatprep.subr.mxu0 %v731
    %940 = vmatpush2.msra.mxu0 %v730
    %941 = vmatprep.subr.mxu0 %v723
    %942 = vmatpush2.msra.mxu0 %v722
    %943 = vmatprep.subr.mxu0 %v715
    %944 = vmatpush2.msra.mxu0 %v714
    %945 = vmatprep.subr.mxu0 %v707
    %946 = vmatpush2.msra.mxu0 %v706
    %947 = vmatprep.subr.mxu0 %v699
    %948 = vmatpush2.msra.mxu0 %v698
    %949 = vmatprep.subr.mxu0 %v691
    %950 = vmatpush2.msra.mxu0 %v690
    %951 = vmatprep.mubr.f32.mxu0 %v559
    %952 = vmatmul.mubr.f32.gmra.mxu0 %v558
    %v953 = vpop.f32.mrf.mxu0
    %v954 = vadd.f32 0.0, %v953
    %v955 = vpop.f32.mrf.mxu0
    %v956 = vadd.f32 0.0, %v955
    %957 = vdwg.mxu0
    %958 = vmatprep.subr.mxu0 %v685
    %959 = vmatpush1.msra.mxu0 %v684
    %960 = vmatprep.subr.mxu0 %v677
    %961 = vmatpush1.msra.mxu0 %v676
    %962 = vmatprep.subr.mxu0 %v669
    %963 = vmatpush1.msra.mxu0 %v668
    %964 = vmatprep.subr.mxu0 %v661
    %965 = vmatpush1.msra.mxu0 %v660
    %966 = vmatprep.subr.mxu0 %v653
    %967 = vmatpush1.msra.mxu0 %v652
    %968 = vmatprep.subr.mxu0 %v645
    %969 = vmatpush1.msra.mxu0 %v644
    %970 = vmatprep.subr.mxu0 %v637
    %971 = vmatpush1.msra.mxu0 %v636
    %972 = vmatprep.subr.mxu0 %v629
    %973 = vmatpush1.msra.mxu0 %v628
    %974 = vmatprep.subr.mxu0 %v621
    %975 = vmatpush1.msra.mxu0 %v620
    %976 = vmatprep.subr.mxu0 %v613
    %977 = vmatpush1.msra.mxu0 %v612
    %978 = vmatprep.subr.mxu0 %v605
    %979 = vmatpush1.msra.mxu0 %v604
    %980 = vmatprep.subr.mxu0 %v597
    %981 = vmatpush1.msra.mxu0 %v596
    %982 = vmatprep.subr.mxu0 %v589
    %983 = vmatpush1.msra.mxu0 %v588
    %984 = vmatprep.subr.mxu0 %v581
    %985 = vmatpush1.msra.mxu0 %v580
    %986 = vmatprep.subr.mxu0 %v573
    %987 = vmatpush1.msra.mxu0 %v572
    %988 = vmatprep.subr.mxu0 %v565
    %989 = vmatpush1.msra.mxu0 %v564
    %990 = vmatprep.subr.mxu0 %v813
    %991 = vmatpush2.msra.mxu0 %v812
    %992 = vmatprep.subr.mxu0 %v805
    %993 = vmatpush2.msra.mxu0 %v804
    %994 = vmatprep.subr.mxu0 %v797
    %995 = vmatpush2.msra.mxu0 %v796
    %996 = vmatprep.subr.mxu0 %v789
    %997 = vmatpush2.msra.mxu0 %v788
    %998 = vmatprep.subr.mxu0 %v781
    %999 = vmatpush2.msra.mxu0 %v780
    %1000 = vmatprep.subr.mxu0 %v773
    %1001 = vmatpush2.msra.mxu0 %v772
    %1002 = vmatprep.subr.mxu0 %v765
    %1003 = vmatpush2.msra.mxu0 %v764
    %1004 = vmatprep.subr.mxu0 %v757
    %1005 = vmatpush2.msra.mxu0 %v756
    %1006 = vmatprep.subr.mxu0 %v749
    %1007 = vmatpush2.msra.mxu0 %v748
    %1008 = vmatprep.subr.mxu0 %v741
    %1009 = vmatpush2.msra.mxu0 %v740
    %1010 = vmatprep.subr.mxu0 %v733
    %1011 = vmatpush2.msra.mxu0 %v732
    %1012 = vmatprep.subr.mxu0 %v725
    %1013 = vmatpush2.msra.mxu0 %v724
    %1014 = vmatprep.subr.mxu0 %v717
    %1015 = vmatpush2.msra.mxu0 %v716
    %1016 = vmatprep.subr.mxu0 %v709
    %1017 = vmatpush2.msra.mxu0 %v708
    %1018 = vmatprep.subr.mxu0 %v701
    %1019 = vmatpush2.msra.mxu0 %v700
    %1020 = vmatprep.subr.mxu0 %v693
    %1021 = vmatpush2.msra.mxu0 %v692
    %1022 = vmatprep.mubr.f32.mxu0 %v559
    %1023 = vmatmul.mubr.f32.gmra.mxu0 %v558
    %v1024 = vpop.f32.mrf.mxu0
    %v1025 = vadd.f32 0.0, %v1024
    %v1026 = vpop.f32.mrf.mxu0
    %v1027 = vadd.f32 0.0, %v1026
    %1028 = vdwg.mxu0
    %1029 = vmatprep.subr.mxu0 %v687
    %1030 = vmatpush1.msra.mxu0 %v686
    %1031 = vmatprep.subr.mxu0 %v679
    %1032 = vmatpush1.msra.mxu0 %v678
    %1033 = vmatprep.subr.mxu0 %v671
    %1034 = vmatpush1.msra.mxu0 %v670
    %1035 = vmatprep.subr.mxu0 %v663
    %1036 = vmatpush1.msra.mxu0 %v662
    %1037 = vmatprep.subr.mxu0 %v655
    %1038 = vmatpush1.msra.mxu0 %v654
    %1039 = vmatprep.subr.mxu0 %v647
    %1040 = vmatpush1.msra.mxu0 %v646
    %1041 = vmatprep.subr.mxu0 %v639
    %1042 = vmatpush1.msra.mxu0 %v638
    %1043 = vmatprep.subr.mxu0 %v631
    %1044 = vmatpush1.msra.mxu0 %v630
    %1045 = vmatprep.subr.mxu0 %v623
    %1046 = vmatpush1.msra.mxu0 %v622
    %1047 = vmatprep.subr.mxu0 %v615
    %1048 = vmatpush1.msra.mxu0 %v614
    %1049 = vmatprep.subr.mxu0 %v607
    %1050 = vmatpush1.msra.mxu0 %v606
    %1051 = vmatprep.subr.mxu0 %v599
    %1052 = vmatpush1.msra.mxu0 %v598
    %1053 = vmatprep.subr.mxu0 %v591
    %1054 = vmatpush1.msra.mxu0 %v590
    %1055 = vmatprep.subr.mxu0 %v583
    %1056 = vmatpush1.msra.mxu0 %v582
    %1057 = vmatprep.subr.mxu0 %v575
    %1058 = vmatpush1.msra.mxu0 %v574
    %1059 = vmatprep.subr.mxu0 %v567
    %1060 = vmatpush1.msra.mxu0 %v566
    %1061 = vmatprep.subr.mxu0 %v815
    %1062 = vmatpush2.msra.mxu0 %v814
    %1063 = vmatprep.subr.mxu0 %v807
    %1064 = vmatpush2.msra.mxu0 %v806
    %1065 = vmatprep.subr.mxu0 %v799
    %1066 = vmatpush2.msra.mxu0 %v798
    %1067 = vmatprep.subr.mxu0 %v791
    %1068 = vmatpush2.msra.mxu0 %v790
    %1069 = vmatprep.subr.mxu0 %v783
    %1070 = vmatpush2.msra.mxu0 %v782
    %1071 = vmatprep.subr.mxu0 %v775
    %1072 = vmatpush2.msra.mxu0 %v774
    %1073 = vmatprep.subr.mxu0 %v767
    %1074 = vmatpush2.msra.mxu0 %v766
    %1075 = vmatprep.subr.mxu0 %v759
    %1076 = vmatpush2.msra.mxu0 %v758
    %1077 = vmatprep.subr.mxu0 %v751
    %1078 = vmatpush2.msra.mxu0 %v750
    %1079 = vmatprep.subr.mxu0 %v743
    %1080 = vmatpush2.msra.mxu0 %v742
    %1081 = vmatprep.subr.mxu0 %v735
    %1082 = vmatpush2.msra.mxu0 %v734
    %1083 = vmatprep.subr.mxu0 %v727
    %1084 = vmatpush2.msra.mxu0 %v726
    %1085 = vmatprep.subr.mxu0 %v719
    %1086 = vmatpush2.msra.mxu0 %v718
    %1087 = vmatprep.subr.mxu0 %v711
    %1088 = vmatpush2.msra.mxu0 %v710
    %1089 = vmatprep.subr.mxu0 %v703
    %1090 = vmatpush2.msra.mxu0 %v702
    %1091 = vmatprep.subr.mxu0 %v695
    %1092 = vmatpush2.msra.mxu0 %v694
    %1093 = vmatprep.mubr.f32.mxu0 %v559
    %1094 = vmatmul.mubr.f32.gmra.mxu0 %v558
    %v1095 = vpop.f32.mrf.mxu0
    %v1096 = vadd.f32 0.0, %v1095
    %v1097 = vpop.f32.mrf.mxu0
    %v1098 = vadd.f32 0.0, %v1097
    %1099 = vdwg.mxu0
    %v1100 = vadd.f32 %v45, %v883
    %v1101 = vadd.f32 %v45, %v885
    %v1102 = vadd.f32 %v45, %v954
    %v1103 = vadd.f32 %v45, %v956
    %v1104 = vadd.f32 %v45, %v1025
    %v1105 = vadd.f32 %v45, %v1027
    %v1106 = vadd.f32 %v45, %v1096
    %v1107 = vadd.f32 %v45, %v1098
    %v1108 = vld [vmem:[#allocation3 + $0x100] sm:$0xff]
    %v1109 = vld [vmem:[#allocation3 + $0x108] sm:$0xff]
    %v1110 = vld [vmem:[#allocation3 + $0x110] sm:$0xff]
    %v1111 = vld [vmem:[#allocation3 + $0x118] sm:$0xff]
    %v1112 = vld [vmem:[#allocation3 + $0x120] sm:$0xff]
    %v1113 = vld [vmem:[#allocation3 + $0x128] sm:$0xff]
    %v1114 = vld [vmem:[#allocation3 + $0x130] sm:$0xff]
    %v1115 = vld [vmem:[#allocation3 + $0x138] sm:$0xff]
    %1116 = vst [vmem:[#allocation2] sm:$0xff] %v1108
    %1117 = vst [vmem:[#allocation2 + $0x8] sm:$0xff] %v1109
    %1118 = vst [vmem:[#allocation2 + $0x10] sm:$0xff] %v1110
    %1119 = vst [vmem:[#allocation2 + $0x18] sm:$0xff] %v1111
    %1120 = vst [vmem:[#allocation2 + $0x20] sm:$0xff] %v1112
    %1121 = vst [vmem:[#allocation2 + $0x28] sm:$0xff] %v1113
    %1122 = vst [vmem:[#allocation2 + $0x30] sm:$0xff] %v1114
    %1123 = vst [vmem:[#allocation2 + $0x38] sm:$0xff] %v1115
    %v1124 = vld [vmem:[#allocation3 + $0x108] sm:$0xff]
    %v1125 = vld [vmem:[#allocation3 + $0x110] sm:$0xff]
    %v1126 = vld [vmem:[#allocation3 + $0x118] sm:$0xff]
    %v1127 = vld [vmem:[#allocation3 + $0x120] sm:$0xff]
    %v1128 = vld [vmem:[#allocation3 + $0x128] sm:$0xff]
    %v1129 = vld [vmem:[#allocation3 + $0x130] sm:$0xff]
    %v1130 = vld [vmem:[#allocation3 + $0x138] sm:$0xff]
    %v1131 = vld [vmem:[#allocation3 + $0x140] sm:$0xff]
    %1132 = vst [vmem:[#allocation2 + $0x40] sm:$0xff] %v1124
    %1133 = vst [vmem:[#allocation2 + $0x48] sm:$0xff] %v1125
    %1134 = vst [vmem:[#allocation2 + $0x50] sm:$0xff] %v1126
    %1135 = vst [vmem:[#allocation2 + $0x58] sm:$0xff] %v1127
    %1136 = vst [vmem:[#allocation2 + $0x60] sm:$0xff] %v1128
    %1137 = vst [vmem:[#allocation2 + $0x68] sm:$0xff] %v1129
    %1138 = vst [vmem:[#allocation2 + $0x70] sm:$0xff] %v1130
    %1139 = vst [vmem:[#allocation2 + $0x78] sm:$0xff] %v1131
    %v1140 = vld [vmem:[#allocation3 + $0x110] sm:$0xff]
    %v1141 = vld [vmem:[#allocation3 + $0x118] sm:$0xff]
    %v1142 = vld [vmem:[#allocation3 + $0x120] sm:$0xff]
    %v1143 = vld [vmem:[#allocation3 + $0x128] sm:$0xff]
    %v1144 = vld [vmem:[#allocation3 + $0x130] sm:$0xff]
    %v1145 = vld [vmem:[#allocation3 + $0x138] sm:$0xff]
    %v1146 = vld [vmem:[#allocation3 + $0x140] sm:$0xff]
    %v1147 = vld [vmem:[#allocation3 + $0x148] sm:$0xff]
    %1148 = vst [vmem:[#allocation2 + $0x80] sm:$0xff] %v1140
    %1149 = vst [vmem:[#allocation2 + $0x88] sm:$0xff] %v1141
    %1150 = vst [vmem:[#allocation2 + $0x90] sm:$0xff] %v1142
    %1151 = vst [vmem:[#allocation2 + $0x98] sm:$0xff] %v1143
    %1152 = vst [vmem:[#allocation2 + $0xa0] sm:$0xff] %v1144
    %1153 = vst [vmem:[#allocation2 + $0xa8] sm:$0xff] %v1145
    %1154 = vst [vmem:[#allocation2 + $0xb0] sm:$0xff] %v1146
    %1155 = vst [vmem:[#allocation2 + $0xb8] sm:$0xff] %v1147
    %v1156 = vld [vmem:[#allocation3 + $0x118] sm:$0xff]
    %v1157 = vld [vmem:[#allocation3 + $0x120] sm:$0xff]
    %v1158 = vld [vmem:[#allocation3 + $0x128] sm:$0xff]
    %v1159 = vld [vmem:[#allocation3 + $0x130] sm:$0xff]
    %v1160 = vld [vmem:[#allocation3 + $0x138] sm:$0xff]
    %v1161 = vld [vmem:[#allocation3 + $0x140] sm:$0xff]
    %v1162 = vld [vmem:[#allocation3 + $0x148] sm:$0xff]
    %v1163 = vld [vmem:[#allocation3 + $0x150] sm:$0xff]
    %1164 = vst [vmem:[#allocation2 + $0xc0] sm:$0xff] %v1156
    %1165 = vst [vmem:[#allocation2 + $0xc8] sm:$0xff] %v1157
    %1166 = vst [vmem:[#allocation2 + $0xd0] sm:$0xff] %v1158
    %1167 = vst [vmem:[#allocation2 + $0xd8] sm:$0xff] %v1159
    %1168 = vst [vmem:[#allocation2 + $0xe0] sm:$0xff] %v1160
    %1169 = vst [vmem:[#allocation2 + $0xe8] sm:$0xff] %v1161
    %1170 = vst [vmem:[#allocation2 + $0xf0] sm:$0xff] %v1162
    %1171 = vst [vmem:[#allocation2 + $0xf8] sm:$0xff] %v1163
    %v1172 = vld [vmem:[#allocation3 + $0x120] sm:$0xff]
    %v1173 = vld [vmem:[#allocation3 + $0x128] sm:$0xff]
    %v1174 = vld [vmem:[#allocation3 + $0x130] sm:$0xff]
    %v1175 = vld [vmem:[#allocation3 + $0x138] sm:$0xff]
    %v1176 = vld [vmem:[#allocation3 + $0x140] sm:$0xff]
    %v1177 = vld [vmem:[#allocation3 + $0x148] sm:$0xff]
    %v1178 = vld [vmem:[#allocation3 + $0x150] sm:$0xff]
    %v1179 = vld [vmem:[#allocation3 + $0x158] sm:$0xff]
    %1180 = vst [vmem:[#allocation2 + $0x100] sm:$0xff] %v1172
    %1181 = vst [vmem:[#allocation2 + $0x108] sm:$0xff] %v1173
    %1182 = vst [vmem:[#allocation2 + $0x110] sm:$0xff] %v1174
    %1183 = vst [vmem:[#allocation2 + $0x118] sm:$0xff] %v1175
    %1184 = vst [vmem:[#allocation2 + $0x120] sm:$0xff] %v1176
    %1185 = vst [vmem:[#allocation2 + $0x128] sm:$0xff] %v1177
    %1186 = vst [vmem:[#allocation2 + $0x130] sm:$0xff] %v1178
    %1187 = vst [vmem:[#allocation2 + $0x138] sm:$0xff] %v1179
    %v1188 = vld [vmem:[#allocation3 + $0x128] sm:$0xff]
    %v1189 = vld [vmem:[#allocation3 + $0x130] sm:$0xff]
    %v1190 = vld [vmem:[#allocation3 + $0x138] sm:$0xff]
    %v1191 = vld [vmem:[#allocation3 + $0x140] sm:$0xff]
    %v1192 = vld [vmem:[#allocation3 + $0x148] sm:$0xff]
    %v1193 = vld [vmem:[#allocation3 + $0x150] sm:$0xff]
    %v1194 = vld [vmem:[#allocation3 + $0x158] sm:$0xff]
    %v1195 = vld [vmem:[#allocation3 + $0x160] sm:$0xff]
    %1196 = vst [vmem:[#allocation2 + $0x140] sm:$0xff] %v1188
    %1197 = vst [vmem:[#allocation2 + $0x148] sm:$0xff] %v1189
    %1198 = vst [vmem:[#allocation2 + $0x150] sm:$0xff] %v1190
    %1199 = vst [vmem:[#allocation2 + $0x158] sm:$0xff] %v1191
    %1200 = vst [vmem:[#allocation2 + $0x160] sm:$0xff] %v1192
    %1201 = vst [vmem:[#allocation2 + $0x168] sm:$0xff] %v1193
    %1202 = vst [vmem:[#allocation2 + $0x170] sm:$0xff] %v1194
    %1203 = vst [vmem:[#allocation2 + $0x178] sm:$0xff] %v1195
    %v1204 = vld [vmem:[#allocation3 + $0x130] sm:$0xff]
    %v1205 = vld [vmem:[#allocation3 + $0x138] sm:$0xff]
    %v1206 = vld [vmem:[#allocation3 + $0x140] sm:$0xff]
    %v1207 = vld [vmem:[#allocation3 + $0x148] sm:$0xff]
    %v1208 = vld [vmem:[#allocation3 + $0x150] sm:$0xff]
    %v1209 = vld [vmem:[#allocation3 + $0x158] sm:$0xff]
    %v1210 = vld [vmem:[#allocation3 + $0x160] sm:$0xff]
    %v1211 = vld [vmem:[#allocation3 + $0x168] sm:$0xff]
    %1212 = vst [vmem:[#allocation2 + $0x180] sm:$0xff] %v1204
    %1213 = vst [vmem:[#allocation2 + $0x188] sm:$0xff] %v1205
    %1214 = vst [vmem:[#allocation2 + $0x190] sm:$0xff] %v1206
    %1215 = vst [vmem:[#allocation2 + $0x198] sm:$0xff] %v1207
    %1216 = vst [vmem:[#allocation2 + $0x1a0] sm:$0xff] %v1208
    %1217 = vst [vmem:[#allocation2 + $0x1a8] sm:$0xff] %v1209
    %1218 = vst [vmem:[#allocation2 + $0x1b0] sm:$0xff] %v1210
    %1219 = vst [vmem:[#allocation2 + $0x1b8] sm:$0xff] %v1211
    %v1220 = vld [vmem:[#allocation3 + $0x138] sm:$0xff]
    %v1221 = vld [vmem:[#allocation3 + $0x140] sm:$0xff]
    %v1222 = vld [vmem:[#allocation3 + $0x148] sm:$0xff]
    %v1223 = vld [vmem:[#allocation3 + $0x150] sm:$0xff]
    %v1224 = vld [vmem:[#allocation3 + $0x158] sm:$0xff]
    %v1225 = vld [vmem:[#allocation3 + $0x160] sm:$0xff]
    %v1226 = vld [vmem:[#allocation3 + $0x168] sm:$0xff]
    %v1227 = vld [vmem:[#allocation3 + $0x170] sm:$0xff]
    %1228 = vst [vmem:[#allocation2 + $0x1c0] sm:$0xff] %v1220
    %1229 = vst [vmem:[#allocation2 + $0x1c8] sm:$0xff] %v1221
    %1230 = vst [vmem:[#allocation2 + $0x1d0] sm:$0xff] %v1222
    %1231 = vst [vmem:[#allocation2 + $0x1d8] sm:$0xff] %v1223
    %1232 = vst [vmem:[#allocation2 + $0x1e0] sm:$0xff] %v1224
    %1233 = vst [vmem:[#allocation2 + $0x1e8] sm:$0xff] %v1225
    %1234 = vst [vmem:[#allocation2 + $0x1f0] sm:$0xff] %v1226
    %1235 = vst [vmem:[#allocation2 + $0x1f8] sm:$0xff] %v1227
    %v1236 = vld [vmem:[#allocation3 + $0x140] sm:$0xff]
    %v1237 = vld [vmem:[#allocation3 + $0x148] sm:$0xff]
    %v1238 = vld [vmem:[#allocation3 + $0x150] sm:$0xff]
    %v1239 = vld [vmem:[#allocation3 + $0x158] sm:$0xff]
    %v1240 = vld [vmem:[#allocation3 + $0x160] sm:$0xff]
    %v1241 = vld [vmem:[#allocation3 + $0x168] sm:$0xff]
    %v1242 = vld [vmem:[#allocation3 + $0x170] sm:$0xff]
    %v1243 = vld [vmem:[#allocation3 + $0x178] sm:$0xff]
    %1244 = vst [vmem:[#allocation2 + $0x200] sm:$0xff] %v1236
    %1245 = vst [vmem:[#allocation2 + $0x208] sm:$0xff] %v1237
    %1246 = vst [vmem:[#allocation2 + $0x210] sm:$0xff] %v1238
    %1247 = vst [vmem:[#allocation2 + $0x218] sm:$0xff] %v1239
    %1248 = vst [vmem:[#allocation2 + $0x220] sm:$0xff] %v1240
    %1249 = vst [vmem:[#allocation2 + $0x228] sm:$0xff] %v1241
    %1250 = vst [vmem:[#allocation2 + $0x230] sm:$0xff] %v1242
    %1251 = vst [vmem:[#allocation2 + $0x238] sm:$0xff] %v1243
    %v1252 = vld [vmem:[#allocation3 + $0x148] sm:$0xff]
    %v1253 = vld [vmem:[#allocation3 + $0x150] sm:$0xff]
    %v1254 = vld [vmem:[#allocation3 + $0x158] sm:$0xff]
    %v1255 = vld [vmem:[#allocation3 + $0x160] sm:$0xff]
    %v1256 = vld [vmem:[#allocation3 + $0x168] sm:$0xff]
    %v1257 = vld [vmem:[#allocation3 + $0x170] sm:$0xff]
    %v1258 = vld [vmem:[#allocation3 + $0x178] sm:$0xff]
    %v1259 = vld [vmem:[#allocation3 + $0x180] sm:$0xff]
    %1260 = vst [vmem:[#allocation2 + $0x240] sm:$0xff] %v1252
    %1261 = vst [vmem:[#allocation2 + $0x248] sm:$0xff] %v1253
    %1262 = vst [vmem:[#allocation2 + $0x250] sm:$0xff] %v1254
    %1263 = vst [vmem:[#allocation2 + $0x258] sm:$0xff] %v1255
    %1264 = vst [vmem:[#allocation2 + $0x260] sm:$0xff] %v1256
    %1265 = vst [vmem:[#allocation2 + $0x268] sm:$0xff] %v1257
    %1266 = vst [vmem:[#allocation2 + $0x270] sm:$0xff] %v1258
    %1267 = vst [vmem:[#allocation2 + $0x278] sm:$0xff] %v1259
    %v1268 = vld [vmem:[#allocation3 + $0x150] sm:$0xff]
    %v1269 = vld [vmem:[#allocation3 + $0x158] sm:$0xff]
    %v1270 = vld [vmem:[#allocation3 + $0x160] sm:$0xff]
    %v1271 = vld [vmem:[#allocation3 + $0x168] sm:$0xff]
    %v1272 = vld [vmem:[#allocation3 + $0x170] sm:$0xff]
    %v1273 = vld [vmem:[#allocation3 + $0x178] sm:$0xff]
    %v1274 = vld [vmem:[#allocation3 + $0x180] sm:$0xff]
    %v1275 = vld [vmem:[#allocation3 + $0x188] sm:$0xff]
    %1276 = vst [vmem:[#allocation2 + $0x280] sm:$0xff] %v1268
    %1277 = vst [vmem:[#allocation2 + $0x288] sm:$0xff] %v1269
    %1278 = vst [vmem:[#allocation2 + $0x290] sm:$0xff] %v1270
    %1279 = vst [vmem:[#allocation2 + $0x298] sm:$0xff] %v1271
    %1280 = vst [vmem:[#allocation2 + $0x2a0] sm:$0xff] %v1272
    %1281 = vst [vmem:[#allocation2 + $0x2a8] sm:$0xff] %v1273
    %1282 = vst [vmem:[#allocation2 + $0x2b0] sm:$0xff] %v1274
    %1283 = vst [vmem:[#allocation2 + $0x2b8] sm:$0xff] %v1275
    %v1284 = vld [vmem:[#allocation3 + $0x158] sm:$0xff]
    %v1285 = vld [vmem:[#allocation3 + $0x160] sm:$0xff]
    %v1286 = vld [vmem:[#allocation3 + $0x168] sm:$0xff]
    %v1287 = vld [vmem:[#allocation3 + $0x170] sm:$0xff]
    %v1288 = vld [vmem:[#allocation3 + $0x178] sm:$0xff]
    %v1289 = vld [vmem:[#allocation3 + $0x180] sm:$0xff]
    %v1290 = vld [vmem:[#allocation3 + $0x188] sm:$0xff]
    %v1291 = vld [vmem:[#allocation3 + $0x190] sm:$0xff]
    %1292 = vst [vmem:[#allocation2 + $0x2c0] sm:$0xff] %v1284
    %1293 = vst [vmem:[#allocation2 + $0x2c8] sm:$0xff] %v1285
    %1294 = vst [vmem:[#allocation2 + $0x2d0] sm:$0xff] %v1286
    %1295 = vst [vmem:[#allocation2 + $0x2d8] sm:$0xff] %v1287
    %1296 = vst [vmem:[#allocation2 + $0x2e0] sm:$0xff] %v1288
    %1297 = vst [vmem:[#allocation2 + $0x2e8] sm:$0xff] %v1289
    %1298 = vst [vmem:[#allocation2 + $0x2f0] sm:$0xff] %v1290
    %1299 = vst [vmem:[#allocation2 + $0x2f8] sm:$0xff] %v1291
    %v1300 = vld [vmem:[#allocation3 + $0x160] sm:$0xff]
    %v1301 = vld [vmem:[#allocation3 + $0x168] sm:$0xff]
    %v1302 = vld [vmem:[#allocation3 + $0x170] sm:$0xff]
    %v1303 = vld [vmem:[#allocation3 + $0x178] sm:$0xff]
    %v1304 = vld [vmem:[#allocation3 + $0x180] sm:$0xff]
    %v1305 = vld [vmem:[#allocation3 + $0x188] sm:$0xff]
    %v1306 = vld [vmem:[#allocation3 + $0x190] sm:$0xff]
    %v1307 = vld [vmem:[#allocation3 + $0x198] sm:$0xff]
    %1308 = vst [vmem:[#allocation2 + $0x300] sm:$0xff] %v1300
    %1309 = vst [vmem:[#allocation2 + $0x308] sm:$0xff] %v1301
    %1310 = vst [vmem:[#allocation2 + $0x310] sm:$0xff] %v1302
    %1311 = vst [vmem:[#allocation2 + $0x318] sm:$0xff] %v1303
    %1312 = vst [vmem:[#allocation2 + $0x320] sm:$0xff] %v1304
    %1313 = vst [vmem:[#allocation2 + $0x328] sm:$0xff] %v1305
    %1314 = vst [vmem:[#allocation2 + $0x330] sm:$0xff] %v1306
    %1315 = vst [vmem:[#allocation2 + $0x338] sm:$0xff] %v1307
    %v1316 = vld [vmem:[#allocation3 + $0x168] sm:$0xff]
    %v1317 = vld [vmem:[#allocation3 + $0x170] sm:$0xff]
    %v1318 = vld [vmem:[#allocation3 + $0x178] sm:$0xff]
    %v1319 = vld [vmem:[#allocation3 + $0x180] sm:$0xff]
    %v1320 = vld [vmem:[#allocation3 + $0x188] sm:$0xff]
    %v1321 = vld [vmem:[#allocation3 + $0x190] sm:$0xff]
    %v1322 = vld [vmem:[#allocation3 + $0x198] sm:$0xff]
    %v1323 = vld [vmem:[#allocation3 + $0x1a0] sm:$0xff]
    %1324 = vst [vmem:[#allocation2 + $0x340] sm:$0xff] %v1316
    %1325 = vst [vmem:[#allocation2 + $0x348] sm:$0xff] %v1317
    %1326 = vst [vmem:[#allocation2 + $0x350] sm:$0xff] %v1318
    %1327 = vst [vmem:[#allocation2 + $0x358] sm:$0xff] %v1319
    %1328 = vst [vmem:[#allocation2 + $0x360] sm:$0xff] %v1320
    %1329 = vst [vmem:[#allocation2 + $0x368] sm:$0xff] %v1321
    %1330 = vst [vmem:[#allocation2 + $0x370] sm:$0xff] %v1322
    %1331 = vst [vmem:[#allocation2 + $0x378] sm:$0xff] %v1323
    %v1332 = vld [vmem:[#allocation3 + $0x170] sm:$0xff]
    %v1333 = vld [vmem:[#allocation3 + $0x178] sm:$0xff]
    %v1334 = vld [vmem:[#allocation3 + $0x180] sm:$0xff]
    %v1335 = vld [vmem:[#allocation3 + $0x188] sm:$0xff]
    %v1336 = vld [vmem:[#allocation3 + $0x190] sm:$0xff]
    %v1337 = vld [vmem:[#allocation3 + $0x198] sm:$0xff]
    %v1338 = vld [vmem:[#allocation3 + $0x1a0] sm:$0xff]
    %v1339 = vld [vmem:[#allocation3 + $0x1a8] sm:$0xff]
    %1340 = vst [vmem:[#allocation2 + $0x380] sm:$0xff] %v1332
    %1341 = vst [vmem:[#allocation2 + $0x388] sm:$0xff] %v1333
    %1342 = vst [vmem:[#allocation2 + $0x390] sm:$0xff] %v1334
    %1343 = vst [vmem:[#allocation2 + $0x398] sm:$0xff] %v1335
    %1344 = vst [vmem:[#allocation2 + $0x3a0] sm:$0xff] %v1336
    %1345 = vst [vmem:[#allocation2 + $0x3a8] sm:$0xff] %v1337
    %1346 = vst [vmem:[#allocation2 + $0x3b0] sm:$0xff] %v1338
    %1347 = vst [vmem:[#allocation2 + $0x3b8] sm:$0xff] %v1339
    %v1348 = vld [vmem:[#allocation3 + $0x178] sm:$0xff]
    %v1349 = vld [vmem:[#allocation3 + $0x180] sm:$0xff]
    %v1350 = vld [vmem:[#allocation3 + $0x188] sm:$0xff]
    %v1351 = vld [vmem:[#allocation3 + $0x190] sm:$0xff]
    %v1352 = vld [vmem:[#allocation3 + $0x198] sm:$0xff]
    %v1353 = vld [vmem:[#allocation3 + $0x1a0] sm:$0xff]
    %v1354 = vld [vmem:[#allocation3 + $0x1a8] sm:$0xff]
    %v1355 = vld [vmem:[#allocation3 + $0x1b0] sm:$0xff]
    %1356 = vst [vmem:[#allocation2 + $0x3c0] sm:$0xff] %v1348
    %1357 = vst [vmem:[#allocation2 + $0x3c8] sm:$0xff] %v1349
    %1358 = vst [vmem:[#allocation2 + $0x3d0] sm:$0xff] %v1350
    %1359 = vst [vmem:[#allocation2 + $0x3d8] sm:$0xff] %v1351
    %1360 = vst [vmem:[#allocation2 + $0x3e0] sm:$0xff] %v1352
    %1361 = vst [vmem:[#allocation2 + $0x3e8] sm:$0xff] %v1353
    %1362 = vst [vmem:[#allocation2 + $0x3f0] sm:$0xff] %v1354
    %1363 = vst [vmem:[#allocation2 + $0x3f8] sm:$0xff] %v1355
    %v1364 = vld [vmem:[#allocation3 + $0x180] sm:$0xff]
    %v1365 = vld [vmem:[#allocation3 + $0x188] sm:$0xff]
    %v1366 = vld [vmem:[#allocation3 + $0x190] sm:$0xff]
    %v1367 = vld [vmem:[#allocation3 + $0x198] sm:$0xff]
    %v1368 = vld [vmem:[#allocation3 + $0x1a0] sm:$0xff]
    %v1369 = vld [vmem:[#allocation3 + $0x1a8] sm:$0xff]
    %v1370 = vld [vmem:[#allocation3 + $0x1b0] sm:$0xff]
    %v1371 = vld [vmem:[#allocation3 + $0x1b8] sm:$0xff]
    %1372 = vst [vmem:[#allocation2 + $0x400] sm:$0xff] %v1364
    %1373 = vst [vmem:[#allocation2 + $0x408] sm:$0xff] %v1365
    %1374 = vst [vmem:[#allocation2 + $0x410] sm:$0xff] %v1366
    %1375 = vst [vmem:[#allocation2 + $0x418] sm:$0xff] %v1367
    %1376 = vst [vmem:[#allocation2 + $0x420] sm:$0xff] %v1368
    %1377 = vst [vmem:[#allocation2 + $0x428] sm:$0xff] %v1369
    %1378 = vst [vmem:[#allocation2 + $0x430] sm:$0xff] %v1370
    %1379 = vst [vmem:[#allocation2 + $0x438] sm:$0xff] %v1371
    %v1380 = vld [vmem:[#allocation3 + $0x188] sm:$0xff]
    %v1381 = vld [vmem:[#allocation3 + $0x190] sm:$0xff]
    %v1382 = vld [vmem:[#allocation3 + $0x198] sm:$0xff]
    %v1383 = vld [vmem:[#allocation3 + $0x1a0] sm:$0xff]
    %v1384 = vld [vmem:[#allocation3 + $0x1a8] sm:$0xff]
    %v1385 = vld [vmem:[#allocation3 + $0x1b0] sm:$0xff]
    %v1386 = vld [vmem:[#allocation3 + $0x1b8] sm:$0xff]
    %v1387 = vld [vmem:[#allocation3 + $0x1c0] sm:$0xff]
    %1388 = vst [vmem:[#allocation2 + $0x440] sm:$0xff] %v1380
    %1389 = vst [vmem:[#allocation2 + $0x448] sm:$0xff] %v1381
    %1390 = vst [vmem:[#allocation2 + $0x450] sm:$0xff] %v1382
    %1391 = vst [vmem:[#allocation2 + $0x458] sm:$0xff] %v1383
    %1392 = vst [vmem:[#allocation2 + $0x460] sm:$0xff] %v1384
    %1393 = vst [vmem:[#allocation2 + $0x468] sm:$0xff] %v1385
    %1394 = vst [vmem:[#allocation2 + $0x470] sm:$0xff] %v1386
    %1395 = vst [vmem:[#allocation2 + $0x478] sm:$0xff] %v1387
    %v1396 = vld [vmem:[#allocation3 + $0x190] sm:$0xff]
    %v1397 = vld [vmem:[#allocation3 + $0x198] sm:$0xff]
    %v1398 = vld [vmem:[#allocation3 + $0x1a0] sm:$0xff]
    %v1399 = vld [vmem:[#allocation3 + $0x1a8] sm:$0xff]
    %v1400 = vld [vmem:[#allocation3 + $0x1b0] sm:$0xff]
    %v1401 = vld [vmem:[#allocation3 + $0x1b8] sm:$0xff]
    %v1402 = vld [vmem:[#allocation3 + $0x1c0] sm:$0xff]
    %v1403 = vld [vmem:[#allocation3 + $0x1c8] sm:$0xff]
    %1404 = vst [vmem:[#allocation2 + $0x480] sm:$0xff] %v1396
    %1405 = vst [vmem:[#allocation2 + $0x488] sm:$0xff] %v1397
    %1406 = vst [vmem:[#allocation2 + $0x490] sm:$0xff] %v1398
    %1407 = vst [vmem:[#allocation2 + $0x498] sm:$0xff] %v1399
    %1408 = vst [vmem:[#allocation2 + $0x4a0] sm:$0xff] %v1400
    %1409 = vst [vmem:[#allocation2 + $0x4a8] sm:$0xff] %v1401
    %1410 = vst [vmem:[#allocation2 + $0x4b0] sm:$0xff] %v1402
    %1411 = vst [vmem:[#allocation2 + $0x4b8] sm:$0xff] %v1403
    %v1412 = vld [vmem:[#allocation3 + $0x198] sm:$0xff]
    %v1413 = vld [vmem:[#allocation3 + $0x1a0] sm:$0xff]
    %v1414 = vld [vmem:[#allocation3 + $0x1a8] sm:$0xff]
    %v1415 = vld [vmem:[#allocation3 + $0x1b0] sm:$0xff]
    %v1416 = vld [vmem:[#allocation3 + $0x1b8] sm:$0xff]
    %v1417 = vld [vmem:[#allocation3 + $0x1c0] sm:$0xff]
    %v1418 = vld [vmem:[#allocation3 + $0x1c8] sm:$0xff]
    %v1419 = vld [vmem:[#allocation3 + $0x1d0] sm:$0xff]
    %1420 = vst [vmem:[#allocation2 + $0x4c0] sm:$0xff] %v1412
    %1421 = vst [vmem:[#allocation2 + $0x4c8] sm:$0xff] %v1413
    %1422 = vst [vmem:[#allocation2 + $0x4d0] sm:$0xff] %v1414
    %1423 = vst [vmem:[#allocation2 + $0x4d8] sm:$0xff] %v1415
    %1424 = vst [vmem:[#allocation2 + $0x4e0] sm:$0xff] %v1416
    %1425 = vst [vmem:[#allocation2 + $0x4e8] sm:$0xff] %v1417
    %1426 = vst [vmem:[#allocation2 + $0x4f0] sm:$0xff] %v1418
    %1427 = vst [vmem:[#allocation2 + $0x4f8] sm:$0xff] %v1419
    %v1428 = vld [vmem:[#allocation3 + $0x1a0] sm:$0xff]
    %v1429 = vld [vmem:[#allocation3 + $0x1a8] sm:$0xff]
    %v1430 = vld [vmem:[#allocation3 + $0x1b0] sm:$0xff]
    %v1431 = vld [vmem:[#allocation3 + $0x1b8] sm:$0xff]
    %v1432 = vld [vmem:[#allocation3 + $0x1c0] sm:$0xff]
    %v1433 = vld [vmem:[#allocation3 + $0x1c8] sm:$0xff]
    %v1434 = vld [vmem:[#allocation3 + $0x1d0] sm:$0xff]
    %v1435 = vld [vmem:[#allocation3 + $0x1d8] sm:$0xff]
    %1436 = vst [vmem:[#allocation2 + $0x500] sm:$0xff] %v1428
    %1437 = vst [vmem:[#allocation2 + $0x508] sm:$0xff] %v1429
    %1438 = vst [vmem:[#allocation2 + $0x510] sm:$0xff] %v1430
    %1439 = vst [vmem:[#allocation2 + $0x518] sm:$0xff] %v1431
    %1440 = vst [vmem:[#allocation2 + $0x520] sm:$0xff] %v1432
    %1441 = vst [vmem:[#allocation2 + $0x528] sm:$0xff] %v1433
    %1442 = vst [vmem:[#allocation2 + $0x530] sm:$0xff] %v1434
    %1443 = vst [vmem:[#allocation2 + $0x538] sm:$0xff] %v1435
    %v1444 = vld [vmem:[#allocation3 + $0x1a8] sm:$0xff]
    %v1445 = vld [vmem:[#allocation3 + $0x1b0] sm:$0xff]
    %v1446 = vld [vmem:[#allocation3 + $0x1b8] sm:$0xff]
    %v1447 = vld [vmem:[#allocation3 + $0x1c0] sm:$0xff]
    %v1448 = vld [vmem:[#allocation3 + $0x1c8] sm:$0xff]
    %v1449 = vld [vmem:[#allocation3 + $0x1d0] sm:$0xff]
    %v1450 = vld [vmem:[#allocation3 + $0x1d8] sm:$0xff]
    %v1451 = vld [vmem:[#allocation3 + $0x1e0] sm:$0xff]
    %1452 = vst [vmem:[#allocation2 + $0x540] sm:$0xff] %v1444
    %1453 = vst [vmem:[#allocation2 + $0x548] sm:$0xff] %v1445
    %1454 = vst [vmem:[#allocation2 + $0x550] sm:$0xff] %v1446
    %1455 = vst [vmem:[#allocation2 + $0x558] sm:$0xff] %v1447
    %1456 = vst [vmem:[#allocation2 + $0x560] sm:$0xff] %v1448
    %1457 = vst [vmem:[#allocation2 + $0x568] sm:$0xff] %v1449
    %1458 = vst [vmem:[#allocation2 + $0x570] sm:$0xff] %v1450
    %1459 = vst [vmem:[#allocation2 + $0x578] sm:$0xff] %v1451
    %v1460 = vld [vmem:[#allocation3 + $0x1b0] sm:$0xff]
    %v1461 = vld [vmem:[#allocation3 + $0x1b8] sm:$0xff]
    %v1462 = vld [vmem:[#allocation3 + $0x1c0] sm:$0xff]
    %v1463 = vld [vmem:[#allocation3 + $0x1c8] sm:$0xff]
    %v1464 = vld [vmem:[#allocation3 + $0x1d0] sm:$0xff]
    %v1465 = vld [vmem:[#allocation3 + $0x1d8] sm:$0xff]
    %v1466 = vld [vmem:[#allocation3 + $0x1e0] sm:$0xff]
    %v1467 = vld [vmem:[#allocation3 + $0x1e8] sm:$0xff]
    %1468 = vst [vmem:[#allocation2 + $0x580] sm:$0xff] %v1460
    %1469 = vst [vmem:[#allocation2 + $0x588] sm:$0xff] %v1461
    %1470 = vst [vmem:[#allocation2 + $0x590] sm:$0xff] %v1462
    %1471 = vst [vmem:[#allocation2 + $0x598] sm:$0xff] %v1463
    %1472 = vst [vmem:[#allocation2 + $0x5a0] sm:$0xff] %v1464
    %1473 = vst [vmem:[#allocation2 + $0x5a8] sm:$0xff] %v1465
    %1474 = vst [vmem:[#allocation2 + $0x5b0] sm:$0xff] %v1466
    %1475 = vst [vmem:[#allocation2 + $0x5b8] sm:$0xff] %v1467
    %v1476 = vld [vmem:[#allocation3 + $0x1b8] sm:$0xff]
    %v1477 = vld [vmem:[#allocation3 + $0x1c0] sm:$0xff]
    %v1478 = vld [vmem:[#allocation3 + $0x1c8] sm:$0xff]
    %v1479 = vld [vmem:[#allocation3 + $0x1d0] sm:$0xff]
    %v1480 = vld [vmem:[#allocation3 + $0x1d8] sm:$0xff]
    %v1481 = vld [vmem:[#allocation3 + $0x1e0] sm:$0xff]
    %v1482 = vld [vmem:[#allocation3 + $0x1e8] sm:$0xff]
    %v1483 = vld [vmem:[#allocation3 + $0x1f0] sm:$0xff]
    %1484 = vst [vmem:[#allocation2 + $0x5c0] sm:$0xff] %v1476
    %1485 = vst [vmem:[#allocation2 + $0x5c8] sm:$0xff] %v1477
    %1486 = vst [vmem:[#allocation2 + $0x5d0] sm:$0xff] %v1478
    %1487 = vst [vmem:[#allocation2 + $0x5d8] sm:$0xff] %v1479
    %1488 = vst [vmem:[#allocation2 + $0x5e0] sm:$0xff] %v1480
    %1489 = vst [vmem:[#allocation2 + $0x5e8] sm:$0xff] %v1481
    %1490 = vst [vmem:[#allocation2 + $0x5f0] sm:$0xff] %v1482
    %1491 = vst [vmem:[#allocation2 + $0x5f8] sm:$0xff] %v1483
    %v1492 = vld [vmem:[#allocation3 + $0x1c0] sm:$0xff]
    %v1493 = vld [vmem:[#allocation3 + $0x1c8] sm:$0xff]
    %v1494 = vld [vmem:[#allocation3 + $0x1d0] sm:$0xff]
    %v1495 = vld [vmem:[#allocation3 + $0x1d8] sm:$0xff]
    %v1496 = vld [vmem:[#allocation3 + $0x1e0] sm:$0xff]
    %v1497 = vld [vmem:[#allocation3 + $0x1e8] sm:$0xff]
    %v1498 = vld [vmem:[#allocation3 + $0x1f0] sm:$0xff]
    %v1499 = vld [vmem:[#allocation3 + $0x1f8] sm:$0xff]
    %1500 = vst [vmem:[#allocation2 + $0x600] sm:$0xff] %v1492
    %1501 = vst [vmem:[#allocation2 + $0x608] sm:$0xff] %v1493
    %1502 = vst [vmem:[#allocation2 + $0x610] sm:$0xff] %v1494
    %1503 = vst [vmem:[#allocation2 + $0x618] sm:$0xff] %v1495
    %1504 = vst [vmem:[#allocation2 + $0x620] sm:$0xff] %v1496
    %1505 = vst [vmem:[#allocation2 + $0x628] sm:$0xff] %v1497
    %1506 = vst [vmem:[#allocation2 + $0x630] sm:$0xff] %v1498
    %1507 = vst [vmem:[#allocation2 + $0x638] sm:$0xff] %v1499
    %v1508 = vld [vmem:[#allocation3 + $0x1c8] sm:$0xff]
    %v1509 = vld [vmem:[#allocation3 + $0x1d0] sm:$0xff]
    %v1510 = vld [vmem:[#allocation3 + $0x1d8] sm:$0xff]
    %v1511 = vld [vmem:[#allocation3 + $0x1e0] sm:$0xff]
    %v1512 = vld [vmem:[#allocation3 + $0x1e8] sm:$0xff]
    %v1513 = vld [vmem:[#allocation3 + $0x1f0] sm:$0xff]
    %v1514 = vld [vmem:[#allocation3 + $0x1f8] sm:$0xff]
    %v1515 = vld [vmem:[#allocation3 + $0x200] sm:$0xff]
    %1516 = vst [vmem:[#allocation2 + $0x640] sm:$0xff] %v1508
    %1517 = vst [vmem:[#allocation2 + $0x648] sm:$0xff] %v1509
    %1518 = vst [vmem:[#allocation2 + $0x650] sm:$0xff] %v1510
    %1519 = vst [vmem:[#allocation2 + $0x658] sm:$0xff] %v1511
    %1520 = vst [vmem:[#allocation2 + $0x660] sm:$0xff] %v1512
    %1521 = vst [vmem:[#allocation2 + $0x668] sm:$0xff] %v1513
    %1522 = vst [vmem:[#allocation2 + $0x670] sm:$0xff] %v1514
    %1523 = vst [vmem:[#allocation2 + $0x678] sm:$0xff] %v1515
    %v1524 = vld [vmem:[#allocation3 + $0x1d0] sm:$0xff]
    %v1525 = vld [vmem:[#allocation3 + $0x1d8] sm:$0xff]
    %v1526 = vld [vmem:[#allocation3 + $0x1e0] sm:$0xff]
    %v1527 = vld [vmem:[#allocation3 + $0x1e8] sm:$0xff]
    %v1528 = vld [vmem:[#allocation3 + $0x1f0] sm:$0xff]
    %v1529 = vld [vmem:[#allocation3 + $0x1f8] sm:$0xff]
    %v1530 = vld [vmem:[#allocation3 + $0x200] sm:$0xff]
    %v1531 = vld [vmem:[#allocation3 + $0x208] sm:$0xff]
    %1532 = vst [vmem:[#allocation2 + $0x680] sm:$0xff] %v1524
    %1533 = vst [vmem:[#allocation2 + $0x688] sm:$0xff] %v1525
    %1534 = vst [vmem:[#allocation2 + $0x690] sm:$0xff] %v1526
    %1535 = vst [vmem:[#allocation2 + $0x698] sm:$0xff] %v1527
    %1536 = vst [vmem:[#allocation2 + $0x6a0] sm:$0xff] %v1528
    %1537 = vst [vmem:[#allocation2 + $0x6a8] sm:$0xff] %v1529
    %1538 = vst [vmem:[#allocation2 + $0x6b0] sm:$0xff] %v1530
    %1539 = vst [vmem:[#allocation2 + $0x6b8] sm:$0xff] %v1531
    %v1540 = vld [vmem:[#allocation3 + $0x1d8] sm:$0xff]
    %v1541 = vld [vmem:[#allocation3 + $0x1e0] sm:$0xff]
    %v1542 = vld [vmem:[#allocation3 + $0x1e8] sm:$0xff]
    %v1543 = vld [vmem:[#allocation3 + $0x1f0] sm:$0xff]
    %v1544 = vld [vmem:[#allocation3 + $0x1f8] sm:$0xff]
    %v1545 = vld [vmem:[#allocation3 + $0x200] sm:$0xff]
    %v1546 = vld [vmem:[#allocation3 + $0x208] sm:$0xff]
    %v1547 = vld [vmem:[#allocation3 + $0x210] sm:$0xff]
    %1548 = vst [vmem:[#allocation2 + $0x6c0] sm:$0xff] %v1540
    %1549 = vst [vmem:[#allocation2 + $0x6c8] sm:$0xff] %v1541
    %1550 = vst [vmem:[#allocation2 + $0x6d0] sm:$0xff] %v1542
    %1551 = vst [vmem:[#allocation2 + $0x6d8] sm:$0xff] %v1543
    %1552 = vst [vmem:[#allocation2 + $0x6e0] sm:$0xff] %v1544
    %1553 = vst [vmem:[#allocation2 + $0x6e8] sm:$0xff] %v1545
    %1554 = vst [vmem:[#allocation2 + $0x6f0] sm:$0xff] %v1546
    %1555 = vst [vmem:[#allocation2 + $0x6f8] sm:$0xff] %v1547
    %v1556 = vld [vmem:[#allocation3 + $0x1e0] sm:$0xff]
    %v1557 = vld [vmem:[#allocation3 + $0x1e8] sm:$0xff]
    %v1558 = vld [vmem:[#allocation3 + $0x1f0] sm:$0xff]
    %v1559 = vld [vmem:[#allocation3 + $0x1f8] sm:$0xff]
    %v1560 = vld [vmem:[#allocation3 + $0x200] sm:$0xff]
    %v1561 = vld [vmem:[#allocation3 + $0x208] sm:$0xff]
    %v1562 = vld [vmem:[#allocation3 + $0x210] sm:$0xff]
    %v1563 = vld [vmem:[#allocation3 + $0x218] sm:$0xff]
    %1564 = vst [vmem:[#allocation2 + $0x700] sm:$0xff] %v1556
    %1565 = vst [vmem:[#allocation2 + $0x708] sm:$0xff] %v1557
    %1566 = vst [vmem:[#allocation2 + $0x710] sm:$0xff] %v1558
    %1567 = vst [vmem:[#allocation2 + $0x718] sm:$0xff] %v1559
    %1568 = vst [vmem:[#allocation2 + $0x720] sm:$0xff] %v1560
    %1569 = vst [vmem:[#allocation2 + $0x728] sm:$0xff] %v1561
    %1570 = vst [vmem:[#allocation2 + $0x730] sm:$0xff] %v1562
    %1571 = vst [vmem:[#allocation2 + $0x738] sm:$0xff] %v1563
    %v1572 = vld [vmem:[#allocation3 + $0x1e8] sm:$0xff]
    %v1573 = vld [vmem:[#allocation3 + $0x1f0] sm:$0xff]
    %v1574 = vld [vmem:[#allocation3 + $0x1f8] sm:$0xff]
    %v1575 = vld [vmem:[#allocation3 + $0x200] sm:$0xff]
    %v1576 = vld [vmem:[#allocation3 + $0x208] sm:$0xff]
    %v1577 = vld [vmem:[#allocation3 + $0x210] sm:$0xff]
    %v1578 = vld [vmem:[#allocation3 + $0x218] sm:$0xff]
    %v1579 = vld [vmem:[#allocation3 + $0x220] sm:$0xff]
    %1580 = vst [vmem:[#allocation2 + $0x740] sm:$0xff] %v1572
    %1581 = vst [vmem:[#allocation2 + $0x748] sm:$0xff] %v1573
    %1582 = vst [vmem:[#allocation2 + $0x750] sm:$0xff] %v1574
    %1583 = vst [vmem:[#allocation2 + $0x758] sm:$0xff] %v1575
    %1584 = vst [vmem:[#allocation2 + $0x760] sm:$0xff] %v1576
    %1585 = vst [vmem:[#allocation2 + $0x768] sm:$0xff] %v1577
    %1586 = vst [vmem:[#allocation2 + $0x770] sm:$0xff] %v1578
    %1587 = vst [vmem:[#allocation2 + $0x778] sm:$0xff] %v1579
    %v1588 = vld [vmem:[#allocation3 + $0x1f0] sm:$0xff]
    %v1589 = vld [vmem:[#allocation3 + $0x1f8] sm:$0xff]
    %v1590 = vld [vmem:[#allocation3 + $0x200] sm:$0xff]
    %v1591 = vld [vmem:[#allocation3 + $0x208] sm:$0xff]
    %v1592 = vld [vmem:[#allocation3 + $0x210] sm:$0xff]
    %v1593 = vld [vmem:[#allocation3 + $0x218] sm:$0xff]
    %v1594 = vld [vmem:[#allocation3 + $0x220] sm:$0xff]
    %v1595 = vld [vmem:[#allocation3 + $0x228] sm:$0xff]
    %1596 = vst [vmem:[#allocation2 + $0x780] sm:$0xff] %v1588
    %1597 = vst [vmem:[#allocation2 + $0x788] sm:$0xff] %v1589
    %1598 = vst [vmem:[#allocation2 + $0x790] sm:$0xff] %v1590
    %1599 = vst [vmem:[#allocation2 + $0x798] sm:$0xff] %v1591
    %1600 = vst [vmem:[#allocation2 + $0x7a0] sm:$0xff] %v1592
    %1601 = vst [vmem:[#allocation2 + $0x7a8] sm:$0xff] %v1593
    %1602 = vst [vmem:[#allocation2 + $0x7b0] sm:$0xff] %v1594
    %1603 = vst [vmem:[#allocation2 + $0x7b8] sm:$0xff] %v1595
    %v1604 = vld [vmem:[#allocation3 + $0x1f8] sm:$0xff]
    %v1605 = vld [vmem:[#allocation3 + $0x200] sm:$0xff]
    %v1606 = vld [vmem:[#allocation3 + $0x208] sm:$0xff]
    %v1607 = vld [vmem:[#allocation3 + $0x210] sm:$0xff]
    %v1608 = vld [vmem:[#allocation3 + $0x218] sm:$0xff]
    %v1609 = vld [vmem:[#allocation3 + $0x220] sm:$0xff]
    %v1610 = vld [vmem:[#allocation3 + $0x228] sm:$0xff]
    %v1611 = vld [vmem:[#allocation3 + $0x230] sm:$0xff]
    %1612 = vst [vmem:[#allocation2 + $0x7c0] sm:$0xff] %v1604
    %1613 = vst [vmem:[#allocation2 + $0x7c8] sm:$0xff] %v1605
    %1614 = vst [vmem:[#allocation2 + $0x7d0] sm:$0xff] %v1606
    %1615 = vst [vmem:[#allocation2 + $0x7d8] sm:$0xff] %v1607
    %1616 = vst [vmem:[#allocation2 + $0x7e0] sm:$0xff] %v1608
    %1617 = vst [vmem:[#allocation2 + $0x7e8] sm:$0xff] %v1609
    %1618 = vst [vmem:[#allocation2 + $0x7f0] sm:$0xff] %v1610
    %1619 = vst [vmem:[#allocation2 + $0x7f8] sm:$0xff] %v1611
    %v1620 = vld [vmem:[#allocation6 + $0x10] sm:$0xff]
    %v1621 = vld [vmem:[#allocation6 + $0x18] sm:$0xff]
    %v1622 = vld [vmem:[#allocation2] sm:$0xff]
    %v1623 = vld [vmem:[#allocation2 + $0x8] sm:$0xff]
    %v1624 = vld [vmem:[#allocation2 + $0x10] sm:$0xff]
    %v1625 = vld [vmem:[#allocation2 + $0x18] sm:$0xff]
    %v1626 = vld [vmem:[#allocation2 + $0x20] sm:$0xff]
    %v1627 = vld [vmem:[#allocation2 + $0x28] sm:$0xff]
    %v1628 = vld [vmem:[#allocation2 + $0x30] sm:$0xff]
    %v1629 = vld [vmem:[#allocation2 + $0x38] sm:$0xff]
    %v1630 = vld [vmem:[#allocation2 + $0x40] sm:$0xff]
    %v1631 = vld [vmem:[#allocation2 + $0x48] sm:$0xff]
    %v1632 = vld [vmem:[#allocation2 + $0x50] sm:$0xff]
    %v1633 = vld [vmem:[#allocation2 + $0x58] sm:$0xff]
    %v1634 = vld [vmem:[#allocation2 + $0x60] sm:$0xff]
    %v1635 = vld [vmem:[#allocation2 + $0x68] sm:$0xff]
    %v1636 = vld [vmem:[#allocation2 + $0x70] sm:$0xff]
    %v1637 = vld [vmem:[#allocation2 + $0x78] sm:$0xff]
    %v1638 = vld [vmem:[#allocation2 + $0x80] sm:$0xff]
    %v1639 = vld [vmem:[#allocation2 + $0x88] sm:$0xff]
    %v1640 = vld [vmem:[#allocation2 + $0x90] sm:$0xff]
    %v1641 = vld [vmem:[#allocation2 + $0x98] sm:$0xff]
    %v1642 = vld [vmem:[#allocation2 + $0xa0] sm:$0xff]
    %v1643 = vld [vmem:[#allocation2 + $0xa8] sm:$0xff]
    %v1644 = vld [vmem:[#allocation2 + $0xb0] sm:$0xff]
    %v1645 = vld [vmem:[#allocation2 + $0xb8] sm:$0xff]
    %v1646 = vld [vmem:[#allocation2 + $0xc0] sm:$0xff]
    %v1647 = vld [vmem:[#allocation2 + $0xc8] sm:$0xff]
    %v1648 = vld [vmem:[#allocation2 + $0xd0] sm:$0xff]
    %v1649 = vld [vmem:[#allocation2 + $0xd8] sm:$0xff]
    %v1650 = vld [vmem:[#allocation2 + $0xe0] sm:$0xff]
    %v1651 = vld [vmem:[#allocation2 + $0xe8] sm:$0xff]
    %v1652 = vld [vmem:[#allocation2 + $0xf0] sm:$0xff]
    %v1653 = vld [vmem:[#allocation2 + $0xf8] sm:$0xff]
    %v1654 = vld [vmem:[#allocation2 + $0x100] sm:$0xff]
    %v1655 = vld [vmem:[#allocation2 + $0x108] sm:$0xff]
    %v1656 = vld [vmem:[#allocation2 + $0x110] sm:$0xff]
    %v1657 = vld [vmem:[#allocation2 + $0x118] sm:$0xff]
    %v1658 = vld [vmem:[#allocation2 + $0x120] sm:$0xff]
    %v1659 = vld [vmem:[#allocation2 + $0x128] sm:$0xff]
    %v1660 = vld [vmem:[#allocation2 + $0x130] sm:$0xff]
    %v1661 = vld [vmem:[#allocation2 + $0x138] sm:$0xff]
    %v1662 = vld [vmem:[#allocation2 + $0x140] sm:$0xff]
    %v1663 = vld [vmem:[#allocation2 + $0x148] sm:$0xff]
    %v1664 = vld [vmem:[#allocation2 + $0x150] sm:$0xff]
    %v1665 = vld [vmem:[#allocation2 + $0x158] sm:$0xff]
    %v1666 = vld [vmem:[#allocation2 + $0x160] sm:$0xff]
    %v1667 = vld [vmem:[#allocation2 + $0x168] sm:$0xff]
    %v1668 = vld [vmem:[#allocation2 + $0x170] sm:$0xff]
    %v1669 = vld [vmem:[#allocation2 + $0x178] sm:$0xff]
    %v1670 = vld [vmem:[#allocation2 + $0x180] sm:$0xff]
    %v1671 = vld [vmem:[#allocation2 + $0x188] sm:$0xff]
    %v1672 = vld [vmem:[#allocation2 + $0x190] sm:$0xff]
    %v1673 = vld [vmem:[#allocation2 + $0x198] sm:$0xff]
    %v1674 = vld [vmem:[#allocation2 + $0x1a0] sm:$0xff]
    %v1675 = vld [vmem:[#allocation2 + $0x1a8] sm:$0xff]
    %v1676 = vld [vmem:[#allocation2 + $0x1b0] sm:$0xff]
    %v1677 = vld [vmem:[#allocation2 + $0x1b8] sm:$0xff]
    %v1678 = vld [vmem:[#allocation2 + $0x1c0] sm:$0xff]
    %v1679 = vld [vmem:[#allocation2 + $0x1c8] sm:$0xff]
    %v1680 = vld [vmem:[#allocation2 + $0x1d0] sm:$0xff]
    %v1681 = vld [vmem:[#allocation2 + $0x1d8] sm:$0xff]
    %v1682 = vld [vmem:[#allocation2 + $0x1e0] sm:$0xff]
    %v1683 = vld [vmem:[#allocation2 + $0x1e8] sm:$0xff]
    %v1684 = vld [vmem:[#allocation2 + $0x1f0] sm:$0xff]
    %v1685 = vld [vmem:[#allocation2 + $0x1f8] sm:$0xff]
    %v1686 = vld [vmem:[#allocation2 + $0x200] sm:$0xff]
    %v1687 = vld [vmem:[#allocation2 + $0x208] sm:$0xff]
    %v1688 = vld [vmem:[#allocation2 + $0x210] sm:$0xff]
    %v1689 = vld [vmem:[#allocation2 + $0x218] sm:$0xff]
    %v1690 = vld [vmem:[#allocation2 + $0x220] sm:$0xff]
    %v1691 = vld [vmem:[#allocation2 + $0x228] sm:$0xff]
    %v1692 = vld [vmem:[#allocation2 + $0x230] sm:$0xff]
    %v1693 = vld [vmem:[#allocation2 + $0x238] sm:$0xff]
    %v1694 = vld [vmem:[#allocation2 + $0x240] sm:$0xff]
    %v1695 = vld [vmem:[#allocation2 + $0x248] sm:$0xff]
    %v1696 = vld [vmem:[#allocation2 + $0x250] sm:$0xff]
    %v1697 = vld [vmem:[#allocation2 + $0x258] sm:$0xff]
    %v1698 = vld [vmem:[#allocation2 + $0x260] sm:$0xff]
    %v1699 = vld [vmem:[#allocation2 + $0x268] sm:$0xff]
    %v1700 = vld [vmem:[#allocation2 + $0x270] sm:$0xff]
    %v1701 = vld [vmem:[#allocation2 + $0x278] sm:$0xff]
    %v1702 = vld [vmem:[#allocation2 + $0x280] sm:$0xff]
    %v1703 = vld [vmem:[#allocation2 + $0x288] sm:$0xff]
    %v1704 = vld [vmem:[#allocation2 + $0x290] sm:$0xff]
    %v1705 = vld [vmem:[#allocation2 + $0x298] sm:$0xff]
    %v1706 = vld [vmem:[#allocation2 + $0x2a0] sm:$0xff]
    %v1707 = vld [vmem:[#allocation2 + $0x2a8] sm:$0xff]
    %v1708 = vld [vmem:[#allocation2 + $0x2b0] sm:$0xff]
    %v1709 = vld [vmem:[#allocation2 + $0x2b8] sm:$0xff]
    %v1710 = vld [vmem:[#allocation2 + $0x2c0] sm:$0xff]
    %v1711 = vld [vmem:[#allocation2 + $0x2c8] sm:$0xff]
    %v1712 = vld [vmem:[#allocation2 + $0x2d0] sm:$0xff]
    %v1713 = vld [vmem:[#allocation2 + $0x2d8] sm:$0xff]
    %v1714 = vld [vmem:[#allocation2 + $0x2e0] sm:$0xff]
    %v1715 = vld [vmem:[#allocation2 + $0x2e8] sm:$0xff]
    %v1716 = vld [vmem:[#allocation2 + $0x2f0] sm:$0xff]
    %v1717 = vld [vmem:[#allocation2 + $0x2f8] sm:$0xff]
    %v1718 = vld [vmem:[#allocation2 + $0x300] sm:$0xff]
    %v1719 = vld [vmem:[#allocation2 + $0x308] sm:$0xff]
    %v1720 = vld [vmem:[#allocation2 + $0x310] sm:$0xff]
    %v1721 = vld [vmem:[#allocation2 + $0x318] sm:$0xff]
    %v1722 = vld [vmem:[#allocation2 + $0x320] sm:$0xff]
    %v1723 = vld [vmem:[#allocation2 + $0x328] sm:$0xff]
    %v1724 = vld [vmem:[#allocation2 + $0x330] sm:$0xff]
    %v1725 = vld [vmem:[#allocation2 + $0x338] sm:$0xff]
    %v1726 = vld [vmem:[#allocation2 + $0x340] sm:$0xff]
    %v1727 = vld [vmem:[#allocation2 + $0x348] sm:$0xff]
    %v1728 = vld [vmem:[#allocation2 + $0x350] sm:$0xff]
    %v1729 = vld [vmem:[#allocation2 + $0x358] sm:$0xff]
    %v1730 = vld [vmem:[#allocation2 + $0x360] sm:$0xff]
    %v1731 = vld [vmem:[#allocation2 + $0x368] sm:$0xff]
    %v1732 = vld [vmem:[#allocation2 + $0x370] sm:$0xff]
    %v1733 = vld [vmem:[#allocation2 + $0x378] sm:$0xff]
    %v1734 = vld [vmem:[#allocation2 + $0x380] sm:$0xff]
    %v1735 = vld [vmem:[#allocation2 + $0x388] sm:$0xff]
    %v1736 = vld [vmem:[#allocation2 + $0x390] sm:$0xff]
    %v1737 = vld [vmem:[#allocation2 + $0x398] sm:$0xff]
    %v1738 = vld [vmem:[#allocation2 + $0x3a0] sm:$0xff]
    %v1739 = vld [vmem:[#allocation2 + $0x3a8] sm:$0xff]
    %v1740 = vld [vmem:[#allocation2 + $0x3b0] sm:$0xff]
    %v1741 = vld [vmem:[#allocation2 + $0x3b8] sm:$0xff]
    %v1742 = vld [vmem:[#allocation2 + $0x3c0] sm:$0xff]
    %v1743 = vld [vmem:[#allocation2 + $0x3c8] sm:$0xff]
    %v1744 = vld [vmem:[#allocation2 + $0x3d0] sm:$0xff]
    %v1745 = vld [vmem:[#allocation2 + $0x3d8] sm:$0xff]
    %v1746 = vld [vmem:[#allocation2 + $0x3e0] sm:$0xff]
    %v1747 = vld [vmem:[#allocation2 + $0x3e8] sm:$0xff]
    %v1748 = vld [vmem:[#allocation2 + $0x3f0] sm:$0xff]
    %v1749 = vld [vmem:[#allocation2 + $0x3f8] sm:$0xff]
    %v1750 = vld [vmem:[#allocation2 + $0x400] sm:$0xff]
    %v1751 = vld [vmem:[#allocation2 + $0x408] sm:$0xff]
    %v1752 = vld [vmem:[#allocation2 + $0x410] sm:$0xff]
    %v1753 = vld [vmem:[#allocation2 + $0x418] sm:$0xff]
    %v1754 = vld [vmem:[#allocation2 + $0x420] sm:$0xff]
    %v1755 = vld [vmem:[#allocation2 + $0x428] sm:$0xff]
    %v1756 = vld [vmem:[#allocation2 + $0x430] sm:$0xff]
    %v1757 = vld [vmem:[#allocation2 + $0x438] sm:$0xff]
    %v1758 = vld [vmem:[#allocation2 + $0x440] sm:$0xff]
    %v1759 = vld [vmem:[#allocation2 + $0x448] sm:$0xff]
    %v1760 = vld [vmem:[#allocation2 + $0x450] sm:$0xff]
    %v1761 = vld [vmem:[#allocation2 + $0x458] sm:$0xff]
    %v1762 = vld [vmem:[#allocation2 + $0x460] sm:$0xff]
    %v1763 = vld [vmem:[#allocation2 + $0x468] sm:$0xff]
    %v1764 = vld [vmem:[#allocation2 + $0x470] sm:$0xff]
    %v1765 = vld [vmem:[#allocation2 + $0x478] sm:$0xff]
    %v1766 = vld [vmem:[#allocation2 + $0x480] sm:$0xff]
    %v1767 = vld [vmem:[#allocation2 + $0x488] sm:$0xff]
    %v1768 = vld [vmem:[#allocation2 + $0x490] sm:$0xff]
    %v1769 = vld [vmem:[#allocation2 + $0x498] sm:$0xff]
    %v1770 = vld [vmem:[#allocation2 + $0x4a0] sm:$0xff]
    %v1771 = vld [vmem:[#allocation2 + $0x4a8] sm:$0xff]
    %v1772 = vld [vmem:[#allocation2 + $0x4b0] sm:$0xff]
    %v1773 = vld [vmem:[#allocation2 + $0x4b8] sm:$0xff]
    %v1774 = vld [vmem:[#allocation2 + $0x4c0] sm:$0xff]
    %v1775 = vld [vmem:[#allocation2 + $0x4c8] sm:$0xff]
    %v1776 = vld [vmem:[#allocation2 + $0x4d0] sm:$0xff]
    %v1777 = vld [vmem:[#allocation2 + $0x4d8] sm:$0xff]
    %v1778 = vld [vmem:[#allocation2 + $0x4e0] sm:$0xff]
    %v1779 = vld [vmem:[#allocation2 + $0x4e8] sm:$0xff]
    %v1780 = vld [vmem:[#allocation2 + $0x4f0] sm:$0xff]
    %v1781 = vld [vmem:[#allocation2 + $0x4f8] sm:$0xff]
    %v1782 = vld [vmem:[#allocation2 + $0x500] sm:$0xff]
    %v1783 = vld [vmem:[#allocation2 + $0x508] sm:$0xff]
    %v1784 = vld [vmem:[#allocation2 + $0x510] sm:$0xff]
    %v1785 = vld [vmem:[#allocation2 + $0x518] sm:$0xff]
    %v1786 = vld [vmem:[#allocation2 + $0x520] sm:$0xff]
    %v1787 = vld [vmem:[#allocation2 + $0x528] sm:$0xff]
    %v1788 = vld [vmem:[#allocation2 + $0x530] sm:$0xff]
    %v1789 = vld [vmem:[#allocation2 + $0x538] sm:$0xff]
    %v1790 = vld [vmem:[#allocation2 + $0x540] sm:$0xff]
    %v1791 = vld [vmem:[#allocation2 + $0x548] sm:$0xff]
    %v1792 = vld [vmem:[#allocation2 + $0x550] sm:$0xff]
    %v1793 = vld [vmem:[#allocation2 + $0x558] sm:$0xff]
    %v1794 = vld [vmem:[#allocation2 + $0x560] sm:$0xff]
    %v1795 = vld [vmem:[#allocation2 + $0x568] sm:$0xff]
    %v1796 = vld [vmem:[#allocation2 + $0x570] sm:$0xff]
    %v1797 = vld [vmem:[#allocation2 + $0x578] sm:$0xff]
    %v1798 = vld [vmem:[#allocation2 + $0x580] sm:$0xff]
    %v1799 = vld [vmem:[#allocation2 + $0x588] sm:$0xff]
    %v1800 = vld [vmem:[#allocation2 + $0x590] sm:$0xff]
    %v1801 = vld [vmem:[#allocation2 + $0x598] sm:$0xff]
    %v1802 = vld [vmem:[#allocation2 + $0x5a0] sm:$0xff]
    %v1803 = vld [vmem:[#allocation2 + $0x5a8] sm:$0xff]
    %v1804 = vld [vmem:[#allocation2 + $0x5b0] sm:$0xff]
    %v1805 = vld [vmem:[#allocation2 + $0x5b8] sm:$0xff]
    %v1806 = vld [vmem:[#allocation2 + $0x5c0] sm:$0xff]
    %v1807 = vld [vmem:[#allocation2 + $0x5c8] sm:$0xff]
    %v1808 = vld [vmem:[#allocation2 + $0x5d0] sm:$0xff]
    %v1809 = vld [vmem:[#allocation2 + $0x5d8] sm:$0xff]
    %v1810 = vld [vmem:[#allocation2 + $0x5e0] sm:$0xff]
    %v1811 = vld [vmem:[#allocation2 + $0x5e8] sm:$0xff]
    %v1812 = vld [vmem:[#allocation2 + $0x5f0] sm:$0xff]
    %v1813 = vld [vmem:[#allocation2 + $0x5f8] sm:$0xff]
    %v1814 = vld [vmem:[#allocation2 + $0x600] sm:$0xff]
    %v1815 = vld [vmem:[#allocation2 + $0x608] sm:$0xff]
    %v1816 = vld [vmem:[#allocation2 + $0x610] sm:$0xff]
    %v1817 = vld [vmem:[#allocation2 + $0x618] sm:$0xff]
    %v1818 = vld [vmem:[#allocation2 + $0x620] sm:$0xff]
    %v1819 = vld [vmem:[#allocation2 + $0x628] sm:$0xff]
    %v1820 = vld [vmem:[#allocation2 + $0x630] sm:$0xff]
    %v1821 = vld [vmem:[#allocation2 + $0x638] sm:$0xff]
    %v1822 = vld [vmem:[#allocation2 + $0x640] sm:$0xff]
    %v1823 = vld [vmem:[#allocation2 + $0x648] sm:$0xff]
    %v1824 = vld [vmem:[#allocation2 + $0x650] sm:$0xff]
    %v1825 = vld [vmem:[#allocation2 + $0x658] sm:$0xff]
    %v1826 = vld [vmem:[#allocation2 + $0x660] sm:$0xff]
    %v1827 = vld [vmem:[#allocation2 + $0x668] sm:$0xff]
    %v1828 = vld [vmem:[#allocation2 + $0x670] sm:$0xff]
    %v1829 = vld [vmem:[#allocation2 + $0x678] sm:$0xff]
    %v1830 = vld [vmem:[#allocation2 + $0x680] sm:$0xff]
    %v1831 = vld [vmem:[#allocation2 + $0x688] sm:$0xff]
    %v1832 = vld [vmem:[#allocation2 + $0x690] sm:$0xff]
    %v1833 = vld [vmem:[#allocation2 + $0x698] sm:$0xff]
    %v1834 = vld [vmem:[#allocation2 + $0x6a0] sm:$0xff]
    %v1835 = vld [vmem:[#allocation2 + $0x6a8] sm:$0xff]
    %v1836 = vld [vmem:[#allocation2 + $0x6b0] sm:$0xff]
    %v1837 = vld [vmem:[#allocation2 + $0x6b8] sm:$0xff]
    %v1838 = vld [vmem:[#allocation2 + $0x6c0] sm:$0xff]
    %v1839 = vld [vmem:[#allocation2 + $0x6c8] sm:$0xff]
    %v1840 = vld [vmem:[#allocation2 + $0x6d0] sm:$0xff]
    %v1841 = vld [vmem:[#allocation2 + $0x6d8] sm:$0xff]
    %v1842 = vld [vmem:[#allocation2 + $0x6e0] sm:$0xff]
    %v1843 = vld [vmem:[#allocation2 + $0x6e8] sm:$0xff]
    %v1844 = vld [vmem:[#allocation2 + $0x6f0] sm:$0xff]
    %v1845 = vld [vmem:[#allocation2 + $0x6f8] sm:$0xff]
    %v1846 = vld [vmem:[#allocation2 + $0x700] sm:$0xff]
    %v1847 = vld [vmem:[#allocation2 + $0x708] sm:$0xff]
    %v1848 = vld [vmem:[#allocation2 + $0x710] sm:$0xff]
    %v1849 = vld [vmem:[#allocation2 + $0x718] sm:$0xff]
    %v1850 = vld [vmem:[#allocation2 + $0x720] sm:$0xff]
    %v1851 = vld [vmem:[#allocation2 + $0x728] sm:$0xff]
    %v1852 = vld [vmem:[#allocation2 + $0x730] sm:$0xff]
    %v1853 = vld [vmem:[#allocation2 + $0x738] sm:$0xff]
    %v1854 = vld [vmem:[#allocation2 + $0x740] sm:$0xff]
    %v1855 = vld [vmem:[#allocation2 + $0x748] sm:$0xff]
    %v1856 = vld [vmem:[#allocation2 + $0x750] sm:$0xff]
    %v1857 = vld [vmem:[#allocation2 + $0x758] sm:$0xff]
    %v1858 = vld [vmem:[#allocation2 + $0x760] sm:$0xff]
    %v1859 = vld [vmem:[#allocation2 + $0x768] sm:$0xff]
    %v1860 = vld [vmem:[#allocation2 + $0x770] sm:$0xff]
    %v1861 = vld [vmem:[#allocation2 + $0x778] sm:$0xff]
    %v1862 = vld [vmem:[#allocation2 + $0x780] sm:$0xff]
    %v1863 = vld [vmem:[#allocation2 + $0x788] sm:$0xff]
    %v1864 = vld [vmem:[#allocation2 + $0x790] sm:$0xff]
    %v1865 = vld [vmem:[#allocation2 + $0x798] sm:$0xff]
    %v1866 = vld [vmem:[#allocation2 + $0x7a0] sm:$0xff]
    %v1867 = vld [vmem:[#allocation2 + $0x7a8] sm:$0xff]
    %v1868 = vld [vmem:[#allocation2 + $0x7b0] sm:$0xff]
    %v1869 = vld [vmem:[#allocation2 + $0x7b8] sm:$0xff]
    %v1870 = vld [vmem:[#allocation2 + $0x7c0] sm:$0xff]
    %v1871 = vld [vmem:[#allocation2 + $0x7c8] sm:$0xff]
    %v1872 = vld [vmem:[#allocation2 + $0x7d0] sm:$0xff]
    %v1873 = vld [vmem:[#allocation2 + $0x7d8] sm:$0xff]
    %v1874 = vld [vmem:[#allocation2 + $0x7e0] sm:$0xff]
    %v1875 = vld [vmem:[#allocation2 + $0x7e8] sm:$0xff]
    %v1876 = vld [vmem:[#allocation2 + $0x7f0] sm:$0xff]
    %v1877 = vld [vmem:[#allocation2 + $0x7f8] sm:$0xff]
    %1878 = vmatprep.subr.mxu0 %v1743
    %1879 = vmatpush1.msra.mxu0 %v1742
    %1880 = vmatprep.subr.mxu0 %v1735
    %1881 = vmatpush1.msra.mxu0 %v1734
    %1882 = vmatprep.subr.mxu0 %v1727
    %1883 = vmatpush1.msra.mxu0 %v1726
    %1884 = vmatprep.subr.mxu0 %v1719
    %1885 = vmatpush1.msra.mxu0 %v1718
    %1886 = vmatprep.subr.mxu0 %v1711
    %1887 = vmatpush1.msra.mxu0 %v1710
    %1888 = vmatprep.subr.mxu0 %v1703
    %1889 = vmatpush1.msra.mxu0 %v1702
    %1890 = vmatprep.subr.mxu0 %v1695
    %1891 = vmatpush1.msra.mxu0 %v1694
    %1892 = vmatprep.subr.mxu0 %v1687
    %1893 = vmatpush1.msra.mxu0 %v1686
    %1894 = vmatprep.subr.mxu0 %v1679
    %1895 = vmatpush1.msra.mxu0 %v1678
    %1896 = vmatprep.subr.mxu0 %v1671
    %1897 = vmatpush1.msra.mxu0 %v1670
    %1898 = vmatprep.subr.mxu0 %v1663
    %1899 = vmatpush1.msra.mxu0 %v1662
    %1900 = vmatprep.subr.mxu0 %v1655
    %1901 = vmatpush1.msra.mxu0 %v1654
    %1902 = vmatprep.subr.mxu0 %v1647
    %1903 = vmatpush1.msra.mxu0 %v1646
    %1904 = vmatprep.subr.mxu0 %v1639
    %1905 = vmatpush1.msra.mxu0 %v1638
    %1906 = vmatprep.subr.mxu0 %v1631
    %1907 = vmatpush1.msra.mxu0 %v1630
    %1908 = vmatprep.subr.mxu0 %v1623
    %1909 = vmatpush1.msra.mxu0 %v1622
    %1910 = vmatprep.subr.mxu0 %v1871
    %1911 = vmatpush2.msra.mxu0 %v1870
    %1912 = vmatprep.subr.mxu0 %v1863
    %1913 = vmatpush2.msra.mxu0 %v1862
    %1914 = vmatprep.subr.mxu0 %v1855
    %1915 = vmatpush2.msra.mxu0 %v1854
    %1916 = vmatprep.subr.mxu0 %v1847
    %1917 = vmatpush2.msra.mxu0 %v1846
    %1918 = vmatprep.subr.mxu0 %v1839
    %1919 = vmatpush2.msra.mxu0 %v1838
    %1920 = vmatprep.subr.mxu0 %v1831
    %1921 = vmatpush2.msra.mxu0 %v1830
    %1922 = vmatprep.subr.mxu0 %v1823
    %1923 = vmatpush2.msra.mxu0 %v1822
    %1924 = vmatprep.subr.mxu0 %v1815
    %1925 = vmatpush2.msra.mxu0 %v1814
    %1926 = vmatprep.subr.mxu0 %v1807
    %1927 = vmatpush2.msra.mxu0 %v1806
    %1928 = vmatprep.subr.mxu0 %v1799
    %1929 = vmatpush2.msra.mxu0 %v1798
    %1930 = vmatprep.subr.mxu0 %v1791
    %1931 = vmatpush2.msra.mxu0 %v1790
    %1932 = vmatprep.subr.mxu0 %v1783
    %1933 = vmatpush2.msra.mxu0 %v1782
    %1934 = vmatprep.subr.mxu0 %v1775
    %1935 = vmatpush2.msra.mxu0 %v1774
    %1936 = vmatprep.subr.mxu0 %v1767
    %1937 = vmatpush2.msra.mxu0 %v1766
    %1938 = vmatprep.subr.mxu0 %v1759
    %1939 = vmatpush2.msra.mxu0 %v1758
    %1940 = vmatprep.subr.mxu0 %v1751
    %1941 = vmatpush2.msra.mxu0 %v1750
    %1942 = vmatprep.mubr.f32.mxu0 %v1621
    %1943 = vmatmul.mubr.f32.gmra.mxu0 %v1620
    %v1944 = vpop.f32.mrf.mxu0
    %v1945 = vadd.f32 0.0, %v1944
    %v1946 = vpop.f32.mrf.mxu0
    %v1947 = vadd.f32 0.0, %v1946
    %1948 = vdwg.mxu0
    %1949 = vmatprep.subr.mxu0 %v1745
    %1950 = vmatpush1.msra.mxu0 %v1744
    %1951 = vmatprep.subr.mxu0 %v1737
    %1952 = vmatpush1.msra.mxu0 %v1736
    %1953 = vmatprep.subr.mxu0 %v1729
    %1954 = vmatpush1.msra.mxu0 %v1728
    %1955 = vmatprep.subr.mxu0 %v1721
    %1956 = vmatpush1.msra.mxu0 %v1720
    %1957 = vmatprep.subr.mxu0 %v1713
    %1958 = vmatpush1.msra.mxu0 %v1712
    %1959 = vmatprep.subr.mxu0 %v1705
    %1960 = vmatpush1.msra.mxu0 %v1704
    %1961 = vmatprep.subr.mxu0 %v1697
    %1962 = vmatpush1.msra.mxu0 %v1696
    %1963 = vmatprep.subr.mxu0 %v1689
    %1964 = vmatpush1.msra.mxu0 %v1688
    %1965 = vmatprep.subr.mxu0 %v1681
    %1966 = vmatpush1.msra.mxu0 %v1680
    %1967 = vmatprep.subr.mxu0 %v1673
    %1968 = vmatpush1.msra.mxu0 %v1672
    %1969 = vmatprep.subr.mxu0 %v1665
    %1970 = vmatpush1.msra.mxu0 %v1664
    %1971 = vmatprep.subr.mxu0 %v1657
    %1972 = vmatpush1.msra.mxu0 %v1656
    %1973 = vmatprep.subr.mxu0 %v1649
    %1974 = vmatpush1.msra.mxu0 %v1648
    %1975 = vmatprep.subr.mxu0 %v1641
    %1976 = vmatpush1.msra.mxu0 %v1640
    %1977 = vmatprep.subr.mxu0 %v1633
    %1978 = vmatpush1.msra.mxu0 %v1632
    %1979 = vmatprep.subr.mxu0 %v1625
    %1980 = vmatpush1.msra.mxu0 %v1624
    %1981 = vmatprep.subr.mxu0 %v1873
    %1982 = vmatpush2.msra.mxu0 %v1872
    %1983 = vmatprep.subr.mxu0 %v1865
    %1984 = vmatpush2.msra.mxu0 %v1864
    %1985 = vmatprep.subr.mxu0 %v1857
    %1986 = vmatpush2.msra.mxu0 %v1856
    %1987 = vmatprep.subr.mxu0 %v1849
    %1988 = vmatpush2.msra.mxu0 %v1848
    %1989 = vmatprep.subr.mxu0 %v1841
    %1990 = vmatpush2.msra.mxu0 %v1840
    %1991 = vmatprep.subr.mxu0 %v1833
    %1992 = vmatpush2.msra.mxu0 %v1832
    %1993 = vmatprep.subr.mxu0 %v1825
    %1994 = vmatpush2.msra.mxu0 %v1824
    %1995 = vmatprep.subr.mxu0 %v1817
    %1996 = vmatpush2.msra.mxu0 %v1816
    %1997 = vmatprep.subr.mxu0 %v1809
    %1998 = vmatpush2.msra.mxu0 %v1808
    %1999 = vmatprep.subr.mxu0 %v1801
    %2000 = vmatpush2.msra.mxu0 %v1800
    %2001 = vmatprep.subr.mxu0 %v1793
    %2002 = vmatpush2.msra.mxu0 %v1792
    %2003 = vmatprep.subr.mxu0 %v1785
    %2004 = vmatpush2.msra.mxu0 %v1784
    %2005 = vmatprep.subr.mxu0 %v1777
    %2006 = vmatpush2.msra.mxu0 %v1776
    %2007 = vmatprep.subr.mxu0 %v1769
    %2008 = vmatpush2.msra.mxu0 %v1768
    %2009 = vmatprep.subr.mxu0 %v1761
    %2010 = vmatpush2.msra.mxu0 %v1760
    %2011 = vmatprep.subr.mxu0 %v1753
    %2012 = vmatpush2.msra.mxu0 %v1752
    %2013 = vmatprep.mubr.f32.mxu0 %v1621
    %2014 = vmatmul.mubr.f32.gmra.mxu0 %v1620
    %v2015 = vpop.f32.mrf.mxu0
    %v2016 = vadd.f32 0.0, %v2015
    %v2017 = vpop.f32.mrf.mxu0
    %v2018 = vadd.f32 0.0, %v2017
    %2019 = vdwg.mxu0
    %2020 = vmatprep.subr.mxu0 %v1747
    %2021 = vmatpush1.msra.mxu0 %v1746
    %2022 = vmatprep.subr.mxu0 %v1739
    %2023 = vmatpush1.msra.mxu0 %v1738
    %2024 = vmatprep.subr.mxu0 %v1731
    %2025 = vmatpush1.msra.mxu0 %v1730
    %2026 = vmatprep.subr.mxu0 %v1723
    %2027 = vmatpush1.msra.mxu0 %v1722
    %2028 = vmatprep.subr.mxu0 %v1715
    %2029 = vmatpush1.msra.mxu0 %v1714
    %2030 = vmatprep.subr.mxu0 %v1707
    %2031 = vmatpush1.msra.mxu0 %v1706
    %2032 = vmatprep.subr.mxu0 %v1699
    %2033 = vmatpush1.msra.mxu0 %v1698
    %2034 = vmatprep.subr.mxu0 %v1691
    %2035 = vmatpush1.msra.mxu0 %v1690
    %2036 = vmatprep.subr.mxu0 %v1683
    %2037 = vmatpush1.msra.mxu0 %v1682
    %2038 = vmatprep.subr.mxu0 %v1675
    %2039 = vmatpush1.msra.mxu0 %v1674
    %2040 = vmatprep.subr.mxu0 %v1667
    %2041 = vmatpush1.msra.mxu0 %v1666
    %2042 = vmatprep.subr.mxu0 %v1659
    %2043 = vmatpush1.msra.mxu0 %v1658
    %2044 = vmatprep.subr.mxu0 %v1651
    %2045 = vmatpush1.msra.mxu0 %v1650
    %2046 = vmatprep.subr.mxu0 %v1643
    %2047 = vmatpush1.msra.mxu0 %v1642
    %2048 = vmatprep.subr.mxu0 %v1635
    %2049 = vmatpush1.msra.mxu0 %v1634
    %2050 = vmatprep.subr.mxu0 %v1627
    %2051 = vmatpush1.msra.mxu0 %v1626
    %2052 = vmatprep.subr.mxu0 %v1875
    %2053 = vmatpush2.msra.mxu0 %v1874
    %2054 = vmatprep.subr.mxu0 %v1867
    %2055 = vmatpush2.msra.mxu0 %v1866
    %2056 = vmatprep.subr.mxu0 %v1859
    %2057 = vmatpush2.msra.mxu0 %v1858
    %2058 = vmatprep.subr.mxu0 %v1851
    %2059 = vmatpush2.msra.mxu0 %v1850
    %2060 = vmatprep.subr.mxu0 %v1843
    %2061 = vmatpush2.msra.mxu0 %v1842
    %2062 = vmatprep.subr.mxu0 %v1835
    %2063 = vmatpush2.msra.mxu0 %v1834
    %2064 = vmatprep.subr.mxu0 %v1827
    %2065 = vmatpush2.msra.mxu0 %v1826
    %2066 = vmatprep.subr.mxu0 %v1819
    %2067 = vmatpush2.msra.mxu0 %v1818
    %2068 = vmatprep.subr.mxu0 %v1811
    %2069 = vmatpush2.msra.mxu0 %v1810
    %2070 = vmatprep.subr.mxu0 %v1803
    %2071 = vmatpush2.msra.mxu0 %v1802
    %2072 = vmatprep.subr.mxu0 %v1795
    %2073 = vmatpush2.msra.mxu0 %v1794
    %2074 = vmatprep.subr.mxu0 %v1787
    %2075 = vmatpush2.msra.mxu0 %v1786
    %2076 = vmatprep.subr.mxu0 %v1779
    %2077 = vmatpush2.msra.mxu0 %v1778
    %2078 = vmatprep.subr.mxu0 %v1771
    %2079 = vmatpush2.msra.mxu0 %v1770
    %2080 = vmatprep.subr.mxu0 %v1763
    %2081 = vmatpush2.msra.mxu0 %v1762
    %2082 = vmatprep.subr.mxu0 %v1755
    %2083 = vmatpush2.msra.mxu0 %v1754
    %2084 = vmatprep.mubr.f32.mxu0 %v1621
    %2085 = vmatmul.mubr.f32.gmra.mxu0 %v1620
    %v2086 = vpop.f32.mrf.mxu0
    %v2087 = vadd.f32 0.0, %v2086
    %v2088 = vpop.f32.mrf.mxu0
    %v2089 = vadd.f32 0.0, %v2088
    %2090 = vdwg.mxu0
    %2091 = vmatprep.subr.mxu0 %v1749
    %2092 = vmatpush1.msra.mxu0 %v1748
    %2093 = vmatprep.subr.mxu0 %v1741
    %2094 = vmatpush1.msra.mxu0 %v1740
    %2095 = vmatprep.subr.mxu0 %v1733
    %2096 = vmatpush1.msra.mxu0 %v1732
    %2097 = vmatprep.subr.mxu0 %v1725
    %2098 = vmatpush1.msra.mxu0 %v1724
    %2099 = vmatprep.subr.mxu0 %v1717
    %2100 = vmatpush1.msra.mxu0 %v1716
    %2101 = vmatprep.subr.mxu0 %v1709
    %2102 = vmatpush1.msra.mxu0 %v1708
    %2103 = vmatprep.subr.mxu0 %v1701
    %2104 = vmatpush1.msra.mxu0 %v1700
    %2105 = vmatprep.subr.mxu0 %v1693
    %2106 = vmatpush1.msra.mxu0 %v1692
    %2107 = vmatprep.subr.mxu0 %v1685
    %2108 = vmatpush1.msra.mxu0 %v1684
    %2109 = vmatprep.subr.mxu0 %v1677
    %2110 = vmatpush1.msra.mxu0 %v1676
    %2111 = vmatprep.subr.mxu0 %v1669
    %2112 = vmatpush1.msra.mxu0 %v1668
    %2113 = vmatprep.subr.mxu0 %v1661
    %2114 = vmatpush1.msra.mxu0 %v1660
    %2115 = vmatprep.subr.mxu0 %v1653
    %2116 = vmatpush1.msra.mxu0 %v1652
    %2117 = vmatprep.subr.mxu0 %v1645
    %2118 = vmatpush1.msra.mxu0 %v1644
    %2119 = vmatprep.subr.mxu0 %v1637
    %2120 = vmatpush1.msra.mxu0 %v1636
    %2121 = vmatprep.subr.mxu0 %v1629
    %2122 = vmatpush1.msra.mxu0 %v1628
    %2123 = vmatprep.subr.mxu0 %v1877
    %2124 = vmatpush2.msra.mxu0 %v1876
    %2125 = vmatprep.subr.mxu0 %v1869
    %2126 = vmatpush2.msra.mxu0 %v1868
    %2127 = vmatprep.subr.mxu0 %v1861
    %2128 = vmatpush2.msra.mxu0 %v1860
    %2129 = vmatprep.subr.mxu0 %v1853
    %2130 = vmatpush2.msra.mxu0 %v1852
    %2131 = vmatprep.subr.mxu0 %v1845
    %2132 = vmatpush2.msra.mxu0 %v1844
    %2133 = vmatprep.subr.mxu0 %v1837
    %2134 = vmatpush2.msra.mxu0 %v1836
    %2135 = vmatprep.subr.mxu0 %v1829
    %2136 = vmatpush2.msra.mxu0 %v1828
    %2137 = vmatprep.subr.mxu0 %v1821
    %2138 = vmatpush2.msra.mxu0 %v1820
    %2139 = vmatprep.subr.mxu0 %v1813
    %2140 = vmatpush2.msra.mxu0 %v1812
    %2141 = vmatprep.subr.mxu0 %v1805
    %2142 = vmatpush2.msra.mxu0 %v1804
    %2143 = vmatprep.subr.mxu0 %v1797
    %2144 = vmatpush2.msra.mxu0 %v1796
    %2145 = vmatprep.subr.mxu0 %v1789
    %2146 = vmatpush2.msra.mxu0 %v1788
    %2147 = vmatprep.subr.mxu0 %v1781
    %2148 = vmatpush2.msra.mxu0 %v1780
    %2149 = vmatprep.subr.mxu0 %v1773
    %2150 = vmatpush2.msra.mxu0 %v1772
    %2151 = vmatprep.subr.mxu0 %v1765
    %2152 = vmatpush2.msra.mxu0 %v1764
    %2153 = vmatprep.subr.mxu0 %v1757
    %2154 = vmatpush2.msra.mxu0 %v1756
    %2155 = vmatprep.mubr.f32.mxu0 %v1621
    %2156 = vmatmul.mubr.f32.gmra.mxu0 %v1620
    %v2157 = vpop.f32.mrf.mxu0
    %v2158 = vadd.f32 0.0, %v2157
    %v2159 = vpop.f32.mrf.mxu0
    %v2160 = vadd.f32 0.0, %v2159
    %2161 = vdwg.mxu0
    %v2162 = vadd.f32 %v1100, %v1945
    %v2163 = vadd.f32 %v1101, %v1947
    %v2164 = vadd.f32 %v1102, %v2016
    %v2165 = vadd.f32 %v1103, %v2018
    %v2166 = vadd.f32 %v1104, %v2087
    %v2167 = vadd.f32 %v1105, %v2089
    %v2168 = vadd.f32 %v1106, %v2158
    %v2169 = vadd.f32 %v1107, %v2160
    %v2170 = vld [vmem:[#allocation3 + $0x200] sm:$0xff]
    %v2171 = vld [vmem:[#allocation3 + $0x208] sm:$0xff]
    %v2172 = vld [vmem:[#allocation3 + $0x210] sm:$0xff]
    %v2173 = vld [vmem:[#allocation3 + $0x218] sm:$0xff]
    %v2174 = vld [vmem:[#allocation3 + $0x220] sm:$0xff]
    %v2175 = vld [vmem:[#allocation3 + $0x228] sm:$0xff]
    %v2176 = vld [vmem:[#allocation3 + $0x230] sm:$0xff]
    %v2177 = vld [vmem:[#allocation3 + $0x238] sm:$0xff]
    %2178 = vst [vmem:[#allocation2] sm:$0xff] %v2170
    %2179 = vst [vmem:[#allocation2 + $0x8] sm:$0xff] %v2171
    %2180 = vst [vmem:[#allocation2 + $0x10] sm:$0xff] %v2172
    %2181 = vst [vmem:[#allocation2 + $0x18] sm:$0xff] %v2173
    %2182 = vst [vmem:[#allocation2 + $0x20] sm:$0xff] %v2174
    %2183 = vst [vmem:[#allocation2 + $0x28] sm:$0xff] %v2175
    %2184 = vst [vmem:[#allocation2 + $0x30] sm:$0xff] %v2176
    %2185 = vst [vmem:[#allocation2 + $0x38] sm:$0xff] %v2177
    %v2186 = vld [vmem:[#allocation3 + $0x208] sm:$0xff]
    %v2187 = vld [vmem:[#allocation3 + $0x210] sm:$0xff]
    %v2188 = vld [vmem:[#allocation3 + $0x218] sm:$0xff]
    %v2189 = vld [vmem:[#allocation3 + $0x220] sm:$0xff]
    %v2190 = vld [vmem:[#allocation3 + $0x228] sm:$0xff]
    %v2191 = vld [vmem:[#allocation3 + $0x230] sm:$0xff]
    %v2192 = vld [vmem:[#allocation3 + $0x238] sm:$0xff]
    %v2193 = vld [vmem:[#allocation3 + $0x240] sm:$0xff]
    %2194 = vst [vmem:[#allocation2 + $0x40] sm:$0xff] %v2186
    %2195 = vst [vmem:[#allocation2 + $0x48] sm:$0xff] %v2187
    %2196 = vst [vmem:[#allocation2 + $0x50] sm:$0xff] %v2188
    %2197 = vst [vmem:[#allocation2 + $0x58] sm:$0xff] %v2189
    %2198 = vst [vmem:[#allocation2 + $0x60] sm:$0xff] %v2190
    %2199 = vst [vmem:[#allocation2 + $0x68] sm:$0xff] %v2191
    %2200 = vst [vmem:[#allocation2 + $0x70] sm:$0xff] %v2192
    %2201 = vst [vmem:[#allocation2 + $0x78] sm:$0xff] %v2193
    %v2202 = vld [vmem:[#allocation3 + $0x210] sm:$0xff]
    %v2203 = vld [vmem:[#allocation3 + $0x218] sm:$0xff]
    %v2204 = vld [vmem:[#allocation3 + $0x220] sm:$0xff]
    %v2205 = vld [vmem:[#allocation3 + $0x228] sm:$0xff]
    %v2206 = vld [vmem:[#allocation3 + $0x230] sm:$0xff]
    %v2207 = vld [vmem:[#allocation3 + $0x238] sm:$0xff]
    %v2208 = vld [vmem:[#allocation3 + $0x240] sm:$0xff]
    %v2209 = vld [vmem:[#allocation3 + $0x248] sm:$0xff]
    %2210 = vst [vmem:[#allocation2 + $0x80] sm:$0xff] %v2202
    %2211 = vst [vmem:[#allocation2 + $0x88] sm:$0xff] %v2203
    %2212 = vst [vmem:[#allocation2 + $0x90] sm:$0xff] %v2204
    %2213 = vst [vmem:[#allocation2 + $0x98] sm:$0xff] %v2205
    %2214 = vst [vmem:[#allocation2 + $0xa0] sm:$0xff] %v2206
    %2215 = vst [vmem:[#allocation2 + $0xa8] sm:$0xff] %v2207
    %2216 = vst [vmem:[#allocation2 + $0xb0] sm:$0xff] %v2208
    %2217 = vst [vmem:[#allocation2 + $0xb8] sm:$0xff] %v2209
    %v2218 = vld [vmem:[#allocation3 + $0x218] sm:$0xff]
    %v2219 = vld [vmem:[#allocation3 + $0x220] sm:$0xff]
    %v2220 = vld [vmem:[#allocation3 + $0x228] sm:$0xff]
    %v2221 = vld [vmem:[#allocation3 + $0x230] sm:$0xff]
    %v2222 = vld [vmem:[#allocation3 + $0x238] sm:$0xff]
    %v2223 = vld [vmem:[#allocation3 + $0x240] sm:$0xff]
    %v2224 = vld [vmem:[#allocation3 + $0x248] sm:$0xff]
    %v2225 = vld [vmem:[#allocation3 + $0x250] sm:$0xff]
    %2226 = vst [vmem:[#allocation2 + $0xc0] sm:$0xff] %v2218
    %2227 = vst [vmem:[#allocation2 + $0xc8] sm:$0xff] %v2219
    %2228 = vst [vmem:[#allocation2 + $0xd0] sm:$0xff] %v2220
    %2229 = vst [vmem:[#allocation2 + $0xd8] sm:$0xff] %v2221
    %2230 = vst [vmem:[#allocation2 + $0xe0] sm:$0xff] %v2222
    %2231 = vst [vmem:[#allocation2 + $0xe8] sm:$0xff] %v2223
    %2232 = vst [vmem:[#allocation2 + $0xf0] sm:$0xff] %v2224
    %2233 = vst [vmem:[#allocation2 + $0xf8] sm:$0xff] %v2225
    %v2234 = vld [vmem:[#allocation3 + $0x220] sm:$0xff]
    %v2235 = vld [vmem:[#allocation3 + $0x228] sm:$0xff]
    %v2236 = vld [vmem:[#allocation3 + $0x230] sm:$0xff]
    %v2237 = vld [vmem:[#allocation3 + $0x238] sm:$0xff]
    %v2238 = vld [vmem:[#allocation3 + $0x240] sm:$0xff]
    %v2239 = vld [vmem:[#allocation3 + $0x248] sm:$0xff]
    %v2240 = vld [vmem:[#allocation3 + $0x250] sm:$0xff]
    %v2241 = vld [vmem:[#allocation3 + $0x258] sm:$0xff]
    %2242 = vst [vmem:[#allocation2 + $0x100] sm:$0xff] %v2234
    %2243 = vst [vmem:[#allocation2 + $0x108] sm:$0xff] %v2235
    %2244 = vst [vmem:[#allocation2 + $0x110] sm:$0xff] %v2236
    %2245 = vst [vmem:[#allocation2 + $0x118] sm:$0xff] %v2237
    %2246 = vst [vmem:[#allocation2 + $0x120] sm:$0xff] %v2238
    %2247 = vst [vmem:[#allocation2 + $0x128] sm:$0xff] %v2239
    %2248 = vst [vmem:[#allocation2 + $0x130] sm:$0xff] %v2240
    %2249 = vst [vmem:[#allocation2 + $0x138] sm:$0xff] %v2241
    %v2250 = vld [vmem:[#allocation3 + $0x228] sm:$0xff]
    %v2251 = vld [vmem:[#allocation3 + $0x230] sm:$0xff]
    %v2252 = vld [vmem:[#allocation3 + $0x238] sm:$0xff]
    %v2253 = vld [vmem:[#allocation3 + $0x240] sm:$0xff]
    %v2254 = vld [vmem:[#allocation3 + $0x248] sm:$0xff]
    %v2255 = vld [vmem:[#allocation3 + $0x250] sm:$0xff]
    %v2256 = vld [vmem:[#allocation3 + $0x258] sm:$0xff]
    %v2257 = vld [vmem:[#allocation3 + $0x260] sm:$0xff]
    %2258 = vst [vmem:[#allocation2 + $0x140] sm:$0xff] %v2250
    %2259 = vst [vmem:[#allocation2 + $0x148] sm:$0xff] %v2251
    %2260 = vst [vmem:[#allocation2 + $0x150] sm:$0xff] %v2252
    %2261 = vst [vmem:[#allocation2 + $0x158] sm:$0xff] %v2253
    %2262 = vst [vmem:[#allocation2 + $0x160] sm:$0xff] %v2254
    %2263 = vst [vmem:[#allocation2 + $0x168] sm:$0xff] %v2255
    %2264 = vst [vmem:[#allocation2 + $0x170] sm:$0xff] %v2256
    %2265 = vst [vmem:[#allocation2 + $0x178] sm:$0xff] %v2257
    %v2266 = vld [vmem:[#allocation3 + $0x230] sm:$0xff]
    %v2267 = vld [vmem:[#allocation3 + $0x238] sm:$0xff]
    %v2268 = vld [vmem:[#allocation3 + $0x240] sm:$0xff]
    %v2269 = vld [vmem:[#allocation3 + $0x248] sm:$0xff]
    %v2270 = vld [vmem:[#allocation3 + $0x250] sm:$0xff]
    %v2271 = vld [vmem:[#allocation3 + $0x258] sm:$0xff]
    %v2272 = vld [vmem:[#allocation3 + $0x260] sm:$0xff]
    %v2273 = vld [vmem:[#allocation3 + $0x268] sm:$0xff]
    %2274 = vst [vmem:[#allocation2 + $0x180] sm:$0xff] %v2266
    %2275 = vst [vmem:[#allocation2 + $0x188] sm:$0xff] %v2267
    %2276 = vst [vmem:[#allocation2 + $0x190] sm:$0xff] %v2268
    %2277 = vst [vmem:[#allocation2 + $0x198] sm:$0xff] %v2269
    %2278 = vst [vmem:[#allocation2 + $0x1a0] sm:$0xff] %v2270
    %2279 = vst [vmem:[#allocation2 + $0x1a8] sm:$0xff] %v2271
    %2280 = vst [vmem:[#allocation2 + $0x1b0] sm:$0xff] %v2272
    %2281 = vst [vmem:[#allocation2 + $0x1b8] sm:$0xff] %v2273
    %v2282 = vld [vmem:[#allocation3 + $0x238] sm:$0xff]
    %v2283 = vld [vmem:[#allocation3 + $0x240] sm:$0xff]
    %v2284 = vld [vmem:[#allocation3 + $0x248] sm:$0xff]
    %v2285 = vld [vmem:[#allocation3 + $0x250] sm:$0xff]
    %v2286 = vld [vmem:[#allocation3 + $0x258] sm:$0xff]
    %v2287 = vld [vmem:[#allocation3 + $0x260] sm:$0xff]
    %v2288 = vld [vmem:[#allocation3 + $0x268] sm:$0xff]
    %v2289 = vld [vmem:[#allocation3 + $0x270] sm:$0xff]
    %2290 = vst [vmem:[#allocation2 + $0x1c0] sm:$0xff] %v2282
    %2291 = vst [vmem:[#allocation2 + $0x1c8] sm:$0xff] %v2283
    %2292 = vst [vmem:[#allocation2 + $0x1d0] sm:$0xff] %v2284
    %2293 = vst [vmem:[#allocation2 + $0x1d8] sm:$0xff] %v2285
    %2294 = vst [vmem:[#allocation2 + $0x1e0] sm:$0xff] %v2286
    %2295 = vst [vmem:[#allocation2 + $0x1e8] sm:$0xff] %v2287
    %2296 = vst [vmem:[#allocation2 + $0x1f0] sm:$0xff] %v2288
    %2297 = vst [vmem:[#allocation2 + $0x1f8] sm:$0xff] %v2289
    %v2298 = vld [vmem:[#allocation3 + $0x240] sm:$0xff]
    %v2299 = vld [vmem:[#allocation3 + $0x248] sm:$0xff]
    %v2300 = vld [vmem:[#allocation3 + $0x250] sm:$0xff]
    %v2301 = vld [vmem:[#allocation3 + $0x258] sm:$0xff]
    %v2302 = vld [vmem:[#allocation3 + $0x260] sm:$0xff]
    %v2303 = vld [vmem:[#allocation3 + $0x268] sm:$0xff]
    %v2304 = vld [vmem:[#allocation3 + $0x270] sm:$0xff]
    %v2305 = vld [vmem:[#allocation3 + $0x278] sm:$0xff]
    %2306 = vst [vmem:[#allocation2 + $0x200] sm:$0xff] %v2298
    %2307 = vst [vmem:[#allocation2 + $0x208] sm:$0xff] %v2299
    %2308 = vst [vmem:[#allocation2 + $0x210] sm:$0xff] %v2300
    %2309 = vst [vmem:[#allocation2 + $0x218] sm:$0xff] %v2301
    %2310 = vst [vmem:[#allocation2 + $0x220] sm:$0xff] %v2302
    %2311 = vst [vmem:[#allocation2 + $0x228] sm:$0xff] %v2303
    %2312 = vst [vmem:[#allocation2 + $0x230] sm:$0xff] %v2304
    %2313 = vst [vmem:[#allocation2 + $0x238] sm:$0xff] %v2305
    %v2314 = vld [vmem:[#allocation3 + $0x248] sm:$0xff]
    %v2315 = vld [vmem:[#allocation3 + $0x250] sm:$0xff]
    %v2316 = vld [vmem:[#allocation3 + $0x258] sm:$0xff]
    %v2317 = vld [vmem:[#allocation3 + $0x260] sm:$0xff]
    %v2318 = vld [vmem:[#allocation3 + $0x268] sm:$0xff]
    %v2319 = vld [vmem:[#allocation3 + $0x270] sm:$0xff]
    %v2320 = vld [vmem:[#allocation3 + $0x278] sm:$0xff]
    %v2321 = vld [vmem:[#allocation3 + $0x280] sm:$0xff]
    %2322 = vst [vmem:[#allocation2 + $0x240] sm:$0xff] %v2314
    %2323 = vst [vmem:[#allocation2 + $0x248] sm:$0xff] %v2315
    %2324 = vst [vmem:[#allocation2 + $0x250] sm:$0xff] %v2316
    %2325 = vst [vmem:[#allocation2 + $0x258] sm:$0xff] %v2317
    %2326 = vst [vmem:[#allocation2 + $0x260] sm:$0xff] %v2318
    %2327 = vst [vmem:[#allocation2 + $0x268] sm:$0xff] %v2319
    %2328 = vst [vmem:[#allocation2 + $0x270] sm:$0xff] %v2320
    %2329 = vst [vmem:[#allocation2 + $0x278] sm:$0xff] %v2321
    %v2330 = vld [vmem:[#allocation3 + $0x250] sm:$0xff]
    %v2331 = vld [vmem:[#allocation3 + $0x258] sm:$0xff]
    %v2332 = vld [vmem:[#allocation3 + $0x260] sm:$0xff]
    %v2333 = vld [vmem:[#allocation3 + $0x268] sm:$0xff]
    %v2334 = vld [vmem:[#allocation3 + $0x270] sm:$0xff]
    %v2335 = vld [vmem:[#allocation3 + $0x278] sm:$0xff]
    %v2336 = vld [vmem:[#allocation3 + $0x280] sm:$0xff]
    %v2337 = vld [vmem:[#allocation3 + $0x288] sm:$0xff]
    %2338 = vst [vmem:[#allocation2 + $0x280] sm:$0xff] %v2330
    %2339 = vst [vmem:[#allocation2 + $0x288] sm:$0xff] %v2331
    %2340 = vst [vmem:[#allocation2 + $0x290] sm:$0xff] %v2332
    %2341 = vst [vmem:[#allocation2 + $0x298] sm:$0xff] %v2333
    %2342 = vst [vmem:[#allocation2 + $0x2a0] sm:$0xff] %v2334
    %2343 = vst [vmem:[#allocation2 + $0x2a8] sm:$0xff] %v2335
    %2344 = vst [vmem:[#allocation2 + $0x2b0] sm:$0xff] %v2336
    %2345 = vst [vmem:[#allocation2 + $0x2b8] sm:$0xff] %v2337
    %v2346 = vld [vmem:[#allocation3 + $0x258] sm:$0xff]
    %v2347 = vld [vmem:[#allocation3 + $0x260] sm:$0xff]
    %v2348 = vld [vmem:[#allocation3 + $0x268] sm:$0xff]
    %v2349 = vld [vmem:[#allocation3 + $0x270] sm:$0xff]
    %v2350 = vld [vmem:[#allocation3 + $0x278] sm:$0xff]
    %v2351 = vld [vmem:[#allocation3 + $0x280] sm:$0xff]
    %v2352 = vld [vmem:[#allocation3 + $0x288] sm:$0xff]
    %v2353 = vld [vmem:[#allocation3 + $0x290] sm:$0xff]
    %2354 = vst [vmem:[#allocation2 + $0x2c0] sm:$0xff] %v2346
    %2355 = vst [vmem:[#allocation2 + $0x2c8] sm:$0xff] %v2347
    %2356 = vst [vmem:[#allocation2 + $0x2d0] sm:$0xff] %v2348
    %2357 = vst [vmem:[#allocation2 + $0x2d8] sm:$0xff] %v2349
    %2358 = vst [vmem:[#allocation2 + $0x2e0] sm:$0xff] %v2350
    %2359 = vst [vmem:[#allocation2 + $0x2e8] sm:$0xff] %v2351
    %2360 = vst [vmem:[#allocation2 + $0x2f0] sm:$0xff] %v2352
    %2361 = vst [vmem:[#allocation2 + $0x2f8] sm:$0xff] %v2353
    %v2362 = vld [vmem:[#allocation3 + $0x260] sm:$0xff]
    %v2363 = vld [vmem:[#allocation3 + $0x268] sm:$0xff]
    %v2364 = vld [vmem:[#allocation3 + $0x270] sm:$0xff]
    %v2365 = vld [vmem:[#allocation3 + $0x278] sm:$0xff]
    %v2366 = vld [vmem:[#allocation3 + $0x280] sm:$0xff]
    %v2367 = vld [vmem:[#allocation3 + $0x288] sm:$0xff]
    %v2368 = vld [vmem:[#allocation3 + $0x290] sm:$0xff]
    %v2369 = vld [vmem:[#allocation3 + $0x298] sm:$0xff]
    %2370 = vst [vmem:[#allocation2 + $0x300] sm:$0xff] %v2362
    %2371 = vst [vmem:[#allocation2 + $0x308] sm:$0xff] %v2363
    %2372 = vst [vmem:[#allocation2 + $0x310] sm:$0xff] %v2364
    %2373 = vst [vmem:[#allocation2 + $0x318] sm:$0xff] %v2365
    %2374 = vst [vmem:[#allocation2 + $0x320] sm:$0xff] %v2366
    %2375 = vst [vmem:[#allocation2 + $0x328] sm:$0xff] %v2367
    %2376 = vst [vmem:[#allocation2 + $0x330] sm:$0xff] %v2368
    %2377 = vst [vmem:[#allocation2 + $0x338] sm:$0xff] %v2369
    %v2378 = vld [vmem:[#allocation3 + $0x268] sm:$0xff]
    %v2379 = vld [vmem:[#allocation3 + $0x270] sm:$0xff]
    %v2380 = vld [vmem:[#allocation3 + $0x278] sm:$0xff]
    %v2381 = vld [vmem:[#allocation3 + $0x280] sm:$0xff]
    %v2382 = vld [vmem:[#allocation3 + $0x288] sm:$0xff]
    %v2383 = vld [vmem:[#allocation3 + $0x290] sm:$0xff]
    %v2384 = vld [vmem:[#allocation3 + $0x298] sm:$0xff]
    %v2385 = vld [vmem:[#allocation3 + $0x2a0] sm:$0xff]
    %2386 = vst [vmem:[#allocation2 + $0x340] sm:$0xff] %v2378
    %2387 = vst [vmem:[#allocation2 + $0x348] sm:$0xff] %v2379
    %2388 = vst [vmem:[#allocation2 + $0x350] sm:$0xff] %v2380
    %2389 = vst [vmem:[#allocation2 + $0x358] sm:$0xff] %v2381
    %2390 = vst [vmem:[#allocation2 + $0x360] sm:$0xff] %v2382
    %2391 = vst [vmem:[#allocation2 + $0x368] sm:$0xff] %v2383
    %2392 = vst [vmem:[#allocation2 + $0x370] sm:$0xff] %v2384
    %2393 = vst [vmem:[#allocation2 + $0x378] sm:$0xff] %v2385
    %v2394 = vld [vmem:[#allocation3 + $0x270] sm:$0xff]
    %v2395 = vld [vmem:[#allocation3 + $0x278] sm:$0xff]
    %v2396 = vld [vmem:[#allocation3 + $0x280] sm:$0xff]
    %v2397 = vld [vmem:[#allocation3 + $0x288] sm:$0xff]
    %v2398 = vld [vmem:[#allocation3 + $0x290] sm:$0xff]
    %v2399 = vld [vmem:[#allocation3 + $0x298] sm:$0xff]
    %v2400 = vld [vmem:[#allocation3 + $0x2a0] sm:$0xff]
    %v2401 = vld [vmem:[#allocation3 + $0x2a8] sm:$0xff]
    %2402 = vst [vmem:[#allocation2 + $0x380] sm:$0xff] %v2394
    %2403 = vst [vmem:[#allocation2 + $0x388] sm:$0xff] %v2395
    %2404 = vst [vmem:[#allocation2 + $0x390] sm:$0xff] %v2396
    %2405 = vst [vmem:[#allocation2 + $0x398] sm:$0xff] %v2397
    %2406 = vst [vmem:[#allocation2 + $0x3a0] sm:$0xff] %v2398
    %2407 = vst [vmem:[#allocation2 + $0x3a8] sm:$0xff] %v2399
    %2408 = vst [vmem:[#allocation2 + $0x3b0] sm:$0xff] %v2400
    %2409 = vst [vmem:[#allocation2 + $0x3b8] sm:$0xff] %v2401
    %v2410 = vld [vmem:[#allocation3 + $0x278] sm:$0xff]
    %v2411 = vld [vmem:[#allocation3 + $0x280] sm:$0xff]
    %v2412 = vld [vmem:[#allocation3 + $0x288] sm:$0xff]
    %v2413 = vld [vmem:[#allocation3 + $0x290] sm:$0xff]
    %v2414 = vld [vmem:[#allocation3 + $0x298] sm:$0xff]
    %v2415 = vld [vmem:[#allocation3 + $0x2a0] sm:$0xff]
    %v2416 = vld [vmem:[#allocation3 + $0x2a8] sm:$0xff]
    %v2417 = vld [vmem:[#allocation3 + $0x2b0] sm:$0xff]
    %2418 = vst [vmem:[#allocation2 + $0x3c0] sm:$0xff] %v2410
    %2419 = vst [vmem:[#allocation2 + $0x3c8] sm:$0xff] %v2411
    %2420 = vst [vmem:[#allocation2 + $0x3d0] sm:$0xff] %v2412
    %2421 = vst [vmem:[#allocation2 + $0x3d8] sm:$0xff] %v2413
    %2422 = vst [vmem:[#allocation2 + $0x3e0] sm:$0xff] %v2414
    %2423 = vst [vmem:[#allocation2 + $0x3e8] sm:$0xff] %v2415
    %2424 = vst [vmem:[#allocation2 + $0x3f0] sm:$0xff] %v2416
    %2425 = vst [vmem:[#allocation2 + $0x3f8] sm:$0xff] %v2417
    %v2426 = vld [vmem:[#allocation3 + $0x280] sm:$0xff]
    %v2427 = vld [vmem:[#allocation3 + $0x288] sm:$0xff]
    %v2428 = vld [vmem:[#allocation3 + $0x290] sm:$0xff]
    %v2429 = vld [vmem:[#allocation3 + $0x298] sm:$0xff]
    %v2430 = vld [vmem:[#allocation3 + $0x2a0] sm:$0xff]
    %v2431 = vld [vmem:[#allocation3 + $0x2a8] sm:$0xff]
    %v2432 = vld [vmem:[#allocation3 + $0x2b0] sm:$0xff]
    %v2433 = vld [vmem:[#allocation3 + $0x2b8] sm:$0xff]
    %2434 = vst [vmem:[#allocation2 + $0x400] sm:$0xff] %v2426
    %2435 = vst [vmem:[#allocation2 + $0x408] sm:$0xff] %v2427
    %2436 = vst [vmem:[#allocation2 + $0x410] sm:$0xff] %v2428
    %2437 = vst [vmem:[#allocation2 + $0x418] sm:$0xff] %v2429
    %2438 = vst [vmem:[#allocation2 + $0x420] sm:$0xff] %v2430
    %2439 = vst [vmem:[#allocation2 + $0x428] sm:$0xff] %v2431
    %2440 = vst [vmem:[#allocation2 + $0x430] sm:$0xff] %v2432
    %2441 = vst [vmem:[#allocation2 + $0x438] sm:$0xff] %v2433
    %v2442 = vld [vmem:[#allocation3 + $0x288] sm:$0xff]
    %v2443 = vld [vmem:[#allocation3 + $0x290] sm:$0xff]
    %v2444 = vld [vmem:[#allocation3 + $0x298] sm:$0xff]
    %v2445 = vld [vmem:[#allocation3 + $0x2a0] sm:$0xff]
    %v2446 = vld [vmem:[#allocation3 + $0x2a8] sm:$0xff]
    %v2447 = vld [vmem:[#allocation3 + $0x2b0] sm:$0xff]
    %v2448 = vld [vmem:[#allocation3 + $0x2b8] sm:$0xff]
    %v2449 = vld [vmem:[#allocation3 + $0x2c0] sm:$0xff]
    %2450 = vst [vmem:[#allocation2 + $0x440] sm:$0xff] %v2442
    %2451 = vst [vmem:[#allocation2 + $0x448] sm:$0xff] %v2443
    %2452 = vst [vmem:[#allocation2 + $0x450] sm:$0xff] %v2444
    %2453 = vst [vmem:[#allocation2 + $0x458] sm:$0xff] %v2445
    %2454 = vst [vmem:[#allocation2 + $0x460] sm:$0xff] %v2446
    %2455 = vst [vmem:[#allocation2 + $0x468] sm:$0xff] %v2447
    %2456 = vst [vmem:[#allocation2 + $0x470] sm:$0xff] %v2448
    %2457 = vst [vmem:[#allocation2 + $0x478] sm:$0xff] %v2449
    %v2458 = vld [vmem:[#allocation3 + $0x290] sm:$0xff]
    %v2459 = vld [vmem:[#allocation3 + $0x298] sm:$0xff]
    %v2460 = vld [vmem:[#allocation3 + $0x2a0] sm:$0xff]
    %v2461 = vld [vmem:[#allocation3 + $0x2a8] sm:$0xff]
    %v2462 = vld [vmem:[#allocation3 + $0x2b0] sm:$0xff]
    %v2463 = vld [vmem:[#allocation3 + $0x2b8] sm:$0xff]
    %v2464 = vld [vmem:[#allocation3 + $0x2c0] sm:$0xff]
    %v2465 = vld [vmem:[#allocation3 + $0x2c8] sm:$0xff]
    %2466 = vst [vmem:[#allocation2 + $0x480] sm:$0xff] %v2458
    %2467 = vst [vmem:[#allocation2 + $0x488] sm:$0xff] %v2459
    %2468 = vst [vmem:[#allocation2 + $0x490] sm:$0xff] %v2460
    %2469 = vst [vmem:[#allocation2 + $0x498] sm:$0xff] %v2461
    %2470 = vst [vmem:[#allocation2 + $0x4a0] sm:$0xff] %v2462
    %2471 = vst [vmem:[#allocation2 + $0x4a8] sm:$0xff] %v2463
    %2472 = vst [vmem:[#allocation2 + $0x4b0] sm:$0xff] %v2464
    %2473 = vst [vmem:[#allocation2 + $0x4b8] sm:$0xff] %v2465
    %v2474 = vld [vmem:[#allocation3 + $0x298] sm:$0xff]
    %v2475 = vld [vmem:[#allocation3 + $0x2a0] sm:$0xff]
    %v2476 = vld [vmem:[#allocation3 + $0x2a8] sm:$0xff]
    %v2477 = vld [vmem:[#allocation3 + $0x2b0] sm:$0xff]
    %v2478 = vld [vmem:[#allocation3 + $0x2b8] sm:$0xff]
    %v2479 = vld [vmem:[#allocation3 + $0x2c0] sm:$0xff]
    %v2480 = vld [vmem:[#allocation3 + $0x2c8] sm:$0xff]
    %v2481 = vld [vmem:[#allocation3 + $0x2d0] sm:$0xff]
    %2482 = vst [vmem:[#allocation2 + $0x4c0] sm:$0xff] %v2474
    %2483 = vst [vmem:[#allocation2 + $0x4c8] sm:$0xff] %v2475
    %2484 = vst [vmem:[#allocation2 + $0x4d0] sm:$0xff] %v2476
    %2485 = vst [vmem:[#allocation2 + $0x4d8] sm:$0xff] %v2477
    %2486 = vst [vmem:[#allocation2 + $0x4e0] sm:$0xff] %v2478
    %2487 = vst [vmem:[#allocation2 + $0x4e8] sm:$0xff] %v2479
    %2488 = vst [vmem:[#allocation2 + $0x4f0] sm:$0xff] %v2480
    %2489 = vst [vmem:[#allocation2 + $0x4f8] sm:$0xff] %v2481
    %v2490 = vld [vmem:[#allocation3 + $0x2a0] sm:$0xff]
    %v2491 = vld [vmem:[#allocation3 + $0x2a8] sm:$0xff]
    %v2492 = vld [vmem:[#allocation3 + $0x2b0] sm:$0xff]
    %v2493 = vld [vmem:[#allocation3 + $0x2b8] sm:$0xff]
    %v2494 = vld [vmem:[#allocation3 + $0x2c0] sm:$0xff]
    %v2495 = vld [vmem:[#allocation3 + $0x2c8] sm:$0xff]
    %v2496 = vld [vmem:[#allocation3 + $0x2d0] sm:$0xff]
    %v2497 = vld [vmem:[#allocation3 + $0x2d8] sm:$0xff]
    %2498 = vst [vmem:[#allocation2 + $0x500] sm:$0xff] %v2490
    %2499 = vst [vmem:[#allocation2 + $0x508] sm:$0xff] %v2491
    %2500 = vst [vmem:[#allocation2 + $0x510] sm:$0xff] %v2492
    %2501 = vst [vmem:[#allocation2 + $0x518] sm:$0xff] %v2493
    %2502 = vst [vmem:[#allocation2 + $0x520] sm:$0xff] %v2494
    %2503 = vst [vmem:[#allocation2 + $0x528] sm:$0xff] %v2495
    %2504 = vst [vmem:[#allocation2 + $0x530] sm:$0xff] %v2496
    %2505 = vst [vmem:[#allocation2 + $0x538] sm:$0xff] %v2497
    %v2506 = vld [vmem:[#allocation3 + $0x2a8] sm:$0xff]
    %v2507 = vld [vmem:[#allocation3 + $0x2b0] sm:$0xff]
    %v2508 = vld [vmem:[#allocation3 + $0x2b8] sm:$0xff]
    %v2509 = vld [vmem:[#allocation3 + $0x2c0] sm:$0xff]
    %v2510 = vld [vmem:[#allocation3 + $0x2c8] sm:$0xff]
    %v2511 = vld [vmem:[#allocation3 + $0x2d0] sm:$0xff]
    %v2512 = vld [vmem:[#allocation3 + $0x2d8] sm:$0xff]
    %v2513 = vld [vmem:[#allocation3 + $0x2e0] sm:$0xff]
    %2514 = vst [vmem:[#allocation2 + $0x540] sm:$0xff] %v2506
    %2515 = vst [vmem:[#allocation2 + $0x548] sm:$0xff] %v2507
    %2516 = vst [vmem:[#allocation2 + $0x550] sm:$0xff] %v2508
    %2517 = vst [vmem:[#allocation2 + $0x558] sm:$0xff] %v2509
    %2518 = vst [vmem:[#allocation2 + $0x560] sm:$0xff] %v2510
    %2519 = vst [vmem:[#allocation2 + $0x568] sm:$0xff] %v2511
    %2520 = vst [vmem:[#allocation2 + $0x570] sm:$0xff] %v2512
    %2521 = vst [vmem:[#allocation2 + $0x578] sm:$0xff] %v2513
    %v2522 = vld [vmem:[#allocation3 + $0x2b0] sm:$0xff]
    %v2523 = vld [vmem:[#allocation3 + $0x2b8] sm:$0xff]
    %v2524 = vld [vmem:[#allocation3 + $0x2c0] sm:$0xff]
    %v2525 = vld [vmem:[#allocation3 + $0x2c8] sm:$0xff]
    %v2526 = vld [vmem:[#allocation3 + $0x2d0] sm:$0xff]
    %v2527 = vld [vmem:[#allocation3 + $0x2d8] sm:$0xff]
    %v2528 = vld [vmem:[#allocation3 + $0x2e0] sm:$0xff]
    %v2529 = vld [vmem:[#allocation3 + $0x2e8] sm:$0xff]
    %2530 = vst [vmem:[#allocation2 + $0x580] sm:$0xff] %v2522
    %2531 = vst [vmem:[#allocation2 + $0x588] sm:$0xff] %v2523
    %2532 = vst [vmem:[#allocation2 + $0x590] sm:$0xff] %v2524
    %2533 = vst [vmem:[#allocation2 + $0x598] sm:$0xff] %v2525
    %2534 = vst [vmem:[#allocation2 + $0x5a0] sm:$0xff] %v2526
    %2535 = vst [vmem:[#allocation2 + $0x5a8] sm:$0xff] %v2527
    %2536 = vst [vmem:[#allocation2 + $0x5b0] sm:$0xff] %v2528
    %2537 = vst [vmem:[#allocation2 + $0x5b8] sm:$0xff] %v2529
    %v2538 = vld [vmem:[#allocation3 + $0x2b8] sm:$0xff]
    %v2539 = vld [vmem:[#allocation3 + $0x2c0] sm:$0xff]
    %v2540 = vld [vmem:[#allocation3 + $0x2c8] sm:$0xff]
    %v2541 = vld [vmem:[#allocation3 + $0x2d0] sm:$0xff]
    %v2542 = vld [vmem:[#allocation3 + $0x2d8] sm:$0xff]
    %v2543 = vld [vmem:[#allocation3 + $0x2e0] sm:$0xff]
    %v2544 = vld [vmem:[#allocation3 + $0x2e8] sm:$0xff]
    %v2545 = vld [vmem:[#allocation3 + $0x2f0] sm:$0xff]
    %2546 = vst [vmem:[#allocation2 + $0x5c0] sm:$0xff] %v2538
    %2547 = vst [vmem:[#allocation2 + $0x5c8] sm:$0xff] %v2539
    %2548 = vst [vmem:[#allocation2 + $0x5d0] sm:$0xff] %v2540
    %2549 = vst [vmem:[#allocation2 + $0x5d8] sm:$0xff] %v2541
    %2550 = vst [vmem:[#allocation2 + $0x5e0] sm:$0xff] %v2542
    %2551 = vst [vmem:[#allocation2 + $0x5e8] sm:$0xff] %v2543
    %2552 = vst [vmem:[#allocation2 + $0x5f0] sm:$0xff] %v2544
    %2553 = vst [vmem:[#allocation2 + $0x5f8] sm:$0xff] %v2545
    %v2554 = vld [vmem:[#allocation3 + $0x2c0] sm:$0xff]
    %v2555 = vld [vmem:[#allocation3 + $0x2c8] sm:$0xff]
    %v2556 = vld [vmem:[#allocation3 + $0x2d0] sm:$0xff]
    %v2557 = vld [vmem:[#allocation3 + $0x2d8] sm:$0xff]
    %v2558 = vld [vmem:[#allocation3 + $0x2e0] sm:$0xff]
    %v2559 = vld [vmem:[#allocation3 + $0x2e8] sm:$0xff]
    %v2560 = vld [vmem:[#allocation3 + $0x2f0] sm:$0xff]
    %v2561 = vld [vmem:[#allocation3 + $0x2f8] sm:$0xff]
    %2562 = vst [vmem:[#allocation2 + $0x600] sm:$0xff] %v2554
    %2563 = vst [vmem:[#allocation2 + $0x608] sm:$0xff] %v2555
    %2564 = vst [vmem:[#allocation2 + $0x610] sm:$0xff] %v2556
    %2565 = vst [vmem:[#allocation2 + $0x618] sm:$0xff] %v2557
    %2566 = vst [vmem:[#allocation2 + $0x620] sm:$0xff] %v2558
    %2567 = vst [vmem:[#allocation2 + $0x628] sm:$0xff] %v2559
    %2568 = vst [vmem:[#allocation2 + $0x630] sm:$0xff] %v2560
    %2569 = vst [vmem:[#allocation2 + $0x638] sm:$0xff] %v2561
    %v2570 = vld [vmem:[#allocation3 + $0x2c8] sm:$0xff]
    %v2571 = vld [vmem:[#allocation3 + $0x2d0] sm:$0xff]
    %v2572 = vld [vmem:[#allocation3 + $0x2d8] sm:$0xff]
    %v2573 = vld [vmem:[#allocation3 + $0x2e0] sm:$0xff]
    %v2574 = vld [vmem:[#allocation3 + $0x2e8] sm:$0xff]
    %v2575 = vld [vmem:[#allocation3 + $0x2f0] sm:$0xff]
    %v2576 = vld [vmem:[#allocation3 + $0x2f8] sm:$0xff]
    %v2577 = vld [vmem:[#allocation3 + $0x300] sm:$0xff]
    %2578 = vst [vmem:[#allocation2 + $0x640] sm:$0xff] %v2570
    %2579 = vst [vmem:[#allocation2 + $0x648] sm:$0xff] %v2571
    %2580 = vst [vmem:[#allocation2 + $0x650] sm:$0xff] %v2572
    %2581 = vst [vmem:[#allocation2 + $0x658] sm:$0xff] %v2573
    %2582 = vst [vmem:[#allocation2 + $0x660] sm:$0xff] %v2574
    %2583 = vst [vmem:[#allocation2 + $0x668] sm:$0xff] %v2575
    %2584 = vst [vmem:[#allocation2 + $0x670] sm:$0xff] %v2576
    %2585 = vst [vmem:[#allocation2 + $0x678] sm:$0xff] %v2577
    %v2586 = vld [vmem:[#allocation3 + $0x2d0] sm:$0xff]
    %v2587 = vld [vmem:[#allocation3 + $0x2d8] sm:$0xff]
    %v2588 = vld [vmem:[#allocation3 + $0x2e0] sm:$0xff]
    %v2589 = vld [vmem:[#allocation3 + $0x2e8] sm:$0xff]
    %v2590 = vld [vmem:[#allocation3 + $0x2f0] sm:$0xff]
    %v2591 = vld [vmem:[#allocation3 + $0x2f8] sm:$0xff]
    %v2592 = vld [vmem:[#allocation3 + $0x300] sm:$0xff]
    %v2593 = vld [vmem:[#allocation3 + $0x308] sm:$0xff]
    %2594 = vst [vmem:[#allocation2 + $0x680] sm:$0xff] %v2586
    %2595 = vst [vmem:[#allocation2 + $0x688] sm:$0xff] %v2587
    %2596 = vst [vmem:[#allocation2 + $0x690] sm:$0xff] %v2588
    %2597 = vst [vmem:[#allocation2 + $0x698] sm:$0xff] %v2589
    %2598 = vst [vmem:[#allocation2 + $0x6a0] sm:$0xff] %v2590
    %2599 = vst [vmem:[#allocation2 + $0x6a8] sm:$0xff] %v2591
    %2600 = vst [vmem:[#allocation2 + $0x6b0] sm:$0xff] %v2592
    %2601 = vst [vmem:[#allocation2 + $0x6b8] sm:$0xff] %v2593
    %v2602 = vld [vmem:[#allocation3 + $0x2d8] sm:$0xff]
    %v2603 = vld [vmem:[#allocation3 + $0x2e0] sm:$0xff]
    %v2604 = vld [vmem:[#allocation3 + $0x2e8] sm:$0xff]
    %v2605 = vld [vmem:[#allocation3 + $0x2f0] sm:$0xff]
    %v2606 = vld [vmem:[#allocation3 + $0x2f8] sm:$0xff]
    %v2607 = vld [vmem:[#allocation3 + $0x300] sm:$0xff]
    %v2608 = vld [vmem:[#allocation3 + $0x308] sm:$0xff]
    %v2609 = vld [vmem:[#allocation3 + $0x310] sm:$0xff]
    %2610 = vst [vmem:[#allocation2 + $0x6c0] sm:$0xff] %v2602
    %2611 = vst [vmem:[#allocation2 + $0x6c8] sm:$0xff] %v2603
    %2612 = vst [vmem:[#allocation2 + $0x6d0] sm:$0xff] %v2604
    %2613 = vst [vmem:[#allocation2 + $0x6d8] sm:$0xff] %v2605
    %2614 = vst [vmem:[#allocation2 + $0x6e0] sm:$0xff] %v2606
    %2615 = vst [vmem:[#allocation2 + $0x6e8] sm:$0xff] %v2607
    %2616 = vst [vmem:[#allocation2 + $0x6f0] sm:$0xff] %v2608
    %2617 = vst [vmem:[#allocation2 + $0x6f8] sm:$0xff] %v2609
    %v2618 = vld [vmem:[#allocation3 + $0x2e0] sm:$0xff]
    %v2619 = vld [vmem:[#allocation3 + $0x2e8] sm:$0xff]
    %v2620 = vld [vmem:[#allocation3 + $0x2f0] sm:$0xff]
    %v2621 = vld [vmem:[#allocation3 + $0x2f8] sm:$0xff]
    %v2622 = vld [vmem:[#allocation3 + $0x300] sm:$0xff]
    %v2623 = vld [vmem:[#allocation3 + $0x308] sm:$0xff]
    %v2624 = vld [vmem:[#allocation3 + $0x310] sm:$0xff]
    %v2625 = vld [vmem:[#allocation3 + $0x318] sm:$0xff]
    %2626 = vst [vmem:[#allocation2 + $0x700] sm:$0xff] %v2618
    %2627 = vst [vmem:[#allocation2 + $0x708] sm:$0xff] %v2619
    %2628 = vst [vmem:[#allocation2 + $0x710] sm:$0xff] %v2620
    %2629 = vst [vmem:[#allocation2 + $0x718] sm:$0xff] %v2621
    %2630 = vst [vmem:[#allocation2 + $0x720] sm:$0xff] %v2622
    %2631 = vst [vmem:[#allocation2 + $0x728] sm:$0xff] %v2623
    %2632 = vst [vmem:[#allocation2 + $0x730] sm:$0xff] %v2624
    %2633 = vst [vmem:[#allocation2 + $0x738] sm:$0xff] %v2625
    %v2634 = vld [vmem:[#allocation3 + $0x2e8] sm:$0xff]
    %v2635 = vld [vmem:[#allocation3 + $0x2f0] sm:$0xff]
    %v2636 = vld [vmem:[#allocation3 + $0x2f8] sm:$0xff]
    %v2637 = vld [vmem:[#allocation3 + $0x300] sm:$0xff]
    %v2638 = vld [vmem:[#allocation3 + $0x308] sm:$0xff]
    %v2639 = vld [vmem:[#allocation3 + $0x310] sm:$0xff]
    %v2640 = vld [vmem:[#allocation3 + $0x318] sm:$0xff]
    %v2641 = vld [vmem:[#allocation3 + $0x320] sm:$0xff]
    %2642 = vst [vmem:[#allocation2 + $0x740] sm:$0xff] %v2634
    %2643 = vst [vmem:[#allocation2 + $0x748] sm:$0xff] %v2635
    %2644 = vst [vmem:[#allocation2 + $0x750] sm:$0xff] %v2636
    %2645 = vst [vmem:[#allocation2 + $0x758] sm:$0xff] %v2637
    %2646 = vst [vmem:[#allocation2 + $0x760] sm:$0xff] %v2638
    %2647 = vst [vmem:[#allocation2 + $0x768] sm:$0xff] %v2639
    %2648 = vst [vmem:[#allocation2 + $0x770] sm:$0xff] %v2640
    %2649 = vst [vmem:[#allocation2 + $0x778] sm:$0xff] %v2641
    %v2650 = vld [vmem:[#allocation3 + $0x2f0] sm:$0xff]
    %v2651 = vld [vmem:[#allocation3 + $0x2f8] sm:$0xff]
    %v2652 = vld [vmem:[#allocation3 + $0x300] sm:$0xff]
    %v2653 = vld [vmem:[#allocation3 + $0x308] sm:$0xff]
    %v2654 = vld [vmem:[#allocation3 + $0x310] sm:$0xff]
    %v2655 = vld [vmem:[#allocation3 + $0x318] sm:$0xff]
    %v2656 = vld [vmem:[#allocation3 + $0x320] sm:$0xff]
    %v2657 = vld [vmem:[#allocation3 + $0x328] sm:$0xff]
    %2658 = vst [vmem:[#allocation2 + $0x780] sm:$0xff] %v2650
    %2659 = vst [vmem:[#allocation2 + $0x788] sm:$0xff] %v2651
    %2660 = vst [vmem:[#allocation2 + $0x790] sm:$0xff] %v2652
    %2661 = vst [vmem:[#allocation2 + $0x798] sm:$0xff] %v2653
    %2662 = vst [vmem:[#allocation2 + $0x7a0] sm:$0xff] %v2654
    %2663 = vst [vmem:[#allocation2 + $0x7a8] sm:$0xff] %v2655
    %2664 = vst [vmem:[#allocation2 + $0x7b0] sm:$0xff] %v2656
    %2665 = vst [vmem:[#allocation2 + $0x7b8] sm:$0xff] %v2657
    %v2666 = vld [vmem:[#allocation3 + $0x2f8] sm:$0xff]
    %v2667 = vld [vmem:[#allocation3 + $0x300] sm:$0xff]
    %v2668 = vld [vmem:[#allocation3 + $0x308] sm:$0xff]
    %v2669 = vld [vmem:[#allocation3 + $0x310] sm:$0xff]
    %v2670 = vld [vmem:[#allocation3 + $0x318] sm:$0xff]
    %v2671 = vld [vmem:[#allocation3 + $0x320] sm:$0xff]
    %v2672 = vld [vmem:[#allocation3 + $0x328] sm:$0xff]
    %v2673 = vld [vmem:[#allocation3 + $0x330] sm:$0xff]
    %2674 = vst [vmem:[#allocation2 + $0x7c0] sm:$0xff] %v2666
    %2675 = vst [vmem:[#allocation2 + $0x7c8] sm:$0xff] %v2667
    %2676 = vst [vmem:[#allocation2 + $0x7d0] sm:$0xff] %v2668
    %2677 = vst [vmem:[#allocation2 + $0x7d8] sm:$0xff] %v2669
    %2678 = vst [vmem:[#allocation2 + $0x7e0] sm:$0xff] %v2670
    %2679 = vst [vmem:[#allocation2 + $0x7e8] sm:$0xff] %v2671
    %2680 = vst [vmem:[#allocation2 + $0x7f0] sm:$0xff] %v2672
    %2681 = vst [vmem:[#allocation2 + $0x7f8] sm:$0xff] %v2673
    %v2682 = vld [vmem:[#allocation6 + $0x20] sm:$0xff]
    %v2683 = vld [vmem:[#allocation6 + $0x28] sm:$0xff]
    %v2684 = vld [vmem:[#allocation2] sm:$0xff]
    %v2685 = vld [vmem:[#allocation2 + $0x8] sm:$0xff]
    %v2686 = vld [vmem:[#allocation2 + $0x10] sm:$0xff]
    %v2687 = vld [vmem:[#allocation2 + $0x18] sm:$0xff]
    %v2688 = vld [vmem:[#allocation2 + $0x20] sm:$0xff]
    %v2689 = vld [vmem:[#allocation2 + $0x28] sm:$0xff]
    %v2690 = vld [vmem:[#allocation2 + $0x30] sm:$0xff]
    %v2691 = vld [vmem:[#allocation2 + $0x38] sm:$0xff]
    %v2692 = vld [vmem:[#allocation2 + $0x40] sm:$0xff]
    %v2693 = vld [vmem:[#allocation2 + $0x48] sm:$0xff]
    %v2694 = vld [vmem:[#allocation2 + $0x50] sm:$0xff]
    %v2695 = vld [vmem:[#allocation2 + $0x58] sm:$0xff]
    %v2696 = vld [vmem:[#allocation2 + $0x60] sm:$0xff]
    %v2697 = vld [vmem:[#allocation2 + $0x68] sm:$0xff]
    %v2698 = vld [vmem:[#allocation2 + $0x70] sm:$0xff]
    %v2699 = vld [vmem:[#allocation2 + $0x78] sm:$0xff]
    %v2700 = vld [vmem:[#allocation2 + $0x80] sm:$0xff]
    %v2701 = vld [vmem:[#allocation2 + $0x88] sm:$0xff]
    %v2702 = vld [vmem:[#allocation2 + $0x90] sm:$0xff]
    %v2703 = vld [vmem:[#allocation2 + $0x98] sm:$0xff]
    %v2704 = vld [vmem:[#allocation2 + $0xa0] sm:$0xff]
    %v2705 = vld [vmem:[#allocation2 + $0xa8] sm:$0xff]
    %v2706 = vld [vmem:[#allocation2 + $0xb0] sm:$0xff]
    %v2707 = vld [vmem:[#allocation2 + $0xb8] sm:$0xff]
    %v2708 = vld [vmem:[#allocation2 + $0xc0] sm:$0xff]
    %v2709 = vld [vmem:[#allocation2 + $0xc8] sm:$0xff]
    %v2710 = vld [vmem:[#allocation2 + $0xd0] sm:$0xff]
    %v2711 = vld [vmem:[#allocation2 + $0xd8] sm:$0xff]
    %v2712 = vld [vmem:[#allocation2 + $0xe0] sm:$0xff]
    %v2713 = vld [vmem:[#allocation2 + $0xe8] sm:$0xff]
    %v2714 = vld [vmem:[#allocation2 + $0xf0] sm:$0xff]
    %v2715 = vld [vmem:[#allocation2 + $0xf8] sm:$0xff]
    %v2716 = vld [vmem:[#allocation2 + $0x100] sm:$0xff]
    %v2717 = vld [vmem:[#allocation2 + $0x108] sm:$0xff]
    %v2718 = vld [vmem:[#allocation2 + $0x110] sm:$0xff]
    %v2719 = vld [vmem:[#allocation2 + $0x118] sm:$0xff]
    %v2720 = vld [vmem:[#allocation2 + $0x120] sm:$0xff]
    %v2721 = vld [vmem:[#allocation2 + $0x128] sm:$0xff]
    %v2722 = vld [vmem:[#allocation2 + $0x130] sm:$0xff]
    %v2723 = vld [vmem:[#allocation2 + $0x138] sm:$0xff]
    %v2724 = vld [vmem:[#allocation2 + $0x140] sm:$0xff]
    %v2725 = vld [vmem:[#allocation2 + $0x148] sm:$0xff]
    %v2726 = vld [vmem:[#allocation2 + $0x150] sm:$0xff]
    %v2727 = vld [vmem:[#allocation2 + $0x158] sm:$0xff]
    %v2728 = vld [vmem:[#allocation2 + $0x160] sm:$0xff]
    %v2729 = vld [vmem:[#allocation2 + $0x168] sm:$0xff]
    %v2730 = vld [vmem:[#allocation2 + $0x170] sm:$0xff]
    %v2731 = vld [vmem:[#allocation2 + $0x178] sm:$0xff]
    %v2732 = vld [vmem:[#allocation2 + $0x180] sm:$0xff]
    %v2733 = vld [vmem:[#allocation2 + $0x188] sm:$0xff]
    %v2734 = vld [vmem:[#allocation2 + $0x190] sm:$0xff]
    %v2735 = vld [vmem:[#allocation2 + $0x198] sm:$0xff]
    %v2736 = vld [vmem:[#allocation2 + $0x1a0] sm:$0xff]
    %v2737 = vld [vmem:[#allocation2 + $0x1a8] sm:$0xff]
    %v2738 = vld [vmem:[#allocation2 + $0x1b0] sm:$0xff]
    %v2739 = vld [vmem:[#allocation2 + $0x1b8] sm:$0xff]
    %v2740 = vld [vmem:[#allocation2 + $0x1c0] sm:$0xff]
    %v2741 = vld [vmem:[#allocation2 + $0x1c8] sm:$0xff]
    %v2742 = vld [vmem:[#allocation2 + $0x1d0] sm:$0xff]
    %v2743 = vld [vmem:[#allocation2 + $0x1d8] sm:$0xff]
    %v2744 = vld [vmem:[#allocation2 + $0x1e0] sm:$0xff]
    %v2745 = vld [vmem:[#allocation2 + $0x1e8] sm:$0xff]
    %v2746 = vld [vmem:[#allocation2 + $0x1f0] sm:$0xff]
    %v2747 = vld [vmem:[#allocation2 + $0x1f8] sm:$0xff]
    %v2748 = vld [vmem:[#allocation2 + $0x200] sm:$0xff]
    %v2749 = vld [vmem:[#allocation2 + $0x208] sm:$0xff]
    %v2750 = vld [vmem:[#allocation2 + $0x210] sm:$0xff]
    %v2751 = vld [vmem:[#allocation2 + $0x218] sm:$0xff]
    %v2752 = vld [vmem:[#allocation2 + $0x220] sm:$0xff]
    %v2753 = vld [vmem:[#allocation2 + $0x228] sm:$0xff]
    %v2754 = vld [vmem:[#allocation2 + $0x230] sm:$0xff]
    %v2755 = vld [vmem:[#allocation2 + $0x238] sm:$0xff]
    %v2756 = vld [vmem:[#allocation2 + $0x240] sm:$0xff]
    %v2757 = vld [vmem:[#allocation2 + $0x248] sm:$0xff]
    %v2758 = vld [vmem:[#allocation2 + $0x250] sm:$0xff]
    %v2759 = vld [vmem:[#allocation2 + $0x258] sm:$0xff]
    %v2760 = vld [vmem:[#allocation2 + $0x260] sm:$0xff]
    %v2761 = vld [vmem:[#allocation2 + $0x268] sm:$0xff]
    %v2762 = vld [vmem:[#allocation2 + $0x270] sm:$0xff]
    %v2763 = vld [vmem:[#allocation2 + $0x278] sm:$0xff]
    %v2764 = vld [vmem:[#allocation2 + $0x280] sm:$0xff]
    %v2765 = vld [vmem:[#allocation2 + $0x288] sm:$0xff]
    %v2766 = vld [vmem:[#allocation2 + $0x290] sm:$0xff]
    %v2767 = vld [vmem:[#allocation2 + $0x298] sm:$0xff]
    %v2768 = vld [vmem:[#allocation2 + $0x2a0] sm:$0xff]
    %v2769 = vld [vmem:[#allocation2 + $0x2a8] sm:$0xff]
    %v2770 = vld [vmem:[#allocation2 + $0x2b0] sm:$0xff]
    %v2771 = vld [vmem:[#allocation2 + $0x2b8] sm:$0xff]
    %v2772 = vld [vmem:[#allocation2 + $0x2c0] sm:$0xff]
    %v2773 = vld [vmem:[#allocation2 + $0x2c8] sm:$0xff]
    %v2774 = vld [vmem:[#allocation2 + $0x2d0] sm:$0xff]
    %v2775 = vld [vmem:[#allocation2 + $0x2d8] sm:$0xff]
    %v2776 = vld [vmem:[#allocation2 + $0x2e0] sm:$0xff]
    %v2777 = vld [vmem:[#allocation2 + $0x2e8] sm:$0xff]
    %v2778 = vld [vmem:[#allocation2 + $0x2f0] sm:$0xff]
    %v2779 = vld [vmem:[#allocation2 + $0x2f8] sm:$0xff]
    %v2780 = vld [vmem:[#allocation2 + $0x300] sm:$0xff]
    %v2781 = vld [vmem:[#allocation2 + $0x308] sm:$0xff]
    %v2782 = vld [vmem:[#allocation2 + $0x310] sm:$0xff]
    %v2783 = vld [vmem:[#allocation2 + $0x318] sm:$0xff]
    %v2784 = vld [vmem:[#allocation2 + $0x320] sm:$0xff]
    %v2785 = vld [vmem:[#allocation2 + $0x328] sm:$0xff]
    %v2786 = vld [vmem:[#allocation2 + $0x330] sm:$0xff]
    %v2787 = vld [vmem:[#allocation2 + $0x338] sm:$0xff]
    %v2788 = vld [vmem:[#allocation2 + $0x340] sm:$0xff]
    %v2789 = vld [vmem:[#allocation2 + $0x348] sm:$0xff]
    %v2790 = vld [vmem:[#allocation2 + $0x350] sm:$0xff]
    %v2791 = vld [vmem:[#allocation2 + $0x358] sm:$0xff]
    %v2792 = vld [vmem:[#allocation2 + $0x360] sm:$0xff]
    %v2793 = vld [vmem:[#allocation2 + $0x368] sm:$0xff]
    %v2794 = vld [vmem:[#allocation2 + $0x370] sm:$0xff]
    %v2795 = vld [vmem:[#allocation2 + $0x378] sm:$0xff]
    %v2796 = vld [vmem:[#allocation2 + $0x380] sm:$0xff]
    %v2797 = vld [vmem:[#allocation2 + $0x388] sm:$0xff]
    %v2798 = vld [vmem:[#allocation2 + $0x390] sm:$0xff]
    %v2799 = vld [vmem:[#allocation2 + $0x398] sm:$0xff]
    %v2800 = vld [vmem:[#allocation2 + $0x3a0] sm:$0xff]
    %v2801 = vld [vmem:[#allocation2 + $0x3a8] sm:$0xff]
    %v2802 = vld [vmem:[#allocation2 + $0x3b0] sm:$0xff]
    %v2803 = vld [vmem:[#allocation2 + $0x3b8] sm:$0xff]
    %v2804 = vld [vmem:[#allocation2 + $0x3c0] sm:$0xff]
    %v2805 = vld [vmem:[#allocation2 + $0x3c8] sm:$0xff]
    %v2806 = vld [vmem:[#allocation2 + $0x3d0] sm:$0xff]
    %v2807 = vld [vmem:[#allocation2 + $0x3d8] sm:$0xff]
    %v2808 = vld [vmem:[#allocation2 + $0x3e0] sm:$0xff]
    %v2809 = vld [vmem:[#allocation2 + $0x3e8] sm:$0xff]
    %v2810 = vld [vmem:[#allocation2 + $0x3f0] sm:$0xff]
    %v2811 = vld [vmem:[#allocation2 + $0x3f8] sm:$0xff]
    %v2812 = vld [vmem:[#allocation2 + $0x400] sm:$0xff]
    %v2813 = vld [vmem:[#allocation2 + $0x408] sm:$0xff]
    %v2814 = vld [vmem:[#allocation2 + $0x410] sm:$0xff]
    %v2815 = vld [vmem:[#allocation2 + $0x418] sm:$0xff]
    %v2816 = vld [vmem:[#allocation2 + $0x420] sm:$0xff]
    %v2817 = vld [vmem:[#allocation2 + $0x428] sm:$0xff]
    %v2818 = vld [vmem:[#allocation2 + $0x430] sm:$0xff]
    %v2819 = vld [vmem:[#allocation2 + $0x438] sm:$0xff]
    %v2820 = vld [vmem:[#allocation2 + $0x440] sm:$0xff]
    %v2821 = vld [vmem:[#allocation2 + $0x448] sm:$0xff]
    %v2822 = vld [vmem:[#allocation2 + $0x450] sm:$0xff]
    %v2823 = vld [vmem:[#allocation2 + $0x458] sm:$0xff]
    %v2824 = vld [vmem:[#allocation2 + $0x460] sm:$0xff]
    %v2825 = vld [vmem:[#allocation2 + $0x468] sm:$0xff]
    %v2826 = vld [vmem:[#allocation2 + $0x470] sm:$0xff]
    %v2827 = vld [vmem:[#allocation2 + $0x478] sm:$0xff]
    %v2828 = vld [vmem:[#allocation2 + $0x480] sm:$0xff]
    %v2829 = vld [vmem:[#allocation2 + $0x488] sm:$0xff]
    %v2830 = vld [vmem:[#allocation2 + $0x490] sm:$0xff]
    %v2831 = vld [vmem:[#allocation2 + $0x498] sm:$0xff]
    %v2832 = vld [vmem:[#allocation2 + $0x4a0] sm:$0xff]
    %v2833 = vld [vmem:[#allocation2 + $0x4a8] sm:$0xff]
    %v2834 = vld [vmem:[#allocation2 + $0x4b0] sm:$0xff]
    %v2835 = vld [vmem:[#allocation2 + $0x4b8] sm:$0xff]
    %v2836 = vld [vmem:[#allocation2 + $0x4c0] sm:$0xff]
    %v2837 = vld [vmem:[#allocation2 + $0x4c8] sm:$0xff]
    %v2838 = vld [vmem:[#allocation2 + $0x4d0] sm:$0xff]
    %v2839 = vld [vmem:[#allocation2 + $0x4d8] sm:$0xff]
    %v2840 = vld [vmem:[#allocation2 + $0x4e0] sm:$0xff]
    %v2841 = vld [vmem:[#allocation2 + $0x4e8] sm:$0xff]
    %v2842 = vld [vmem:[#allocation2 + $0x4f0] sm:$0xff]
    %v2843 = vld [vmem:[#allocation2 + $0x4f8] sm:$0xff]
    %v2844 = vld [vmem:[#allocation2 + $0x500] sm:$0xff]
    %v2845 = vld [vmem:[#allocation2 + $0x508] sm:$0xff]
    %v2846 = vld [vmem:[#allocation2 + $0x510] sm:$0xff]
    %v2847 = vld [vmem:[#allocation2 + $0x518] sm:$0xff]
    %v2848 = vld [vmem:[#allocation2 + $0x520] sm:$0xff]
    %v2849 = vld [vmem:[#allocation2 + $0x528] sm:$0xff]
    %v2850 = vld [vmem:[#allocation2 + $0x530] sm:$0xff]
    %v2851 = vld [vmem:[#allocation2 + $0x538] sm:$0xff]
    %v2852 = vld [vmem:[#allocation2 + $0x540] sm:$0xff]
    %v2853 = vld [vmem:[#allocation2 + $0x548] sm:$0xff]
    %v2854 = vld [vmem:[#allocation2 + $0x550] sm:$0xff]
    %v2855 = vld [vmem:[#allocation2 + $0x558] sm:$0xff]
    %v2856 = vld [vmem:[#allocation2 + $0x560] sm:$0xff]
    %v2857 = vld [vmem:[#allocation2 + $0x568] sm:$0xff]
    %v2858 = vld [vmem:[#allocation2 + $0x570] sm:$0xff]
    %v2859 = vld [vmem:[#allocation2 + $0x578] sm:$0xff]
    %v2860 = vld [vmem:[#allocation2 + $0x580] sm:$0xff]
    %v2861 = vld [vmem:[#allocation2 + $0x588] sm:$0xff]
    %v2862 = vld [vmem:[#allocation2 + $0x590] sm:$0xff]
    %v2863 = vld [vmem:[#allocation2 + $0x598] sm:$0xff]
    %v2864 = vld [vmem:[#allocation2 + $0x5a0] sm:$0xff]
    %v2865 = vld [vmem:[#allocation2 + $0x5a8] sm:$0xff]
    %v2866 = vld [vmem:[#allocation2 + $0x5b0] sm:$0xff]
    %v2867 = vld [vmem:[#allocation2 + $0x5b8] sm:$0xff]
    %v2868 = vld [vmem:[#allocation2 + $0x5c0] sm:$0xff]
    %v2869 = vld [vmem:[#allocation2 + $0x5c8] sm:$0xff]
    %v2870 = vld [vmem:[#allocation2 + $0x5d0] sm:$0xff]
    %v2871 = vld [vmem:[#allocation2 + $0x5d8] sm:$0xff]
    %v2872 = vld [vmem:[#allocation2 + $0x5e0] sm:$0xff]
    %v2873 = vld [vmem:[#allocation2 + $0x5e8] sm:$0xff]
    %v2874 = vld [vmem:[#allocation2 + $0x5f0] sm:$0xff]
    %v2875 = vld [vmem:[#allocation2 + $0x5f8] sm:$0xff]
    %v2876 = vld [vmem:[#allocation2 + $0x600] sm:$0xff]
    %v2877 = vld [vmem:[#allocation2 + $0x608] sm:$0xff]
    %v2878 = vld [vmem:[#allocation2 + $0x610] sm:$0xff]
    %v2879 = vld [vmem:[#allocation2 + $0x618] sm:$0xff]
    %v2880 = vld [vmem:[#allocation2 + $0x620] sm:$0xff]
    %v2881 = vld [vmem:[#allocation2 + $0x628] sm:$0xff]
    %v2882 = vld [vmem:[#allocation2 + $0x630] sm:$0xff]
    %v2883 = vld [vmem:[#allocation2 + $0x638] sm:$0xff]
    %v2884 = vld [vmem:[#allocation2 + $0x640] sm:$0xff]
    %v2885 = vld [vmem:[#allocation2 + $0x648] sm:$0xff]
    %v2886 = vld [vmem:[#allocation2 + $0x650] sm:$0xff]
    %v2887 = vld [vmem:[#allocation2 + $0x658] sm:$0xff]
    %v2888 = vld [vmem:[#allocation2 + $0x660] sm:$0xff]
    %v2889 = vld [vmem:[#allocation2 + $0x668] sm:$0xff]
    %v2890 = vld [vmem:[#allocation2 + $0x670] sm:$0xff]
    %v2891 = vld [vmem:[#allocation2 + $0x678] sm:$0xff]
    %v2892 = vld [vmem:[#allocation2 + $0x680] sm:$0xff]
    %v2893 = vld [vmem:[#allocation2 + $0x688] sm:$0xff]
    %v2894 = vld [vmem:[#allocation2 + $0x690] sm:$0xff]
    %v2895 = vld [vmem:[#allocation2 + $0x698] sm:$0xff]
    %v2896 = vld [vmem:[#allocation2 + $0x6a0] sm:$0xff]
    %v2897 = vld [vmem:[#allocation2 + $0x6a8] sm:$0xff]
    %v2898 = vld [vmem:[#allocation2 + $0x6b0] sm:$0xff]
    %v2899 = vld [vmem:[#allocation2 + $0x6b8] sm:$0xff]
    %v2900 = vld [vmem:[#allocation2 + $0x6c0] sm:$0xff]
    %v2901 = vld [vmem:[#allocation2 + $0x6c8] sm:$0xff]
    %v2902 = vld [vmem:[#allocation2 + $0x6d0] sm:$0xff]
    %v2903 = vld [vmem:[#allocation2 + $0x6d8] sm:$0xff]
    %v2904 = vld [vmem:[#allocation2 + $0x6e0] sm:$0xff]
    %v2905 = vld [vmem:[#allocation2 + $0x6e8] sm:$0xff]
    %v2906 = vld [vmem:[#allocation2 + $0x6f0] sm:$0xff]
    %v2907 = vld [vmem:[#allocation2 + $0x6f8] sm:$0xff]
    %v2908 = vld [vmem:[#allocation2 + $0x700] sm:$0xff]
    %v2909 = vld [vmem:[#allocation2 + $0x708] sm:$0xff]
    %v2910 = vld [vmem:[#allocation2 + $0x710] sm:$0xff]
    %v2911 = vld [vmem:[#allocation2 + $0x718] sm:$0xff]
    %v2912 = vld [vmem:[#allocation2 + $0x720] sm:$0xff]
    %v2913 = vld [vmem:[#allocation2 + $0x728] sm:$0xff]
    %v2914 = vld [vmem:[#allocation2 + $0x730] sm:$0xff]
    %v2915 = vld [vmem:[#allocation2 + $0x738] sm:$0xff]
    %v2916 = vld [vmem:[#allocation2 + $0x740] sm:$0xff]
    %v2917 = vld [vmem:[#allocation2 + $0x748] sm:$0xff]
    %v2918 = vld [vmem:[#allocation2 + $0x750] sm:$0xff]
    %v2919 = vld [vmem:[#allocation2 + $0x758] sm:$0xff]
    %v2920 = vld [vmem:[#allocation2 + $0x760] sm:$0xff]
    %v2921 = vld [vmem:[#allocation2 + $0x768] sm:$0xff]
    %v2922 = vld [vmem:[#allocation2 + $0x770] sm:$0xff]
    %v2923 = vld [vmem:[#allocation2 + $0x778] sm:$0xff]
    %v2924 = vld [vmem:[#allocation2 + $0x780] sm:$0xff]
    %v2925 = vld [vmem:[#allocation2 + $0x788] sm:$0xff]
    %v2926 = vld [vmem:[#allocation2 + $0x790] sm:$0xff]
    %v2927 = vld [vmem:[#allocation2 + $0x798] sm:$0xff]
    %v2928 = vld [vmem:[#allocation2 + $0x7a0] sm:$0xff]
    %v2929 = vld [vmem:[#allocation2 + $0x7a8] sm:$0xff]
    %v2930 = vld [vmem:[#allocation2 + $0x7b0] sm:$0xff]
    %v2931 = vld [vmem:[#allocation2 + $0x7b8] sm:$0xff]
    %v2932 = vld [vmem:[#allocation2 + $0x7c0] sm:$0xff]
    %v2933 = vld [vmem:[#allocation2 + $0x7c8] sm:$0xff]
    %v2934 = vld [vmem:[#allocation2 + $0x7d0] sm:$0xff]
    %v2935 = vld [vmem:[#allocation2 + $0x7d8] sm:$0xff]
    %v2936 = vld [vmem:[#allocation2 + $0x7e0] sm:$0xff]
    %v2937 = vld [vmem:[#allocation2 + $0x7e8] sm:$0xff]
    %v2938 = vld [vmem:[#allocation2 + $0x7f0] sm:$0xff]
    %v2939 = vld [vmem:[#allocation2 + $0x7f8] sm:$0xff]
    %2940 = vmatprep.subr.mxu0 %v2805
    %2941 = vmatpush1.msra.mxu0 %v2804
    %2942 = vmatprep.subr.mxu0 %v2797
    %2943 = vmatpush1.msra.mxu0 %v2796
    %2944 = vmatprep.subr.mxu0 %v2789
    %2945 = vmatpush1.msra.mxu0 %v2788
    %2946 = vmatprep.subr.mxu0 %v2781
    %2947 = vmatpush1.msra.mxu0 %v2780
    %2948 = vmatprep.subr.mxu0 %v2773
    %2949 = vmatpush1.msra.mxu0 %v2772
    %2950 = vmatprep.subr.mxu0 %v2765
    %2951 = vmatpush1.msra.mxu0 %v2764
    %2952 = vmatprep.subr.mxu0 %v2757
    %2953 = vmatpush1.msra.mxu0 %v2756
    %2954 = vmatprep.subr.mxu0 %v2749
    %2955 = vmatpush1.msra.mxu0 %v2748
    %2956 = vmatprep.subr.mxu0 %v2741
    %2957 = vmatpush1.msra.mxu0 %v2740
    %2958 = vmatprep.subr.mxu0 %v2733
    %2959 = vmatpush1.msra.mxu0 %v2732
    %2960 = vmatprep.subr.mxu0 %v2725
    %2961 = vmatpush1.msra.mxu0 %v2724
    %2962 = vmatprep.subr.mxu0 %v2717
    %2963 = vmatpush1.msra.mxu0 %v2716
    %2964 = vmatprep.subr.mxu0 %v2709
    %2965 = vmatpush1.msra.mxu0 %v2708
    %2966 = vmatprep.subr.mxu0 %v2701
    %2967 = vmatpush1.msra.mxu0 %v2700
    %2968 = vmatprep.subr.mxu0 %v2693
    %2969 = vmatpush1.msra.mxu0 %v2692
    %2970 = vmatprep.subr.mxu0 %v2685
    %2971 = vmatpush1.msra.mxu0 %v2684
    %2972 = vmatprep.subr.mxu0 %v2933
    %2973 = vmatpush2.msra.mxu0 %v2932
    %2974 = vmatprep.subr.mxu0 %v2925
    %2975 = vmatpush2.msra.mxu0 %v2924
    %2976 = vmatprep.subr.mxu0 %v2917
    %2977 = vmatpush2.msra.mxu0 %v2916
    %2978 = vmatprep.subr.mxu0 %v2909
    %2979 = vmatpush2.msra.mxu0 %v2908
    %2980 = vmatprep.subr.mxu0 %v2901
    %2981 = vmatpush2.msra.mxu0 %v2900
    %2982 = vmatprep.subr.mxu0 %v2893
    %2983 = vmatpush2.msra.mxu0 %v2892
    %2984 = vmatprep.subr.mxu0 %v2885
    %2985 = vmatpush2.msra.mxu0 %v2884
    %2986 = vmatprep.subr.mxu0 %v2877
    %2987 = vmatpush2.msra.mxu0 %v2876
    %2988 = vmatprep.subr.mxu0 %v2869
    %2989 = vmatpush2.msra.mxu0 %v2868
    %2990 = vmatprep.subr.mxu0 %v2861
    %2991 = vmatpush2.msra.mxu0 %v2860
    %2992 = vmatprep.subr.mxu0 %v2853
    %2993 = vmatpush2.msra.mxu0 %v2852
    %2994 = vmatprep.subr.mxu0 %v2845
    %2995 = vmatpush2.msra.mxu0 %v2844
    %2996 = vmatprep.subr.mxu0 %v2837
    %2997 = vmatpush2.msra.mxu0 %v2836
    %2998 = vmatprep.subr.mxu0 %v2829
    %2999 = vmatpush2.msra.mxu0 %v2828
    %3000 = vmatprep.subr.mxu0 %v2821
    %3001 = vmatpush2.msra.mxu0 %v2820
    %3002 = vmatprep.subr.mxu0 %v2813
    %3003 = vmatpush2.msra.mxu0 %v2812
    %3004 = vmatprep.mubr.f32.mxu0 %v2683
    %3005 = vmatmul.mubr.f32.gmra.mxu0 %v2682
    %v3006 = vpop.f32.mrf.mxu0
    %v3007 = vadd.f32 0.0, %v3006
    %v3008 = vpop.f32.mrf.mxu0
    %v3009 = vadd.f32 0.0, %v3008
    %3010 = vdwg.mxu0
    %3011 = vmatprep.subr.mxu0 %v2807
    %3012 = vmatpush1.msra.mxu0 %v2806
    %3013 = vmatprep.subr.mxu0 %v2799
    %3014 = vmatpush1.msra.mxu0 %v2798
    %3015 = vmatprep.subr.mxu0 %v2791
    %3016 = vmatpush1.msra.mxu0 %v2790
    %3017 = vmatprep.subr.mxu0 %v2783
    %3018 = vmatpush1.msra.mxu0 %v2782
    %3019 = vmatprep.subr.mxu0 %v2775
    %3020 = vmatpush1.msra.mxu0 %v2774
    %3021 = vmatprep.subr.mxu0 %v2767
    %3022 = vmatpush1.msra.mxu0 %v2766
    %3023 = vmatprep.subr.mxu0 %v2759
    %3024 = vmatpush1.msra.mxu0 %v2758
    %3025 = vmatprep.subr.mxu0 %v2751
    %3026 = vmatpush1.msra.mxu0 %v2750
    %3027 = vmatprep.subr.mxu0 %v2743
    %3028 = vmatpush1.msra.mxu0 %v2742
    %3029 = vmatprep.subr.mxu0 %v2735
    %3030 = vmatpush1.msra.mxu0 %v2734
    %3031 = vmatprep.subr.mxu0 %v2727
    %3032 = vmatpush1.msra.mxu0 %v2726
    %3033 = vmatprep.subr.mxu0 %v2719
    %3034 = vmatpush1.msra.mxu0 %v2718
    %3035 = vmatprep.subr.mxu0 %v2711
    %3036 = vmatpush1.msra.mxu0 %v2710
    %3037 = vmatprep.subr.mxu0 %v2703
    %3038 = vmatpush1.msra.mxu0 %v2702
    %3039 = vmatprep.subr.mxu0 %v2695
    %3040 = vmatpush1.msra.mxu0 %v2694
    %3041 = vmatprep.subr.mxu0 %v2687
    %3042 = vmatpush1.msra.mxu0 %v2686
    %3043 = vmatprep.subr.mxu0 %v2935
    %3044 = vmatpush2.msra.mxu0 %v2934
    %3045 = vmatprep.subr.mxu0 %v2927
    %3046 = vmatpush2.msra.mxu0 %v2926
    %3047 = vmatprep.subr.mxu0 %v2919
    %3048 = vmatpush2.msra.mxu0 %v2918
    %3049 = vmatprep.subr.mxu0 %v2911
    %3050 = vmatpush2.msra.mxu0 %v2910
    %3051 = vmatprep.subr.mxu0 %v2903
    %3052 = vmatpush2.msra.mxu0 %v2902
    %3053 = vmatprep.subr.mxu0 %v2895
    %3054 = vmatpush2.msra.mxu0 %v2894
    %3055 = vmatprep.subr.mxu0 %v2887
    %3056 = vmatpush2.msra.mxu0 %v2886
    %3057 = vmatprep.subr.mxu0 %v2879
    %3058 = vmatpush2.msra.mxu0 %v2878
    %3059 = vmatprep.subr.mxu0 %v2871
    %3060 = vmatpush2.msra.mxu0 %v2870
    %3061 = vmatprep.subr.mxu0 %v2863
    %3062 = vmatpush2.msra.mxu0 %v2862
    %3063 = vmatprep.subr.mxu0 %v2855
    %3064 = vmatpush2.msra.mxu0 %v2854
    %3065 = vmatprep.subr.mxu0 %v2847
    %3066 = vmatpush2.msra.mxu0 %v2846
    %3067 = vmatprep.subr.mxu0 %v2839
    %3068 = vmatpush2.msra.mxu0 %v2838
    %3069 = vmatprep.subr.mxu0 %v2831
    %3070 = vmatpush2.msra.mxu0 %v2830
    %3071 = vmatprep.subr.mxu0 %v2823
    %3072 = vmatpush2.msra.mxu0 %v2822
    %3073 = vmatprep.subr.mxu0 %v2815
    %3074 = vmatpush2.msra.mxu0 %v2814
    %3075 = vmatprep.mubr.f32.mxu0 %v2683
    %3076 = vmatmul.mubr.f32.gmra.mxu0 %v2682
    %v3077 = vpop.f32.mrf.mxu0
    %v3078 = vadd.f32 0.0, %v3077
    %v3079 = vpop.f32.mrf.mxu0
    %v3080 = vadd.f32 0.0, %v3079
    %3081 = vdwg.mxu0
    %3082 = vmatprep.subr.mxu0 %v2809
    %3083 = vmatpush1.msra.mxu0 %v2808
    %3084 = vmatprep.subr.mxu0 %v2801
    %3085 = vmatpush1.msra.mxu0 %v2800
    %3086 = vmatprep.subr.mxu0 %v2793
    %3087 = vmatpush1.msra.mxu0 %v2792
    %3088 = vmatprep.subr.mxu0 %v2785
    %3089 = vmatpush1.msra.mxu0 %v2784
    %3090 = vmatprep.subr.mxu0 %v2777
    %3091 = vmatpush1.msra.mxu0 %v2776
    %3092 = vmatprep.subr.mxu0 %v2769
    %3093 = vmatpush1.msra.mxu0 %v2768
    %3094 = vmatprep.subr.mxu0 %v2761
    %3095 = vmatpush1.msra.mxu0 %v2760
    %3096 = vmatprep.subr.mxu0 %v2753
    %3097 = vmatpush1.msra.mxu0 %v2752
    %3098 = vmatprep.subr.mxu0 %v2745
    %3099 = vmatpush1.msra.mxu0 %v2744
    %3100 = vmatprep.subr.mxu0 %v2737
    %3101 = vmatpush1.msra.mxu0 %v2736
    %3102 = vmatprep.subr.mxu0 %v2729
    %3103 = vmatpush1.msra.mxu0 %v2728
    %3104 = vmatprep.subr.mxu0 %v2721
    %3105 = vmatpush1.msra.mxu0 %v2720
    %3106 = vmatprep.subr.mxu0 %v2713
    %3107 = vmatpush1.msra.mxu0 %v2712
    %3108 = vmatprep.subr.mxu0 %v2705
    %3109 = vmatpush1.msra.mxu0 %v2704
    %3110 = vmatprep.subr.mxu0 %v2697
    %3111 = vmatpush1.msra.mxu0 %v2696
    %3112 = vmatprep.subr.mxu0 %v2689
    %3113 = vmatpush1.msra.mxu0 %v2688
    %3114 = vmatprep.subr.mxu0 %v2937
    %3115 = vmatpush2.msra.mxu0 %v2936
    %3116 = vmatprep.subr.mxu0 %v2929
    %3117 = vmatpush2.msra.mxu0 %v2928
    %3118 = vmatprep.subr.mxu0 %v2921
    %3119 = vmatpush2.msra.mxu0 %v2920
    %3120 = vmatprep.subr.mxu0 %v2913
    %3121 = vmatpush2.msra.mxu0 %v2912
    %3122 = vmatprep.subr.mxu0 %v2905
    %3123 = vmatpush2.msra.mxu0 %v2904
    %3124 = vmatprep.subr.mxu0 %v2897
    %3125 = vmatpush2.msra.mxu0 %v2896
    %3126 = vmatprep.subr.mxu0 %v2889
    %3127 = vmatpush2.msra.mxu0 %v2888
    %3128 = vmatprep.subr.mxu0 %v2881
    %3129 = vmatpush2.msra.mxu0 %v2880
    %3130 = vmatprep.subr.mxu0 %v2873
    %3131 = vmatpush2.msra.mxu0 %v2872
    %3132 = vmatprep.subr.mxu0 %v2865
    %3133 = vmatpush2.msra.mxu0 %v2864
    %3134 = vmatprep.subr.mxu0 %v2857
    %3135 = vmatpush2.msra.mxu0 %v2856
    %3136 = vmatprep.subr.mxu0 %v2849
    %3137 = vmatpush2.msra.mxu0 %v2848
    %3138 = vmatprep.subr.mxu0 %v2841
    %3139 = vmatpush2.msra.mxu0 %v2840
    %3140 = vmatprep.subr.mxu0 %v2833
    %3141 = vmatpush2.msra.mxu0 %v2832
    %3142 = vmatprep.subr.mxu0 %v2825
    %3143 = vmatpush2.msra.mxu0 %v2824
    %3144 = vmatprep.subr.mxu0 %v2817
    %3145 = vmatpush2.msra.mxu0 %v2816
    %3146 = vmatprep.mubr.f32.mxu0 %v2683
    %3147 = vmatmul.mubr.f32.gmra.mxu0 %v2682
    %v3148 = vpop.f32.mrf.mxu0
    %v3149 = vadd.f32 0.0, %v3148
    %v3150 = vpop.f32.mrf.mxu0
    %v3151 = vadd.f32 0.0, %v3150
    %3152 = vdwg.mxu0
    %3153 = vmatprep.subr.mxu0 %v2811
    %3154 = vmatpush1.msra.mxu0 %v2810
    %3155 = vmatprep.subr.mxu0 %v2803
    %3156 = vmatpush1.msra.mxu0 %v2802
    %3157 = vmatprep.subr.mxu0 %v2795
    %3158 = vmatpush1.msra.mxu0 %v2794
    %3159 = vmatprep.subr.mxu0 %v2787
    %3160 = vmatpush1.msra.mxu0 %v2786
    %3161 = vmatprep.subr.mxu0 %v2779
    %3162 = vmatpush1.msra.mxu0 %v2778
    %3163 = vmatprep.subr.mxu0 %v2771
    %3164 = vmatpush1.msra.mxu0 %v2770
    %3165 = vmatprep.subr.mxu0 %v2763
    %3166 = vmatpush1.msra.mxu0 %v2762
    %3167 = vmatprep.subr.mxu0 %v2755
    %3168 = vmatpush1.msra.mxu0 %v2754
    %3169 = vmatprep.subr.mxu0 %v2747
    %3170 = vmatpush1.msra.mxu0 %v2746
    %3171 = vmatprep.subr.mxu0 %v2739
    %3172 = vmatpush1.msra.mxu0 %v2738
    %3173 = vmatprep.subr.mxu0 %v2731
    %3174 = vmatpush1.msra.mxu0 %v2730
    %3175 = vmatprep.subr.mxu0 %v2723
    %3176 = vmatpush1.msra.mxu0 %v2722
    %3177 = vmatprep.subr.mxu0 %v2715
    %3178 = vmatpush1.msra.mxu0 %v2714
    %3179 = vmatprep.subr.mxu0 %v2707
    %3180 = vmatpush1.msra.mxu0 %v2706
    %3181 = vmatprep.subr.mxu0 %v2699
    %3182 = vmatpush1.msra.mxu0 %v2698
    %3183 = vmatprep.subr.mxu0 %v2691
    %3184 = vmatpush1.msra.mxu0 %v2690
    %3185 = vmatprep.subr.mxu0 %v2939
    %3186 = vmatpush2.msra.mxu0 %v2938
    %3187 = vmatprep.subr.mxu0 %v2931
    %3188 = vmatpush2.msra.mxu0 %v2930
    %3189 = vmatprep.subr.mxu0 %v2923
    %3190 = vmatpush2.msra.mxu0 %v2922
    %3191 = vmatprep.subr.mxu0 %v2915
    %3192 = vmatpush2.msra.mxu0 %v2914
    %3193 = vmatprep.subr.mxu0 %v2907
    %3194 = vmatpush2.msra.mxu0 %v2906
    %3195 = vmatprep.subr.mxu0 %v2899
    %3196 = vmatpush2.msra.mxu0 %v2898
    %3197 = vmatprep.subr.mxu0 %v2891
    %3198 = vmatpush2.msra.mxu0 %v2890
    %3199 = vmatprep.subr.mxu0 %v2883
    %3200 = vmatpush2.msra.mxu0 %v2882
    %3201 = vmatprep.subr.mxu0 %v2875
    %3202 = vmatpush2.msra.mxu0 %v2874
    %3203 = vmatprep.subr.mxu0 %v2867
    %3204 = vmatpush2.msra.mxu0 %v2866
    %3205 = vmatprep.subr.mxu0 %v2859
    %3206 = vmatpush2.msra.mxu0 %v2858
    %3207 = vmatprep.subr.mxu0 %v2851
    %3208 = vmatpush2.msra.mxu0 %v2850
    %3209 = vmatprep.subr.mxu0 %v2843
    %3210 = vmatpush2.msra.mxu0 %v2842
    %3211 = vmatprep.subr.mxu0 %v2835
    %3212 = vmatpush2.msra.mxu0 %v2834
    %3213 = vmatprep.subr.mxu0 %v2827
    %3214 = vmatpush2.msra.mxu0 %v2826
    %3215 = vmatprep.subr.mxu0 %v2819
    %3216 = vmatpush2.msra.mxu0 %v2818
    %3217 = vmatprep.mubr.f32.mxu0 %v2683
    %3218 = vmatmul.mubr.f32.gmra.mxu0 %v2682
    %v3219 = vpop.f32.mrf.mxu0
    %v3220 = vadd.f32 0.0, %v3219
    %v3221 = vpop.f32.mrf.mxu0
    %v3222 = vadd.f32 0.0, %v3221
    %3223 = vdwg.mxu0
    %v3224 = vadd.f32 %v2162, %v3007
    %v3225 = vadd.f32 %v2163, %v3009
    %v3226 = vadd.f32 %v2164, %v3078
    %v3227 = vadd.f32 %v2165, %v3080
    %v3228 = vadd.f32 %v2166, %v3149
    %v3229 = vadd.f32 %v2167, %v3151
    %v3230 = vadd.f32 %v2168, %v3220
    %v3231 = vadd.f32 %v2169, %v3222
    %v3232 = vld [vmem:[#allocation3 + $0x300] sm:$0xff]
    %v3233 = vld [vmem:[#allocation3 + $0x308] sm:$0xff]
    %v3234 = vld [vmem:[#allocation3 + $0x310] sm:$0xff]
    %v3235 = vld [vmem:[#allocation3 + $0x318] sm:$0xff]
    %v3236 = vld [vmem:[#allocation3 + $0x320] sm:$0xff]
    %v3237 = vld [vmem:[#allocation3 + $0x328] sm:$0xff]
    %v3238 = vld [vmem:[#allocation3 + $0x330] sm:$0xff]
    %v3239 = vld [vmem:[#allocation3 + $0x338] sm:$0xff]
    %3240 = vst [vmem:[#allocation2] sm:$0xff] %v3232
    %3241 = vst [vmem:[#allocation2 + $0x8] sm:$0xff] %v3233
    %3242 = vst [vmem:[#allocation2 + $0x10] sm:$0xff] %v3234
    %3243 = vst [vmem:[#allocation2 + $0x18] sm:$0xff] %v3235
    %3244 = vst [vmem:[#allocation2 + $0x20] sm:$0xff] %v3236
    %3245 = vst [vmem:[#allocation2 + $0x28] sm:$0xff] %v3237
    %3246 = vst [vmem:[#allocation2 + $0x30] sm:$0xff] %v3238
    %3247 = vst [vmem:[#allocation2 + $0x38] sm:$0xff] %v3239
    %v3248 = vld [vmem:[#allocation3 + $0x308] sm:$0xff]
    %v3249 = vld [vmem:[#allocation3 + $0x310] sm:$0xff]
    %v3250 = vld [vmem:[#allocation3 + $0x318] sm:$0xff]
    %v3251 = vld [vmem:[#allocation3 + $0x320] sm:$0xff]
    %v3252 = vld [vmem:[#allocation3 + $0x328] sm:$0xff]
    %v3253 = vld [vmem:[#allocation3 + $0x330] sm:$0xff]
    %v3254 = vld [vmem:[#allocation3 + $0x338] sm:$0xff]
    %v3255 = vld [vmem:[#allocation3 + $0x340] sm:$0xff]
    %3256 = vst [vmem:[#allocation2 + $0x40] sm:$0xff] %v3248
    %3257 = vst [vmem:[#allocation2 + $0x48] sm:$0xff] %v3249
    %3258 = vst [vmem:[#allocation2 + $0x50] sm:$0xff] %v3250
    %3259 = vst [vmem:[#allocation2 + $0x58] sm:$0xff] %v3251
    %3260 = vst [vmem:[#allocation2 + $0x60] sm:$0xff] %v3252
    %3261 = vst [vmem:[#allocation2 + $0x68] sm:$0xff] %v3253
    %3262 = vst [vmem:[#allocation2 + $0x70] sm:$0xff] %v3254
    %3263 = vst [vmem:[#allocation2 + $0x78] sm:$0xff] %v3255
    %v3264 = vld [vmem:[#allocation3 + $0x310] sm:$0xff]
    %v3265 = vld [vmem:[#allocation3 + $0x318] sm:$0xff]
    %v3266 = vld [vmem:[#allocation3 + $0x320] sm:$0xff]
    %v3267 = vld [vmem:[#allocation3 + $0x328] sm:$0xff]
    %v3268 = vld [vmem:[#allocation3 + $0x330] sm:$0xff]
    %v3269 = vld [vmem:[#allocation3 + $0x338] sm:$0xff]
    %v3270 = vld [vmem:[#allocation3 + $0x340] sm:$0xff]
    %v3271 = vld [vmem:[#allocation3 + $0x348] sm:$0xff]
    %3272 = vst [vmem:[#allocation2 + $0x80] sm:$0xff] %v3264
    %3273 = vst [vmem:[#allocation2 + $0x88] sm:$0xff] %v3265
    %3274 = vst [vmem:[#allocation2 + $0x90] sm:$0xff] %v3266
    %3275 = vst [vmem:[#allocation2 + $0x98] sm:$0xff] %v3267
    %3276 = vst [vmem:[#allocation2 + $0xa0] sm:$0xff] %v3268
    %3277 = vst [vmem:[#allocation2 + $0xa8] sm:$0xff] %v3269
    %3278 = vst [vmem:[#allocation2 + $0xb0] sm:$0xff] %v3270
    %3279 = vst [vmem:[#allocation2 + $0xb8] sm:$0xff] %v3271
    %v3280 = vld [vmem:[#allocation3 + $0x318] sm:$0xff]
    %v3281 = vld [vmem:[#allocation3 + $0x320] sm:$0xff]
    %v3282 = vld [vmem:[#allocation3 + $0x328] sm:$0xff]
    %v3283 = vld [vmem:[#allocation3 + $0x330] sm:$0xff]
    %v3284 = vld [vmem:[#allocation3 + $0x338] sm:$0xff]
    %v3285 = vld [vmem:[#allocation3 + $0x340] sm:$0xff]
    %v3286 = vld [vmem:[#allocation3 + $0x348] sm:$0xff]
    %v3287 = vld [vmem:[#allocation3 + $0x350] sm:$0xff]
    %3288 = vst [vmem:[#allocation2 + $0xc0] sm:$0xff] %v3280
    %3289 = vst [vmem:[#allocation2 + $0xc8] sm:$0xff] %v3281
    %3290 = vst [vmem:[#allocation2 + $0xd0] sm:$0xff] %v3282
    %3291 = vst [vmem:[#allocation2 + $0xd8] sm:$0xff] %v3283
    %3292 = vst [vmem:[#allocation2 + $0xe0] sm:$0xff] %v3284
    %3293 = vst [vmem:[#allocation2 + $0xe8] sm:$0xff] %v3285
    %3294 = vst [vmem:[#allocation2 + $0xf0] sm:$0xff] %v3286
    %3295 = vst [vmem:[#allocation2 + $0xf8] sm:$0xff] %v3287
    %v3296 = vld [vmem:[#allocation3 + $0x320] sm:$0xff]
    %v3297 = vld [vmem:[#allocation3 + $0x328] sm:$0xff]
    %v3298 = vld [vmem:[#allocation3 + $0x330] sm:$0xff]
    %v3299 = vld [vmem:[#allocation3 + $0x338] sm:$0xff]
    %v3300 = vld [vmem:[#allocation3 + $0x340] sm:$0xff]
    %v3301 = vld [vmem:[#allocation3 + $0x348] sm:$0xff]
    %v3302 = vld [vmem:[#allocation3 + $0x350] sm:$0xff]
    %v3303 = vld [vmem:[#allocation3 + $0x358] sm:$0xff]
    %3304 = vst [vmem:[#allocation2 + $0x100] sm:$0xff] %v3296
    %3305 = vst [vmem:[#allocation2 + $0x108] sm:$0xff] %v3297
    %3306 = vst [vmem:[#allocation2 + $0x110] sm:$0xff] %v3298
    %3307 = vst [vmem:[#allocation2 + $0x118] sm:$0xff] %v3299
    %3308 = vst [vmem:[#allocation2 + $0x120] sm:$0xff] %v3300
    %3309 = vst [vmem:[#allocation2 + $0x128] sm:$0xff] %v3301
    %3310 = vst [vmem:[#allocation2 + $0x130] sm:$0xff] %v3302
    %3311 = vst [vmem:[#allocation2 + $0x138] sm:$0xff] %v3303
    %v3312 = vld [vmem:[#allocation3 + $0x328] sm:$0xff]
    %v3313 = vld [vmem:[#allocation3 + $0x330] sm:$0xff]
    %v3314 = vld [vmem:[#allocation3 + $0x338] sm:$0xff]
    %v3315 = vld [vmem:[#allocation3 + $0x340] sm:$0xff]
    %v3316 = vld [vmem:[#allocation3 + $0x348] sm:$0xff]
    %v3317 = vld [vmem:[#allocation3 + $0x350] sm:$0xff]
    %v3318 = vld [vmem:[#allocation3 + $0x358] sm:$0xff]
    %v3319 = vld [vmem:[#allocation3 + $0x360] sm:$0xff]
    %3320 = vst [vmem:[#allocation2 + $0x140] sm:$0xff] %v3312
    %3321 = vst [vmem:[#allocation2 + $0x148] sm:$0xff] %v3313
    %3322 = vst [vmem:[#allocation2 + $0x150] sm:$0xff] %v3314
    %3323 = vst [vmem:[#allocation2 + $0x158] sm:$0xff] %v3315
    %3324 = vst [vmem:[#allocation2 + $0x160] sm:$0xff] %v3316
    %3325 = vst [vmem:[#allocation2 + $0x168] sm:$0xff] %v3317
    %3326 = vst [vmem:[#allocation2 + $0x170] sm:$0xff] %v3318
    %3327 = vst [vmem:[#allocation2 + $0x178] sm:$0xff] %v3319
    %v3328 = vld [vmem:[#allocation3 + $0x330] sm:$0xff]
    %v3329 = vld [vmem:[#allocation3 + $0x338] sm:$0xff]
    %v3330 = vld [vmem:[#allocation3 + $0x340] sm:$0xff]
    %v3331 = vld [vmem:[#allocation3 + $0x348] sm:$0xff]
    %v3332 = vld [vmem:[#allocation3 + $0x350] sm:$0xff]
    %v3333 = vld [vmem:[#allocation3 + $0x358] sm:$0xff]
    %v3334 = vld [vmem:[#allocation3 + $0x360] sm:$0xff]
    %v3335 = vld [vmem:[#allocation3 + $0x368] sm:$0xff]
    %3336 = vst [vmem:[#allocation2 + $0x180] sm:$0xff] %v3328
    %3337 = vst [vmem:[#allocation2 + $0x188] sm:$0xff] %v3329
    %3338 = vst [vmem:[#allocation2 + $0x190] sm:$0xff] %v3330
    %3339 = vst [vmem:[#allocation2 + $0x198] sm:$0xff] %v3331
    %3340 = vst [vmem:[#allocation2 + $0x1a0] sm:$0xff] %v3332
    %3341 = vst [vmem:[#allocation2 + $0x1a8] sm:$0xff] %v3333
    %3342 = vst [vmem:[#allocation2 + $0x1b0] sm:$0xff] %v3334
    %3343 = vst [vmem:[#allocation2 + $0x1b8] sm:$0xff] %v3335
    %v3344 = vld [vmem:[#allocation3 + $0x338] sm:$0xff]
    %v3345 = vld [vmem:[#allocation3 + $0x340] sm:$0xff]
    %v3346 = vld [vmem:[#allocation3 + $0x348] sm:$0xff]
    %v3347 = vld [vmem:[#allocation3 + $0x350] sm:$0xff]
    %v3348 = vld [vmem:[#allocation3 + $0x358] sm:$0xff]
    %v3349 = vld [vmem:[#allocation3 + $0x360] sm:$0xff]
    %v3350 = vld [vmem:[#allocation3 + $0x368] sm:$0xff]
    %v3351 = vld [vmem:[#allocation3 + $0x370] sm:$0xff]
    %3352 = vst [vmem:[#allocation2 + $0x1c0] sm:$0xff] %v3344
    %3353 = vst [vmem:[#allocation2 + $0x1c8] sm:$0xff] %v3345
    %3354 = vst [vmem:[#allocation2 + $0x1d0] sm:$0xff] %v3346
    %3355 = vst [vmem:[#allocation2 + $0x1d8] sm:$0xff] %v3347
    %3356 = vst [vmem:[#allocation2 + $0x1e0] sm:$0xff] %v3348
    %3357 = vst [vmem:[#allocation2 + $0x1e8] sm:$0xff] %v3349
    %3358 = vst [vmem:[#allocation2 + $0x1f0] sm:$0xff] %v3350
    %3359 = vst [vmem:[#allocation2 + $0x1f8] sm:$0xff] %v3351
    %v3360 = vld [vmem:[#allocation3 + $0x340] sm:$0xff]
    %v3361 = vld [vmem:[#allocation3 + $0x348] sm:$0xff]
    %v3362 = vld [vmem:[#allocation3 + $0x350] sm:$0xff]
    %v3363 = vld [vmem:[#allocation3 + $0x358] sm:$0xff]
    %v3364 = vld [vmem:[#allocation3 + $0x360] sm:$0xff]
    %v3365 = vld [vmem:[#allocation3 + $0x368] sm:$0xff]
    %v3366 = vld [vmem:[#allocation3 + $0x370] sm:$0xff]
    %v3367 = vld [vmem:[#allocation3 + $0x378] sm:$0xff]
    %3368 = vst [vmem:[#allocation2 + $0x200] sm:$0xff] %v3360
    %3369 = vst [vmem:[#allocation2 + $0x208] sm:$0xff] %v3361
    %3370 = vst [vmem:[#allocation2 + $0x210] sm:$0xff] %v3362
    %3371 = vst [vmem:[#allocation2 + $0x218] sm:$0xff] %v3363
    %3372 = vst [vmem:[#allocation2 + $0x220] sm:$0xff] %v3364
    %3373 = vst [vmem:[#allocation2 + $0x228] sm:$0xff] %v3365
    %3374 = vst [vmem:[#allocation2 + $0x230] sm:$0xff] %v3366
    %3375 = vst [vmem:[#allocation2 + $0x238] sm:$0xff] %v3367
    %v3376 = vld [vmem:[#allocation3 + $0x348] sm:$0xff]
    %v3377 = vld [vmem:[#allocation3 + $0x350] sm:$0xff]
    %v3378 = vld [vmem:[#allocation3 + $0x358] sm:$0xff]
    %v3379 = vld [vmem:[#allocation3 + $0x360] sm:$0xff]
    %v3380 = vld [vmem:[#allocation3 + $0x368] sm:$0xff]
    %v3381 = vld [vmem:[#allocation3 + $0x370] sm:$0xff]
    %v3382 = vld [vmem:[#allocation3 + $0x378] sm:$0xff]
    %v3383 = vld [vmem:[#allocation3 + $0x380] sm:$0xff]
    %3384 = vst [vmem:[#allocation2 + $0x240] sm:$0xff] %v3376
    %3385 = vst [vmem:[#allocation2 + $0x248] sm:$0xff] %v3377
    %3386 = vst [vmem:[#allocation2 + $0x250] sm:$0xff] %v3378
    %3387 = vst [vmem:[#allocation2 + $0x258] sm:$0xff] %v3379
    %3388 = vst [vmem:[#allocation2 + $0x260] sm:$0xff] %v3380
    %3389 = vst [vmem:[#allocation2 + $0x268] sm:$0xff] %v3381
    %3390 = vst [vmem:[#allocation2 + $0x270] sm:$0xff] %v3382
    %3391 = vst [vmem:[#allocation2 + $0x278] sm:$0xff] %v3383
    %v3392 = vld [vmem:[#allocation3 + $0x350] sm:$0xff]
    %v3393 = vld [vmem:[#allocation3 + $0x358] sm:$0xff]
    %v3394 = vld [vmem:[#allocation3 + $0x360] sm:$0xff]
    %v3395 = vld [vmem:[#allocation3 + $0x368] sm:$0xff]
    %v3396 = vld [vmem:[#allocation3 + $0x370] sm:$0xff]
    %v3397 = vld [vmem:[#allocation3 + $0x378] sm:$0xff]
    %v3398 = vld [vmem:[#allocation3 + $0x380] sm:$0xff]
    %v3399 = vld [vmem:[#allocation3 + $0x388] sm:$0xff]
    %3400 = vst [vmem:[#allocation2 + $0x280] sm:$0xff] %v3392
    %3401 = vst [vmem:[#allocation2 + $0x288] sm:$0xff] %v3393
    %3402 = vst [vmem:[#allocation2 + $0x290] sm:$0xff] %v3394
    %3403 = vst [vmem:[#allocation2 + $0x298] sm:$0xff] %v3395
    %3404 = vst [vmem:[#allocation2 + $0x2a0] sm:$0xff] %v3396
    %3405 = vst [vmem:[#allocation2 + $0x2a8] sm:$0xff] %v3397
    %3406 = vst [vmem:[#allocation2 + $0x2b0] sm:$0xff] %v3398
    %3407 = vst [vmem:[#allocation2 + $0x2b8] sm:$0xff] %v3399
    %v3408 = vld [vmem:[#allocation3 + $0x358] sm:$0xff]
    %v3409 = vld [vmem:[#allocation3 + $0x360] sm:$0xff]
    %v3410 = vld [vmem:[#allocation3 + $0x368] sm:$0xff]
    %v3411 = vld [vmem:[#allocation3 + $0x370] sm:$0xff]
    %v3412 = vld [vmem:[#allocation3 + $0x378] sm:$0xff]
    %v3413 = vld [vmem:[#allocation3 + $0x380] sm:$0xff]
    %v3414 = vld [vmem:[#allocation3 + $0x388] sm:$0xff]
    %v3415 = vld [vmem:[#allocation3 + $0x390] sm:$0xff]
    %3416 = vst [vmem:[#allocation2 + $0x2c0] sm:$0xff] %v3408
    %3417 = vst [vmem:[#allocation2 + $0x2c8] sm:$0xff] %v3409
    %3418 = vst [vmem:[#allocation2 + $0x2d0] sm:$0xff] %v3410
    %3419 = vst [vmem:[#allocation2 + $0x2d8] sm:$0xff] %v3411
    %3420 = vst [vmem:[#allocation2 + $0x2e0] sm:$0xff] %v3412
    %3421 = vst [vmem:[#allocation2 + $0x2e8] sm:$0xff] %v3413
    %3422 = vst [vmem:[#allocation2 + $0x2f0] sm:$0xff] %v3414
    %3423 = vst [vmem:[#allocation2 + $0x2f8] sm:$0xff] %v3415
    %v3424 = vld [vmem:[#allocation3 + $0x360] sm:$0xff]
    %v3425 = vld [vmem:[#allocation3 + $0x368] sm:$0xff]
    %v3426 = vld [vmem:[#allocation3 + $0x370] sm:$0xff]
    %v3427 = vld [vmem:[#allocation3 + $0x378] sm:$0xff]
    %v3428 = vld [vmem:[#allocation3 + $0x380] sm:$0xff]
    %v3429 = vld [vmem:[#allocation3 + $0x388] sm:$0xff]
    %v3430 = vld [vmem:[#allocation3 + $0x390] sm:$0xff]
    %v3431 = vld [vmem:[#allocation3 + $0x398] sm:$0xff]
    %3432 = vst [vmem:[#allocation2 + $0x300] sm:$0xff] %v3424
    %3433 = vst [vmem:[#allocation2 + $0x308] sm:$0xff] %v3425
    %3434 = vst [vmem:[#allocation2 + $0x310] sm:$0xff] %v3426
    %3435 = vst [vmem:[#allocation2 + $0x318] sm:$0xff] %v3427
    %3436 = vst [vmem:[#allocation2 + $0x320] sm:$0xff] %v3428
    %3437 = vst [vmem:[#allocation2 + $0x328] sm:$0xff] %v3429
    %3438 = vst [vmem:[#allocation2 + $0x330] sm:$0xff] %v3430
    %3439 = vst [vmem:[#allocation2 + $0x338] sm:$0xff] %v3431
    %v3440 = vld [vmem:[#allocation3 + $0x368] sm:$0xff]
    %v3441 = vld [vmem:[#allocation3 + $0x370] sm:$0xff]
    %v3442 = vld [vmem:[#allocation3 + $0x378] sm:$0xff]
    %v3443 = vld [vmem:[#allocation3 + $0x380] sm:$0xff]
    %v3444 = vld [vmem:[#allocation3 + $0x388] sm:$0xff]
    %v3445 = vld [vmem:[#allocation3 + $0x390] sm:$0xff]
    %v3446 = vld [vmem:[#allocation3 + $0x398] sm:$0xff]
    %v3447 = vld [vmem:[#allocation3 + $0x3a0] sm:$0xff]
    %3448 = vst [vmem:[#allocation2 + $0x340] sm:$0xff] %v3440
    %3449 = vst [vmem:[#allocation2 + $0x348] sm:$0xff] %v3441
    %3450 = vst [vmem:[#allocation2 + $0x350] sm:$0xff] %v3442
    %3451 = vst [vmem:[#allocation2 + $0x358] sm:$0xff] %v3443
    %3452 = vst [vmem:[#allocation2 + $0x360] sm:$0xff] %v3444
    %3453 = vst [vmem:[#allocation2 + $0x368] sm:$0xff] %v3445
    %3454 = vst [vmem:[#allocation2 + $0x370] sm:$0xff] %v3446
    %3455 = vst [vmem:[#allocation2 + $0x378] sm:$0xff] %v3447
    %v3456 = vld [vmem:[#allocation3 + $0x370] sm:$0xff]
    %v3457 = vld [vmem:[#allocation3 + $0x378] sm:$0xff]
    %v3458 = vld [vmem:[#allocation3 + $0x380] sm:$0xff]
    %v3459 = vld [vmem:[#allocation3 + $0x388] sm:$0xff]
    %v3460 = vld [vmem:[#allocation3 + $0x390] sm:$0xff]
    %v3461 = vld [vmem:[#allocation3 + $0x398] sm:$0xff]
    %v3462 = vld [vmem:[#allocation3 + $0x3a0] sm:$0xff]
    %v3463 = vld [vmem:[#allocation3 + $0x3a8] sm:$0xff]
    %3464 = vst [vmem:[#allocation2 + $0x380] sm:$0xff] %v3456
    %3465 = vst [vmem:[#allocation2 + $0x388] sm:$0xff] %v3457
    %3466 = vst [vmem:[#allocation2 + $0x390] sm:$0xff] %v3458
    %3467 = vst [vmem:[#allocation2 + $0x398] sm:$0xff] %v3459
    %3468 = vst [vmem:[#allocation2 + $0x3a0] sm:$0xff] %v3460
    %3469 = vst [vmem:[#allocation2 + $0x3a8] sm:$0xff] %v3461
    %3470 = vst [vmem:[#allocation2 + $0x3b0] sm:$0xff] %v3462
    %3471 = vst [vmem:[#allocation2 + $0x3b8] sm:$0xff] %v3463
    %v3472 = vld [vmem:[#allocation3 + $0x378] sm:$0xff]
    %v3473 = vld [vmem:[#allocation3 + $0x380] sm:$0xff]
    %v3474 = vld [vmem:[#allocation3 + $0x388] sm:$0xff]
    %v3475 = vld [vmem:[#allocation3 + $0x390] sm:$0xff]
    %v3476 = vld [vmem:[#allocation3 + $0x398] sm:$0xff]
    %v3477 = vld [vmem:[#allocation3 + $0x3a0] sm:$0xff]
    %v3478 = vld [vmem:[#allocation3 + $0x3a8] sm:$0xff]
    %v3479 = vld [vmem:[#allocation3 + $0x3b0] sm:$0xff]
    %3480 = vst [vmem:[#allocation2 + $0x3c0] sm:$0xff] %v3472
    %3481 = vst [vmem:[#allocation2 + $0x3c8] sm:$0xff] %v3473
    %3482 = vst [vmem:[#allocation2 + $0x3d0] sm:$0xff] %v3474
    %3483 = vst [vmem:[#allocation2 + $0x3d8] sm:$0xff] %v3475
    %3484 = vst [vmem:[#allocation2 + $0x3e0] sm:$0xff] %v3476
    %3485 = vst [vmem:[#allocation2 + $0x3e8] sm:$0xff] %v3477
    %3486 = vst [vmem:[#allocation2 + $0x3f0] sm:$0xff] %v3478
    %3487 = vst [vmem:[#allocation2 + $0x3f8] sm:$0xff] %v3479
    %v3488 = vld [vmem:[#allocation3 + $0x380] sm:$0xff]
    %v3489 = vld [vmem:[#allocation3 + $0x388] sm:$0xff]
    %v3490 = vld [vmem:[#allocation3 + $0x390] sm:$0xff]
    %v3491 = vld [vmem:[#allocation3 + $0x398] sm:$0xff]
    %v3492 = vld [vmem:[#allocation3 + $0x3a0] sm:$0xff]
    %v3493 = vld [vmem:[#allocation3 + $0x3a8] sm:$0xff]
    %v3494 = vld [vmem:[#allocation3 + $0x3b0] sm:$0xff]
    %v3495 = vld [vmem:[#allocation3 + $0x3b8] sm:$0xff]
    %3496 = vst [vmem:[#allocation2 + $0x400] sm:$0xff] %v3488
    %3497 = vst [vmem:[#allocation2 + $0x408] sm:$0xff] %v3489
    %3498 = vst [vmem:[#allocation2 + $0x410] sm:$0xff] %v3490
    %3499 = vst [vmem:[#allocation2 + $0x418] sm:$0xff] %v3491
    %3500 = vst [vmem:[#allocation2 + $0x420] sm:$0xff] %v3492
    %3501 = vst [vmem:[#allocation2 + $0x428] sm:$0xff] %v3493
    %3502 = vst [vmem:[#allocation2 + $0x430] sm:$0xff] %v3494
    %3503 = vst [vmem:[#allocation2 + $0x438] sm:$0xff] %v3495
    %v3504 = vld [vmem:[#allocation3 + $0x388] sm:$0xff]
    %v3505 = vld [vmem:[#allocation3 + $0x390] sm:$0xff]
    %v3506 = vld [vmem:[#allocation3 + $0x398] sm:$0xff]
    %v3507 = vld [vmem:[#allocation3 + $0x3a0] sm:$0xff]
    %v3508 = vld [vmem:[#allocation3 + $0x3a8] sm:$0xff]
    %v3509 = vld [vmem:[#allocation3 + $0x3b0] sm:$0xff]
    %v3510 = vld [vmem:[#allocation3 + $0x3b8] sm:$0xff]
    %v3511 = vld [vmem:[#allocation3 + $0x3c0] sm:$0xff]
    %3512 = vst [vmem:[#allocation2 + $0x440] sm:$0xff] %v3504
    %3513 = vst [vmem:[#allocation2 + $0x448] sm:$0xff] %v3505
    %3514 = vst [vmem:[#allocation2 + $0x450] sm:$0xff] %v3506
    %3515 = vst [vmem:[#allocation2 + $0x458] sm:$0xff] %v3507
    %3516 = vst [vmem:[#allocation2 + $0x460] sm:$0xff] %v3508
    %3517 = vst [vmem:[#allocation2 + $0x468] sm:$0xff] %v3509
    %3518 = vst [vmem:[#allocation2 + $0x470] sm:$0xff] %v3510
    %3519 = vst [vmem:[#allocation2 + $0x478] sm:$0xff] %v3511
    %v3520 = vld [vmem:[#allocation3 + $0x390] sm:$0xff]
    %v3521 = vld [vmem:[#allocation3 + $0x398] sm:$0xff]
    %v3522 = vld [vmem:[#allocation3 + $0x3a0] sm:$0xff]
    %v3523 = vld [vmem:[#allocation3 + $0x3a8] sm:$0xff]
    %v3524 = vld [vmem:[#allocation3 + $0x3b0] sm:$0xff]
    %v3525 = vld [vmem:[#allocation3 + $0x3b8] sm:$0xff]
    %v3526 = vld [vmem:[#allocation3 + $0x3c0] sm:$0xff]
    %v3527 = vld [vmem:[#allocation3 + $0x3c8] sm:$0xff]
    %3528 = vst [vmem:[#allocation2 + $0x480] sm:$0xff] %v3520
    %3529 = vst [vmem:[#allocation2 + $0x488] sm:$0xff] %v3521
    %3530 = vst [vmem:[#allocation2 + $0x490] sm:$0xff] %v3522
    %3531 = vst [vmem:[#allocation2 + $0x498] sm:$0xff] %v3523
    %3532 = vst [vmem:[#allocation2 + $0x4a0] sm:$0xff] %v3524
    %3533 = vst [vmem:[#allocation2 + $0x4a8] sm:$0xff] %v3525
    %3534 = vst [vmem:[#allocation2 + $0x4b0] sm:$0xff] %v3526
    %3535 = vst [vmem:[#allocation2 + $0x4b8] sm:$0xff] %v3527
    %v3536 = vld [vmem:[#allocation3 + $0x398] sm:$0xff]
    %v3537 = vld [vmem:[#allocation3 + $0x3a0] sm:$0xff]
    %v3538 = vld [vmem:[#allocation3 + $0x3a8] sm:$0xff]
    %v3539 = vld [vmem:[#allocation3 + $0x3b0] sm:$0xff]
    %v3540 = vld [vmem:[#allocation3 + $0x3b8] sm:$0xff]
    %v3541 = vld [vmem:[#allocation3 + $0x3c0] sm:$0xff]
    %v3542 = vld [vmem:[#allocation3 + $0x3c8] sm:$0xff]
    %v3543 = vld [vmem:[#allocation3 + $0x3d0] sm:$0xff]
    %3544 = vst [vmem:[#allocation2 + $0x4c0] sm:$0xff] %v3536
    %3545 = vst [vmem:[#allocation2 + $0x4c8] sm:$0xff] %v3537
    %3546 = vst [vmem:[#allocation2 + $0x4d0] sm:$0xff] %v3538
    %3547 = vst [vmem:[#allocation2 + $0x4d8] sm:$0xff] %v3539
    %3548 = vst [vmem:[#allocation2 + $0x4e0] sm:$0xff] %v3540
    %3549 = vst [vmem:[#allocation2 + $0x4e8] sm:$0xff] %v3541
    %3550 = vst [vmem:[#allocation2 + $0x4f0] sm:$0xff] %v3542
    %3551 = vst [vmem:[#allocation2 + $0x4f8] sm:$0xff] %v3543
    %v3552 = vld [vmem:[#allocation3 + $0x3a0] sm:$0xff]
    %v3553 = vld [vmem:[#allocation3 + $0x3a8] sm:$0xff]
    %v3554 = vld [vmem:[#allocation3 + $0x3b0] sm:$0xff]
    %v3555 = vld [vmem:[#allocation3 + $0x3b8] sm:$0xff]
    %v3556 = vld [vmem:[#allocation3 + $0x3c0] sm:$0xff]
    %v3557 = vld [vmem:[#allocation3 + $0x3c8] sm:$0xff]
    %v3558 = vld [vmem:[#allocation3 + $0x3d0] sm:$0xff]
    %v3559 = vld [vmem:[#allocation3 + $0x3d8] sm:$0xff]
    %3560 = vst [vmem:[#allocation2 + $0x500] sm:$0xff] %v3552
    %3561 = vst [vmem:[#allocation2 + $0x508] sm:$0xff] %v3553
    %3562 = vst [vmem:[#allocation2 + $0x510] sm:$0xff] %v3554
    %3563 = vst [vmem:[#allocation2 + $0x518] sm:$0xff] %v3555
    %3564 = vst [vmem:[#allocation2 + $0x520] sm:$0xff] %v3556
    %3565 = vst [vmem:[#allocation2 + $0x528] sm:$0xff] %v3557
    %3566 = vst [vmem:[#allocation2 + $0x530] sm:$0xff] %v3558
    %3567 = vst [vmem:[#allocation2 + $0x538] sm:$0xff] %v3559
    %v3568 = vld [vmem:[#allocation3 + $0x3a8] sm:$0xff]
    %v3569 = vld [vmem:[#allocation3 + $0x3b0] sm:$0xff]
    %v3570 = vld [vmem:[#allocation3 + $0x3b8] sm:$0xff]
    %v3571 = vld [vmem:[#allocation3 + $0x3c0] sm:$0xff]
    %v3572 = vld [vmem:[#allocation3 + $0x3c8] sm:$0xff]
    %v3573 = vld [vmem:[#allocation3 + $0x3d0] sm:$0xff]
    %v3574 = vld [vmem:[#allocation3 + $0x3d8] sm:$0xff]
    %v3575 = vld [vmem:[#allocation3 + $0x3e0] sm:$0xff]
    %3576 = vst [vmem:[#allocation2 + $0x540] sm:$0xff] %v3568
    %3577 = vst [vmem:[#allocation2 + $0x548] sm:$0xff] %v3569
    %3578 = vst [vmem:[#allocation2 + $0x550] sm:$0xff] %v3570
    %3579 = vst [vmem:[#allocation2 + $0x558] sm:$0xff] %v3571
    %3580 = vst [vmem:[#allocation2 + $0x560] sm:$0xff] %v3572
    %3581 = vst [vmem:[#allocation2 + $0x568] sm:$0xff] %v3573
    %3582 = vst [vmem:[#allocation2 + $0x570] sm:$0xff] %v3574
    %3583 = vst [vmem:[#allocation2 + $0x578] sm:$0xff] %v3575
    %v3584 = vld [vmem:[#allocation3 + $0x3b0] sm:$0xff]
    %v3585 = vld [vmem:[#allocation3 + $0x3b8] sm:$0xff]
    %v3586 = vld [vmem:[#allocation3 + $0x3c0] sm:$0xff]
    %v3587 = vld [vmem:[#allocation3 + $0x3c8] sm:$0xff]
    %v3588 = vld [vmem:[#allocation3 + $0x3d0] sm:$0xff]
    %v3589 = vld [vmem:[#allocation3 + $0x3d8] sm:$0xff]
    %v3590 = vld [vmem:[#allocation3 + $0x3e0] sm:$0xff]
    %v3591 = vld [vmem:[#allocation3 + $0x3e8] sm:$0xff]
    %3592 = vst [vmem:[#allocation2 + $0x580] sm:$0xff] %v3584
    %3593 = vst [vmem:[#allocation2 + $0x588] sm:$0xff] %v3585
    %3594 = vst [vmem:[#allocation2 + $0x590] sm:$0xff] %v3586
    %3595 = vst [vmem:[#allocation2 + $0x598] sm:$0xff] %v3587
    %3596 = vst [vmem:[#allocation2 + $0x5a0] sm:$0xff] %v3588
    %3597 = vst [vmem:[#allocation2 + $0x5a8] sm:$0xff] %v3589
    %3598 = vst [vmem:[#allocation2 + $0x5b0] sm:$0xff] %v3590
    %3599 = vst [vmem:[#allocation2 + $0x5b8] sm:$0xff] %v3591
    %v3600 = vld [vmem:[#allocation3 + $0x3b8] sm:$0xff]
    %v3601 = vld [vmem:[#allocation3 + $0x3c0] sm:$0xff]
    %v3602 = vld [vmem:[#allocation3 + $0x3c8] sm:$0xff]
    %v3603 = vld [vmem:[#allocation3 + $0x3d0] sm:$0xff]
    %v3604 = vld [vmem:[#allocation3 + $0x3d8] sm:$0xff]
    %v3605 = vld [vmem:[#allocation3 + $0x3e0] sm:$0xff]
    %v3606 = vld [vmem:[#allocation3 + $0x3e8] sm:$0xff]
    %v3607 = vld [vmem:[#allocation3 + $0x3f0] sm:$0xff]
    %3608 = vst [vmem:[#allocation2 + $0x5c0] sm:$0xff] %v3600
    %3609 = vst [vmem:[#allocation2 + $0x5c8] sm:$0xff] %v3601
    %3610 = vst [vmem:[#allocation2 + $0x5d0] sm:$0xff] %v3602
    %3611 = vst [vmem:[#allocation2 + $0x5d8] sm:$0xff] %v3603
    %3612 = vst [vmem:[#allocation2 + $0x5e0] sm:$0xff] %v3604
    %3613 = vst [vmem:[#allocation2 + $0x5e8] sm:$0xff] %v3605
    %3614 = vst [vmem:[#allocation2 + $0x5f0] sm:$0xff] %v3606
    %3615 = vst [vmem:[#allocation2 + $0x5f8] sm:$0xff] %v3607
    %v3616 = vld [vmem:[#allocation3 + $0x3c0] sm:$0xff]
    %v3617 = vld [vmem:[#allocation3 + $0x3c8] sm:$0xff]
    %v3618 = vld [vmem:[#allocation3 + $0x3d0] sm:$0xff]
    %v3619 = vld [vmem:[#allocation3 + $0x3d8] sm:$0xff]
    %v3620 = vld [vmem:[#allocation3 + $0x3e0] sm:$0xff]
    %v3621 = vld [vmem:[#allocation3 + $0x3e8] sm:$0xff]
    %v3622 = vld [vmem:[#allocation3 + $0x3f0] sm:$0xff]
    %v3623 = vld [vmem:[#allocation3 + $0x3f8] sm:$0xff]
    %3624 = vst [vmem:[#allocation2 + $0x600] sm:$0xff] %v3616
    %3625 = vst [vmem:[#allocation2 + $0x608] sm:$0xff] %v3617
    %3626 = vst [vmem:[#allocation2 + $0x610] sm:$0xff] %v3618
    %3627 = vst [vmem:[#allocation2 + $0x618] sm:$0xff] %v3619
    %3628 = vst [vmem:[#allocation2 + $0x620] sm:$0xff] %v3620
    %3629 = vst [vmem:[#allocation2 + $0x628] sm:$0xff] %v3621
    %3630 = vst [vmem:[#allocation2 + $0x630] sm:$0xff] %v3622
    %3631 = vst [vmem:[#allocation2 + $0x638] sm:$0xff] %v3623
    %v3632 = vld [vmem:[#allocation3 + $0x3c8] sm:$0xff]
    %v3633 = vld [vmem:[#allocation3 + $0x3d0] sm:$0xff]
    %v3634 = vld [vmem:[#allocation3 + $0x3d8] sm:$0xff]
    %v3635 = vld [vmem:[#allocation3 + $0x3e0] sm:$0xff]
    %v3636 = vld [vmem:[#allocation3 + $0x3e8] sm:$0xff]
    %v3637 = vld [vmem:[#allocation3 + $0x3f0] sm:$0xff]
    %v3638 = vld [vmem:[#allocation3 + $0x3f8] sm:$0xff]
    %v3639 = vld [vmem:[#allocation3 + $0x400] sm:$0xff]
    %3640 = vst [vmem:[#allocation2 + $0x640] sm:$0xff] %v3632
    %3641 = vst [vmem:[#allocation2 + $0x648] sm:$0xff] %v3633
    %3642 = vst [vmem:[#allocation2 + $0x650] sm:$0xff] %v3634
    %3643 = vst [vmem:[#allocation2 + $0x658] sm:$0xff] %v3635
    %3644 = vst [vmem:[#allocation2 + $0x660] sm:$0xff] %v3636
    %3645 = vst [vmem:[#allocation2 + $0x668] sm:$0xff] %v3637
    %3646 = vst [vmem:[#allocation2 + $0x670] sm:$0xff] %v3638
    %3647 = vst [vmem:[#allocation2 + $0x678] sm:$0xff] %v3639
    %v3648 = vld [vmem:[#allocation3 + $0x3d0] sm:$0xff]
    %v3649 = vld [vmem:[#allocation3 + $0x3d8] sm:$0xff]
    %v3650 = vld [vmem:[#allocation3 + $0x3e0] sm:$0xff]
    %v3651 = vld [vmem:[#allocation3 + $0x3e8] sm:$0xff]
    %v3652 = vld [vmem:[#allocation3 + $0x3f0] sm:$0xff]
    %v3653 = vld [vmem:[#allocation3 + $0x3f8] sm:$0xff]
    %v3654 = vld [vmem:[#allocation3 + $0x400] sm:$0xff]
    %v3655 = vld [vmem:[#allocation3 + $0x408] sm:$0xff]
    %3656 = vst [vmem:[#allocation2 + $0x680] sm:$0xff] %v3648
    %3657 = vst [vmem:[#allocation2 + $0x688] sm:$0xff] %v3649
    %3658 = vst [vmem:[#allocation2 + $0x690] sm:$0xff] %v3650
    %3659 = vst [vmem:[#allocation2 + $0x698] sm:$0xff] %v3651
    %3660 = vst [vmem:[#allocation2 + $0x6a0] sm:$0xff] %v3652
    %3661 = vst [vmem:[#allocation2 + $0x6a8] sm:$0xff] %v3653
    %3662 = vst [vmem:[#allocation2 + $0x6b0] sm:$0xff] %v3654
    %3663 = vst [vmem:[#allocation2 + $0x6b8] sm:$0xff] %v3655
    %v3664 = vld [vmem:[#allocation3 + $0x3d8] sm:$0xff]
    %v3665 = vld [vmem:[#allocation3 + $0x3e0] sm:$0xff]
    %v3666 = vld [vmem:[#allocation3 + $0x3e8] sm:$0xff]
    %v3667 = vld [vmem:[#allocation3 + $0x3f0] sm:$0xff]
    %v3668 = vld [vmem:[#allocation3 + $0x3f8] sm:$0xff]
    %v3669 = vld [vmem:[#allocation3 + $0x400] sm:$0xff]
    %v3670 = vld [vmem:[#allocation3 + $0x408] sm:$0xff]
    %v3671 = vld [vmem:[#allocation3 + $0x410] sm:$0xff]
    %3672 = vst [vmem:[#allocation2 + $0x6c0] sm:$0xff] %v3664
    %3673 = vst [vmem:[#allocation2 + $0x6c8] sm:$0xff] %v3665
    %3674 = vst [vmem:[#allocation2 + $0x6d0] sm:$0xff] %v3666
    %3675 = vst [vmem:[#allocation2 + $0x6d8] sm:$0xff] %v3667
    %3676 = vst [vmem:[#allocation2 + $0x6e0] sm:$0xff] %v3668
    %3677 = vst [vmem:[#allocation2 + $0x6e8] sm:$0xff] %v3669
    %3678 = vst [vmem:[#allocation2 + $0x6f0] sm:$0xff] %v3670
    %3679 = vst [vmem:[#allocation2 + $0x6f8] sm:$0xff] %v3671
    %v3680 = vld [vmem:[#allocation3 + $0x3e0] sm:$0xff]
    %v3681 = vld [vmem:[#allocation3 + $0x3e8] sm:$0xff]
    %v3682 = vld [vmem:[#allocation3 + $0x3f0] sm:$0xff]
    %v3683 = vld [vmem:[#allocation3 + $0x3f8] sm:$0xff]
    %v3684 = vld [vmem:[#allocation3 + $0x400] sm:$0xff]
    %v3685 = vld [vmem:[#allocation3 + $0x408] sm:$0xff]
    %v3686 = vld [vmem:[#allocation3 + $0x410] sm:$0xff]
    %v3687 = vld [vmem:[#allocation3 + $0x418] sm:$0xff]
    %3688 = vst [vmem:[#allocation2 + $0x700] sm:$0xff] %v3680
    %3689 = vst [vmem:[#allocation2 + $0x708] sm:$0xff] %v3681
    %3690 = vst [vmem:[#allocation2 + $0x710] sm:$0xff] %v3682
    %3691 = vst [vmem:[#allocation2 + $0x718] sm:$0xff] %v3683
    %3692 = vst [vmem:[#allocation2 + $0x720] sm:$0xff] %v3684
    %3693 = vst [vmem:[#allocation2 + $0x728] sm:$0xff] %v3685
    %3694 = vst [vmem:[#allocation2 + $0x730] sm:$0xff] %v3686
    %3695 = vst [vmem:[#allocation2 + $0x738] sm:$0xff] %v3687
    %v3696 = vld [vmem:[#allocation3 + $0x3e8] sm:$0xff]
    %v3697 = vld [vmem:[#allocation3 + $0x3f0] sm:$0xff]
    %v3698 = vld [vmem:[#allocation3 + $0x3f8] sm:$0xff]
    %v3699 = vld [vmem:[#allocation3 + $0x400] sm:$0xff]
    %v3700 = vld [vmem:[#allocation3 + $0x408] sm:$0xff]
    %v3701 = vld [vmem:[#allocation3 + $0x410] sm:$0xff]
    %v3702 = vld [vmem:[#allocation3 + $0x418] sm:$0xff]
    %v3703 = vld [vmem:[#allocation3 + $0x420] sm:$0xff]
    %3704 = vst [vmem:[#allocation2 + $0x740] sm:$0xff] %v3696
    %3705 = vst [vmem:[#allocation2 + $0x748] sm:$0xff] %v3697
    %3706 = vst [vmem:[#allocation2 + $0x750] sm:$0xff] %v3698
    %3707 = vst [vmem:[#allocation2 + $0x758] sm:$0xff] %v3699
    %3708 = vst [vmem:[#allocation2 + $0x760] sm:$0xff] %v3700
    %3709 = vst [vmem:[#allocation2 + $0x768] sm:$0xff] %v3701
    %3710 = vst [vmem:[#allocation2 + $0x770] sm:$0xff] %v3702
    %3711 = vst [vmem:[#allocation2 + $0x778] sm:$0xff] %v3703
    %v3712 = vld [vmem:[#allocation3 + $0x3f0] sm:$0xff]
    %v3713 = vld [vmem:[#allocation3 + $0x3f8] sm:$0xff]
    %v3714 = vld [vmem:[#allocation3 + $0x400] sm:$0xff]
    %v3715 = vld [vmem:[#allocation3 + $0x408] sm:$0xff]
    %v3716 = vld [vmem:[#allocation3 + $0x410] sm:$0xff]
    %v3717 = vld [vmem:[#allocation3 + $0x418] sm:$0xff]
    %v3718 = vld [vmem:[#allocation3 + $0x420] sm:$0xff]
    %v3719 = vld [vmem:[#allocation3 + $0x428] sm:$0xff]
    %3720 = vst [vmem:[#allocation2 + $0x780] sm:$0xff] %v3712
    %3721 = vst [vmem:[#allocation2 + $0x788] sm:$0xff] %v3713
    %3722 = vst [vmem:[#allocation2 + $0x790] sm:$0xff] %v3714
    %3723 = vst [vmem:[#allocation2 + $0x798] sm:$0xff] %v3715
    %3724 = vst [vmem:[#allocation2 + $0x7a0] sm:$0xff] %v3716
    %3725 = vst [vmem:[#allocation2 + $0x7a8] sm:$0xff] %v3717
    %3726 = vst [vmem:[#allocation2 + $0x7b0] sm:$0xff] %v3718
    %3727 = vst [vmem:[#allocation2 + $0x7b8] sm:$0xff] %v3719
    %v3728 = vld [vmem:[#allocation3 + $0x3f8] sm:$0xff]
    %v3729 = vld [vmem:[#allocation3 + $0x400] sm:$0xff]
    %v3730 = vld [vmem:[#allocation3 + $0x408] sm:$0xff]
    %v3731 = vld [vmem:[#allocation3 + $0x410] sm:$0xff]
    %v3732 = vld [vmem:[#allocation3 + $0x418] sm:$0xff]
    %v3733 = vld [vmem:[#allocation3 + $0x420] sm:$0xff]
    %v3734 = vld [vmem:[#allocation3 + $0x428] sm:$0xff]
    %v3735 = vld [vmem:[#allocation3 + $0x430] sm:$0xff]
    %3736 = vst [vmem:[#allocation2 + $0x7c0] sm:$0xff] %v3728
    %3737 = vst [vmem:[#allocation2 + $0x7c8] sm:$0xff] %v3729
    %3738 = vst [vmem:[#allocation2 + $0x7d0] sm:$0xff] %v3730
    %3739 = vst [vmem:[#allocation2 + $0x7d8] sm:$0xff] %v3731
    %3740 = vst [vmem:[#allocation2 + $0x7e0] sm:$0xff] %v3732
    %3741 = vst [vmem:[#allocation2 + $0x7e8] sm:$0xff] %v3733
    %3742 = vst [vmem:[#allocation2 + $0x7f0] sm:$0xff] %v3734
    %3743 = vst [vmem:[#allocation2 + $0x7f8] sm:$0xff] %v3735
    %v3744 = vld [vmem:[#allocation6 + $0x30] sm:$0xff]
    %v3745 = vld [vmem:[#allocation6 + $0x38] sm:$0xff]
    %v3746 = vld [vmem:[#allocation2] sm:$0xff]
    %v3747 = vld [vmem:[#allocation2 + $0x8] sm:$0xff]
    %v3748 = vld [vmem:[#allocation2 + $0x10] sm:$0xff]
    %v3749 = vld [vmem:[#allocation2 + $0x18] sm:$0xff]
    %v3750 = vld [vmem:[#allocation2 + $0x20] sm:$0xff]
    %v3751 = vld [vmem:[#allocation2 + $0x28] sm:$0xff]
    %v3752 = vld [vmem:[#allocation2 + $0x30] sm:$0xff]
    %v3753 = vld [vmem:[#allocation2 + $0x38] sm:$0xff]
    %v3754 = vld [vmem:[#allocation2 + $0x40] sm:$0xff]
    %v3755 = vld [vmem:[#allocation2 + $0x48] sm:$0xff]
    %v3756 = vld [vmem:[#allocation2 + $0x50] sm:$0xff]
    %v3757 = vld [vmem:[#allocation2 + $0x58] sm:$0xff]
    %v3758 = vld [vmem:[#allocation2 + $0x60] sm:$0xff]
    %v3759 = vld [vmem:[#allocation2 + $0x68] sm:$0xff]
    %v3760 = vld [vmem:[#allocation2 + $0x70] sm:$0xff]
    %v3761 = vld [vmem:[#allocation2 + $0x78] sm:$0xff]
    %v3762 = vld [vmem:[#allocation2 + $0x80] sm:$0xff]
    %v3763 = vld [vmem:[#allocation2 + $0x88] sm:$0xff]
    %v3764 = vld [vmem:[#allocation2 + $0x90] sm:$0xff]
    %v3765 = vld [vmem:[#allocation2 + $0x98] sm:$0xff]
    %v3766 = vld [vmem:[#allocation2 + $0xa0] sm:$0xff]
    %v3767 = vld [vmem:[#allocation2 + $0xa8] sm:$0xff]
    %v3768 = vld [vmem:[#allocation2 + $0xb0] sm:$0xff]
    %v3769 = vld [vmem:[#allocation2 + $0xb8] sm:$0xff]
    %v3770 = vld [vmem:[#allocation2 + $0xc0] sm:$0xff]
    %v3771 = vld [vmem:[#allocation2 + $0xc8] sm:$0xff]
    %v3772 = vld [vmem:[#allocation2 + $0xd0] sm:$0xff]
    %v3773 = vld [vmem:[#allocation2 + $0xd8] sm:$0xff]
    %v3774 = vld [vmem:[#allocation2 + $0xe0] sm:$0xff]
    %v3775 = vld [vmem:[#allocation2 + $0xe8] sm:$0xff]
    %v3776 = vld [vmem:[#allocation2 + $0xf0] sm:$0xff]
    %v3777 = vld [vmem:[#allocation2 + $0xf8] sm:$0xff]
    %v3778 = vld [vmem:[#allocation2 + $0x100] sm:$0xff]
    %v3779 = vld [vmem:[#allocation2 + $0x108] sm:$0xff]
    %v3780 = vld [vmem:[#allocation2 + $0x110] sm:$0xff]
    %v3781 = vld [vmem:[#allocation2 + $0x118] sm:$0xff]
    %v3782 = vld [vmem:[#allocation2 + $0x120] sm:$0xff]
    %v3783 = vld [vmem:[#allocation2 + $0x128] sm:$0xff]
    %v3784 = vld [vmem:[#allocation2 + $0x130] sm:$0xff]
    %v3785 = vld [vmem:[#allocation2 + $0x138] sm:$0xff]
    %v3786 = vld [vmem:[#allocation2 + $0x140] sm:$0xff]
    %v3787 = vld [vmem:[#allocation2 + $0x148] sm:$0xff]
    %v3788 = vld [vmem:[#allocation2 + $0x150] sm:$0xff]
    %v3789 = vld [vmem:[#allocation2 + $0x158] sm:$0xff]
    %v3790 = vld [vmem:[#allocation2 + $0x160] sm:$0xff]
    %v3791 = vld [vmem:[#allocation2 + $0x168] sm:$0xff]
    %v3792 = vld [vmem:[#allocation2 + $0x170] sm:$0xff]
    %v3793 = vld [vmem:[#allocation2 + $0x178] sm:$0xff]
    %v3794 = vld [vmem:[#allocation2 + $0x180] sm:$0xff]
    %v3795 = vld [vmem:[#allocation2 + $0x188] sm:$0xff]
    %v3796 = vld [vmem:[#allocation2 + $0x190] sm:$0xff]
    %v3797 = vld [vmem:[#allocation2 + $0x198] sm:$0xff]
    %v3798 = vld [vmem:[#allocation2 + $0x1a0] sm:$0xff]
    %v3799 = vld [vmem:[#allocation2 + $0x1a8] sm:$0xff]
    %v3800 = vld [vmem:[#allocation2 + $0x1b0] sm:$0xff]
    %v3801 = vld [vmem:[#allocation2 + $0x1b8] sm:$0xff]
    %v3802 = vld [vmem:[#allocation2 + $0x1c0] sm:$0xff]
    %v3803 = vld [vmem:[#allocation2 + $0x1c8] sm:$0xff]
    %v3804 = vld [vmem:[#allocation2 + $0x1d0] sm:$0xff]
    %v3805 = vld [vmem:[#allocation2 + $0x1d8] sm:$0xff]
    %v3806 = vld [vmem:[#allocation2 + $0x1e0] sm:$0xff]
    %v3807 = vld [vmem:[#allocation2 + $0x1e8] sm:$0xff]
    %v3808 = vld [vmem:[#allocation2 + $0x1f0] sm:$0xff]
    %v3809 = vld [vmem:[#allocation2 + $0x1f8] sm:$0xff]
    %v3810 = vld [vmem:[#allocation2 + $0x200] sm:$0xff]
    %v3811 = vld [vmem:[#allocation2 + $0x208] sm:$0xff]
    %v3812 = vld [vmem:[#allocation2 + $0x210] sm:$0xff]
    %v3813 = vld [vmem:[#allocation2 + $0x218] sm:$0xff]
    %v3814 = vld [vmem:[#allocation2 + $0x220] sm:$0xff]
    %v3815 = vld [vmem:[#allocation2 + $0x228] sm:$0xff]
    %v3816 = vld [vmem:[#allocation2 + $0x230] sm:$0xff]
    %v3817 = vld [vmem:[#allocation2 + $0x238] sm:$0xff]
    %v3818 = vld [vmem:[#allocation2 + $0x240] sm:$0xff]
    %v3819 = vld [vmem:[#allocation2 + $0x248] sm:$0xff]
    %v3820 = vld [vmem:[#allocation2 + $0x250] sm:$0xff]
    %v3821 = vld [vmem:[#allocation2 + $0x258] sm:$0xff]
    %v3822 = vld [vmem:[#allocation2 + $0x260] sm:$0xff]
    %v3823 = vld [vmem:[#allocation2 + $0x268] sm:$0xff]
    %v3824 = vld [vmem:[#allocation2 + $0x270] sm:$0xff]
    %v3825 = vld [vmem:[#allocation2 + $0x278] sm:$0xff]
    %v3826 = vld [vmem:[#allocation2 + $0x280] sm:$0xff]
    %v3827 = vld [vmem:[#allocation2 + $0x288] sm:$0xff]
    %v3828 = vld [vmem:[#allocation2 + $0x290] sm:$0xff]
    %v3829 = vld [vmem:[#allocation2 + $0x298] sm:$0xff]
    %v3830 = vld [vmem:[#allocation2 + $0x2a0] sm:$0xff]
    %v3831 = vld [vmem:[#allocation2 + $0x2a8] sm:$0xff]
    %v3832 = vld [vmem:[#allocation2 + $0x2b0] sm:$0xff]
    %v3833 = vld [vmem:[#allocation2 + $0x2b8] sm:$0xff]
    %v3834 = vld [vmem:[#allocation2 + $0x2c0] sm:$0xff]
    %v3835 = vld [vmem:[#allocation2 + $0x2c8] sm:$0xff]
    %v3836 = vld [vmem:[#allocation2 + $0x2d0] sm:$0xff]
    %v3837 = vld [vmem:[#allocation2 + $0x2d8] sm:$0xff]
    %v3838 = vld [vmem:[#allocation2 + $0x2e0] sm:$0xff]
    %v3839 = vld [vmem:[#allocation2 + $0x2e8] sm:$0xff]
    %v3840 = vld [vmem:[#allocation2 + $0x2f0] sm:$0xff]
    %v3841 = vld [vmem:[#allocation2 + $0x2f8] sm:$0xff]
    %v3842 = vld [vmem:[#allocation2 + $0x300] sm:$0xff]
    %v3843 = vld [vmem:[#allocation2 + $0x308] sm:$0xff]
    %v3844 = vld [vmem:[#allocation2 + $0x310] sm:$0xff]
    %v3845 = vld [vmem:[#allocation2 + $0x318] sm:$0xff]
    %v3846 = vld [vmem:[#allocation2 + $0x320] sm:$0xff]
    %v3847 = vld [vmem:[#allocation2 + $0x328] sm:$0xff]
    %v3848 = vld [vmem:[#allocation2 + $0x330] sm:$0xff]
    %v3849 = vld [vmem:[#allocation2 + $0x338] sm:$0xff]
    %v3850 = vld [vmem:[#allocation2 + $0x340] sm:$0xff]
    %v3851 = vld [vmem:[#allocation2 + $0x348] sm:$0xff]
    %v3852 = vld [vmem:[#allocation2 + $0x350] sm:$0xff]
    %v3853 = vld [vmem:[#allocation2 + $0x358] sm:$0xff]
    %v3854 = vld [vmem:[#allocation2 + $0x360] sm:$0xff]
    %v3855 = vld [vmem:[#allocation2 + $0x368] sm:$0xff]
    %v3856 = vld [vmem:[#allocation2 + $0x370] sm:$0xff]
    %v3857 = vld [vmem:[#allocation2 + $0x378] sm:$0xff]
    %v3858 = vld [vmem:[#allocation2 + $0x380] sm:$0xff]
    %v3859 = vld [vmem:[#allocation2 + $0x388] sm:$0xff]
    %v3860 = vld [vmem:[#allocation2 + $0x390] sm:$0xff]
    %v3861 = vld [vmem:[#allocation2 + $0x398] sm:$0xff]
    %v3862 = vld [vmem:[#allocation2 + $0x3a0] sm:$0xff]
    %v3863 = vld [vmem:[#allocation2 + $0x3a8] sm:$0xff]
    %v3864 = vld [vmem:[#allocation2 + $0x3b0] sm:$0xff]
    %v3865 = vld [vmem:[#allocation2 + $0x3b8] sm:$0xff]
    %v3866 = vld [vmem:[#allocation2 + $0x3c0] sm:$0xff]
    %v3867 = vld [vmem:[#allocation2 + $0x3c8] sm:$0xff]
    %v3868 = vld [vmem:[#allocation2 + $0x3d0] sm:$0xff]
    %v3869 = vld [vmem:[#allocation2 + $0x3d8] sm:$0xff]
    %v3870 = vld [vmem:[#allocation2 + $0x3e0] sm:$0xff]
    %v3871 = vld [vmem:[#allocation2 + $0x3e8] sm:$0xff]
    %v3872 = vld [vmem:[#allocation2 + $0x3f0] sm:$0xff]
    %v3873 = vld [vmem:[#allocation2 + $0x3f8] sm:$0xff]
    %v3874 = vld [vmem:[#allocation2 + $0x400] sm:$0xff]
    %v3875 = vld [vmem:[#allocation2 + $0x408] sm:$0xff]
    %v3876 = vld [vmem:[#allocation2 + $0x410] sm:$0xff]
    %v3877 = vld [vmem:[#allocation2 + $0x418] sm:$0xff]
    %v3878 = vld [vmem:[#allocation2 + $0x420] sm:$0xff]
    %v3879 = vld [vmem:[#allocation2 + $0x428] sm:$0xff]
    %v3880 = vld [vmem:[#allocation2 + $0x430] sm:$0xff]
    %v3881 = vld [vmem:[#allocation2 + $0x438] sm:$0xff]
    %v3882 = vld [vmem:[#allocation2 + $0x440] sm:$0xff]
    %v3883 = vld [vmem:[#allocation2 + $0x448] sm:$0xff]
    %v3884 = vld [vmem:[#allocation2 + $0x450] sm:$0xff]
    %v3885 = vld [vmem:[#allocation2 + $0x458] sm:$0xff]
    %v3886 = vld [vmem:[#allocation2 + $0x460] sm:$0xff]
    %v3887 = vld [vmem:[#allocation2 + $0x468] sm:$0xff]
    %v3888 = vld [vmem:[#allocation2 + $0x470] sm:$0xff]
    %v3889 = vld [vmem:[#allocation2 + $0x478] sm:$0xff]
    %v3890 = vld [vmem:[#allocation2 + $0x480] sm:$0xff]
    %v3891 = vld [vmem:[#allocation2 + $0x488] sm:$0xff]
    %v3892 = vld [vmem:[#allocation2 + $0x490] sm:$0xff]
    %v3893 = vld [vmem:[#allocation2 + $0x498] sm:$0xff]
    %v3894 = vld [vmem:[#allocation2 + $0x4a0] sm:$0xff]
    %v3895 = vld [vmem:[#allocation2 + $0x4a8] sm:$0xff]
    %v3896 = vld [vmem:[#allocation2 + $0x4b0] sm:$0xff]
    %v3897 = vld [vmem:[#allocation2 + $0x4b8] sm:$0xff]
    %v3898 = vld [vmem:[#allocation2 + $0x4c0] sm:$0xff]
    %v3899 = vld [vmem:[#allocation2 + $0x4c8] sm:$0xff]
    %v3900 = vld [vmem:[#allocation2 + $0x4d0] sm:$0xff]
    %v3901 = vld [vmem:[#allocation2 + $0x4d8] sm:$0xff]
    %v3902 = vld [vmem:[#allocation2 + $0x4e0] sm:$0xff]
    %v3903 = vld [vmem:[#allocation2 + $0x4e8] sm:$0xff]
    %v3904 = vld [vmem:[#allocation2 + $0x4f0] sm:$0xff]
    %v3905 = vld [vmem:[#allocation2 + $0x4f8] sm:$0xff]
    %v3906 = vld [vmem:[#allocation2 + $0x500] sm:$0xff]
    %v3907 = vld [vmem:[#allocation2 + $0x508] sm:$0xff]
    %v3908 = vld [vmem:[#allocation2 + $0x510] sm:$0xff]
    %v3909 = vld [vmem:[#allocation2 + $0x518] sm:$0xff]
    %v3910 = vld [vmem:[#allocation2 + $0x520] sm:$0xff]
    %v3911 = vld [vmem:[#allocation2 + $0x528] sm:$0xff]
    %v3912 = vld [vmem:[#allocation2 + $0x530] sm:$0xff]
    %v3913 = vld [vmem:[#allocation2 + $0x538] sm:$0xff]
    %v3914 = vld [vmem:[#allocation2 + $0x540] sm:$0xff]
    %v3915 = vld [vmem:[#allocation2 + $0x548] sm:$0xff]
    %v3916 = vld [vmem:[#allocation2 + $0x550] sm:$0xff]
    %v3917 = vld [vmem:[#allocation2 + $0x558] sm:$0xff]
    %v3918 = vld [vmem:[#allocation2 + $0x560] sm:$0xff]
    %v3919 = vld [vmem:[#allocation2 + $0x568] sm:$0xff]
    %v3920 = vld [vmem:[#allocation2 + $0x570] sm:$0xff]
    %v3921 = vld [vmem:[#allocation2 + $0x578] sm:$0xff]
    %v3922 = vld [vmem:[#allocation2 + $0x580] sm:$0xff]
    %v3923 = vld [vmem:[#allocation2 + $0x588] sm:$0xff]
    %v3924 = vld [vmem:[#allocation2 + $0x590] sm:$0xff]
    %v3925 = vld [vmem:[#allocation2 + $0x598] sm:$0xff]
    %v3926 = vld [vmem:[#allocation2 + $0x5a0] sm:$0xff]
    %v3927 = vld [vmem:[#allocation2 + $0x5a8] sm:$0xff]
    %v3928 = vld [vmem:[#allocation2 + $0x5b0] sm:$0xff]
    %v3929 = vld [vmem:[#allocation2 + $0x5b8] sm:$0xff]
    %v3930 = vld [vmem:[#allocation2 + $0x5c0] sm:$0xff]
    %v3931 = vld [vmem:[#allocation2 + $0x5c8] sm:$0xff]
    %v3932 = vld [vmem:[#allocation2 + $0x5d0] sm:$0xff]
    %v3933 = vld [vmem:[#allocation2 + $0x5d8] sm:$0xff]
    %v3934 = vld [vmem:[#allocation2 + $0x5e0] sm:$0xff]
    %v3935 = vld [vmem:[#allocation2 + $0x5e8] sm:$0xff]
    %v3936 = vld [vmem:[#allocation2 + $0x5f0] sm:$0xff]
    %v3937 = vld [vmem:[#allocation2 + $0x5f8] sm:$0xff]
    %v3938 = vld [vmem:[#allocation2 + $0x600] sm:$0xff]
    %v3939 = vld [vmem:[#allocation2 + $0x608] sm:$0xff]
    %v3940 = vld [vmem:[#allocation2 + $0x610] sm:$0xff]
    %v3941 = vld [vmem:[#allocation2 + $0x618] sm:$0xff]
    %v3942 = vld [vmem:[#allocation2 + $0x620] sm:$0xff]
    %v3943 = vld [vmem:[#allocation2 + $0x628] sm:$0xff]
    %v3944 = vld [vmem:[#allocation2 + $0x630] sm:$0xff]
    %v3945 = vld [vmem:[#allocation2 + $0x638] sm:$0xff]
    %v3946 = vld [vmem:[#allocation2 + $0x640] sm:$0xff]
    %v3947 = vld [vmem:[#allocation2 + $0x648] sm:$0xff]
    %v3948 = vld [vmem:[#allocation2 + $0x650] sm:$0xff]
    %v3949 = vld [vmem:[#allocation2 + $0x658] sm:$0xff]
    %v3950 = vld [vmem:[#allocation2 + $0x660] sm:$0xff]
    %v3951 = vld [vmem:[#allocation2 + $0x668] sm:$0xff]
    %v3952 = vld [vmem:[#allocation2 + $0x670] sm:$0xff]
    %v3953 = vld [vmem:[#allocation2 + $0x678] sm:$0xff]
    %v3954 = vld [vmem:[#allocation2 + $0x680] sm:$0xff]
    %v3955 = vld [vmem:[#allocation2 + $0x688] sm:$0xff]
    %v3956 = vld [vmem:[#allocation2 + $0x690] sm:$0xff]
    %v3957 = vld [vmem:[#allocation2 + $0x698] sm:$0xff]
    %v3958 = vld [vmem:[#allocation2 + $0x6a0] sm:$0xff]
    %v3959 = vld [vmem:[#allocation2 + $0x6a8] sm:$0xff]
    %v3960 = vld [vmem:[#allocation2 + $0x6b0] sm:$0xff]
    %v3961 = vld [vmem:[#allocation2 + $0x6b8] sm:$0xff]
    %v3962 = vld [vmem:[#allocation2 + $0x6c0] sm:$0xff]
    %v3963 = vld [vmem:[#allocation2 + $0x6c8] sm:$0xff]
    %v3964 = vld [vmem:[#allocation2 + $0x6d0] sm:$0xff]
    %v3965 = vld [vmem:[#allocation2 + $0x6d8] sm:$0xff]
    %v3966 = vld [vmem:[#allocation2 + $0x6e0] sm:$0xff]
    %v3967 = vld [vmem:[#allocation2 + $0x6e8] sm:$0xff]
    %v3968 = vld [vmem:[#allocation2 + $0x6f0] sm:$0xff]
    %v3969 = vld [vmem:[#allocation2 + $0x6f8] sm:$0xff]
    %v3970 = vld [vmem:[#allocation2 + $0x700] sm:$0xff]
    %v3971 = vld [vmem:[#allocation2 + $0x708] sm:$0xff]
    %v3972 = vld [vmem:[#allocation2 + $0x710] sm:$0xff]
    %v3973 = vld [vmem:[#allocation2 + $0x718] sm:$0xff]
    %v3974 = vld [vmem:[#allocation2 + $0x720] sm:$0xff]
    %v3975 = vld [vmem:[#allocation2 + $0x728] sm:$0xff]
    %v3976 = vld [vmem:[#allocation2 + $0x730] sm:$0xff]
    %v3977 = vld [vmem:[#allocation2 + $0x738] sm:$0xff]
    %v3978 = vld [vmem:[#allocation2 + $0x740] sm:$0xff]
    %v3979 = vld [vmem:[#allocation2 + $0x748] sm:$0xff]
    %v3980 = vld [vmem:[#allocation2 + $0x750] sm:$0xff]
    %v3981 = vld [vmem:[#allocation2 + $0x758] sm:$0xff]
    %v3982 = vld [vmem:[#allocation2 + $0x760] sm:$0xff]
    %v3983 = vld [vmem:[#allocation2 + $0x768] sm:$0xff]
    %v3984 = vld [vmem:[#allocation2 + $0x770] sm:$0xff]
    %v3985 = vld [vmem:[#allocation2 + $0x778] sm:$0xff]
    %v3986 = vld [vmem:[#allocation2 + $0x780] sm:$0xff]
    %v3987 = vld [vmem:[#allocation2 + $0x788] sm:$0xff]
    %v3988 = vld [vmem:[#allocation2 + $0x790] sm:$0xff]
    %v3989 = vld [vmem:[#allocation2 + $0x798] sm:$0xff]
    %v3990 = vld [vmem:[#allocation2 + $0x7a0] sm:$0xff]
    %v3991 = vld [vmem:[#allocation2 + $0x7a8] sm:$0xff]
    %v3992 = vld [vmem:[#allocation2 + $0x7b0] sm:$0xff]
    %v3993 = vld [vmem:[#allocation2 + $0x7b8] sm:$0xff]
    %v3994 = vld [vmem:[#allocation2 + $0x7c0] sm:$0xff]
    %v3995 = vld [vmem:[#allocation2 + $0x7c8] sm:$0xff]
    %v3996 = vld [vmem:[#allocation2 + $0x7d0] sm:$0xff]
    %v3997 = vld [vmem:[#allocation2 + $0x7d8] sm:$0xff]
    %v3998 = vld [vmem:[#allocation2 + $0x7e0] sm:$0xff]
    %v3999 = vld [vmem:[#allocation2 + $0x7e8] sm:$0xff]
    %v4000 = vld [vmem:[#allocation2 + $0x7f0] sm:$0xff]
    %v4001 = vld [vmem:[#allocation2 + $0x7f8] sm:$0xff]
    %4002 = vmatprep.subr.mxu0 %v3867
    %4003 = vmatpush1.msra.mxu0 %v3866
    %4004 = vmatprep.subr.mxu0 %v3859
    %4005 = vmatpush1.msra.mxu0 %v3858
    %4006 = vmatprep.subr.mxu0 %v3851
    %4007 = vmatpush1.msra.mxu0 %v3850
    %4008 = vmatprep.subr.mxu0 %v3843
    %4009 = vmatpush1.msra.mxu0 %v3842
    %4010 = vmatprep.subr.mxu0 %v3835
    %4011 = vmatpush1.msra.mxu0 %v3834
    %4012 = vmatprep.subr.mxu0 %v3827
    %4013 = vmatpush1.msra.mxu0 %v3826
    %4014 = vmatprep.subr.mxu0 %v3819
    %4015 = vmatpush1.msra.mxu0 %v3818
    %4016 = vmatprep.subr.mxu0 %v3811
    %4017 = vmatpush1.msra.mxu0 %v3810
    %4018 = vmatprep.subr.mxu0 %v3803
    %4019 = vmatpush1.msra.mxu0 %v3802
    %4020 = vmatprep.subr.mxu0 %v3795
    %4021 = vmatpush1.msra.mxu0 %v3794
    %4022 = vmatprep.subr.mxu0 %v3787
    %4023 = vmatpush1.msra.mxu0 %v3786
    %4024 = vmatprep.subr.mxu0 %v3779
    %4025 = vmatpush1.msra.mxu0 %v3778
    %4026 = vmatprep.subr.mxu0 %v3771
    %4027 = vmatpush1.msra.mxu0 %v3770
    %4028 = vmatprep.subr.mxu0 %v3763
    %4029 = vmatpush1.msra.mxu0 %v3762
    %4030 = vmatprep.subr.mxu0 %v3755
    %4031 = vmatpush1.msra.mxu0 %v3754
    %4032 = vmatprep.subr.mxu0 %v3747
    %4033 = vmatpush1.msra.mxu0 %v3746
    %4034 = vmatprep.subr.mxu0 %v3995
    %4035 = vmatpush2.msra.mxu0 %v3994
    %4036 = vmatprep.subr.mxu0 %v3987
    %4037 = vmatpush2.msra.mxu0 %v3986
    %4038 = vmatprep.subr.mxu0 %v3979
    %4039 = vmatpush2.msra.mxu0 %v3978
    %4040 = vmatprep.subr.mxu0 %v3971
    %4041 = vmatpush2.msra.mxu0 %v3970
    %4042 = vmatprep.subr.mxu0 %v3963
    %4043 = vmatpush2.msra.mxu0 %v3962
    %4044 = vmatprep.subr.mxu0 %v3955
    %4045 = vmatpush2.msra.mxu0 %v3954
    %4046 = vmatprep.subr.mxu0 %v3947
    %4047 = vmatpush2.msra.mxu0 %v3946
    %4048 = vmatprep.subr.mxu0 %v3939
    %4049 = vmatpush2.msra.mxu0 %v3938
    %4050 = vmatprep.subr.mxu0 %v3931
    %4051 = vmatpush2.msra.mxu0 %v3930
    %4052 = vmatprep.subr.mxu0 %v3923
    %4053 = vmatpush2.msra.mxu0 %v3922
    %4054 = vmatprep.subr.mxu0 %v3915
    %4055 = vmatpush2.msra.mxu0 %v3914
    %4056 = vmatprep.subr.mxu0 %v3907
    %4057 = vmatpush2.msra.mxu0 %v3906
    %4058 = vmatprep.subr.mxu0 %v3899
    %4059 = vmatpush2.msra.mxu0 %v3898
    %4060 = vmatprep.subr.mxu0 %v3891
    %4061 = vmatpush2.msra.mxu0 %v3890
    %4062 = vmatprep.subr.mxu0 %v3883
    %4063 = vmatpush2.msra.mxu0 %v3882
    %4064 = vmatprep.subr.mxu0 %v3875
    %4065 = vmatpush2.msra.mxu0 %v3874
    %4066 = vmatprep.mubr.f32.mxu0 %v3745
    %4067 = vmatmul.mubr.f32.gmra.mxu0 %v3744
    %v4068 = vpop.f32.mrf.mxu0
    %v4069 = vadd.f32 0.0, %v4068
    %v4070 = vpop.f32.mrf.mxu0
    %v4071 = vadd.f32 0.0, %v4070
    %4072 = vdwg.mxu0
    %4073 = vmatprep.subr.mxu0 %v3869
    %4074 = vmatpush1.msra.mxu0 %v3868
    %4075 = vmatprep.subr.mxu0 %v3861
    %4076 = vmatpush1.msra.mxu0 %v3860
    %4077 = vmatprep.subr.mxu0 %v3853
    %4078 = vmatpush1.msra.mxu0 %v3852
    %4079 = vmatprep.subr.mxu0 %v3845
    %4080 = vmatpush1.msra.mxu0 %v3844
    %4081 = vmatprep.subr.mxu0 %v3837
    %4082 = vmatpush1.msra.mxu0 %v3836
    %4083 = vmatprep.subr.mxu0 %v3829
    %4084 = vmatpush1.msra.mxu0 %v3828
    %4085 = vmatprep.subr.mxu0 %v3821
    %4086 = vmatpush1.msra.mxu0 %v3820
    %4087 = vmatprep.subr.mxu0 %v3813
    %4088 = vmatpush1.msra.mxu0 %v3812
    %4089 = vmatprep.subr.mxu0 %v3805
    %4090 = vmatpush1.msra.mxu0 %v3804
    %4091 = vmatprep.subr.mxu0 %v3797
    %4092 = vmatpush1.msra.mxu0 %v3796
    %4093 = vmatprep.subr.mxu0 %v3789
    %4094 = vmatpush1.msra.mxu0 %v3788
    %4095 = vmatprep.subr.mxu0 %v3781
    %4096 = vmatpush1.msra.mxu0 %v3780
    %4097 = vmatprep.subr.mxu0 %v3773
    %4098 = vmatpush1.msra.mxu0 %v3772
    %4099 = vmatprep.subr.mxu0 %v3765
    %4100 = vmatpush1.msra.mxu0 %v3764
    %4101 = vmatprep.subr.mxu0 %v3757
    %4102 = vmatpush1.msra.mxu0 %v3756
    %4103 = vmatprep.subr.mxu0 %v3749
    %4104 = vmatpush1.msra.mxu0 %v3748
    %4105 = vmatprep.subr.mxu0 %v3997
    %4106 = vmatpush2.msra.mxu0 %v3996
    %4107 = vmatprep.subr.mxu0 %v3989
    %4108 = vmatpush2.msra.mxu0 %v3988
    %4109 = vmatprep.subr.mxu0 %v3981
    %4110 = vmatpush2.msra.mxu0 %v3980
    %4111 = vmatprep.subr.mxu0 %v3973
    %4112 = vmatpush2.msra.mxu0 %v3972
    %4113 = vmatprep.subr.mxu0 %v3965
    %4114 = vmatpush2.msra.mxu0 %v3964
    %4115 = vmatprep.subr.mxu0 %v3957
    %4116 = vmatpush2.msra.mxu0 %v3956
    %4117 = vmatprep.subr.mxu0 %v3949
    %4118 = vmatpush2.msra.mxu0 %v3948
    %4119 = vmatprep.subr.mxu0 %v3941
    %4120 = vmatpush2.msra.mxu0 %v3940
    %4121 = vmatprep.subr.mxu0 %v3933
    %4122 = vmatpush2.msra.mxu0 %v3932
    %4123 = vmatprep.subr.mxu0 %v3925
    %4124 = vmatpush2.msra.mxu0 %v3924
    %4125 = vmatprep.subr.mxu0 %v3917
    %4126 = vmatpush2.msra.mxu0 %v3916
    %4127 = vmatprep.subr.mxu0 %v3909
    %4128 = vmatpush2.msra.mxu0 %v3908
    %4129 = vmatprep.subr.mxu0 %v3901
    %4130 = vmatpush2.msra.mxu0 %v3900
    %4131 = vmatprep.subr.mxu0 %v3893
    %4132 = vmatpush2.msra.mxu0 %v3892
    %4133 = vmatprep.subr.mxu0 %v3885
    %4134 = vmatpush2.msra.mxu0 %v3884
    %4135 = vmatprep.subr.mxu0 %v3877
    %4136 = vmatpush2.msra.mxu0 %v3876
    %4137 = vmatprep.mubr.f32.mxu0 %v3745
    %4138 = vmatmul.mubr.f32.gmra.mxu0 %v3744
    %v4139 = vpop.f32.mrf.mxu0
    %v4140 = vadd.f32 0.0, %v4139
    %v4141 = vpop.f32.mrf.mxu0
    %v4142 = vadd.f32 0.0, %v4141
    %4143 = vdwg.mxu0
    %4144 = vmatprep.subr.mxu0 %v3871
    %4145 = vmatpush1.msra.mxu0 %v3870
    %4146 = vmatprep.subr.mxu0 %v3863
    %4147 = vmatpush1.msra.mxu0 %v3862
    %4148 = vmatprep.subr.mxu0 %v3855
    %4149 = vmatpush1.msra.mxu0 %v3854
    %4150 = vmatprep.subr.mxu0 %v3847
    %4151 = vmatpush1.msra.mxu0 %v3846
    %4152 = vmatprep.subr.mxu0 %v3839
    %4153 = vmatpush1.msra.mxu0 %v3838
    %4154 = vmatprep.subr.mxu0 %v3831
    %4155 = vmatpush1.msra.mxu0 %v3830
    %4156 = vmatprep.subr.mxu0 %v3823
    %4157 = vmatpush1.msra.mxu0 %v3822
    %4158 = vmatprep.subr.mxu0 %v3815
    %4159 = vmatpush1.msra.mxu0 %v3814
    %4160 = vmatprep.subr.mxu0 %v3807
    %4161 = vmatpush1.msra.mxu0 %v3806
    %4162 = vmatprep.subr.mxu0 %v3799
    %4163 = vmatpush1.msra.mxu0 %v3798
    %4164 = vmatprep.subr.mxu0 %v3791
    %4165 = vmatpush1.msra.mxu0 %v3790
    %4166 = vmatprep.subr.mxu0 %v3783
    %4167 = vmatpush1.msra.mxu0 %v3782
    %4168 = vmatprep.subr.mxu0 %v3775
    %4169 = vmatpush1.msra.mxu0 %v3774
    %4170 = vmatprep.subr.mxu0 %v3767
    %4171 = vmatpush1.msra.mxu0 %v3766
    %4172 = vmatprep.subr.mxu0 %v3759
    %4173 = vmatpush1.msra.mxu0 %v3758
    %4174 = vmatprep.subr.mxu0 %v3751
    %4175 = vmatpush1.msra.mxu0 %v3750
    %4176 = vmatprep.subr.mxu0 %v3999
    %4177 = vmatpush2.msra.mxu0 %v3998
    %4178 = vmatprep.subr.mxu0 %v3991
    %4179 = vmatpush2.msra.mxu0 %v3990
    %4180 = vmatprep.subr.mxu0 %v3983
    %4181 = vmatpush2.msra.mxu0 %v3982
    %4182 = vmatprep.subr.mxu0 %v3975
    %4183 = vmatpush2.msra.mxu0 %v3974
    %4184 = vmatprep.subr.mxu0 %v3967
    %4185 = vmatpush2.msra.mxu0 %v3966
    %4186 = vmatprep.subr.mxu0 %v3959
    %4187 = vmatpush2.msra.mxu0 %v3958
    %4188 = vmatprep.subr.mxu0 %v3951
    %4189 = vmatpush2.msra.mxu0 %v3950
    %4190 = vmatprep.subr.mxu0 %v3943
    %4191 = vmatpush2.msra.mxu0 %v3942
    %4192 = vmatprep.subr.mxu0 %v3935
    %4193 = vmatpush2.msra.mxu0 %v3934
    %4194 = vmatprep.subr.mxu0 %v3927
    %4195 = vmatpush2.msra.mxu0 %v3926
    %4196 = vmatprep.subr.mxu0 %v3919
    %4197 = vmatpush2.msra.mxu0 %v3918
    %4198 = vmatprep.subr.mxu0 %v3911
    %4199 = vmatpush2.msra.mxu0 %v3910
    %4200 = vmatprep.subr.mxu0 %v3903
    %4201 = vmatpush2.msra.mxu0 %v3902
    %4202 = vmatprep.subr.mxu0 %v3895
    %4203 = vmatpush2.msra.mxu0 %v3894
    %4204 = vmatprep.subr.mxu0 %v3887
    %4205 = vmatpush2.msra.mxu0 %v3886
    %4206 = vmatprep.subr.mxu0 %v3879
    %4207 = vmatpush2.msra.mxu0 %v3878
    %4208 = vmatprep.mubr.f32.mxu0 %v3745
    %4209 = vmatmul.mubr.f32.gmra.mxu0 %v3744
    %v4210 = vpop.f32.mrf.mxu0
    %v4211 = vadd.f32 0.0, %v4210
    %v4212 = vpop.f32.mrf.mxu0
    %v4213 = vadd.f32 0.0, %v4212
    %4214 = vdwg.mxu0
    %4215 = vmatprep.subr.mxu0 %v3873
    %4216 = vmatpush1.msra.mxu0 %v3872
    %4217 = vmatprep.subr.mxu0 %v3865
    %4218 = vmatpush1.msra.mxu0 %v3864
    %4219 = vmatprep.subr.mxu0 %v3857
    %4220 = vmatpush1.msra.mxu0 %v3856
    %4221 = vmatprep.subr.mxu0 %v3849
    %4222 = vmatpush1.msra.mxu0 %v3848
    %4223 = vmatprep.subr.mxu0 %v3841
    %4224 = vmatpush1.msra.mxu0 %v3840
    %4225 = vmatprep.subr.mxu0 %v3833
    %4226 = vmatpush1.msra.mxu0 %v3832
    %4227 = vmatprep.subr.mxu0 %v3825
    %4228 = vmatpush1.msra.mxu0 %v3824
    %4229 = vmatprep.subr.mxu0 %v3817
    %4230 = vmatpush1.msra.mxu0 %v3816
    %4231 = vmatprep.subr.mxu0 %v3809
    %4232 = vmatpush1.msra.mxu0 %v3808
    %4233 = vmatprep.subr.mxu0 %v3801
    %4234 = vmatpush1.msra.mxu0 %v3800
    %4235 = vmatprep.subr.mxu0 %v3793
    %4236 = vmatpush1.msra.mxu0 %v3792
    %4237 = vmatprep.subr.mxu0 %v3785
    %4238 = vmatpush1.msra.mxu0 %v3784
    %4239 = vmatprep.subr.mxu0 %v3777
    %4240 = vmatpush1.msra.mxu0 %v3776
    %4241 = vmatprep.subr.mxu0 %v3769
    %4242 = vmatpush1.msra.mxu0 %v3768
    %4243 = vmatprep.subr.mxu0 %v3761
    %4244 = vmatpush1.msra.mxu0 %v3760
    %4245 = vmatprep.subr.mxu0 %v3753
    %4246 = vmatpush1.msra.mxu0 %v3752
    %4247 = vmatprep.subr.mxu0 %v4001
    %4248 = vmatpush2.msra.mxu0 %v4000
    %4249 = vmatprep.subr.mxu0 %v3993
    %4250 = vmatpush2.msra.mxu0 %v3992
    %4251 = vmatprep.subr.mxu0 %v3985
    %4252 = vmatpush2.msra.mxu0 %v3984
    %4253 = vmatprep.subr.mxu0 %v3977
    %4254 = vmatpush2.msra.mxu0 %v3976
    %4255 = vmatprep.subr.mxu0 %v3969
    %4256 = vmatpush2.msra.mxu0 %v3968
    %4257 = vmatprep.subr.mxu0 %v3961
    %4258 = vmatpush2.msra.mxu0 %v3960
    %4259 = vmatprep.subr.mxu0 %v3953
    %4260 = vmatpush2.msra.mxu0 %v3952
    %4261 = vmatprep.subr.mxu0 %v3945
    %4262 = vmatpush2.msra.mxu0 %v3944
    %4263 = vmatprep.subr.mxu0 %v3937
    %4264 = vmatpush2.msra.mxu0 %v3936
    %4265 = vmatprep.subr.mxu0 %v3929
    %4266 = vmatpush2.msra.mxu0 %v3928
    %4267 = vmatprep.subr.mxu0 %v3921
    %4268 = vmatpush2.msra.mxu0 %v3920
    %4269 = vmatprep.subr.mxu0 %v3913
    %4270 = vmatpush2.msra.mxu0 %v3912
    %4271 = vmatprep.subr.mxu0 %v3905
    %4272 = vmatpush2.msra.mxu0 %v3904
    %4273 = vmatprep.subr.mxu0 %v3897
    %4274 = vmatpush2.msra.mxu0 %v3896
    %4275 = vmatprep.subr.mxu0 %v3889
    %4276 = vmatpush2.msra.mxu0 %v3888
    %4277 = vmatprep.subr.mxu0 %v3881
    %4278 = vmatpush2.msra.mxu0 %v3880
    %4279 = vmatprep.mubr.f32.mxu0 %v3745
    %4280 = vmatmul.mubr.f32.gmra.mxu0 %v3744
    %v4281 = vpop.f32.mrf.mxu0
    %v4282 = vadd.f32 0.0, %v4281
    %v4283 = vpop.f32.mrf.mxu0
    %v4284 = vadd.f32 0.0, %v4283
    %4285 = vdwg.mxu0
    %v4286 = vadd.f32 %v3224, %v4069
    %v4287 = vadd.f32 %v3225, %v4071
    %v4288 = vadd.f32 %v3226, %v4140
    %v4289 = vadd.f32 %v3227, %v4142
    %v4290 = vadd.f32 %v3228, %v4211
    %v4291 = vadd.f32 %v3229, %v4213
    %v4292 = vadd.f32 %v3230, %v4282
    %v4293 = vadd.f32 %v3231, %v4284
    %4294 = vst [vmem:[#allocation8] sm:$0xff] %v4286
    %4295 = vst [vmem:[#allocation8 + $0x8] sm:$0xff] %v4287
    %4296 = vst [vmem:[#allocation8 + $0x10] sm:$0xff] %v4288
    %4297 = vst [vmem:[#allocation8 + $0x18] sm:$0xff] %v4289
    %4298 = vst [vmem:[#allocation8 + $0x20] sm:$0xff] %v4290
    %4299 = vst [vmem:[#allocation8 + $0x28] sm:$0xff] %v4291
    %4300 = vst [vmem:[#allocation8 + $0x30] sm:$0xff] %v4292
    %4301 = vst [vmem:[#allocation8 + $0x38] sm:$0xff] %v4293
    // Predicated region
    $region22: #{tpu_custom_call.1} parent=1 // pred_check
      _
    $region23: #{tpu_custom_call.1} parent=1 // pred_check_branch
      %4303 = sbr.rel (0) target = $region25
    $region24: #{tpu_custom_call.1} parent=1 // pred_region
      %s4305 = ssub.s32 1024, 1024
      %4306 = vsyncadd [#allocation5], %s4305
      %s4308 = sshll.u32 [#allocation8], 4
      %s4309 = int_to_ptr.vmem [resolvable:$true] %s4308
      %4311 = dma.vmem_to_hbm [thread:$0]  %s4309, 1024, %s3, [#allocation5]
    $region25: #{tpu_custom_call.1} parent=1 // pred_fallthru
      _
    // Predicated region
    $region26: #{tpu_custom_call.1} parent=1 // pred_check
      _
    $region27: #{tpu_custom_call.1} parent=1 // pred_check_branch
      %4313 = sbr.rel (0) target = $region29
    $region28: #{tpu_custom_call.1} parent=1 // pred_region
      %4314 = dma.done [#allocation5], 1024
    $region29: #{tpu_custom_call.1} parent=1 // pred_fallthru
      _
    %4315 = vsyncpa [#allocation4], 1
    %4316 = vsyncpa [#allocation7], 1
    %4317 = vsyncpa [#allocation5], 1

</llo_original>
